<compile_context>
chip_gen: v5e
topology: v5e:2x2
jax: 0.10.0
libtpu: 0.0.40
codegen_flags: <defaults>
</compile_context>

<pallas_src>
import functools
import numpy as np
import jax
import jax.numpy as jnp
from jax.experimental import pallas as pl
from jax.experimental.pallas import tpu as pltpu


CFG = dict(img=32, in_ch=3, patch=4, embed=32, window=4,
           depths=(2, 2), heads=(2, 4), mlp_ratio=4, num_classes=10)

EPS = 1e-5
_GELU_C = 0.7978845608028654  # sqrt(2/pi)


# --------------------------- in-kernel helpers ------------------------------ #

def _layernorm(x, g, b):
    mu = jnp.mean(x, axis=-1, keepdims=True)
    var = jnp.mean((x - mu) * (x - mu), axis=-1, keepdims=True)
    return (x - mu) * jax.lax.rsqrt(var + EPS) * g + b


def _gelu_tanh(x):
    # TODO(synk): torch nn.GELU defaults to the exact erf form; tanh approximation used here.
    return 0.5 * x * (1.0 + jnp.tanh(_GELU_C * (x + 0.044715 * x * x * x)))


def _const_spec(shape):
    zeros = (0,) * len(shape)
    return pl.BlockSpec(shape, lambda i: zeros)


# --------------------------- fused Swin block ------------------------------- #

def _swin_block_kernel(nW, N, C, heads, d,
                       xw_ref, bias_ref, wqkv_ref, bqkv_ref, pw_ref, pb_ref,
                       n1g_ref, n1b_ref, n2g_ref, n2b_ref,
                       f1w_ref, f1b_ref, f2w_ref, f2b_ref, o_ref):
    T = nW * N
    scale = float(d) ** -0.5

    x = xw_ref[0].reshape(T, C)                      # (T, C) f32, window-ordered tokens

    # ---- attention branch ----
    xn = _layernorm(x, n1g_ref[...], n1b_ref[...])
    xn_b = xn.astype(jnp.bfloat16)

    wqkv = wqkv_ref[...]                             # (3, heads, C, d) bf16
    bqkv = bqkv_ref[...]                             # (3, heads, 1, d) f32
    pw = pw_ref[...]                                 # (heads, d, C)    bf16
    bias = bias_ref[...]                             # (nW, heads, N, N) f32

    attn = jnp.zeros((T, C), jnp.float32)
    for h in range(heads):                           # heads is 2 or 4 (static unroll)
        q = jnp.dot(xn_b, wqkv[0, h], preferred_element_type=jnp.float32) + bqkv[0, h]
        k = jnp.dot(xn_b, wqkv[1, h], preferred_element_type=jnp.float32) + bqkv[1, h]
        v = jnp.dot(xn_b, wqkv[2, h], preferred_element_type=jnp.float32) + bqkv[2, h]
        qw = (q * scale).reshape(nW, N, d).astype(jnp.bfloat16)
        kw = k.reshape(nW, N, d).astype(jnp.bfloat16)
        vw = v.reshape(nW, N, d).astype(jnp.bfloat16)
        s = jnp.einsum("wqd,wkd->wqk", qw, kw,
                       preferred_element_type=jnp.float32) + bias[:, h]
        m = jnp.max(s, axis=-1, keepdims=True)
        e = jnp.exp(s - m)
        p = e / jnp.sum(e, axis=-1, keepdims=True)
        oh = jnp.einsum("wqk,wkd->wqd", p.astype(jnp.bfloat16), vw,
                        preferred_element_type=jnp.float32)     # (nW, N, d)
        # per-head projection summed == concat(heads) @ proj_w  (lane-dense output)
        attn = attn + jnp.dot(oh.reshape(T, d).astype(jnp.bfloat16), pw[h],
                              preferred_element_type=jnp.float32)
    x = x + attn + pb_ref[...]

    # ---- MLP branch ----
    xn2 = _layernorm(x, n2g_ref[...], n2b_ref[...])
    h1 = jnp.dot(xn2.astype(jnp.bfloat16), f1w_ref[...],
                 preferred_element_type=jnp.float32) + f1b_ref[...]
    h1 = _gelu_tanh(h1)
    h2 = jnp.dot(h1.astype(jnp.bfloat16), f2w_ref[...],
                 preferred_element_type=jnp.float32) + f2b_ref[...]
    o_ref[0] = (x + h2).reshape(nW, N, C)


def swin_block(x, p, H, W, heads, shift, ws):
    B, L, C = x.shape
    N = ws * ws
    nW = (H // ws) * (W // ws)
    d = C // heads
    hid = p["fc1_w"].shape[1]

    # roll + window partition (pure token permutation; all per-token ops commute)
    xs = x.reshape(B, H, W, C)
    if shift > 0:
        xs = jnp.roll(xs, (-shift, -shift), axis=(1, 2))
    xw = xs.reshape(B, H // ws, ws, W // ws, ws, C)
    xw = xw.transpose(0, 1, 3, 2, 4, 5).reshape(B, nW, N, C)

    kern = functools.partial(_swin_block_kernel, nW, N, C, heads, d)
    out = pl.pallas_call(
        kern,
        out_shape=jax.ShapeDtypeStruct((B, nW, N, C), jnp.float32),
        grid=(B,),
        in_specs=[
            pl.BlockSpec((1, nW, N, C), lambda b: (b, 0, 0, 0)),
            _const_spec((nW, heads, N, N)),
            _const_spec((3, heads, C, d)),
            _const_spec((3, heads, 1, d)),
            _const_spec((heads, d, C)),
            _const_spec((1, C)),
            _const_spec((1, C)),
            _const_spec((1, C)),
            _const_spec((1, C)),
            _const_spec((1, C)),
            _const_spec((C, hid)),
            _const_spec((1, hid)),
            _const_spec((hid, C)),
            _const_spec((1, C)),
        ],
        out_specs=pl.BlockSpec((1, nW, N, C), lambda b: (b, 0, 0, 0)),
        compiler_params=pltpu.CompilerParams(dimension_semantics=("parallel",)),
    )(xw, p["attn_bias"], p["wqkv"], p["bqkv"], p["proj_w"], p["proj_b"],
      p["norm1_g"], p["norm1_b"], p["norm2_g"], p["norm2_b"],
      p["fc1_w"], p["fc1_b"], p["fc2_w"], p["fc2_b"])

    # window reverse + roll back
    xr = out.reshape(B, H // ws, W // ws, ws, ws, C)
    xr = xr.transpose(0, 1, 3, 2, 4, 5).reshape(B, H, W, C)
    if shift > 0:
        xr = jnp.roll(xr, (shift, shift), axis=(1, 2))
    return xr.reshape(B, L, C)


# ----------------------- patch embed / merge / head ------------------------- #

def _patch_embed_kernel(x_ref, w_ref, b_ref, g_ref, gb_ref, o_ref):
    y = jnp.dot(x_ref[...].astype(jnp.bfloat16), w_ref[...],
                preferred_element_type=jnp.float32) + b_ref[...]
    o_ref[...] = _layernorm(y, g_ref[...], gb_ref[...])


def patch_embed(x_flat, params):
    M, K = x_flat.shape
    E = params["patch_w"].shape[1]
    return pl.pallas_call(
        _patch_embed_kernel,
        out_shape=jax.ShapeDtypeStruct((M, E), jnp.float32),
        grid=(1,),
        in_specs=[_const_spec((M, K)), _const_spec((K, E)), _const_spec((1, E)),
                  _const_spec((1, E)), _const_spec((1, E))],
        out_specs=_const_spec((M, E)),
    )(x_flat, params["patch_w"], params["patch_b"],
      params["patch_norm_g"], params["patch_norm_b"])


def _patch_merge_kernel(x_ref, g_ref, b_ref, w_ref, o_ref):
    xn = _layernorm(x_ref[...], g_ref[...], b_ref[...])
    o_ref[...] = jnp.dot(xn.astype(jnp.bfloat16), w_ref[...],
                         preferred_element_type=jnp.float32)   # no bias in Swin reduction


def patch_merging(x, p, H, W):
    B, L, C = x.shape
    x = x.reshape(B, H, W, C)
    x0, x1 = x[:, 0::2, 0::2], x[:, 1::2, 0::2]
    x2, x3 = x[:, 0::2, 1::2], x[:, 1::2, 1::2]
    xm = jnp.concatenate([x0, x1, x2, x3], axis=-1)
    M = B * (H // 2) * (W // 2)
    xm = xm.reshape(M, 4 * C)
    out = pl.pallas_call(
        _patch_merge_kernel,
        out_shape=jax.ShapeDtypeStruct((M, 2 * C), jnp.float32),
        grid=(1,),
        in_specs=[_const_spec((M, 4 * C)), _const_spec((1, 4 * C)),
                  _const_spec((1, 4 * C)), _const_spec((4 * C, 2 * C))],
        out_specs=_const_spec((M, 2 * C)),
    )(xm, p["norm_g"], p["norm_b"], p["red_w"])
    return out.reshape(B, (H // 2) * (W // 2), 2 * C)


def _head_kernel(B, L, C, x_ref, g_ref, b_ref, w_ref, hb_ref, o_ref):
    x = x_ref[...].reshape(B * L, C)
    xn = _layernorm(x, g_ref[...], b_ref[...])
    # global average pool over tokens (static per-image sublane reductions)
    rows = [jnp.mean(xn[b * L:(b + 1) * L, :], axis=0, keepdims=True) for b in range(B)]
    pooled = jnp.concatenate(rows, axis=0)                       # (B, C)
    o_ref[...] = jnp.dot(pooled.astype(jnp.bfloat16), w_ref[...],
                         preferred_element_type=jnp.float32) + hb_ref[...]


def head_forward(x, params):
    B, L, C = x.shape
    NC = params["head_w"].shape[1]
    return pl.pallas_call(
        functools.partial(_head_kernel, B, L, C),
        out_shape=jax.ShapeDtypeStruct((B, NC), jnp.float32),
        grid=(1,),
        in_specs=[_const_spec((B, L, C)), _const_spec((1, C)), _const_spec((1, C)),
                  _const_spec((C, NC)), _const_spec((1, NC))],
        out_specs=_const_spec((B, NC)),
    )(x, params["norm_g"], params["norm_b"], params["head_w"], params["head_b"])


# --------------------------- static attention bias -------------------------- #

def relative_position_index(ws):
    coords = np.stack(np.meshgrid(np.arange(ws), np.arange(ws), indexing="ij"))
    coords_flat = coords.reshape(2, -1)
    rel = coords_flat[:, :, None] - coords_flat[:, None, :]
    rel = rel.transpose(1, 2, 0).astype(np.int64)
    rel[:, :, 0] += ws - 1
    rel[:, :, 1] += ws - 1
    rel[:, :, 0] *= 2 * ws - 1
    return rel.sum(-1)  # (N, N)


def shifted_window_mask(H, W, ws, shift):
    img_mask = np.zeros((1, H, W, 1), np.float32)
    slices = (slice(0, -ws), slice(-ws, -shift), slice(-shift, None))
    cnt = 0
    for hs in slices:
        for wsl in slices:
            img_mask[:, hs, wsl, :] = cnt
            cnt += 1
    m = img_mask.reshape(1, H // ws, ws, W // ws, ws, 1).transpose(0, 1, 3, 2, 4, 5)
    m = m.reshape(-1, ws * ws)
    attn = m[:, None, :] - m[:, :, None]
    return np.where(attn != 0, -100.0, 0.0).astype(np.float32)  # (nW, N, N)


# --------------------------- model construction ----------------------------- #

def init_params(key):
    c = CFG
    keys = iter(jax.random.split(key, 512))
    dn = lambda shape: jax.random.normal(next(keys), shape, jnp.float32) * 0.02
    dn16 = lambda shape: dn(shape).astype(jnp.bfloat16)
    zeros = lambda shape: jnp.zeros(shape, jnp.float32)
    ones = lambda shape: jnp.ones(shape, jnp.float32)

    ws = c["window"]
    N = ws * ws
    rel_idx = relative_position_index(ws)

    params = {
        "patch_w": dn16((c["patch"] * c["patch"] * c["in_ch"], c["embed"])),
        "patch_b": zeros((1, c["embed"])),
        "patch_norm_g": ones((1, c["embed"])),
        "patch_norm_b": zeros((1, c["embed"])),
        "stages": [],
    }

    dim = c["embed"]
    H = W = c["img"] // c["patch"]
    for si, (depth, heads) in enumerate(zip(c["depths"], c["heads"])):
        d = dim // heads
        hid = dim * c["mlp_ratio"]
        nW = (H // ws) * (W // ws)
        shift_size = 0 if ws >= H else ws // 2
        mask = shifted_window_mask(H, W, ws, shift_size) if shift_size > 0 else None
        blocks = []
        for bi in range(depth):
            shift = shift_size if (bi % 2 == 1) else 0
            # precomputed relative-position bias (+ shifted-window mask), per window
            rel_table = dn(((2 * ws - 1) ** 2, heads))
            rel_bias = rel_table[rel_idx.reshape(-1)].reshape(N, N, heads)
            rel_bias = jnp.transpose(rel_bias, (2, 0, 1))          # (heads, N, N)
            bias = jnp.broadcast_to(rel_bias[None], (nW, heads, N, N))
            if shift > 0:
                bias = bias + jnp.asarray(mask)[:, None, :, :]
            blocks.append({
                "attn_bias": jnp.asarray(bias, jnp.float32),
                "wqkv": dn16((3, heads, dim, d)),
                "bqkv": zeros((3, heads, 1, d)),
                "proj_w": dn16((heads, d, dim)),
                "proj_b": zeros((1, dim)),
                "norm1_g": ones((1, dim)), "norm1_b": zeros((1, dim)),
                "norm2_g": ones((1, dim)), "norm2_b": zeros((1, dim)),
                "fc1_w": dn16((dim, hid)), "fc1_b": zeros((1, hid)),
                "fc2_w": dn16((hid, dim)), "fc2_b": zeros((1, dim)),
            })
        stage = {"blocks": blocks, "heads": heads}
        if si < len(c["depths"]) - 1:
            stage["merge"] = {"norm_g": ones((1, 4 * dim)), "norm_b": zeros((1, 4 * dim)),
                              "red_w": dn16((4 * dim, 2 * dim))}
            dim *= 2
            H, W = H // 2, W // 2
        params["stages"].append(stage)

    params["norm_g"] = ones((1, dim))
    params["norm_b"] = zeros((1, dim))
    params["head_w"] = dn16((dim, c["num_classes"]))
    params["head_b"] = zeros((1, c["num_classes"]))
    return params


def swin_forward(params, x_nchw):
    c = CFG
    B = x_nchw.shape[0]
    P, ws = c["patch"], c["window"]
    x = jnp.transpose(x_nchw, (0, 2, 3, 1)).astype(jnp.float32)    # NCHW -> NHWC
    H = W = c["img"] // P

    # patch embed: 4x4 stride-4 conv == matmul on flattened (ph, pw, ch) patches
    xp = x.reshape(B, H, P, W, P, c["in_ch"]).transpose(0, 1, 3, 2, 4, 5)
    xp = xp.reshape(B * H * W, P * P * c["in_ch"])
    xt = patch_embed(xp, params)
    x = xt.reshape(B, H * W, c["embed"])

    dim = c["embed"]
    for si, stage in enumerate(params["stages"]):
        shift_size = 0 if ws >= H else ws // 2
        for bi, blk in enumerate(stage["blocks"]):
            shift = shift_size if (bi % 2 == 1) else 0
            x = swin_block(x, blk, H, W, stage["heads"], shift, ws)
        if "merge" in stage:
            x = patch_merging(x, stage["merge"], H, W)
            H, W, dim = H // 2, W // 2, dim * 2

    logits = head_forward(x, params)                               # (B, num_classes)
    return logits.reshape(B, -1)                                   # == x.view(x.size(0), -1)


if __name__ == "__main__":
    key = jax.random.PRNGKey(0)
    pkey, xkey = jax.random.split(key)
    params = init_params(pkey)
    x = jax.random.normal(xkey, (2, CFG["in_ch"], CFG["img"], CFG["img"]), jnp.float32)

    fwd = jax.jit(functools.partial(swin_forward, params))
    out = fwd(x)
    jax.block_until_ready(out)
    assert out.shape == (2, CFG["num_classes"]), out.shape
    assert jnp.all(jnp.isfinite(out))
    print("KERNEL_OK")
</pallas_src>

<mosaic_0001>
module attributes {stable_mosaic.version = 11 : i64} {
  func.func @_patch_embed_kernel(%arg0: i32, %arg1: memref<128x48xf32, #tpu.memory_space<vmem>>, %arg2: memref<48x32xbf16, #tpu.memory_space<vmem>>, %arg3: memref<1x32xf32, #tpu.memory_space<vmem>>, %arg4: memref<1x32xf32, #tpu.memory_space<vmem>>, %arg5: memref<1x32xf32, #tpu.memory_space<vmem>>, %arg6: memref<128x32xf32, #tpu.memory_space<vmem>>) attributes {dimension_semantics = [#tpu.dimension_semantics<arbitrary>], iteration_bounds = array<i64: 1>, scalar_prefetch = 0 : i64, scratch_operands = 0 : i64, tpu.core_type = #tpu.core_type<tc>, window_params = [{pipeline_mode = #tpu.pipeline_mode<synchronous>, transform_indices = @transform_0, window_bounds = array<i64: 128, 48>}, {pipeline_mode = #tpu.pipeline_mode<synchronous>, transform_indices = @transform_1, window_bounds = array<i64: 48, 32>}, {pipeline_mode = #tpu.pipeline_mode<synchronous>, transform_indices = @transform_2, window_bounds = array<i64: 1, 32>}, {pipeline_mode = #tpu.pipeline_mode<synchronous>, transform_indices = @transform_3, window_bounds = array<i64: 1, 32>}, {pipeline_mode = #tpu.pipeline_mode<synchronous>, transform_indices = @transform_4, window_bounds = array<i64: 1, 32>}, {pipeline_mode = #tpu.pipeline_mode<synchronous>, transform_indices = @transform_5, window_bounds = array<i64: 128, 32>}]} {
    %c0 = arith.constant 0 : index
    %c0_0 = arith.constant 0 : index
    %0 = vector.load %arg1[%c0, %c0_0] : memref<128x48xf32, #tpu.memory_space<vmem>>, vector<128x48xf32>
    %1 = arith.truncf %0 : vector<128x48xf32> to vector<128x48xbf16>
    %c0_1 = arith.constant 0 : index
    %c0_2 = arith.constant 0 : index
    %2 = vector.load %arg2[%c0_1, %c0_2] : memref<48x32xbf16, #tpu.memory_space<vmem>>, vector<48x32xbf16>
    %cst = arith.constant dense<0.000000e+00> : vector<128x32xf32>
    %3 = tpu.matmul %1, %2, %cst {dimension_numbers = #tpu.dot_dimension_numbers<[1], [0], [0], [1], [0, 0, 1, 1], [], []>} : vector<128x48xbf16>, vector<48x32xbf16>, vector<128x32xf32> -> vector<128x32xf32>
    %c0_3 = arith.constant 0 : index
    %c0_4 = arith.constant 0 : index
    %4 = vector.load %arg3[%c0_3, %c0_4] : memref<1x32xf32, #tpu.memory_space<vmem>>, vector<1x32xf32>
    %5 = vector.broadcast %4 : vector<1x32xf32> to vector<128x32xf32>
    %6 = arith.addf %3, %5 : vector<128x32xf32>
    %c0_5 = arith.constant 0 : index
    %c0_6 = arith.constant 0 : index
    %7 = vector.load %arg4[%c0_5, %c0_6] : memref<1x32xf32, #tpu.memory_space<vmem>>, vector<1x32xf32>
    %c0_7 = arith.constant 0 : index
    %c0_8 = arith.constant 0 : index
    %8 = vector.load %arg5[%c0_7, %c0_8] : memref<1x32xf32, #tpu.memory_space<vmem>>, vector<1x32xf32>
    %cst_9 = arith.constant dense<0.000000e+00> : vector<128xf32>
    %9 = vector.multi_reduction <add>, %6, %cst_9 [1] : vector<128x32xf32> to vector<128xf32>
    %10 = vector.shape_cast %9 : vector<128xf32> to vector<128x1xf32>
    %cst_10 = arith.constant 3.200000e+01 : f32
    %11 = vector.broadcast %cst_10 : f32 to vector<128x1xf32>
    %12 = arith.divf %10, %11 : vector<128x1xf32>
    %13 = vector.broadcast %12 : vector<128x1xf32> to vector<128x32xf32>
    %14 = arith.subf %6, %13 : vector<128x32xf32>
    %15 = vector.broadcast %12 : vector<128x1xf32> to vector<128x32xf32>
    %16 = arith.subf %6, %15 : vector<128x32xf32>
    %17 = arith.mulf %14, %16 : vector<128x32xf32>
    %cst_11 = arith.constant dense<0.000000e+00> : vector<128xf32>
    %18 = vector.multi_reduction <add>, %17, %cst_11 [1] : vector<128x32xf32> to vector<128xf32>
    %19 = vector.shape_cast %18 : vector<128xf32> to vector<128x1xf32>
    %cst_12 = arith.constant 3.200000e+01 : f32
    %20 = vector.broadcast %cst_12 : f32 to vector<128x1xf32>
    %21 = arith.divf %19, %20 : vector<128x1xf32>
    %22 = vector.broadcast %12 : vector<128x1xf32> to vector<128x32xf32>
    %23 = arith.subf %6, %22 : vector<128x32xf32>
    %cst_13 = arith.constant 9.99999974E-6 : f32
    %24 = vector.broadcast %cst_13 : f32 to vector<128x1xf32>
    %25 = arith.addf %21, %24 : vector<128x1xf32>
    %26 = math.rsqrt %25 : vector<128x1xf32>
    %27 = vector.broadcast %26 : vector<128x1xf32> to vector<128x32xf32>
    %28 = arith.mulf %23, %27 : vector<128x32xf32>
    %29 = vector.broadcast %7 : vector<1x32xf32> to vector<128x32xf32>
    %30 = arith.mulf %28, %29 : vector<128x32xf32>
    %31 = vector.broadcast %8 : vector<1x32xf32> to vector<128x32xf32>
    %32 = arith.addf %30, %31 : vector<128x32xf32>
    %c0_14 = arith.constant 0 : index
    %c0_15 = arith.constant 0 : index
    %33 = vector.load %arg6[%c0_14, %c0_15] : memref<128x32xf32, #tpu.memory_space<vmem>>, vector<128x32xf32>
    tpu.vector_store %arg6[%c0_14, %c0_15], %32 {strides = array<i32>} : memref<128x32xf32, #tpu.memory_space<vmem>>, vector<128x32xf32>,
    return
  }
  func.func @transform_0(%arg0: i32) -> (i32, i32) {
    %c0_i32 = arith.constant 0 : i32
    %c0_i32_0 = arith.constant 0 : i32
    %c0_i32_1 = arith.constant 0 : i32
    return %c0_i32, %c0_i32_0 : i32, i32
  }
  func.func @transform_1(%arg0: i32) -> (i32, i32) {
    %c0_i32 = arith.constant 0 : i32
    %c0_i32_0 = arith.constant 0 : i32
    %c0_i32_1 = arith.constant 0 : i32
    return %c0_i32, %c0_i32_0 : i32, i32
  }
  func.func @transform_2(%arg0: i32) -> (i32, i32) {
    %c0_i32 = arith.constant 0 : i32
    %c0_i32_0 = arith.constant 0 : i32
    %c0_i32_1 = arith.constant 0 : i32
    return %c0_i32, %c0_i32_0 : i32, i32
  }
  func.func @transform_3(%arg0: i32) -> (i32, i32) {
    %c0_i32 = arith.constant 0 : i32
    %c0_i32_0 = arith.constant 0 : i32
    %c0_i32_1 = arith.constant 0 : i32
    return %c0_i32, %c0_i32_0 : i32, i32
  }
  func.func @transform_4(%arg0: i32) -> (i32, i32) {
    %c0_i32 = arith.constant 0 : i32
    %c0_i32_0 = arith.constant 0 : i32
    %c0_i32_1 = arith.constant 0 : i32
    return %c0_i32, %c0_i32_0 : i32, i32
  }
  func.func @transform_5(%arg0: i32) -> (i32, i32) {
    %c0_i32 = arith.constant 0 : i32
    %c0_i32_0 = arith.constant 0 : i32
    %c0_i32_1 = arith.constant 0 : i32
    return %c0_i32, %c0_i32_0 : i32, i32
  }
}

module attributes {stable_mosaic.version = 11 : i64} {
  func.func @_swin_block_kernel(%arg0: i32, %arg1: memref<1x4x16x32xf32, #tpu.memory_space<vmem>>, %arg2: memref<4x2x16x16xf32, #tpu.memory_space<vmem>>, %arg3: memref<3x2x32x16xbf16, #tpu.memory_space<vmem>>, %arg4: memref<3x2x1x16xf32, #tpu.memory_space<vmem>>, %arg5: memref<2x16x32xbf16, #tpu.memory_space<vmem>>, %arg6: memref<1x32xf32, #tpu.memory_space<vmem>>, %arg7: memref<1x32xf32, #tpu.memory_space<vmem>>, %arg8: memref<1x32xf32, #tpu.memory_space<vmem>>, %arg9: memref<1x32xf32, #tpu.memory_space<vmem>>, %arg10: memref<1x32xf32, #tpu.memory_space<vmem>>, %arg11: memref<32x128xbf16, #tpu.memory_space<vmem>>, %arg12: memref<1x128xf32, #tpu.memory_space<vmem>>, %arg13: memref<128x32xbf16, #tpu.memory_space<vmem>>, %arg14: memref<1x32xf32, #tpu.memory_space<vmem>>, %arg15: memref<1x4x16x32xf32, #tpu.memory_space<vmem>>) attributes {dimension_semantics = [#tpu.dimension_semantics<parallel>], iteration_bounds = array<i64: 2>, scalar_prefetch = 0 : i64, scratch_operands = 0 : i64, tpu.core_type = #tpu.core_type<tc>, window_params = [{transform_indices = @transform_0, window_bounds = array<i64: 1, 4, 16, 32>}, {pipeline_mode = #tpu.pipeline_mode<synchronous>, transform_indices = @transform_1, window_bounds = array<i64: 4, 2, 16, 16>}, {pipeline_mode = #tpu.pipeline_mode<synchronous>, transform_indices = @transform_2, window_bounds = array<i64: 3, 2, 32, 16>}, {pipeline_mode = #tpu.pipeline_mode<synchronous>, transform_indices = @transform_3, window_bounds = array<i64: 3, 2, 1, 16>}, {pipeline_mode = #tpu.pipeline_mode<synchronous>, transform_indices = @transform_4, window_bounds = array<i64: 2, 16, 32>}, {pipeline_mode = #tpu.pipeline_mode<synchronous>, transform_indices = @transform_5, window_bounds = array<i64: 1, 32>}, {pipeline_mode = #tpu.pipeline_mode<synchronous>, transform_indices = @transform_6, window_bounds = array<i64: 1, 32>}, {pipeline_mode = #tpu.pipeline_mode<synchronous>, transform_indices = @transform_7, window_bounds = array<i64: 1, 32>}, {pipeline_mode = #tpu.pipeline_mode<synchronous>, transform_indices = @transform_8, window_bounds = array<i64: 1, 32>}, {pipeline_mode = #tpu.pipeline_mode<synchronous>, transform_indices = @transform_9, window_bounds = array<i64: 1, 32>}, {pipeline_mode = #tpu.pipeline_mode<synchronous>, transform_indices = @transform_10, window_bounds = array<i64: 32, 128>}, {pipeline_mode = #tpu.pipeline_mode<synchronous>, transform_indices = @transform_11, window_bounds = array<i64: 1, 128>}, {pipeline_mode = #tpu.pipeline_mode<synchronous>, transform_indices = @transform_12, window_bounds = array<i64: 128, 32>}, {pipeline_mode = #tpu.pipeline_mode<synchronous>, transform_indices = @transform_13, window_bounds = array<i64: 1, 32>}, {transform_indices = @transform_14, window_bounds = array<i64: 1, 4, 16, 32>}]} {
    %c0 = arith.constant 0 : index
    %c0_0 = arith.constant 0 : index
    %c0_1 = arith.constant 0 : index
    %c0_2 = arith.constant 0 : index
    %0 = vector.load %arg1[%c0, %c0_0, %c0_1, %c0_2] : memref<1x4x16x32xf32, #tpu.memory_space<vmem>>, vector<1x4x16x32xf32>
    %1 = vector.shape_cast %0 : vector<1x4x16x32xf32> to vector<4x16x32xf32>
    %2 = vector.shape_cast %1 : vector<4x16x32xf32> to vector<64x32xf32>
    %c0_3 = arith.constant 0 : index
    %c0_4 = arith.constant 0 : index
    %3 = vector.load %arg7[%c0_3, %c0_4] : memref<1x32xf32, #tpu.memory_space<vmem>>, vector<1x32xf32>
    %c0_5 = arith.constant 0 : index
    %c0_6 = arith.constant 0 : index
    %4 = vector.load %arg8[%c0_5, %c0_6] : memref<1x32xf32, #tpu.memory_space<vmem>>, vector<1x32xf32>
    %cst = arith.constant dense<0.000000e+00> : vector<64xf32>
    %5 = vector.multi_reduction <add>, %2, %cst [1] : vector<64x32xf32> to vector<64xf32>
    %6 = vector.shape_cast %5 : vector<64xf32> to vector<64x1xf32>
    %cst_7 = arith.constant 3.200000e+01 : f32
    %7 = vector.broadcast %cst_7 : f32 to vector<64x1xf32>
    %8 = arith.divf %6, %7 : vector<64x1xf32>
    %9 = vector.broadcast %8 : vector<64x1xf32> to vector<64x32xf32>
    %10 = arith.subf %2, %9 : vector<64x32xf32>
    %11 = vector.broadcast %8 : vector<64x1xf32> to vector<64x32xf32>
    %12 = arith.subf %2, %11 : vector<64x32xf32>
    %13 = arith.mulf %10, %12 : vector<64x32xf32>
    %cst_8 = arith.constant dense<0.000000e+00> : vector<64xf32>
    %14 = vector.multi_reduction <add>, %13, %cst_8 [1] : vector<64x32xf32> to vector<64xf32>
    %15 = vector.shape_cast %14 : vector<64xf32> to vector<64x1xf32>
    %cst_9 = arith.constant 3.200000e+01 : f32
    %16 = vector.broadcast %cst_9 : f32 to vector<64x1xf32>
    %17 = arith.divf %15, %16 : vector<64x1xf32>
    %18 = vector.broadcast %8 : vector<64x1xf32> to vector<64x32xf32>
    %19 = arith.subf %2, %18 : vector<64x32xf32>
    %cst_10 = arith.constant 9.99999974E-6 : f32
    %20 = vector.broadcast %cst_10 : f32 to vector<64x1xf32>
    %21 = arith.addf %17, %20 : vector<64x1xf32>
    %22 = math.rsqrt %21 : vector<64x1xf32>
    %23 = vector.broadcast %22 : vector<64x1xf32> to vector<64x32xf32>
    %24 = arith.mulf %19, %23 : vector<64x32xf32>
    %25 = vector.broadcast %3 : vector<1x32xf32> to vector<64x32xf32>
    %26 = arith.mulf %24, %25 : vector<64x32xf32>
    %27 = vector.broadcast %4 : vector<1x32xf32> to vector<64x32xf32>
    %28 = arith.addf %26, %27 : vector<64x32xf32>
    %29 = arith.truncf %28 : vector<64x32xf32> to vector<64x32xbf16>
    %c0_11 = arith.constant 0 : index
    %c0_12 = arith.constant 0 : index
    %c0_13 = arith.constant 0 : index
    %c0_14 = arith.constant 0 : index
    %30 = vector.load %arg3[%c0_11, %c0_12, %c0_13, %c0_14] : memref<3x2x32x16xbf16, #tpu.memory_space<vmem>>, vector<3x2x32x16xbf16>
    %c0_15 = arith.constant 0 : index
    %c0_16 = arith.constant 0 : index
    %c0_17 = arith.constant 0 : index
    %c0_18 = arith.constant 0 : index
    %31 = vector.load %arg4[%c0_15, %c0_16, %c0_17, %c0_18] : memref<3x2x1x16xf32, #tpu.memory_space<vmem>>, vector<3x2x1x16xf32>
    %c0_19 = arith.constant 0 : index
    %c0_20 = arith.constant 0 : index
    %c0_21 = arith.constant 0 : index
    %32 = vector.load %arg5[%c0_19, %c0_20, %c0_21] : memref<2x16x32xbf16, #tpu.memory_space<vmem>>, vector<2x16x32xbf16>
    %c0_22 = arith.constant 0 : index
    %c0_23 = arith.constant 0 : index
    %c0_24 = arith.constant 0 : index
    %c0_25 = arith.constant 0 : index
    %33 = vector.load %arg2[%c0_22, %c0_23, %c0_24, %c0_25] : memref<4x2x16x16xf32, #tpu.memory_space<vmem>>, vector<4x2x16x16xf32>
    %cst_26 = arith.constant 0.000000e+00 : f32
    %34 = vector.broadcast %cst_26 : f32 to vector<64x32xf32>
    %35 = vector.extract_strided_slice %30 {offsets = [0, 0, 0, 0], sizes = [1, 1, 32, 16], strides = [1, 1, 1, 1]} : vector<3x2x32x16xbf16> to vector<1x1x32x16xbf16>
    %36 = vector.shape_cast %35 : vector<1x1x32x16xbf16> to vector<32x16xbf16>
    %cst_27 = arith.constant dense<0.000000e+00> : vector<64x16xf32>
    %37 = tpu.matmul %29, %36, %cst_27 {dimension_numbers = #tpu.dot_dimension_numbers<[1], [0], [0], [1], [0, 0, 1, 1], [], []>} : vector<64x32xbf16>, vector<32x16xbf16>, vector<64x16xf32> -> vector<64x16xf32>
    %38 = vector.extract_strided_slice %31 {offsets = [0, 0, 0, 0], sizes = [1, 1, 1, 16], strides = [1, 1, 1, 1]} : vector<3x2x1x16xf32> to vector<1x1x1x16xf32>
    %39 = vector.shape_cast %38 : vector<1x1x1x16xf32> to vector<1x16xf32>
    %40 = vector.broadcast %39 : vector<1x16xf32> to vector<64x16xf32>
    %41 = arith.addf %37, %40 : vector<64x16xf32>
    %42 = vector.extract_strided_slice %30 {offsets = [1, 0, 0, 0], sizes = [1, 1, 32, 16], strides = [1, 1, 1, 1]} : vector<3x2x32x16xbf16> to vector<1x1x32x16xbf16>
    %43 = vector.shape_cast %42 : vector<1x1x32x16xbf16> to vector<32x16xbf16>
    %cst_28 = arith.constant dense<0.000000e+00> : vector<64x16xf32>
    %44 = tpu.matmul %29, %43, %cst_28 {dimension_numbers = #tpu.dot_dimension_numbers<[1], [0], [0], [1], [0, 0, 1, 1], [], []>} : vector<64x32xbf16>, vector<32x16xbf16>, vector<64x16xf32> -> vector<64x16xf32>
    %45 = vector.extract_strided_slice %31 {offsets = [1, 0, 0, 0], sizes = [1, 1, 1, 16], strides = [1, 1, 1, 1]} : vector<3x2x1x16xf32> to vector<1x1x1x16xf32>
    %46 = vector.shape_cast %45 : vector<1x1x1x16xf32> to vector<1x16xf32>
    %47 = vector.broadcast %46 : vector<1x16xf32> to vector<64x16xf32>
    %48 = arith.addf %44, %47 : vector<64x16xf32>
    %49 = vector.extract_strided_slice %30 {offsets = [2, 0, 0, 0], sizes = [1, 1, 32, 16], strides = [1, 1, 1, 1]} : vector<3x2x32x16xbf16> to vector<1x1x32x16xbf16>
    %50 = vector.shape_cast %49 : vector<1x1x32x16xbf16> to vector<32x16xbf16>
    %cst_29 = arith.constant dense<0.000000e+00> : vector<64x16xf32>
    %51 = tpu.matmul %29, %50, %cst_29 {dimension_numbers = #tpu.dot_dimension_numbers<[1], [0], [0], [1], [0, 0, 1, 1], [], []>} : vector<64x32xbf16>, vector<32x16xbf16>, vector<64x16xf32> -> vector<64x16xf32>
    %52 = vector.extract_strided_slice %31 {offsets = [2, 0, 0, 0], sizes = [1, 1, 1, 16], strides = [1, 1, 1, 1]} : vector<3x2x1x16xf32> to vector<1x1x1x16xf32>
    %53 = vector.shape_cast %52 : vector<1x1x1x16xf32> to vector<1x16xf32>
    %54 = vector.broadcast %53 : vector<1x16xf32> to vector<64x16xf32>
    %55 = arith.addf %51, %54 : vector<64x16xf32>
    %cst_30 = arith.constant 2.500000e-01 : f32
    %56 = vector.broadcast %cst_30 : f32 to vector<64x16xf32>
    %57 = arith.mulf %41, %56 : vector<64x16xf32>
    %58 = vector.shape_cast %57 : vector<64x16xf32> to vector<4x16x16xf32>
    %59 = arith.truncf %58 : vector<4x16x16xf32> to vector<4x16x16xbf16>
    %60 = vector.shape_cast %48 : vector<64x16xf32> to vector<4x16x16xf32>
    %61 = arith.truncf %60 : vector<4x16x16xf32> to vector<4x16x16xbf16>
    %62 = vector.shape_cast %55 : vector<64x16xf32> to vector<4x16x16xf32>
    %63 = arith.truncf %62 : vector<4x16x16xf32> to vector<4x16x16xbf16>
    "tpu.trace_start"() <{level = 10 : i32, message = "wqd,wkd->wqk"}> : () -> ()
    %cst_31 = arith.constant dense<0.000000e+00> : vector<4x16x16xf32>
    %64 = tpu.matmul %59, %61, %cst_31 {dimension_numbers = #tpu.dot_dimension_numbers<[2], [2], [1], [1], [0, 0, 0, 1, 1, 1], [0], [0]>} : vector<4x16x16xbf16>, vector<4x16x16xbf16>, vector<4x16x16xf32> -> vector<4x16x16xf32>
    "tpu.trace_stop"() : () -> ()
    %65 = vector.extract_strided_slice %33 {offsets = [0, 0, 0, 0], sizes = [4, 1, 16, 16], strides = [1, 1, 1, 1]} : vector<4x2x16x16xf32> to vector<4x1x16x16xf32>
    %66 = vector.shape_cast %65 : vector<4x1x16x16xf32> to vector<4x16x16xf32>
    %67 = arith.addf %64, %66 : vector<4x16x16xf32>
    %cst_32 = arith.constant dense<0xFF800000> : vector<4x16xf32>
    %68 = vector.multi_reduction <maximumf>, %67, %cst_32 [2] : vector<4x16x16xf32> to vector<4x16xf32>
    %69 = vector.shape_cast %68 : vector<4x16xf32> to vector<4x16x1xf32>
    %70 = vector.broadcast %69 : vector<4x16x1xf32> to vector<4x16x16xf32>
    %71 = arith.subf %67, %70 : vector<4x16x16xf32>
    %72 = math.exp %71 : vector<4x16x16xf32>
    %cst_33 = arith.constant dense<0.000000e+00> : vector<4x16xf32>
    %73 = vector.multi_reduction <add>, %72, %cst_33 [2] : vector<4x16x16xf32> to vector<4x16xf32>
    %74 = vector.shape_cast %73 : vector<4x16xf32> to vector<4x16x1xf32>
    %75 = vector.broadcast %74 : vector<4x16x1xf32> to vector<4x16x16xf32>
    %76 = arith.divf %72, %75 : vector<4x16x16xf32>
    %77 = arith.truncf %76 : vector<4x16x16xf32> to vector<4x16x16xbf16>
    "tpu.trace_start"() <{level = 10 : i32, message = "wqk,wkd->wqd"}> : () -> ()
    %cst_34 = arith.constant dense<0.000000e+00> : vector<4x16x16xf32>
    %78 = tpu.matmul %77, %63, %cst_34 {dimension_numbers = #tpu.dot_dimension_numbers<[2], [1], [1], [2], [0, 0, 0, 1, 1, 2], [0], [0]>} : vector<4x16x16xbf16>, vector<4x16x16xbf16>, vector<4x16x16xf32> -> vector<4x16x16xf32>
    "tpu.trace_stop"() : () -> ()
    %79 = vector.shape_cast %78 : vector<4x16x16xf32> to vector<64x16xf32>
    %80 = arith.truncf %79 : vector<64x16xf32> to vector<64x16xbf16>
    %81 = vector.extract_strided_slice %32 {offsets = [0, 0, 0], sizes = [1, 16, 32], strides = [1, 1, 1]} : vector<2x16x32xbf16> to vector<1x16x32xbf16>
    %82 = vector.shape_cast %81 : vector<1x16x32xbf16> to vector<16x32xbf16>
    %cst_35 = arith.constant dense<0.000000e+00> : vector<64x32xf32>
    %83 = tpu.matmul %80, %82, %cst_35 {dimension_numbers = #tpu.dot_dimension_numbers<[1], [0], [0], [1], [0, 0, 1, 1], [], []>} : vector<64x16xbf16>, vector<16x32xbf16>, vector<64x32xf32> -> vector<64x32xf32>
    %84 = arith.addf %34, %83 : vector<64x32xf32>
    %85 = vector.extract_strided_slice %30 {offsets = [0, 1, 0, 0], sizes = [1, 1, 32, 16], strides = [1, 1, 1, 1]} : vector<3x2x32x16xbf16> to vector<1x1x32x16xbf16>
    %86 = vector.shape_cast %85 : vector<1x1x32x16xbf16> to vector<32x16xbf16>
    %cst_36 = arith.constant dense<0.000000e+00> : vector<64x16xf32>
    %87 = tpu.matmul %29, %86, %cst_36 {dimension_numbers = #tpu.dot_dimension_numbers<[1], [0], [0], [1], [0, 0, 1, 1], [], []>} : vector<64x32xbf16>, vector<32x16xbf16>, vector<64x16xf32> -> vector<64x16xf32>
    %88 = vector.extract_strided_slice %31 {offsets = [0, 1, 0, 0], sizes = [1, 1, 1, 16], strides = [1, 1, 1, 1]} : vector<3x2x1x16xf32> to vector<1x1x1x16xf32>
    %89 = vector.shape_cast %88 : vector<1x1x1x16xf32> to vector<1x16xf32>
    %90 = vector.broadcast %89 : vector<1x16xf32> to vector<64x16xf32>
    %91 = arith.addf %87, %90 : vector<64x16xf32>
    %92 = vector.extract_strided_slice %30 {offsets = [1, 1, 0, 0], sizes = [1, 1, 32, 16], strides = [1, 1, 1, 1]} : vector<3x2x32x16xbf16> to vector<1x1x32x16xbf16>
    %93 = vector.shape_cast %92 : vector<1x1x32x16xbf16> to vector<32x16xbf16>
    %cst_37 = arith.constant dense<0.000000e+00> : vector<64x16xf32>
    %94 = tpu.matmul %29, %93, %cst_37 {dimension_numbers = #tpu.dot_dimension_numbers<[1], [0], [0], [1], [0, 0, 1, 1], [], []>} : vector<64x32xbf16>, vector<32x16xbf16>, vector<64x16xf32> -> vector<64x16xf32>
    %95 = vector.extract_strided_slice %31 {offsets = [1, 1, 0, 0], sizes = [1, 1, 1, 16], strides = [1, 1, 1, 1]} : vector<3x2x1x16xf32> to vector<1x1x1x16xf32>
    %96 = vector.shape_cast %95 : vector<1x1x1x16xf32> to vector<1x16xf32>
    %97 = vector.broadcast %96 : vector<1x16xf32> to vector<64x16xf32>
    %98 = arith.addf %94, %97 : vector<64x16xf32>
    %99 = vector.extract_strided_slice %30 {offsets = [2, 1, 0, 0], sizes = [1, 1, 32, 16], strides = [1, 1, 1, 1]} : vector<3x2x32x16xbf16> to vector<1x1x32x16xbf16>
    %100 = vector.shape_cast %99 : vector<1x1x32x16xbf16> to vector<32x16xbf16>
    %cst_38 = arith.constant dense<0.000000e+00> : vector<64x16xf32>
    %101 = tpu.matmul %29, %100, %cst_38 {dimension_numbers = #tpu.dot_dimension_numbers<[1], [0], [0], [1], [0, 0, 1, 1], [], []>} : vector<64x32xbf16>, vector<32x16xbf16>, vector<64x16xf32> -> vector<64x16xf32>
    %102 = vector.extract_strided_slice %31 {offsets = [2, 1, 0, 0], sizes = [1, 1, 1, 16], strides = [1, 1, 1, 1]} : vector<3x2x1x16xf32> to vector<1x1x1x16xf32>
    %103 = vector.shape_cast %102 : vector<1x1x1x16xf32> to vector<1x16xf32>
    %104 = vector.broadcast %103 : vector<1x16xf32> to vector<64x16xf32>
    %105 = arith.addf %101, %104 : vector<64x16xf32>
    %cst_39 = arith.constant 2.500000e-01 : f32
    %106 = vector.broadcast %cst_39 : f32 to vector<64x16xf32>
    %107 = arith.mulf %91, %106 : vector<64x16xf32>
    %108 = vector.shape_cast %107 : vector<64x16xf32> to vector<4x16x16xf32>
    %109 = arith.truncf %108 : vector<4x16x16xf32> to vector<4x16x16xbf16>
    %110 = vector.shape_cast %98 : vector<64x16xf32> to vector<4x16x16xf32>
    %111 = arith.truncf %110 : vector<4x16x16xf32> to vector<4x16x16xbf16>
    %112 = vector.shape_cast %105 : vector<64x16xf32> to vector<4x16x16xf32>
    %113 = arith.truncf %112 : vector<4x16x16xf32> to vector<4x16x16xbf16>
    "tpu.trace_start"() <{level = 10 : i32, message = "wqd,wkd->wqk"}> : () -> ()
    %cst_40 = arith.constant dense<0.000000e+00> : vector<4x16x16xf32>
    %114 = tpu.matmul %109, %111, %cst_40 {dimension_numbers = #tpu.dot_dimension_numbers<[2], [2], [1], [1], [0, 0, 0, 1, 1, 1], [0], [0]>} : vector<4x16x16xbf16>, vector<4x16x16xbf16>, vector<4x16x16xf32> -> vector<4x16x16xf32>
    "tpu.trace_stop"() : () -> ()
    %115 = vector.extract_strided_slice %33 {offsets = [0, 1, 0, 0], sizes = [4, 1, 16, 16], strides = [1, 1, 1, 1]} : vector<4x2x16x16xf32> to vector<4x1x16x16xf32>
    %116 = vector.shape_cast %115 : vector<4x1x16x16xf32> to vector<4x16x16xf32>
    %117 = arith.addf %114, %116 : vector<4x16x16xf32>
    %cst_41 = arith.constant dense<0xFF800000> : vector<4x16xf32>
    %118 = vector.multi_reduction <maximumf>, %117, %cst_41 [2] : vector<4x16x16xf32> to vector<4x16xf32>
    %119 = vector.shape_cast %118 : vector<4x16xf32> to vector<4x16x1xf32>
    %120 = vector.broadcast %119 : vector<4x16x1xf32> to vector<4x16x16xf32>
    %121 = arith.subf %117, %120 : vector<4x16x16xf32>
    %122 = math.exp %121 : vector<4x16x16xf32>
    %cst_42 = arith.constant dense<0.000000e+00> : vector<4x16xf32>
    %123 = vector.multi_reduction <add>, %122, %cst_42 [2] : vector<4x16x16xf32> to vector<4x16xf32>
    %124 = vector.shape_cast %123 : vector<4x16xf32> to vector<4x16x1xf32>
    %125 = vector.broadcast %124 : vector<4x16x1xf32> to vector<4x16x16xf32>
    %126 = arith.divf %122, %125 : vector<4x16x16xf32>
    %127 = arith.truncf %126 : vector<4x16x16xf32> to vector<4x16x16xbf16>
    "tpu.trace_start"() <{level = 10 : i32, message = "wqk,wkd->wqd"}> : () -> ()
    %cst_43 = arith.constant dense<0.000000e+00> : vector<4x16x16xf32>
    %128 = tpu.matmul %127, %113, %cst_43 {dimension_numbers = #tpu.dot_dimension_numbers<[2], [1], [1], [2], [0, 0, 0, 1, 1, 2], [0], [0]>} : vector<4x16x16xbf16>, vector<4x16x16xbf16>, vector<4x16x16xf32> -> vector<4x16x16xf32>
    "tpu.trace_stop"() : () -> ()
    %129 = vector.shape_cast %128 : vector<4x16x16xf32> to vector<64x16xf32>
    %130 = arith.truncf %129 : vector<64x16xf32> to vector<64x16xbf16>
    %131 = vector.extract_strided_slice %32 {offsets = [1, 0, 0], sizes = [1, 16, 32], strides = [1, 1, 1]} : vector<2x16x32xbf16> to vector<1x16x32xbf16>
    %132 = vector.shape_cast %131 : vector<1x16x32xbf16> to vector<16x32xbf16>
    %cst_44 = arith.constant dense<0.000000e+00> : vector<64x32xf32>
    %133 = tpu.matmul %130, %132, %cst_44 {dimension_numbers = #tpu.dot_dimension_numbers<[1], [0], [0], [1], [0, 0, 1, 1], [], []>} : vector<64x16xbf16>, vector<16x32xbf16>, vector<64x32xf32> -> vector<64x32xf32>
    %134 = arith.addf %84, %133 : vector<64x32xf32>
    %135 = arith.addf %2, %134 : vector<64x32xf32>
    %c0_45 = arith.constant 0 : index
    %c0_46 = arith.constant 0 : index
    %136 = vector.load %arg6[%c0_45, %c0_46] : memref<1x32xf32, #tpu.memory_space<vmem>>, vector<1x32xf32>
    %137 = vector.broadcast %136 : vector<1x32xf32> to vector<64x32xf32>
    %138 = arith.addf %135, %137 : vector<64x32xf32>
    %c0_47 = arith.constant 0 : index
    %c0_48 = arith.constant 0 : index
    %139 = vector.load %arg9[%c0_47, %c0_48] : memref<1x32xf32, #tpu.memory_space<vmem>>, vector<1x32xf32>
    %c0_49 = arith.constant 0 : index
    %c0_50 = arith.constant 0 : index
    %140 = vector.load %arg10[%c0_49, %c0_50] : memref<1x32xf32, #tpu.memory_space<vmem>>, vector<1x32xf32>
    %cst_51 = arith.constant dense<0.000000e+00> : vector<64xf32>
    %141 = vector.multi_reduction <add>, %138, %cst_51 [1] : vector<64x32xf32> to vector<64xf32>
    %142 = vector.shape_cast %141 : vector<64xf32> to vector<64x1xf32>
    %cst_52 = arith.constant 3.200000e+01 : f32
    %143 = vector.broadcast %cst_52 : f32 to vector<64x1xf32>
    %144 = arith.divf %142, %143 : vector<64x1xf32>
    %145 = vector.broadcast %144 : vector<64x1xf32> to vector<64x32xf32>
    %146 = arith.subf %138, %145 : vector<64x32xf32>
    %147 = vector.broadcast %144 : vector<64x1xf32> to vector<64x32xf32>
    %148 = arith.subf %138, %147 : vector<64x32xf32>
    %149 = arith.mulf %146, %148 : vector<64x32xf32>
    %cst_53 = arith.constant dense<0.000000e+00> : vector<64xf32>
    %150 = vector.multi_reduction <add>, %149, %cst_53 [1] : vector<64x32xf32> to vector<64xf32>
    %151 = vector.shape_cast %150 : vector<64xf32> to vector<64x1xf32>
    %cst_54 = arith.constant 3.200000e+01 : f32
    %152 = vector.broadcast %cst_54 : f32 to vector<64x1xf32>
    %153 = arith.divf %151, %152 : vector<64x1xf32>
    %154 = vector.broadcast %144 : vector<64x1xf32> to vector<64x32xf32>
    %155 = arith.subf %138, %154 : vector<64x32xf32>
    %cst_55 = arith.constant 9.99999974E-6 : f32
    %156 = vector.broadcast %cst_55 : f32 to vector<64x1xf32>
    %157 = arith.addf %153, %156 : vector<64x1xf32>
    %158 = math.rsqrt %157 : vector<64x1xf32>
    %159 = vector.broadcast %158 : vector<64x1xf32> to vector<64x32xf32>
    %160 = arith.mulf %155, %159 : vector<64x32xf32>
    %161 = vector.broadcast %139 : vector<1x32xf32> to vector<64x32xf32>
    %162 = arith.mulf %160, %161 : vector<64x32xf32>
    %163 = vector.broadcast %140 : vector<1x32xf32> to vector<64x32xf32>
    %164 = arith.addf %162, %163 : vector<64x32xf32>
    %165 = arith.truncf %164 : vector<64x32xf32> to vector<64x32xbf16>
    %c0_56 = arith.constant 0 : index
    %c0_57 = arith.constant 0 : index
    %166 = vector.load %arg11[%c0_56, %c0_57] : memref<32x128xbf16, #tpu.memory_space<vmem>>, vector<32x128xbf16>
    %cst_58 = arith.constant dense<0.000000e+00> : vector<64x128xf32>
    %167 = tpu.matmul %165, %166, %cst_58 {dimension_numbers = #tpu.dot_dimension_numbers<[1], [0], [0], [1], [0, 0, 1, 1], [], []>} : vector<64x32xbf16>, vector<32x128xbf16>, vector<64x128xf32> -> vector<64x128xf32>
    %c0_59 = arith.constant 0 : index
    %c0_60 = arith.constant 0 : index
    %168 = vector.load %arg12[%c0_59, %c0_60] : memref<1x128xf32, #tpu.memory_space<vmem>>, vector<1x128xf32>
    %169 = vector.broadcast %168 : vector<1x128xf32> to vector<64x128xf32>
    %170 = arith.addf %167, %169 : vector<64x128xf32>
    %cst_61 = arith.constant 5.000000e-01 : f32
    %171 = vector.broadcast %cst_61 : f32 to vector<64x128xf32>
    %172 = arith.mulf %171, %170 : vector<64x128xf32>
    %cst_62 = arith.constant 4.471500e-02 : f32
    %173 = vector.broadcast %cst_62 : f32 to vector<64x128xf32>
    %174 = arith.mulf %173, %170 : vector<64x128xf32>
    %175 = arith.mulf %174, %170 : vector<64x128xf32>
    %176 = arith.mulf %175, %170 : vector<64x128xf32>
    %177 = arith.addf %170, %176 : vector<64x128xf32>
    %cst_63 = arith.constant 0.797884583 : f32
    %178 = vector.broadcast %cst_63 : f32 to vector<64x128xf32>
    %179 = arith.mulf %178, %177 : vector<64x128xf32>
    %180 = math.tanh %179 : vector<64x128xf32>
    %cst_64 = arith.constant 1.000000e+00 : f32
    %181 = vector.broadcast %cst_64 : f32 to vector<64x128xf32>
    %182 = arith.addf %181, %180 : vector<64x128xf32>
    %183 = arith.mulf %172, %182 : vector<64x128xf32>
    %184 = arith.truncf %183 : vector<64x128xf32> to vector<64x128xbf16>
    %c0_65 = arith.constant 0 : index
    %c0_66 = arith.constant 0 : index
    %185 = vector.load %arg13[%c0_65, %c0_66] : memref<128x32xbf16, #tpu.memory_space<vmem>>, vector<128x32xbf16>
    %cst_67 = arith.constant dense<0.000000e+00> : vector<64x32xf32>
    %186 = tpu.matmul %184, %185, %cst_67 {dimension_numbers = #tpu.dot_dimension_numbers<[1], [0], [0], [1], [0, 0, 1, 1], [], []>} : vector<64x128xbf16>, vector<128x32xbf16>, vector<64x32xf32> -> vector<64x32xf32>
    %c0_68 = arith.constant 0 : index
    %c0_69 = arith.constant 0 : index
    %187 = vector.load %arg14[%c0_68, %c0_69] : memref<1x32xf32, #tpu.memory_space<vmem>>, vector<1x32xf32>
    %188 = vector.broadcast %187 : vector<1x32xf32> to vector<64x32xf32>
    %189 = arith.addf %186, %188 : vector<64x32xf32>
    %190 = arith.addf %138, %189 : vector<64x32xf32>
    %191 = vector.shape_cast %190 : vector<64x32xf32> to vector<4x16x32xf32>
    %c0_70 = arith.constant 0 : index
    %c0_71 = arith.constant 0 : index
    %c0_72 = arith.constant 0 : index
    %c0_73 = arith.constant 0 : index
    %192 = vector.load %arg15[%c0_70, %c0_71, %c0_72, %c0_73] : memref<1x4x16x32xf32, #tpu.memory_space<vmem>>, vector<1x4x16x32xf32>
    %193 = vector.shape_cast %192 : vector<1x4x16x32xf32> to vector<4x16x32xf32>
    %194 = vector.shape_cast %191 : vector<4x16x32xf32> to vector<1x4x16x32xf32>
    tpu.vector_store %arg15[%c0_70, %c0_71, %c0_72, %c0_73], %194 {strides = array<i32>} : memref<1x4x16x32xf32, #tpu.memory_space<vmem>>, vector<1x4x16x32xf32>,
    return
  }
  func.func @transform_0(%arg0: i32) -> (i32, i32, i32, i32) {
    %c0_i32 = arith.constant 0 : i32
    %c0_i32_0 = arith.constant 0 : i32
    %c0_i32_1 = arith.constant 0 : i32
    %c0_i32_2 = arith.constant 0 : i32
    return %arg0, %c0_i32, %c0_i32_0, %c0_i32_1 : i32, i32, i32, i32
  }
  func.func @transform_1(%arg0: i32) -> (i32, i32, i32, i32) {
    %c0_i32 = arith.constant 0 : i32
    %c0_i32_0 = arith.constant 0 : i32
    %c0_i32_1 = arith.constant 0 : i32
    %c0_i32_2 = arith.constant 0 : i32
    %c0_i32_3 = arith.constant 0 : i32
    return %c0_i32, %c0_i32_0, %c0_i32_1, %c0_i32_2 : i32, i32, i32, i32
  }
  func.func @transform_2(%arg0: i32) -> (i32, i32, i32, i32) {
    %c0_i32 = arith.constant 0 : i32
    %c0_i32_0 = arith.constant 0 : i32
    %c0_i32_1 = arith.constant 0 : i32
    %c0_i32_2 = arith.constant 0 : i32
    %c0_i32_3 = arith.constant 0 : i32
    return %c0_i32, %c0_i32_0, %c0_i32_1, %c0_i32_2 : i32, i32, i32, i32
  }
  func.func @transform_3(%arg0: i32) -> (i32, i32, i32, i32) {
    %c0_i32 = arith.constant 0 : i32
    %c0_i32_0 = arith.constant 0 : i32
    %c0_i32_1 = arith.constant 0 : i32
    %c0_i32_2 = arith.constant 0 : i32
    %c0_i32_3 = arith.constant 0 : i32
    return %c0_i32, %c0_i32_0, %c0_i32_1, %c0_i32_2 : i32, i32, i32, i32
  }
  func.func @transform_4(%arg0: i32) -> (i32, i32, i32) {
    %c0_i32 = arith.constant 0 : i32
    %c0_i32_0 = arith.constant 0 : i32
    %c0_i32_1 = arith.constant 0 : i32
    %c0_i32_2 = arith.constant 0 : i32
    return %c0_i32, %c0_i32_0, %c0_i32_1 : i32, i32, i32
  }
  func.func @transform_5(%arg0: i32) -> (i32, i32) {
    %c0_i32 = arith.constant 0 : i32
    %c0_i32_0 = arith.constant 0 : i32
    %c0_i32_1 = arith.constant 0 : i32
    return %c0_i32, %c0_i32_0 : i32, i32
  }
  func.func @transform_6(%arg0: i32) -> (i32, i32) {
    %c0_i32 = arith.constant 0 : i32
    %c0_i32_0 = arith.constant 0 : i32
    %c0_i32_1 = arith.constant 0 : i32
    return %c0_i32, %c0_i32_0 : i32, i32
  }
  func.func @transform_7(%arg0: i32) -> (i32, i32) {
    %c0_i32 = arith.constant 0 : i32
    %c0_i32_0 = arith.constant 0 : i32
    %c0_i32_1 = arith.constant 0 : i32
    return %c0_i32, %c0_i32_0 : i32, i32
  }
  func.func @transform_8(%arg0: i32) -> (i32, i32) {
    %c0_i32 = arith.constant 0 : i32
    %c0_i32_0 = arith.constant 0 : i32
    %c0_i32_1 = arith.constant 0 : i32
    return %c0_i32, %c0_i32_0 : i32, i32
  }
  func.func @transform_9(%arg0: i32) -> (i32, i32) {
    %c0_i32 = arith.constant 0 : i32
    %c0_i32_0 = arith.constant 0 : i32
    %c0_i32_1 = arith.constant 0 : i32
    return %c0_i32, %c0_i32_0 : i32, i32
  }
  func.func @transform_10(%arg0: i32) -> (i32, i32) {
    %c0_i32 = arith.constant 0 : i32
    %c0_i32_0 = arith.constant 0 : i32
    %c0_i32_1 = arith.constant 0 : i32
    return %c0_i32, %c0_i32_0 : i32, i32
  }
  func.func @transform_11(%arg0: i32) -> (i32, i32) {
    %c0_i32 = arith.constant 0 : i32
    %c0_i32_0 = arith.constant 0 : i32
    %c0_i32_1 = arith.constant 0 : i32
    return %c0_i32, %c0_i32_0 : i32, i32
  }
  func.func @transform_12(%arg0: i32) -> (i32, i32) {
    %c0_i32 = arith.constant 0 : i32
    %c0_i32_0 = arith.constant 0 : i32
    %c0_i32_1 = arith.constant 0 : i32
    return %c0_i32, %c0_i32_0 : i32, i32
  }
  func.func @transform_13(%arg0: i32) -> (i32, i32) {
    %c0_i32 = arith.constant 0 : i32
    %c0_i32_0 = arith.constant 0 : i32
    %c0_i32_1 = arith.constant 0 : i32
    return %c0_i32, %c0_i32_0 : i32, i32
  }
  func.func @transform_14(%arg0: i32) -> (i32, i32, i32, i32) {
    %c0_i32 = arith.constant 0 : i32
    %c0_i32_0 = arith.constant 0 : i32
    %c0_i32_1 = arith.constant 0 : i32
    %c0_i32_2 = arith.constant 0 : i32
    return %arg0, %c0_i32, %c0_i32_0, %c0_i32_1 : i32, i32, i32, i32
  }
}

module attributes {stable_mosaic.version = 11 : i64} {
  func.func @_patch_merge_kernel(%arg0: i32, %arg1: memref<32x128xf32, #tpu.memory_space<vmem>>, %arg2: memref<1x128xf32, #tpu.memory_space<vmem>>, %arg3: memref<1x128xf32, #tpu.memory_space<vmem>>, %arg4: memref<128x64xbf16, #tpu.memory_space<vmem>>, %arg5: memref<32x64xf32, #tpu.memory_space<vmem>>) attributes {dimension_semantics = [#tpu.dimension_semantics<arbitrary>], iteration_bounds = array<i64: 1>, scalar_prefetch = 0 : i64, scratch_operands = 0 : i64, tpu.core_type = #tpu.core_type<tc>, window_params = [{pipeline_mode = #tpu.pipeline_mode<synchronous>, transform_indices = @transform_0, window_bounds = array<i64: 32, 128>}, {pipeline_mode = #tpu.pipeline_mode<synchronous>, transform_indices = @transform_1, window_bounds = array<i64: 1, 128>}, {pipeline_mode = #tpu.pipeline_mode<synchronous>, transform_indices = @transform_2, window_bounds = array<i64: 1, 128>}, {pipeline_mode = #tpu.pipeline_mode<synchronous>, transform_indices = @transform_3, window_bounds = array<i64: 128, 64>}, {pipeline_mode = #tpu.pipeline_mode<synchronous>, transform_indices = @transform_4, window_bounds = array<i64: 32, 64>}]} {
    %c0 = arith.constant 0 : index
    %c0_0 = arith.constant 0 : index
    %0 = vector.load %arg1[%c0, %c0_0] : memref<32x128xf32, #tpu.memory_space<vmem>>, vector<32x128xf32>
    %c0_1 = arith.constant 0 : index
    %c0_2 = arith.constant 0 : index
    %1 = vector.load %arg2[%c0_1, %c0_2] : memref<1x128xf32, #tpu.memory_space<vmem>>, vector<1x128xf32>
    %c0_3 = arith.constant 0 : index
    %c0_4 = arith.constant 0 : index
    %2 = vector.load %arg3[%c0_3, %c0_4] : memref<1x128xf32, #tpu.memory_space<vmem>>, vector<1x128xf32>
    %cst = arith.constant dense<0.000000e+00> : vector<32xf32>
    %3 = vector.multi_reduction <add>, %0, %cst [1] : vector<32x128xf32> to vector<32xf32>
    %4 = vector.shape_cast %3 : vector<32xf32> to vector<32x1xf32>
    %cst_5 = arith.constant 1.280000e+02 : f32
    %5 = vector.broadcast %cst_5 : f32 to vector<32x1xf32>
    %6 = arith.divf %4, %5 : vector<32x1xf32>
    %7 = vector.broadcast %6 : vector<32x1xf32> to vector<32x128xf32>
    %8 = arith.subf %0, %7 : vector<32x128xf32>
    %9 = vector.broadcast %6 : vector<32x1xf32> to vector<32x128xf32>
    %10 = arith.subf %0, %9 : vector<32x128xf32>
    %11 = arith.mulf %8, %10 : vector<32x128xf32>
    %cst_6 = arith.constant dense<0.000000e+00> : vector<32xf32>
    %12 = vector.multi_reduction <add>, %11, %cst_6 [1] : vector<32x128xf32> to vector<32xf32>
    %13 = vector.shape_cast %12 : vector<32xf32> to vector<32x1xf32>
    %cst_7 = arith.constant 1.280000e+02 : f32
    %14 = vector.broadcast %cst_7 : f32 to vector<32x1xf32>
    %15 = arith.divf %13, %14 : vector<32x1xf32>
    %16 = vector.broadcast %6 : vector<32x1xf32> to vector<32x128xf32>
    %17 = arith.subf %0, %16 : vector<32x128xf32>
    %cst_8 = arith.constant 9.99999974E-6 : f32
    %18 = vector.broadcast %cst_8 : f32 to vector<32x1xf32>
    %19 = arith.addf %15, %18 : vector<32x1xf32>
    %20 = math.rsqrt %19 : vector<32x1xf32>
    %21 = vector.broadcast %20 : vector<32x1xf32> to vector<32x128xf32>
    %22 = arith.mulf %17, %21 : vector<32x128xf32>
    %23 = vector.broadcast %1 : vector<1x128xf32> to vector<32x128xf32>
    %24 = arith.mulf %22, %23 : vector<32x128xf32>
    %25 = vector.broadcast %2 : vector<1x128xf32> to vector<32x128xf32>
    %26 = arith.addf %24, %25 : vector<32x128xf32>
    %27 = arith.truncf %26 : vector<32x128xf32> to vector<32x128xbf16>
    %c0_9 = arith.constant 0 : index
    %c0_10 = arith.constant 0 : index
    %28 = vector.load %arg4[%c0_9, %c0_10] : memref<128x64xbf16, #tpu.memory_space<vmem>>, vector<128x64xbf16>
    %cst_11 = arith.constant dense<0.000000e+00> : vector<32x64xf32>
    %29 = tpu.matmul %27, %28, %cst_11 {dimension_numbers = #tpu.dot_dimension_numbers<[1], [0], [0], [1], [0, 0, 1, 1], [], []>} : vector<32x128xbf16>, vector<128x64xbf16>, vector<32x64xf32> -> vector<32x64xf32>
    %c0_12 = arith.constant 0 : index
    %c0_13 = arith.constant 0 : index
    %30 = vector.load %arg5[%c0_12, %c0_13] : memref<32x64xf32, #tpu.memory_space<vmem>>, vector<32x64xf32>
    tpu.vector_store %arg5[%c0_12, %c0_13], %29 {strides = array<i32>} : memref<32x64xf32, #tpu.memory_space<vmem>>, vector<32x64xf32>,
    return
  }
  func.func @transform_0(%arg0: i32) -> (i32, i32) {
    %c0_i32 = arith.constant 0 : i32
    %c0_i32_0 = arith.constant 0 : i32
    %c0_i32_1 = arith.constant 0 : i32
    return %c0_i32, %c0_i32_0 : i32, i32
  }
  func.func @transform_1(%arg0: i32) -> (i32, i32) {
    %c0_i32 = arith.constant 0 : i32
    %c0_i32_0 = arith.constant 0 : i32
    %c0_i32_1 = arith.constant 0 : i32
    return %c0_i32, %c0_i32_0 : i32, i32
  }
  func.func @transform_2(%arg0: i32) -> (i32, i32) {
    %c0_i32 = arith.constant 0 : i32
    %c0_i32_0 = arith.constant 0 : i32
    %c0_i32_1 = arith.constant 0 : i32
    return %c0_i32, %c0_i32_0 : i32, i32
  }
  func.func @transform_3(%arg0: i32) -> (i32, i32) {
    %c0_i32 = arith.constant 0 : i32
    %c0_i32_0 = arith.constant 0 : i32
    %c0_i32_1 = arith.constant 0 : i32
    return %c0_i32, %c0_i32_0 : i32, i32
  }
  func.func @transform_4(%arg0: i32) -> (i32, i32) {
    %c0_i32 = arith.constant 0 : i32
    %c0_i32_0 = arith.constant 0 : i32
    %c0_i32_1 = arith.constant 0 : i32
    return %c0_i32, %c0_i32_0 : i32, i32
  }
}

module attributes {stable_mosaic.version = 11 : i64} {
  func.func @_head_kernel(%arg0: i32, %arg1: memref<2x16x64xf32, #tpu.memory_space<vmem>>, %arg2: memref<1x64xf32, #tpu.memory_space<vmem>>, %arg3: memref<1x64xf32, #tpu.memory_space<vmem>>, %arg4: memref<64x10xbf16, #tpu.memory_space<vmem>>, %arg5: memref<1x10xf32, #tpu.memory_space<vmem>>, %arg6: memref<2x10xf32, #tpu.memory_space<vmem>>) attributes {dimension_semantics = [#tpu.dimension_semantics<arbitrary>], iteration_bounds = array<i64: 1>, scalar_prefetch = 0 : i64, scratch_operands = 0 : i64, tpu.core_type = #tpu.core_type<tc>, window_params = [{pipeline_mode = #tpu.pipeline_mode<synchronous>, transform_indices = @transform_0, window_bounds = array<i64: 2, 16, 64>}, {pipeline_mode = #tpu.pipeline_mode<synchronous>, transform_indices = @transform_1, window_bounds = array<i64: 1, 64>}, {pipeline_mode = #tpu.pipeline_mode<synchronous>, transform_indices = @transform_2, window_bounds = array<i64: 1, 64>}, {pipeline_mode = #tpu.pipeline_mode<synchronous>, transform_indices = @transform_3, window_bounds = array<i64: 64, 10>}, {pipeline_mode = #tpu.pipeline_mode<synchronous>, transform_indices = @transform_4, window_bounds = array<i64: 1, 10>}, {pipeline_mode = #tpu.pipeline_mode<synchronous>, transform_indices = @transform_5, window_bounds = array<i64: 2, 10>}]} {
    %c0 = arith.constant 0 : index
    %c0_0 = arith.constant 0 : index
    %c0_1 = arith.constant 0 : index
    %0 = vector.load %arg1[%c0, %c0_0, %c0_1] : memref<2x16x64xf32, #tpu.memory_space<vmem>>, vector<2x16x64xf32>
    %1 = vector.shape_cast %0 : vector<2x16x64xf32> to vector<32x64xf32>
    %c0_2 = arith.constant 0 : index
    %c0_3 = arith.constant 0 : index
    %2 = vector.load %arg2[%c0_2, %c0_3] : memref<1x64xf32, #tpu.memory_space<vmem>>, vector<1x64xf32>
    %c0_4 = arith.constant 0 : index
    %c0_5 = arith.constant 0 : index
    %3 = vector.load %arg3[%c0_4, %c0_5] : memref<1x64xf32, #tpu.memory_space<vmem>>, vector<1x64xf32>
    %cst = arith.constant dense<0.000000e+00> : vector<32xf32>
    %4 = vector.multi_reduction <add>, %1, %cst [1] : vector<32x64xf32> to vector<32xf32>
    %5 = vector.shape_cast %4 : vector<32xf32> to vector<32x1xf32>
    %cst_6 = arith.constant 6.400000e+01 : f32
    %6 = vector.broadcast %cst_6 : f32 to vector<32x1xf32>
    %7 = arith.divf %5, %6 : vector<32x1xf32>
    %8 = vector.broadcast %7 : vector<32x1xf32> to vector<32x64xf32>
    %9 = arith.subf %1, %8 : vector<32x64xf32>
    %10 = vector.broadcast %7 : vector<32x1xf32> to vector<32x64xf32>
    %11 = arith.subf %1, %10 : vector<32x64xf32>
    %12 = arith.mulf %9, %11 : vector<32x64xf32>
    %cst_7 = arith.constant dense<0.000000e+00> : vector<32xf32>
    %13 = vector.multi_reduction <add>, %12, %cst_7 [1] : vector<32x64xf32> to vector<32xf32>
    %14 = vector.shape_cast %13 : vector<32xf32> to vector<32x1xf32>
    %cst_8 = arith.constant 6.400000e+01 : f32
    %15 = vector.broadcast %cst_8 : f32 to vector<32x1xf32>
    %16 = arith.divf %14, %15 : vector<32x1xf32>
    %17 = vector.broadcast %7 : vector<32x1xf32> to vector<32x64xf32>
    %18 = arith.subf %1, %17 : vector<32x64xf32>
    %cst_9 = arith.constant 9.99999974E-6 : f32
    %19 = vector.broadcast %cst_9 : f32 to vector<32x1xf32>
    %20 = arith.addf %16, %19 : vector<32x1xf32>
    %21 = math.rsqrt %20 : vector<32x1xf32>
    %22 = vector.broadcast %21 : vector<32x1xf32> to vector<32x64xf32>
    %23 = arith.mulf %18, %22 : vector<32x64xf32>
    %24 = vector.broadcast %2 : vector<1x64xf32> to vector<32x64xf32>
    %25 = arith.mulf %23, %24 : vector<32x64xf32>
    %26 = vector.broadcast %3 : vector<1x64xf32> to vector<32x64xf32>
    %27 = arith.addf %25, %26 : vector<32x64xf32>
    %28 = vector.extract_strided_slice %27 {offsets = [0, 0], sizes = [16, 64], strides = [1, 1]} : vector<32x64xf32> to vector<16x64xf32>
    %cst_10 = arith.constant dense<0.000000e+00> : vector<64xf32>
    %29 = vector.multi_reduction <add>, %28, %cst_10 [0] : vector<16x64xf32> to vector<64xf32>
    %30 = vector.shape_cast %29 : vector<64xf32> to vector<1x64xf32>
    %cst_11 = arith.constant 1.600000e+01 : f32
    %31 = vector.broadcast %cst_11 : f32 to vector<1x64xf32>
    %32 = arith.divf %30, %31 : vector<1x64xf32>
    %33 = vector.extract_strided_slice %27 {offsets = [16, 0], sizes = [16, 64], strides = [1, 1]} : vector<32x64xf32> to vector<16x64xf32>
    %cst_12 = arith.constant dense<0.000000e+00> : vector<64xf32>
    %34 = vector.multi_reduction <add>, %33, %cst_12 [0] : vector<16x64xf32> to vector<64xf32>
    %35 = vector.shape_cast %34 : vector<64xf32> to vector<1x64xf32>
    %cst_13 = arith.constant 1.600000e+01 : f32
    %36 = vector.broadcast %cst_13 : f32 to vector<1x64xf32>
    %37 = arith.divf %35, %36 : vector<1x64xf32>
    %38 = tpu.concatenate %32, %37 in 0 : vector<1x64xf32>, vector<1x64xf32> -> vector<2x64xf32>
    %39 = arith.truncf %38 : vector<2x64xf32> to vector<2x64xbf16>
    %c0_14 = arith.constant 0 : index
    %c0_15 = arith.constant 0 : index
    %40 = vector.load %arg4[%c0_14, %c0_15] : memref<64x10xbf16, #tpu.memory_space<vmem>>, vector<64x10xbf16>
    %cst_16 = arith.constant dense<0.000000e+00> : vector<2x10xf32>
    %41 = tpu.matmul %39, %40, %cst_16 {dimension_numbers = #tpu.dot_dimension_numbers<[1], [0], [0], [1], [0, 0, 1, 1], [], []>} : vector<2x64xbf16>, vector<64x10xbf16>, vector<2x10xf32> -> vector<2x10xf32>
    %c0_17 = arith.constant 0 : index
    %c0_18 = arith.constant 0 : index
    %42 = vector.load %arg5[%c0_17, %c0_18] : memref<1x10xf32, #tpu.memory_space<vmem>>, vector<1x10xf32>
    %43 = vector.broadcast %42 : vector<1x10xf32> to vector<2x10xf32>
    %44 = arith.addf %41, %43 : vector<2x10xf32>
    %c0_19 = arith.constant 0 : index
    %c0_20 = arith.constant 0 : index
    %45 = vector.load %arg6[%c0_19, %c0_20] : memref<2x10xf32, #tpu.memory_space<vmem>>, vector<2x10xf32>
    tpu.vector_store %arg6[%c0_19, %c0_20], %44 {strides = array<i32>} : memref<2x10xf32, #tpu.memory_space<vmem>>, vector<2x10xf32>,
    return
  }
  func.func @transform_0(%arg0: i32) -> (i32, i32, i32) {
    %c0_i32 = arith.constant 0 : i32
    %c0_i32_0 = arith.constant 0 : i32
    %c0_i32_1 = arith.constant 0 : i32
    %c0_i32_2 = arith.constant 0 : i32
    return %c0_i32, %c0_i32_0, %c0_i32_1 : i32, i32, i32
  }
  func.func @transform_1(%arg0: i32) -> (i32, i32) {
    %c0_i32 = arith.constant 0 : i32
    %c0_i32_0 = arith.constant 0 : i32
    %c0_i32_1 = arith.constant 0 : i32
    return %c0_i32, %c0_i32_0 : i32, i32
  }
  func.func @transform_2(%arg0: i32) -> (i32, i32) {
    %c0_i32 = arith.constant 0 : i32
    %c0_i32_0 = arith.constant 0 : i32
    %c0_i32_1 = arith.constant 0 : i32
    return %c0_i32, %c0_i32_0 : i32, i32
  }
  func.func @transform_3(%arg0: i32) -> (i32, i32) {
    %c0_i32 = arith.constant 0 : i32
    %c0_i32_0 = arith.constant 0 : i32
    %c0_i32_1 = arith.constant 0 : i32
    return %c0_i32, %c0_i32_0 : i32, i32
  }
  func.func @transform_4(%arg0: i32) -> (i32, i32) {
    %c0_i32 = arith.constant 0 : i32
    %c0_i32_0 = arith.constant 0 : i32
    %c0_i32_1 = arith.constant 0 : i32
    return %c0_i32, %c0_i32_0 : i32, i32
  }
  func.func @transform_5(%arg0: i32) -> (i32, i32) {
    %c0_i32 = arith.constant 0 : i32
    %c0_i32_0 = arith.constant 0 : i32
    %c0_i32_1 = arith.constant 0 : i32
    return %c0_i32, %c0_i32_0 : i32, i32
  }
}

module attributes {stable_mosaic.version = 11 : i64} {
  func.func @_swin_block_kernel(%arg0: i32, %arg1: memref<1x1x16x64xf32, #tpu.memory_space<vmem>>, %arg2: memref<1x4x16x16xf32, #tpu.memory_space<vmem>>, %arg3: memref<3x4x64x16xbf16, #tpu.memory_space<vmem>>, %arg4: memref<3x4x1x16xf32, #tpu.memory_space<vmem>>, %arg5: memref<4x16x64xbf16, #tpu.memory_space<vmem>>, %arg6: memref<1x64xf32, #tpu.memory_space<vmem>>, %arg7: memref<1x64xf32, #tpu.memory_space<vmem>>, %arg8: memref<1x64xf32, #tpu.memory_space<vmem>>, %arg9: memref<1x64xf32, #tpu.memory_space<vmem>>, %arg10: memref<1x64xf32, #tpu.memory_space<vmem>>, %arg11: memref<64x256xbf16, #tpu.memory_space<vmem>>, %arg12: memref<1x256xf32, #tpu.memory_space<vmem>>, %arg13: memref<256x64xbf16, #tpu.memory_space<vmem>>, %arg14: memref<1x64xf32, #tpu.memory_space<vmem>>, %arg15: memref<1x1x16x64xf32, #tpu.memory_space<vmem>>) attributes {dimension_semantics = [#tpu.dimension_semantics<parallel>], iteration_bounds = array<i64: 2>, scalar_prefetch = 0 : i64, scratch_operands = 0 : i64, tpu.core_type = #tpu.core_type<tc>, window_params = [{transform_indices = @transform_0, window_bounds = array<i64: 1, 1, 16, 64>}, {pipeline_mode = #tpu.pipeline_mode<synchronous>, transform_indices = @transform_1, window_bounds = array<i64: 1, 4, 16, 16>}, {pipeline_mode = #tpu.pipeline_mode<synchronous>, transform_indices = @transform_2, window_bounds = array<i64: 3, 4, 64, 16>}, {pipeline_mode = #tpu.pipeline_mode<synchronous>, transform_indices = @transform_3, window_bounds = array<i64: 3, 4, 1, 16>}, {pipeline_mode = #tpu.pipeline_mode<synchronous>, transform_indices = @transform_4, window_bounds = array<i64: 4, 16, 64>}, {pipeline_mode = #tpu.pipeline_mode<synchronous>, transform_indices = @transform_5, window_bounds = array<i64: 1, 64>}, {pipeline_mode = #tpu.pipeline_mode<synchronous>, transform_indices = @transform_6, window_bounds = array<i64: 1, 64>}, {pipeline_mode = #tpu.pipeline_mode<synchronous>, transform_indices = @transform_7, window_bounds = array<i64: 1, 64>}, {pipeline_mode = #tpu.pipeline_mode<synchronous>, transform_indices = @transform_8, window_bounds = array<i64: 1, 64>}, {pipeline_mode = #tpu.pipeline_mode<synchronous>, transform_indices = @transform_9, window_bounds = array<i64: 1, 64>}, {pipeline_mode = #tpu.pipeline_mode<synchronous>, transform_indices = @transform_10, window_bounds = array<i64: 64, 256>}, {pipeline_mode = #tpu.pipeline_mode<synchronous>, transform_indices = @transform_11, window_bounds = array<i64: 1, 256>}, {pipeline_mode = #tpu.pipeline_mode<synchronous>, transform_indices = @transform_12, window_bounds = array<i64: 256, 64>}, {pipeline_mode = #tpu.pipeline_mode<synchronous>, transform_indices = @transform_13, window_bounds = array<i64: 1, 64>}, {transform_indices = @transform_14, window_bounds = array<i64: 1, 1, 16, 64>}]} {
    %c0 = arith.constant 0 : index
    %c0_0 = arith.constant 0 : index
    %c0_1 = arith.constant 0 : index
    %c0_2 = arith.constant 0 : index
    %0 = vector.load %arg1[%c0, %c0_0, %c0_1, %c0_2] : memref<1x1x16x64xf32, #tpu.memory_space<vmem>>, vector<1x1x16x64xf32>
    %1 = vector.shape_cast %0 : vector<1x1x16x64xf32> to vector<1x16x64xf32>
    %2 = vector.shape_cast %1 : vector<1x16x64xf32> to vector<16x64xf32>
    %c0_3 = arith.constant 0 : index
    %c0_4 = arith.constant 0 : index
    %3 = vector.load %arg7[%c0_3, %c0_4] : memref<1x64xf32, #tpu.memory_space<vmem>>, vector<1x64xf32>
    %c0_5 = arith.constant 0 : index
    %c0_6 = arith.constant 0 : index
    %4 = vector.load %arg8[%c0_5, %c0_6] : memref<1x64xf32, #tpu.memory_space<vmem>>, vector<1x64xf32>
    %cst = arith.constant dense<0.000000e+00> : vector<16xf32>
    %5 = vector.multi_reduction <add>, %2, %cst [1] : vector<16x64xf32> to vector<16xf32>
    %6 = vector.shape_cast %5 : vector<16xf32> to vector<16x1xf32>
    %cst_7 = arith.constant 6.400000e+01 : f32
    %7 = vector.broadcast %cst_7 : f32 to vector<16x1xf32>
    %8 = arith.divf %6, %7 : vector<16x1xf32>
    %9 = vector.broadcast %8 : vector<16x1xf32> to vector<16x64xf32>
    %10 = arith.subf %2, %9 : vector<16x64xf32>
    %11 = vector.broadcast %8 : vector<16x1xf32> to vector<16x64xf32>
    %12 = arith.subf %2, %11 : vector<16x64xf32>
    %13 = arith.mulf %10, %12 : vector<16x64xf32>
    %cst_8 = arith.constant dense<0.000000e+00> : vector<16xf32>
    %14 = vector.multi_reduction <add>, %13, %cst_8 [1] : vector<16x64xf32> to vector<16xf32>
    %15 = vector.shape_cast %14 : vector<16xf32> to vector<16x1xf32>
    %cst_9 = arith.constant 6.400000e+01 : f32
    %16 = vector.broadcast %cst_9 : f32 to vector<16x1xf32>
    %17 = arith.divf %15, %16 : vector<16x1xf32>
    %18 = vector.broadcast %8 : vector<16x1xf32> to vector<16x64xf32>
    %19 = arith.subf %2, %18 : vector<16x64xf32>
    %cst_10 = arith.constant 9.99999974E-6 : f32
    %20 = vector.broadcast %cst_10 : f32 to vector<16x1xf32>
    %21 = arith.addf %17, %20 : vector<16x1xf32>
    %22 = math.rsqrt %21 : vector<16x1xf32>
    %23 = vector.broadcast %22 : vector<16x1xf32> to vector<16x64xf32>
    %24 = arith.mulf %19, %23 : vector<16x64xf32>
    %25 = vector.broadcast %3 : vector<1x64xf32> to vector<16x64xf32>
    %26 = arith.mulf %24, %25 : vector<16x64xf32>
    %27 = vector.broadcast %4 : vector<1x64xf32> to vector<16x64xf32>
    %28 = arith.addf %26, %27 : vector<16x64xf32>
    %29 = arith.truncf %28 : vector<16x64xf32> to vector<16x64xbf16>
    %c0_11 = arith.constant 0 : index
    %c0_12 = arith.constant 0 : index
    %c0_13 = arith.constant 0 : index
    %c0_14 = arith.constant 0 : index
    %30 = vector.load %arg3[%c0_11, %c0_12, %c0_13, %c0_14] : memref<3x4x64x16xbf16, #tpu.memory_space<vmem>>, vector<3x4x64x16xbf16>
    %c0_15 = arith.constant 0 : index
    %c0_16 = arith.constant 0 : index
    %c0_17 = arith.constant 0 : index
    %c0_18 = arith.constant 0 : index
    %31 = vector.load %arg4[%c0_15, %c0_16, %c0_17, %c0_18] : memref<3x4x1x16xf32, #tpu.memory_space<vmem>>, vector<3x4x1x16xf32>
    %c0_19 = arith.constant 0 : index
    %c0_20 = arith.constant 0 : index
    %c0_21 = arith.constant 0 : index
    %32 = vector.load %arg5[%c0_19, %c0_20, %c0_21] : memref<4x16x64xbf16, #tpu.memory_space<vmem>>, vector<4x16x64xbf16>
    %c0_22 = arith.constant 0 : index
    %c0_23 = arith.constant 0 : index
    %c0_24 = arith.constant 0 : index
    %c0_25 = arith.constant 0 : index
    %33 = vector.load %arg2[%c0_22, %c0_23, %c0_24, %c0_25] : memref<1x4x16x16xf32, #tpu.memory_space<vmem>>, vector<1x4x16x16xf32>
    %cst_26 = arith.constant 0.000000e+00 : f32
    %34 = vector.broadcast %cst_26 : f32 to vector<16x64xf32>
    %35 = vector.extract_strided_slice %30 {offsets = [0, 0, 0, 0], sizes = [1, 1, 64, 16], strides = [1, 1, 1, 1]} : vector<3x4x64x16xbf16> to vector<1x1x64x16xbf16>
    %36 = vector.shape_cast %35 : vector<1x1x64x16xbf16> to vector<64x16xbf16>
    %cst_27 = arith.constant dense<0.000000e+00> : vector<16x16xf32>
    %37 = tpu.matmul %29, %36, %cst_27 {dimension_numbers = #tpu.dot_dimension_numbers<[1], [0], [0], [1], [0, 0, 1, 1], [], []>} : vector<16x64xbf16>, vector<64x16xbf16>, vector<16x16xf32> -> vector<16x16xf32>
    %38 = vector.extract_strided_slice %31 {offsets = [0, 0, 0, 0], sizes = [1, 1, 1, 16], strides = [1, 1, 1, 1]} : vector<3x4x1x16xf32> to vector<1x1x1x16xf32>
    %39 = vector.shape_cast %38 : vector<1x1x1x16xf32> to vector<1x16xf32>
    %40 = vector.broadcast %39 : vector<1x16xf32> to vector<16x16xf32>
    %41 = arith.addf %37, %40 : vector<16x16xf32>
    %42 = vector.extract_strided_slice %30 {offsets = [1, 0, 0, 0], sizes = [1, 1, 64, 16], strides = [1, 1, 1, 1]} : vector<3x4x64x16xbf16> to vector<1x1x64x16xbf16>
    %43 = vector.shape_cast %42 : vector<1x1x64x16xbf16> to vector<64x16xbf16>
    %cst_28 = arith.constant dense<0.000000e+00> : vector<16x16xf32>
    %44 = tpu.matmul %29, %43, %cst_28 {dimension_numbers = #tpu.dot_dimension_numbers<[1], [0], [0], [1], [0, 0, 1, 1], [], []>} : vector<16x64xbf16>, vector<64x16xbf16>, vector<16x16xf32> -> vector<16x16xf32>
    %45 = vector.extract_strided_slice %31 {offsets = [1, 0, 0, 0], sizes = [1, 1, 1, 16], strides = [1, 1, 1, 1]} : vector<3x4x1x16xf32> to vector<1x1x1x16xf32>
    %46 = vector.shape_cast %45 : vector<1x1x1x16xf32> to vector<1x16xf32>
    %47 = vector.broadcast %46 : vector<1x16xf32> to vector<16x16xf32>
    %48 = arith.addf %44, %47 : vector<16x16xf32>
    %49 = vector.extract_strided_slice %30 {offsets = [2, 0, 0, 0], sizes = [1, 1, 64, 16], strides = [1, 1, 1, 1]} : vector<3x4x64x16xbf16> to vector<1x1x64x16xbf16>
    %50 = vector.shape_cast %49 : vector<1x1x64x16xbf16> to vector<64x16xbf16>
    %cst_29 = arith.constant dense<0.000000e+00> : vector<16x16xf32>
    %51 = tpu.matmul %29, %50, %cst_29 {dimension_numbers = #tpu.dot_dimension_numbers<[1], [0], [0], [1], [0, 0, 1, 1], [], []>} : vector<16x64xbf16>, vector<64x16xbf16>, vector<16x16xf32> -> vector<16x16xf32>
    %52 = vector.extract_strided_slice %31 {offsets = [2, 0, 0, 0], sizes = [1, 1, 1, 16], strides = [1, 1, 1, 1]} : vector<3x4x1x16xf32> to vector<1x1x1x16xf32>
    %53 = vector.shape_cast %52 : vector<1x1x1x16xf32> to vector<1x16xf32>
    %54 = vector.broadcast %53 : vector<1x16xf32> to vector<16x16xf32>
    %55 = arith.addf %51, %54 : vector<16x16xf32>
    %cst_30 = arith.constant 2.500000e-01 : f32
    %56 = vector.broadcast %cst_30 : f32 to vector<16x16xf32>
    %57 = arith.mulf %41, %56 : vector<16x16xf32>
    %58 = vector.shape_cast %57 : vector<16x16xf32> to vector<1x16x16xf32>
    %59 = arith.truncf %58 : vector<1x16x16xf32> to vector<1x16x16xbf16>
    %60 = vector.shape_cast %48 : vector<16x16xf32> to vector<1x16x16xf32>
    %61 = arith.truncf %60 : vector<1x16x16xf32> to vector<1x16x16xbf16>
    %62 = vector.shape_cast %55 : vector<16x16xf32> to vector<1x16x16xf32>
    %63 = arith.truncf %62 : vector<1x16x16xf32> to vector<1x16x16xbf16>
    "tpu.trace_start"() <{level = 10 : i32, message = "wqd,wkd->wqk"}> : () -> ()
    %cst_31 = arith.constant dense<0.000000e+00> : vector<1x16x16xf32>
    %64 = tpu.matmul %59, %61, %cst_31 {dimension_numbers = #tpu.dot_dimension_numbers<[2], [2], [1], [1], [0, 0, 0, 1, 1, 1], [0], [0]>} : vector<1x16x16xbf16>, vector<1x16x16xbf16>, vector<1x16x16xf32> -> vector<1x16x16xf32>
    "tpu.trace_stop"() : () -> ()
    %65 = vector.extract_strided_slice %33 {offsets = [0, 0, 0, 0], sizes = [1, 1, 16, 16], strides = [1, 1, 1, 1]} : vector<1x4x16x16xf32> to vector<1x1x16x16xf32>
    %66 = vector.shape_cast %65 : vector<1x1x16x16xf32> to vector<1x16x16xf32>
    %67 = arith.addf %64, %66 : vector<1x16x16xf32>
    %cst_32 = arith.constant dense<0xFF800000> : vector<1x16xf32>
    %68 = vector.multi_reduction <maximumf>, %67, %cst_32 [2] : vector<1x16x16xf32> to vector<1x16xf32>
    %69 = vector.shape_cast %68 : vector<1x16xf32> to vector<1x16x1xf32>
    %70 = vector.broadcast %69 : vector<1x16x1xf32> to vector<1x16x16xf32>
    %71 = arith.subf %67, %70 : vector<1x16x16xf32>
    %72 = math.exp %71 : vector<1x16x16xf32>
    %cst_33 = arith.constant dense<0.000000e+00> : vector<1x16xf32>
    %73 = vector.multi_reduction <add>, %72, %cst_33 [2] : vector<1x16x16xf32> to vector<1x16xf32>
    %74 = vector.shape_cast %73 : vector<1x16xf32> to vector<1x16x1xf32>
    %75 = vector.broadcast %74 : vector<1x16x1xf32> to vector<1x16x16xf32>
    %76 = arith.divf %72, %75 : vector<1x16x16xf32>
    %77 = arith.truncf %76 : vector<1x16x16xf32> to vector<1x16x16xbf16>
    "tpu.trace_start"() <{level = 10 : i32, message = "wqk,wkd->wqd"}> : () -> ()
    %cst_34 = arith.constant dense<0.000000e+00> : vector<1x16x16xf32>
    %78 = tpu.matmul %77, %63, %cst_34 {dimension_numbers = #tpu.dot_dimension_numbers<[2], [1], [1], [2], [0, 0, 0, 1, 1, 2], [0], [0]>} : vector<1x16x16xbf16>, vector<1x16x16xbf16>, vector<1x16x16xf32> -> vector<1x16x16xf32>
    "tpu.trace_stop"() : () -> ()
    %79 = vector.shape_cast %78 : vector<1x16x16xf32> to vector<16x16xf32>
    %80 = arith.truncf %79 : vector<16x16xf32> to vector<16x16xbf16>
    %81 = vector.extract_strided_slice %32 {offsets = [0, 0, 0], sizes = [1, 16, 64], strides = [1, 1, 1]} : vector<4x16x64xbf16> to vector<1x16x64xbf16>
    %82 = vector.shape_cast %81 : vector<1x16x64xbf16> to vector<16x64xbf16>
    %cst_35 = arith.constant dense<0.000000e+00> : vector<16x64xf32>
    %83 = tpu.matmul %80, %82, %cst_35 {dimension_numbers = #tpu.dot_dimension_numbers<[1], [0], [0], [1], [0, 0, 1, 1], [], []>} : vector<16x16xbf16>, vector<16x64xbf16>, vector<16x64xf32> -> vector<16x64xf32>
    %84 = arith.addf %34, %83 : vector<16x64xf32>
    %85 = vector.extract_strided_slice %30 {offsets = [0, 1, 0, 0], sizes = [1, 1, 64, 16], strides = [1, 1, 1, 1]} : vector<3x4x64x16xbf16> to vector<1x1x64x16xbf16>
    %86 = vector.shape_cast %85 : vector<1x1x64x16xbf16> to vector<64x16xbf16>
    %cst_36 = arith.constant dense<0.000000e+00> : vector<16x16xf32>
    %87 = tpu.matmul %29, %86, %cst_36 {dimension_numbers = #tpu.dot_dimension_numbers<[1], [0], [0], [1], [0, 0, 1, 1], [], []>} : vector<16x64xbf16>, vector<64x16xbf16>, vector<16x16xf32> -> vector<16x16xf32>
    %88 = vector.extract_strided_slice %31 {offsets = [0, 1, 0, 0], sizes = [1, 1, 1, 16], strides = [1, 1, 1, 1]} : vector<3x4x1x16xf32> to vector<1x1x1x16xf32>
    %89 = vector.shape_cast %88 : vector<1x1x1x16xf32> to vector<1x16xf32>
    %90 = vector.broadcast %89 : vector<1x16xf32> to vector<16x16xf32>
    %91 = arith.addf %87, %90 : vector<16x16xf32>
    %92 = vector.extract_strided_slice %30 {offsets = [1, 1, 0, 0], sizes = [1, 1, 64, 16], strides = [1, 1, 1, 1]} : vector<3x4x64x16xbf16> to vector<1x1x64x16xbf16>
    %93 = vector.shape_cast %92 : vector<1x1x64x16xbf16> to vector<64x16xbf16>
    %cst_37 = arith.constant dense<0.000000e+00> : vector<16x16xf32>
    %94 = tpu.matmul %29, %93, %cst_37 {dimension_numbers = #tpu.dot_dimension_numbers<[1], [0], [0], [1], [0, 0, 1, 1], [], []>} : vector<16x64xbf16>, vector<64x16xbf16>, vector<16x16xf32> -> vector<16x16xf32>
    %95 = vector.extract_strided_slice %31 {offsets = [1, 1, 0, 0], sizes = [1, 1, 1, 16], strides = [1, 1, 1, 1]} : vector<3x4x1x16xf32> to vector<1x1x1x16xf32>
    %96 = vector.shape_cast %95 : vector<1x1x1x16xf32> to vector<1x16xf32>
    %97 = vector.broadcast %96 : vector<1x16xf32> to vector<16x16xf32>
    %98 = arith.addf %94, %97 : vector<16x16xf32>
    %99 = vector.extract_strided_slice %30 {offsets = [2, 1, 0, 0], sizes = [1, 1, 64, 16], strides = [1, 1, 1, 1]} : vector<3x4x64x16xbf16> to vector<1x1x64x16xbf16>
    %100 = vector.shape_cast %99 : vector<1x1x64x16xbf16> to vector<64x16xbf16>
    %cst_38 = arith.constant dense<0.000000e+00> : vector<16x16xf32>
    %101 = tpu.matmul %29, %100, %cst_38 {dimension_numbers = #tpu.dot_dimension_numbers<[1], [0], [0], [1], [0, 0, 1, 1], [], []>} : vector<16x64xbf16>, vector<64x16xbf16>, vector<16x16xf32> -> vector<16x16xf32>
    %102 = vector.extract_strided_slice %31 {offsets = [2, 1, 0, 0], sizes = [1, 1, 1, 16], strides = [1, 1, 1, 1]} : vector<3x4x1x16xf32> to vector<1x1x1x16xf32>
    %103 = vector.shape_cast %102 : vector<1x1x1x16xf32> to vector<1x16xf32>
    %104 = vector.broadcast %103 : vector<1x16xf32> to vector<16x16xf32>
    %105 = arith.addf %101, %104 : vector<16x16xf32>
    %cst_39 = arith.constant 2.500000e-01 : f32
    %106 = vector.broadcast %cst_39 : f32 to vector<16x16xf32>
    %107 = arith.mulf %91, %106 : vector<16x16xf32>
    %108 = vector.shape_cast %107 : vector<16x16xf32> to vector<1x16x16xf32>
    %109 = arith.truncf %108 : vector<1x16x16xf32> to vector<1x16x16xbf16>
    %110 = vector.shape_cast %98 : vector<16x16xf32> to vector<1x16x16xf32>
    %111 = arith.truncf %110 : vector<1x16x16xf32> to vector<1x16x16xbf16>
    %112 = vector.shape_cast %105 : vector<16x16xf32> to vector<1x16x16xf32>
    %113 = arith.truncf %112 : vector<1x16x16xf32> to vector<1x16x16xbf16>
    "tpu.trace_start"() <{level = 10 : i32, message = "wqd,wkd->wqk"}> : () -> ()
    %cst_40 = arith.constant dense<0.000000e+00> : vector<1x16x16xf32>
    %114 = tpu.matmul %109, %111, %cst_40 {dimension_numbers = #tpu.dot_dimension_numbers<[2], [2], [1], [1], [0, 0, 0, 1, 1, 1], [0], [0]>} : vector<1x16x16xbf16>, vector<1x16x16xbf16>, vector<1x16x16xf32> -> vector<1x16x16xf32>
    "tpu.trace_stop"() : () -> ()
    %115 = vector.extract_strided_slice %33 {offsets = [0, 1, 0, 0], sizes = [1, 1, 16, 16], strides = [1, 1, 1, 1]} : vector<1x4x16x16xf32> to vector<1x1x16x16xf32>
    %116 = vector.shape_cast %115 : vector<1x1x16x16xf32> to vector<1x16x16xf32>
    %117 = arith.addf %114, %116 : vector<1x16x16xf32>
    %cst_41 = arith.constant dense<0xFF800000> : vector<1x16xf32>
    %118 = vector.multi_reduction <maximumf>, %117, %cst_41 [2] : vector<1x16x16xf32> to vector<1x16xf32>
    %119 = vector.shape_cast %118 : vector<1x16xf32> to vector<1x16x1xf32>
    %120 = vector.broadcast %119 : vector<1x16x1xf32> to vector<1x16x16xf32>
    %121 = arith.subf %117, %120 : vector<1x16x16xf32>
    %122 = math.exp %121 : vector<1x16x16xf32>
    %cst_42 = arith.constant dense<0.000000e+00> : vector<1x16xf32>
    %123 = vector.multi_reduction <add>, %122, %cst_42 [2] : vector<1x16x16xf32> to vector<1x16xf32>
    %124 = vector.shape_cast %123 : vector<1x16xf32> to vector<1x16x1xf32>
    %125 = vector.broadcast %124 : vector<1x16x1xf32> to vector<1x16x16xf32>
    %126 = arith.divf %122, %125 : vector<1x16x16xf32>
    %127 = arith.truncf %126 : vector<1x16x16xf32> to vector<1x16x16xbf16>
    "tpu.trace_start"() <{level = 10 : i32, message = "wqk,wkd->wqd"}> : () -> ()
    %cst_43 = arith.constant dense<0.000000e+00> : vector<1x16x16xf32>
    %128 = tpu.matmul %127, %113, %cst_43 {dimension_numbers = #tpu.dot_dimension_numbers<[2], [1], [1], [2], [0, 0, 0, 1, 1, 2], [0], [0]>} : vector<1x16x16xbf16>, vector<1x16x16xbf16>, vector<1x16x16xf32> -> vector<1x16x16xf32>
    "tpu.trace_stop"() : () -> ()
    %129 = vector.shape_cast %128 : vector<1x16x16xf32> to vector<16x16xf32>
    %130 = arith.truncf %129 : vector<16x16xf32> to vector<16x16xbf16>
    %131 = vector.extract_strided_slice %32 {offsets = [1, 0, 0], sizes = [1, 16, 64], strides = [1, 1, 1]} : vector<4x16x64xbf16> to vector<1x16x64xbf16>
    %132 = vector.shape_cast %131 : vector<1x16x64xbf16> to vector<16x64xbf16>
    %cst_44 = arith.constant dense<0.000000e+00> : vector<16x64xf32>
    %133 = tpu.matmul %130, %132, %cst_44 {dimension_numbers = #tpu.dot_dimension_numbers<[1], [0], [0], [1], [0, 0, 1, 1], [], []>} : vector<16x16xbf16>, vector<16x64xbf16>, vector<16x64xf32> -> vector<16x64xf32>
    %134 = arith.addf %84, %133 : vector<16x64xf32>
    %135 = vector.extract_strided_slice %30 {offsets = [0, 2, 0, 0], sizes = [1, 1, 64, 16], strides = [1, 1, 1, 1]} : vector<3x4x64x16xbf16> to vector<1x1x64x16xbf16>
    %136 = vector.shape_cast %135 : vector<1x1x64x16xbf16> to vector<64x16xbf16>
    %cst_45 = arith.constant dense<0.000000e+00> : vector<16x16xf32>
    %137 = tpu.matmul %29, %136, %cst_45 {dimension_numbers = #tpu.dot_dimension_numbers<[1], [0], [0], [1], [0, 0, 1, 1], [], []>} : vector<16x64xbf16>, vector<64x16xbf16>, vector<16x16xf32> -> vector<16x16xf32>
    %138 = vector.extract_strided_slice %31 {offsets = [0, 2, 0, 0], sizes = [1, 1, 1, 16], strides = [1, 1, 1, 1]} : vector<3x4x1x16xf32> to vector<1x1x1x16xf32>
    %139 = vector.shape_cast %138 : vector<1x1x1x16xf32> to vector<1x16xf32>
    %140 = vector.broadcast %139 : vector<1x16xf32> to vector<16x16xf32>
    %141 = arith.addf %137, %140 : vector<16x16xf32>
    %142 = vector.extract_strided_slice %30 {offsets = [1, 2, 0, 0], sizes = [1, 1, 64, 16], strides = [1, 1, 1, 1]} : vector<3x4x64x16xbf16> to vector<1x1x64x16xbf16>
    %143 = vector.shape_cast %142 : vector<1x1x64x16xbf16> to vector<64x16xbf16>
    %cst_46 = arith.constant dense<0.000000e+00> : vector<16x16xf32>
    %144 = tpu.matmul %29, %143, %cst_46 {dimension_numbers = #tpu.dot_dimension_numbers<[1], [0], [0], [1], [0, 0, 1, 1], [], []>} : vector<16x64xbf16>, vector<64x16xbf16>, vector<16x16xf32> -> vector<16x16xf32>
    %145 = vector.extract_strided_slice %31 {offsets = [1, 2, 0, 0], sizes = [1, 1, 1, 16], strides = [1, 1, 1, 1]} : vector<3x4x1x16xf32> to vector<1x1x1x16xf32>
    %146 = vector.shape_cast %145 : vector<1x1x1x16xf32> to vector<1x16xf32>
    %147 = vector.broadcast %146 : vector<1x16xf32> to vector<16x16xf32>
    %148 = arith.addf %144, %147 : vector<16x16xf32>
    %149 = vector.extract_strided_slice %30 {offsets = [2, 2, 0, 0], sizes = [1, 1, 64, 16], strides = [1, 1, 1, 1]} : vector<3x4x64x16xbf16> to vector<1x1x64x16xbf16>
    %150 = vector.shape_cast %149 : vector<1x1x64x16xbf16> to vector<64x16xbf16>
    %cst_47 = arith.constant dense<0.000000e+00> : vector<16x16xf32>
    %151 = tpu.matmul %29, %150, %cst_47 {dimension_numbers = #tpu.dot_dimension_numbers<[1], [0], [0], [1], [0, 0, 1, 1], [], []>} : vector<16x64xbf16>, vector<64x16xbf16>, vector<16x16xf32> -> vector<16x16xf32>
    %152 = vector.extract_strided_slice %31 {offsets = [2, 2, 0, 0], sizes = [1, 1, 1, 16], strides = [1, 1, 1, 1]} : vector<3x4x1x16xf32> to vector<1x1x1x16xf32>
    %153 = vector.shape_cast %152 : vector<1x1x1x16xf32> to vector<1x16xf32>
    %154 = vector.broadcast %153 : vector<1x16xf32> to vector<16x16xf32>
    %155 = arith.addf %151, %154 : vector<16x16xf32>
    %cst_48 = arith.constant 2.500000e-01 : f32
    %156 = vector.broadcast %cst_48 : f32 to vector<16x16xf32>
    %157 = arith.mulf %141, %156 : vector<16x16xf32>
    %158 = vector.shape_cast %157 : vector<16x16xf32> to vector<1x16x16xf32>
    %159 = arith.truncf %158 : vector<1x16x16xf32> to vector<1x16x16xbf16>
    %160 = vector.shape_cast %148 : vector<16x16xf32> to vector<1x16x16xf32>
    %161 = arith.truncf %160 : vector<1x16x16xf32> to vector<1x16x16xbf16>
    %162 = vector.shape_cast %155 : vector<16x16xf32> to vector<1x16x16xf32>
    %163 = arith.truncf %162 : vector<1x16x16xf32> to vector<1x16x16xbf16>
    "tpu.trace_start"() <{level = 10 : i32, message = "wqd,wkd->wqk"}> : () -> ()
    %cst_49 = arith.constant dense<0.000000e+00> : vector<1x16x16xf32>
    %164 = tpu.matmul %159, %161, %cst_49 {dimension_numbers = #tpu.dot_dimension_numbers<[2], [2], [1], [1], [0, 0, 0, 1, 1, 1], [0], [0]>} : vector<1x16x16xbf16>, vector<1x16x16xbf16>, vector<1x16x16xf32> -> vector<1x16x16xf32>
    "tpu.trace_stop"() : () -> ()
    %165 = vector.extract_strided_slice %33 {offsets = [0, 2, 0, 0], sizes = [1, 1, 16, 16], strides = [1, 1, 1, 1]} : vector<1x4x16x16xf32> to vector<1x1x16x16xf32>
    %166 = vector.shape_cast %165 : vector<1x1x16x16xf32> to vector<1x16x16xf32>
    %167 = arith.addf %164, %166 : vector<1x16x16xf32>
    %cst_50 = arith.constant dense<0xFF800000> : vector<1x16xf32>
    %168 = vector.multi_reduction <maximumf>, %167, %cst_50 [2] : vector<1x16x16xf32> to vector<1x16xf32>
    %169 = vector.shape_cast %168 : vector<1x16xf32> to vector<1x16x1xf32>
    %170 = vector.broadcast %169 : vector<1x16x1xf32> to vector<1x16x16xf32>
    %171 = arith.subf %167, %170 : vector<1x16x16xf32>
    %172 = math.exp %171 : vector<1x16x16xf32>
    %cst_51 = arith.constant dense<0.000000e+00> : vector<1x16xf32>
    %173 = vector.multi_reduction <add>, %172, %cst_51 [2] : vector<1x16x16xf32> to vector<1x16xf32>
    %174 = vector.shape_cast %173 : vector<1x16xf32> to vector<1x16x1xf32>
    %175 = vector.broadcast %174 : vector<1x16x1xf32> to vector<1x16x16xf32>
    %176 = arith.divf %172, %175 : vector<1x16x16xf32>
    %177 = arith.truncf %176 : vector<1x16x16xf32> to vector<1x16x16xbf16>
    "tpu.trace_start"() <{level = 10 : i32, message = "wqk,wkd->wqd"}> : () -> ()
    %cst_52 = arith.constant dense<0.000000e+00> : vector<1x16x16xf32>
    %178 = tpu.matmul %177, %163, %cst_52 {dimension_numbers = #tpu.dot_dimension_numbers<[2], [1], [1], [2], [0, 0, 0, 1, 1, 2], [0], [0]>} : vector<1x16x16xbf16>, vector<1x16x16xbf16>, vector<1x16x16xf32> -> vector<1x16x16xf32>
    "tpu.trace_stop"() : () -> ()
    %179 = vector.shape_cast %178 : vector<1x16x16xf32> to vector<16x16xf32>
    %180 = arith.truncf %179 : vector<16x16xf32> to vector<16x16xbf16>
    %181 = vector.extract_strided_slice %32 {offsets = [2, 0, 0], sizes = [1, 16, 64], strides = [1, 1, 1]} : vector<4x16x64xbf16> to vector<1x16x64xbf16>
    %182 = vector.shape_cast %181 : vector<1x16x64xbf16> to vector<16x64xbf16>
    %cst_53 = arith.constant dense<0.000000e+00> : vector<16x64xf32>
    %183 = tpu.matmul %180, %182, %cst_53 {dimension_numbers = #tpu.dot_dimension_numbers<[1], [0], [0], [1], [0, 0, 1, 1], [], []>} : vector<16x16xbf16>, vector<16x64xbf16>, vector<16x64xf32> -> vector<16x64xf32>
    %184 = arith.addf %134, %183 : vector<16x64xf32>
    %185 = vector.extract_strided_slice %30 {offsets = [0, 3, 0, 0], sizes = [1, 1, 64, 16], strides = [1, 1, 1, 1]} : vector<3x4x64x16xbf16> to vector<1x1x64x16xbf16>
    %186 = vector.shape_cast %185 : vector<1x1x64x16xbf16> to vector<64x16xbf16>
    %cst_54 = arith.constant dense<0.000000e+00> : vector<16x16xf32>
    %187 = tpu.matmul %29, %186, %cst_54 {dimension_numbers = #tpu.dot_dimension_numbers<[1], [0], [0], [1], [0, 0, 1, 1], [], []>} : vector<16x64xbf16>, vector<64x16xbf16>, vector<16x16xf32> -> vector<16x16xf32>
    %188 = vector.extract_strided_slice %31 {offsets = [0, 3, 0, 0], sizes = [1, 1, 1, 16], strides = [1, 1, 1, 1]} : vector<3x4x1x16xf32> to vector<1x1x1x16xf32>
    %189 = vector.shape_cast %188 : vector<1x1x1x16xf32> to vector<1x16xf32>
    %190 = vector.broadcast %189 : vector<1x16xf32> to vector<16x16xf32>
    %191 = arith.addf %187, %190 : vector<16x16xf32>
    %192 = vector.extract_strided_slice %30 {offsets = [1, 3, 0, 0], sizes = [1, 1, 64, 16], strides = [1, 1, 1, 1]} : vector<3x4x64x16xbf16> to vector<1x1x64x16xbf16>
    %193 = vector.shape_cast %192 : vector<1x1x64x16xbf16> to vector<64x16xbf16>
    %cst_55 = arith.constant dense<0.000000e+00> : vector<16x16xf32>
    %194 = tpu.matmul %29, %193, %cst_55 {dimension_numbers = #tpu.dot_dimension_numbers<[1], [0], [0], [1], [0, 0, 1, 1], [], []>} : vector<16x64xbf16>, vector<64x16xbf16>, vector<16x16xf32> -> vector<16x16xf32>
    %195 = vector.extract_strided_slice %31 {offsets = [1, 3, 0, 0], sizes = [1, 1, 1, 16], strides = [1, 1, 1, 1]} : vector<3x4x1x16xf32> to vector<1x1x1x16xf32>
    %196 = vector.shape_cast %195 : vector<1x1x1x16xf32> to vector<1x16xf32>
    %197 = vector.broadcast %196 : vector<1x16xf32> to vector<16x16xf32>
    %198 = arith.addf %194, %197 : vector<16x16xf32>
    %199 = vector.extract_strided_slice %30 {offsets = [2, 3, 0, 0], sizes = [1, 1, 64, 16], strides = [1, 1, 1, 1]} : vector<3x4x64x16xbf16> to vector<1x1x64x16xbf16>
    %200 = vector.shape_cast %199 : vector<1x1x64x16xbf16> to vector<64x16xbf16>
    %cst_56 = arith.constant dense<0.000000e+00> : vector<16x16xf32>
    %201 = tpu.matmul %29, %200, %cst_56 {dimension_numbers = #tpu.dot_dimension_numbers<[1], [0], [0], [1], [0, 0, 1, 1], [], []>} : vector<16x64xbf16>, vector<64x16xbf16>, vector<16x16xf32> -> vector<16x16xf32>
    %202 = vector.extract_strided_slice %31 {offsets = [2, 3, 0, 0], sizes = [1, 1, 1, 16], strides = [1, 1, 1, 1]} : vector<3x4x1x16xf32> to vector<1x1x1x16xf32>
    %203 = vector.shape_cast %202 : vector<1x1x1x16xf32> to vector<1x16xf32>
    %204 = vector.broadcast %203 : vector<1x16xf32> to vector<16x16xf32>
    %205 = arith.addf %201, %204 : vector<16x16xf32>
    %cst_57 = arith.constant 2.500000e-01 : f32
    %206 = vector.broadcast %cst_57 : f32 to vector<16x16xf32>
    %207 = arith.mulf %191, %206 : vector<16x16xf32>
    %208 = vector.shape_cast %207 : vector<16x16xf32> to vector<1x16x16xf32>
    %209 = arith.truncf %208 : vector<1x16x16xf32> to vector<1x16x16xbf16>
    %210 = vector.shape_cast %198 : vector<16x16xf32> to vector<1x16x16xf32>
    %211 = arith.truncf %210 : vector<1x16x16xf32> to vector<1x16x16xbf16>
    %212 = vector.shape_cast %205 : vector<16x16xf32> to vector<1x16x16xf32>
    %213 = arith.truncf %212 : vector<1x16x16xf32> to vector<1x16x16xbf16>
    "tpu.trace_start"() <{level = 10 : i32, message = "wqd,wkd->wqk"}> : () -> ()
    %cst_58 = arith.constant dense<0.000000e+00> : vector<1x16x16xf32>
    %214 = tpu.matmul %209, %211, %cst_58 {dimension_numbers = #tpu.dot_dimension_numbers<[2], [2], [1], [1], [0, 0, 0, 1, 1, 1], [0], [0]>} : vector<1x16x16xbf16>, vector<1x16x16xbf16>, vector<1x16x16xf32> -> vector<1x16x16xf32>
    "tpu.trace_stop"() : () -> ()
    %215 = vector.extract_strided_slice %33 {offsets = [0, 3, 0, 0], sizes = [1, 1, 16, 16], strides = [1, 1, 1, 1]} : vector<1x4x16x16xf32> to vector<1x1x16x16xf32>
    %216 = vector.shape_cast %215 : vector<1x1x16x16xf32> to vector<1x16x16xf32>
    %217 = arith.addf %214, %216 : vector<1x16x16xf32>
    %cst_59 = arith.constant dense<0xFF800000> : vector<1x16xf32>
    %218 = vector.multi_reduction <maximumf>, %217, %cst_59 [2] : vector<1x16x16xf32> to vector<1x16xf32>
    %219 = vector.shape_cast %218 : vector<1x16xf32> to vector<1x16x1xf32>
    %220 = vector.broadcast %219 : vector<1x16x1xf32> to vector<1x16x16xf32>
    %221 = arith.subf %217, %220 : vector<1x16x16xf32>
    %222 = math.exp %221 : vector<1x16x16xf32>
    %cst_60 = arith.constant dense<0.000000e+00> : vector<1x16xf32>
    %223 = vector.multi_reduction <add>, %222, %cst_60 [2] : vector<1x16x16xf32> to vector<1x16xf32>
    %224 = vector.shape_cast %223 : vector<1x16xf32> to vector<1x16x1xf32>
    %225 = vector.broadcast %224 : vector<1x16x1xf32> to vector<1x16x16xf32>
    %226 = arith.divf %222, %225 : vector<1x16x16xf32>
    %227 = arith.truncf %226 : vector<1x16x16xf32> to vector<1x16x16xbf16>
    "tpu.trace_start"() <{level = 10 : i32, message = "wqk,wkd->wqd"}> : () -> ()
    %cst_61 = arith.constant dense<0.000000e+00> : vector<1x16x16xf32>
    %228 = tpu.matmul %227, %213, %cst_61 {dimension_numbers = #tpu.dot_dimension_numbers<[2], [1], [1], [2], [0, 0, 0, 1, 1, 2], [0], [0]>} : vector<1x16x16xbf16>, vector<1x16x16xbf16>, vector<1x16x16xf32> -> vector<1x16x16xf32>
    "tpu.trace_stop"() : () -> ()
    %229 = vector.shape_cast %228 : vector<1x16x16xf32> to vector<16x16xf32>
    %230 = arith.truncf %229 : vector<16x16xf32> to vector<16x16xbf16>
    %231 = vector.extract_strided_slice %32 {offsets = [3, 0, 0], sizes = [1, 16, 64], strides = [1, 1, 1]} : vector<4x16x64xbf16> to vector<1x16x64xbf16>
    %232 = vector.shape_cast %231 : vector<1x16x64xbf16> to vector<16x64xbf16>
    %cst_62 = arith.constant dense<0.000000e+00> : vector<16x64xf32>
    %233 = tpu.matmul %230, %232, %cst_62 {dimension_numbers = #tpu.dot_dimension_numbers<[1], [0], [0], [1], [0, 0, 1, 1], [], []>} : vector<16x16xbf16>, vector<16x64xbf16>, vector<16x64xf32> -> vector<16x64xf32>
    %234 = arith.addf %184, %233 : vector<16x64xf32>
    %235 = arith.addf %2, %234 : vector<16x64xf32>
    %c0_63 = arith.constant 0 : index
    %c0_64 = arith.constant 0 : index
    %236 = vector.load %arg6[%c0_63, %c0_64] : memref<1x64xf32, #tpu.memory_space<vmem>>, vector<1x64xf32>
    %237 = vector.broadcast %236 : vector<1x64xf32> to vector<16x64xf32>
    %238 = arith.addf %235, %237 : vector<16x64xf32>
    %c0_65 = arith.constant 0 : index
    %c0_66 = arith.constant 0 : index
    %239 = vector.load %arg9[%c0_65, %c0_66] : memref<1x64xf32, #tpu.memory_space<vmem>>, vector<1x64xf32>
    %c0_67 = arith.constant 0 : index
    %c0_68 = arith.constant 0 : index
    %240 = vector.load %arg10[%c0_67, %c0_68] : memref<1x64xf32, #tpu.memory_space<vmem>>, vector<1x64xf32>
    %cst_69 = arith.constant dense<0.000000e+00> : vector<16xf32>
    %241 = vector.multi_reduction <add>, %238, %cst_69 [1] : vector<16x64xf32> to vector<16xf32>
    %242 = vector.shape_cast %241 : vector<16xf32> to vector<16x1xf32>
    %cst_70 = arith.constant 6.400000e+01 : f32
    %243 = vector.broadcast %cst_70 : f32 to vector<16x1xf32>
    %244 = arith.divf %242, %243 : vector<16x1xf32>
    %245 = vector.broadcast %244 : vector<16x1xf32> to vector<16x64xf32>
    %246 = arith.subf %238, %245 : vector<16x64xf32>
    %247 = vector.broadcast %244 : vector<16x1xf32> to vector<16x64xf32>
    %248 = arith.subf %238, %247 : vector<16x64xf32>
    %249 = arith.mulf %246, %248 : vector<16x64xf32>
    %cst_71 = arith.constant dense<0.000000e+00> : vector<16xf32>
    %250 = vector.multi_reduction <add>, %249, %cst_71 [1] : vector<16x64xf32> to vector<16xf32>
    %251 = vector.shape_cast %250 : vector<16xf32> to vector<16x1xf32>
    %cst_72 = arith.constant 6.400000e+01 : f32
    %252 = vector.broadcast %cst_72 : f32 to vector<16x1xf32>
    %253 = arith.divf %251, %252 : vector<16x1xf32>
    %254 = vector.broadcast %244 : vector<16x1xf32> to vector<16x64xf32>
    %255 = arith.subf %238, %254 : vector<16x64xf32>
    %cst_73 = arith.constant 9.99999974E-6 : f32
    %256 = vector.broadcast %cst_73 : f32 to vector<16x1xf32>
    %257 = arith.addf %253, %256 : vector<16x1xf32>
    %258 = math.rsqrt %257 : vector<16x1xf32>
    %259 = vector.broadcast %258 : vector<16x1xf32> to vector<16x64xf32>
    %260 = arith.mulf %255, %259 : vector<16x64xf32>
    %261 = vector.broadcast %239 : vector<1x64xf32> to vector<16x64xf32>
    %262 = arith.mulf %260, %261 : vector<16x64xf32>
    %263 = vector.broadcast %240 : vector<1x64xf32> to vector<16x64xf32>
    %264 = arith.addf %262, %263 : vector<16x64xf32>
    %265 = arith.truncf %264 : vector<16x64xf32> to vector<16x64xbf16>
    %c0_74 = arith.constant 0 : index
    %c0_75 = arith.constant 0 : index
    %266 = vector.load %arg11[%c0_74, %c0_75] : memref<64x256xbf16, #tpu.memory_space<vmem>>, vector<64x256xbf16>
    %cst_76 = arith.constant dense<0.000000e+00> : vector<16x256xf32>
    %267 = tpu.matmul %265, %266, %cst_76 {dimension_numbers = #tpu.dot_dimension_numbers<[1], [0], [0], [1], [0, 0, 1, 1], [], []>} : vector<16x64xbf16>, vector<64x256xbf16>, vector<16x256xf32> -> vector<16x256xf32>
    %c0_77 = arith.constant 0 : index
    %c0_78 = arith.constant 0 : index
    %268 = vector.load %arg12[%c0_77, %c0_78] : memref<1x256xf32, #tpu.memory_space<vmem>>, vector<1x256xf32>
    %269 = vector.broadcast %268 : vector<1x256xf32> to vector<16x256xf32>
    %270 = arith.addf %267, %269 : vector<16x256xf32>
    %cst_79 = arith.constant 5.000000e-01 : f32
    %271 = vector.broadcast %cst_79 : f32 to vector<16x256xf32>
    %272 = arith.mulf %271, %270 : vector<16x256xf32>
    %cst_80 = arith.constant 4.471500e-02 : f32
    %273 = vector.broadcast %cst_80 : f32 to vector<16x256xf32>
    %274 = arith.mulf %273, %270 : vector<16x256xf32>
    %275 = arith.mulf %274, %270 : vector<16x256xf32>
    %276 = arith.mulf %275, %270 : vector<16x256xf32>
    %277 = arith.addf %270, %276 : vector<16x256xf32>
    %cst_81 = arith.constant 0.797884583 : f32
    %278 = vector.broadcast %cst_81 : f32 to vector<16x256xf32>
    %279 = arith.mulf %278, %277 : vector<16x256xf32>
    %280 = math.tanh %279 : vector<16x256xf32>
    %cst_82 = arith.constant 1.000000e+00 : f32
    %281 = vector.broadcast %cst_82 : f32 to vector<16x256xf32>
    %282 = arith.addf %281, %280 : vector<16x256xf32>
    %283 = arith.mulf %272, %282 : vector<16x256xf32>
    %284 = arith.truncf %283 : vector<16x256xf32> to vector<16x256xbf16>
    %c0_83 = arith.constant 0 : index
    %c0_84 = arith.constant 0 : index
    %285 = vector.load %arg13[%c0_83, %c0_84] : memref<256x64xbf16, #tpu.memory_space<vmem>>, vector<256x64xbf16>
    %cst_85 = arith.constant dense<0.000000e+00> : vector<16x64xf32>
    %286 = tpu.matmul %284, %285, %cst_85 {dimension_numbers = #tpu.dot_dimension_numbers<[1], [0], [0], [1], [0, 0, 1, 1], [], []>} : vector<16x256xbf16>, vector<256x64xbf16>, vector<16x64xf32> -> vector<16x64xf32>
    %c0_86 = arith.constant 0 : index
    %c0_87 = arith.constant 0 : index
    %287 = vector.load %arg14[%c0_86, %c0_87] : memref<1x64xf32, #tpu.memory_space<vmem>>, vector<1x64xf32>
    %288 = vector.broadcast %287 : vector<1x64xf32> to vector<16x64xf32>
    %289 = arith.addf %286, %288 : vector<16x64xf32>
    %290 = arith.addf %238, %289 : vector<16x64xf32>
    %291 = vector.shape_cast %290 : vector<16x64xf32> to vector<1x16x64xf32>
    %c0_88 = arith.constant 0 : index
    %c0_89 = arith.constant 0 : index
    %c0_90 = arith.constant 0 : index
    %c0_91 = arith.constant 0 : index
    %292 = vector.load %arg15[%c0_88, %c0_89, %c0_90, %c0_91] : memref<1x1x16x64xf32, #tpu.memory_space<vmem>>, vector<1x1x16x64xf32>
    %293 = vector.shape_cast %292 : vector<1x1x16x64xf32> to vector<1x16x64xf32>
    %294 = vector.shape_cast %291 : vector<1x16x64xf32> to vector<1x1x16x64xf32>
    tpu.vector_store %arg15[%c0_88, %c0_89, %c0_90, %c0_91], %294 {strides = array<i32>} : memref<1x1x16x64xf32, #tpu.memory_space<vmem>>, vector<1x1x16x64xf32>,
    return
  }
  func.func @transform_0(%arg0: i32) -> (i32, i32, i32, i32) {
    %c0_i32 = arith.constant 0 : i32
    %c0_i32_0 = arith.constant 0 : i32
    %c0_i32_1 = arith.constant 0 : i32
    %c0_i32_2 = arith.constant 0 : i32
    return %arg0, %c0_i32, %c0_i32_0, %c0_i32_1 : i32, i32, i32, i32
  }
  func.func @transform_1(%arg0: i32) -> (i32, i32, i32, i32) {
    %c0_i32 = arith.constant 0 : i32
    %c0_i32_0 = arith.constant 0 : i32
    %c0_i32_1 = arith.constant 0 : i32
    %c0_i32_2 = arith.constant 0 : i32
    %c0_i32_3 = arith.constant 0 : i32
    return %c0_i32, %c0_i32_0, %c0_i32_1, %c0_i32_2 : i32, i32, i32, i32
  }
  func.func @transform_2(%arg0: i32) -> (i32, i32, i32, i32) {
    %c0_i32 = arith.constant 0 : i32
    %c0_i32_0 = arith.constant 0 : i32
    %c0_i32_1 = arith.constant 0 : i32
    %c0_i32_2 = arith.constant 0 : i32
    %c0_i32_3 = arith.constant 0 : i32
    return %c0_i32, %c0_i32_0, %c0_i32_1, %c0_i32_2 : i32, i32, i32, i32
  }
  func.func @transform_3(%arg0: i32) -> (i32, i32, i32, i32) {
    %c0_i32 = arith.constant 0 : i32
    %c0_i32_0 = arith.constant 0 : i32
    %c0_i32_1 = arith.constant 0 : i32
    %c0_i32_2 = arith.constant 0 : i32
    %c0_i32_3 = arith.constant 0 : i32
    return %c0_i32, %c0_i32_0, %c0_i32_1, %c0_i32_2 : i32, i32, i32, i32
  }
  func.func @transform_4(%arg0: i32) -> (i32, i32, i32) {
    %c0_i32 = arith.constant 0 : i32
    %c0_i32_0 = arith.constant 0 : i32
    %c0_i32_1 = arith.constant 0 : i32
    %c0_i32_2 = arith.constant 0 : i32
    return %c0_i32, %c0_i32_0, %c0_i32_1 : i32, i32, i32
  }
  func.func @transform_5(%arg0: i32) -> (i32, i32) {
    %c0_i32 = arith.constant 0 : i32
    %c0_i32_0 = arith.constant 0 : i32
    %c0_i32_1 = arith.constant 0 : i32
    return %c0_i32, %c0_i32_0 : i32, i32
  }
  func.func @transform_6(%arg0: i32) -> (i32, i32) {
    %c0_i32 = arith.constant 0 : i32
    %c0_i32_0 = arith.constant 0 : i32
    %c0_i32_1 = arith.constant 0 : i32
    return %c0_i32, %c0_i32_0 : i32, i32
  }
  func.func @transform_7(%arg0: i32) -> (i32, i32) {
    %c0_i32 = arith.constant 0 : i32
    %c0_i32_0 = arith.constant 0 : i32
    %c0_i32_1 = arith.constant 0 : i32
    return %c0_i32, %c0_i32_0 : i32, i32
  }
  func.func @transform_8(%arg0: i32) -> (i32, i32) {
    %c0_i32 = arith.constant 0 : i32
    %c0_i32_0 = arith.constant 0 : i32
    %c0_i32_1 = arith.constant 0 : i32
    return %c0_i32, %c0_i32_0 : i32, i32
  }
  func.func @transform_9(%arg0: i32) -> (i32, i32) {
    %c0_i32 = arith.constant 0 : i32
    %c0_i32_0 = arith.constant 0 : i32
    %c0_i32_1 = arith.constant 0 : i32
    return %c0_i32, %c0_i32_0 : i32, i32
  }
  func.func @transform_10(%arg0: i32) -> (i32, i32) {
    %c0_i32 = arith.constant 0 : i32
    %c0_i32_0 = arith.constant 0 : i32
    %c0_i32_1 = arith.constant 0 : i32
    return %c0_i32, %c0_i32_0 : i32, i32
  }
  func.func @transform_11(%arg0: i32) -> (i32, i32) {
    %c0_i32 = arith.constant 0 : i32
    %c0_i32_0 = arith.constant 0 : i32
    %c0_i32_1 = arith.constant 0 : i32
    return %c0_i32, %c0_i32_0 : i32, i32
  }
  func.func @transform_12(%arg0: i32) -> (i32, i32) {
    %c0_i32 = arith.constant 0 : i32
    %c0_i32_0 = arith.constant 0 : i32
    %c0_i32_1 = arith.constant 0 : i32
    return %c0_i32, %c0_i32_0 : i32, i32
  }
  func.func @transform_13(%arg0: i32) -> (i32, i32) {
    %c0_i32 = arith.constant 0 : i32
    %c0_i32_0 = arith.constant 0 : i32
    %c0_i32_1 = arith.constant 0 : i32
    return %c0_i32, %c0_i32_0 : i32, i32
  }
  func.func @transform_14(%arg0: i32) -> (i32, i32, i32, i32) {
    %c0_i32 = arith.constant 0 : i32
    %c0_i32_0 = arith.constant 0 : i32
    %c0_i32_1 = arith.constant 0 : i32
    %c0_i32_2 = arith.constant 0 : i32
    return %arg0, %c0_i32, %c0_i32_0, %c0_i32_1 : i32, i32, i32, i32
  }
}

</mosaic_0001>

<llo_original>
// kernel: swin_forward.7
$region0: #{swin_forward.7}
  #allocation0 [shape = 'u32[]', space=smem, size = 0x4, offset = 0x4, fixed_abs, tag = 'smem constant byte address 0x4 - core index']
  #allocation1 [shape = 'u32[72,128]{1,0:T(1,128)}', space=vmem, size = 0x9000, scoped, tag = 'internal scratch']
  %s0 = inlined_call_operand.vmem [shape: f32[128,48], index: 0, kind: input, shape index: {}]
  %s1 = inlined_call_operand.vmem [shape: bf16[48,32], index: 1, kind: input, shape index: {}]
  %s2 = inlined_call_operand.vmem [shape: f32[1,32], index: 2, kind: input, shape index: {}, may-alias: {2,4}]
  %s3 = inlined_call_operand.vmem [shape: f32[1,32], index: 3, kind: input, shape index: {}]
  %s4 = inlined_call_operand.vmem [shape: f32[1,32], index: 4, kind: input, shape index: {}, may-alias: {2,4}]
  %s5 = inlined_call_operand.vmem [shape: f32[128,32], index: 5, kind: output, shape index: {}]
  %s6 = sld [smem:[#allocation0]]
  $region30: #{swin_forward.7} parent=0
    _
  %s8 = ssub.s32 1, %s6
  %s9 = scalar_select 0, %s8, %s6
  // Predicated region
  $region2: #{swin_forward.7} parent=0 // pred_check
    _
  $region3: #{swin_forward.7} parent=0 // pred_check_branch
    %11 = sbr.rel (0) target = $region5
  $region4: #{swin_forward.7} parent=0 // pred_region
    _
  $region5: #{swin_forward.7} parent=0 // pred_fallthru
    _
  // Predicated region
  $region6: #{swin_forward.7} parent=0 // pred_check
    _
  $region7: #{swin_forward.7} parent=0 // pred_check_branch
    %13 = sbr.rel (0) target = $region9
  $region8: #{swin_forward.7} parent=0 // pred_region
    _
  $region9: #{swin_forward.7} parent=0 // pred_fallthru
    _
  // Predicated region
  $region10: #{swin_forward.7} parent=0 // pred_check
    _
  $region11: #{swin_forward.7} parent=0 // pred_check_branch
    %15 = sbr.rel (0) target = $region13
  $region12: #{swin_forward.7} parent=0 // pred_region
    _
  $region13: #{swin_forward.7} parent=0 // pred_fallthru
    _
  // Predicated region
  $region14: #{swin_forward.7} parent=0 // pred_check
    _
  $region15: #{swin_forward.7} parent=0 // pred_check_branch
    %17 = sbr.rel (0) target = $region17
  $region16: #{swin_forward.7} parent=0 // pred_region
    _
  $region17: #{swin_forward.7} parent=0 // pred_fallthru
    _
  // Predicated region
  $region18: #{swin_forward.7} parent=0 // pred_check
    _
  $region19: #{swin_forward.7} parent=0 // pred_check_branch
    %19 = sbr.rel (0) target = $region21
  $region20: #{swin_forward.7} parent=0 // pred_region
    _
  $region21: #{swin_forward.7} parent=0 // pred_fallthru
    _
  %v21 = vld [vmem:[%s0] sm:$0xff]
  %v22 = vld [vmem:[%s0 + $0x8] sm:$0xff]
  %v23 = vld [vmem:[%s0 + $0x10] sm:$0xff]
  %v24 = vld [vmem:[%s0 + $0x18] sm:$0xff]
  %v25 = vld [vmem:[%s0 + $0x20] sm:$0xff]
  %v26 = vld [vmem:[%s0 + $0x28] sm:$0xff]
  %v27 = vld [vmem:[%s0 + $0x30] sm:$0xff]
  %v28 = vld [vmem:[%s0 + $0x38] sm:$0xff]
  %v29 = vld [vmem:[%s0 + $0x40] sm:$0xff]
  %v30 = vld [vmem:[%s0 + $0x48] sm:$0xff]
  %v31 = vld [vmem:[%s0 + $0x50] sm:$0xff]
  %v32 = vld [vmem:[%s0 + $0x58] sm:$0xff]
  %v33 = vld [vmem:[%s0 + $0x60] sm:$0xff]
  %v34 = vld [vmem:[%s0 + $0x68] sm:$0xff]
  %v35 = vld [vmem:[%s0 + $0x70] sm:$0xff]
  %v36 = vld [vmem:[%s0 + $0x78] sm:$0xff]
  %v37 = vpack.c.bf16 %v22, %v21
  %v38 = vpack.c.bf16 %v24, %v23
  %v39 = vpack.c.bf16 %v26, %v25
  %v40 = vpack.c.bf16 %v28, %v27
  %v41 = vpack.c.bf16 %v30, %v29
  %v42 = vpack.c.bf16 %v32, %v31
  %v43 = vpack.c.bf16 %v34, %v33
  %v44 = vpack.c.bf16 %v36, %v35
  %v45 = vld [vmem:[%s1] sm:$0xf]
  %v46 = vld [vmem:[%s1 + $0x4] sm:$0xf]
  %v47 = vld [vmem:[%s1 + $0x8] sm:$0xf]
  %v48 = vld [vmem:[%s1 + $0xc] sm:$0xf]
  %v49 = vld [vmem:[%s1 + $0x10] sm:$0xf]
  %v50 = vld [vmem:[%s1 + $0x14] sm:$0xf]
  %v51 = vld [vmem:[%s2] sm:$0x1]
  %v53 = vperm.slane %v51, 0
  %v61 = vunpack.c.l.b16 %v45
  %v62 = vunpack.c.l.b16 %v46
  %v63 = vunpack.c.l.b16 %v47
  %v64 = vunpack.c.l.b16 %v48
  %v65 = vunpack.c.l.b16 %v49
  %v66 = vunpack.c.l.b16 %v50
  %v67 = vpack.c.b16 %v62, %v61
  %v68 = vpack.c.b16 %v64, %v63
  %v69 = vpack.c.b16 %v66, %v65
  %vm73 = vcmask 392192
  %v75 = vsel %vm73, %v37, 0
  %v78 = vsel %vm73, %v38, 0
  %v81 = vsel %vm73, %v39, 0
  %v84 = vsel %vm73, %v40, 0
  %v87 = vsel %vm73, %v41, 0
  %v90 = vsel %vm73, %v42, 0
  %v93 = vsel %vm73, %v43, 0
  %v96 = vsel %vm73, %v44, 0
  %98 = vmatpush.bf16.msra.mxu0 0
  %99 = vmatpush.bf16.msra.mxu0 0
  %100 = vmatpush.bf16.msra.mxu0 0
  %101 = vmatpush.bf16.msra.mxu0 0
  %102 = vmatpush.bf16.msra.mxu0 0
  %103 = vmatpush.bf16.msra.mxu0 %v69
  %104 = vmatpush.bf16.msra.mxu0 %v68
  %105 = vmatpush.bf16.msra.mxu0 %v67
  %106 = vmatmul.bf16.gmra.mxu0 %v75
  %v107 = vpop.f32.mrf.mxu0
  %v108 = vadd.f32 %v53, %v107
  %v109 = vpop.f32.mrf.mxu0
  %v110 = vadd.f32 %v53, %v109
  %111 = vmatmul.bf16.gmra.mxu0 %v78
  %v112 = vpop.f32.mrf.mxu0
  %v113 = vadd.f32 %v53, %v112
  %v114 = vpop.f32.mrf.mxu0
  %v115 = vadd.f32 %v53, %v114
  %116 = vmatmul.bf16.gmra.mxu0 %v81
  %v117 = vpop.f32.mrf.mxu0
  %v118 = vadd.f32 %v53, %v117
  %v119 = vpop.f32.mrf.mxu0
  %v120 = vadd.f32 %v53, %v119
  %121 = vmatmul.bf16.gmra.mxu0 %v84
  %v122 = vpop.f32.mrf.mxu0
  %v123 = vadd.f32 %v53, %v122
  %v124 = vpop.f32.mrf.mxu0
  %v125 = vadd.f32 %v53, %v124
  %126 = vmatmul.bf16.gmra.mxu0 %v87
  %v127 = vpop.f32.mrf.mxu0
  %v128 = vadd.f32 %v53, %v127
  %v129 = vpop.f32.mrf.mxu0
  %v130 = vadd.f32 %v53, %v129
  %131 = vmatmul.bf16.gmra.mxu0 %v90
  %v132 = vpop.f32.mrf.mxu0
  %v133 = vadd.f32 %v53, %v132
  %v134 = vpop.f32.mrf.mxu0
  %v135 = vadd.f32 %v53, %v134
  %136 = vmatmul.bf16.gmra.mxu0 %v93
  %v137 = vpop.f32.mrf.mxu0
  %v138 = vadd.f32 %v53, %v137
  %v139 = vpop.f32.mrf.mxu0
  %v140 = vadd.f32 %v53, %v139
  %141 = vmatmul.bf16.gmra.mxu0 %v96
  %v142 = vpop.f32.mrf.mxu0
  %v143 = vadd.f32 %v53, %v142
  %v144 = vpop.f32.mrf.mxu0
  %v145 = vadd.f32 %v53, %v144
  %146 = vdwg.mxu0
  %v147 = vld [vmem:[%s3] sm:$0x1]
  %v148 = vld [vmem:[%s4] sm:$0x1]
  %vm149 = vcmask 261120
  %v150 = vsel %vm149, %v108, 0.0
  %151 = vadd.xlane.f32.xlu0 %v150
  %v152 = vpop.xlane.xlu0 %151
  %v153 = vsel %vm149, %v110, 0.0
  %154 = vadd.xlane.f32.xlu0 %v153
  %v155 = vpop.xlane.xlu0 %154
  %v156 = vsel %vm149, %v113, 0.0
  %157 = vadd.xlane.f32.xlu0 %v156
  %v158 = vpop.xlane.xlu0 %157
  %v159 = vsel %vm149, %v115, 0.0
  %160 = vadd.xlane.f32.xlu0 %v159
  %v161 = vpop.xlane.xlu0 %160
  %v162 = vsel %vm149, %v118, 0.0
  %163 = vadd.xlane.f32.xlu0 %v162
  %v164 = vpop.xlane.xlu0 %163
  %v165 = vsel %vm149, %v120, 0.0
  %166 = vadd.xlane.f32.xlu0 %v165
  %v167 = vpop.xlane.xlu0 %166
  %v168 = vsel %vm149, %v123, 0.0
  %169 = vadd.xlane.f32.xlu0 %v168
  %v170 = vpop.xlane.xlu0 %169
  %v171 = vsel %vm149, %v125, 0.0
  %172 = vadd.xlane.f32.xlu0 %v171
  %v173 = vpop.xlane.xlu0 %172
  %v174 = vsel %vm149, %v128, 0.0
  %175 = vadd.xlane.f32.xlu0 %v174
  %v176 = vpop.xlane.xlu0 %175
  %v177 = vsel %vm149, %v130, 0.0
  %178 = vadd.xlane.f32.xlu0 %v177
  %v179 = vpop.xlane.xlu0 %178
  %v180 = vsel %vm149, %v133, 0.0
  %181 = vadd.xlane.f32.xlu0 %v180
  %v182 = vpop.xlane.xlu0 %181
  %v183 = vsel %vm149, %v135, 0.0
  %184 = vadd.xlane.f32.xlu0 %v183
  %v185 = vpop.xlane.xlu0 %184
  %v186 = vsel %vm149, %v138, 0.0
  %187 = vadd.xlane.f32.xlu0 %v186
  %v188 = vpop.xlane.xlu0 %187
  %v189 = vsel %vm149, %v140, 0.0
  %190 = vadd.xlane.f32.xlu0 %v189
  %v191 = vpop.xlane.xlu0 %190
  %v192 = vsel %vm149, %v143, 0.0
  %193 = vadd.xlane.f32.xlu0 %v192
  %v194 = vpop.xlane.xlu0 %193
  %v195 = vsel %vm149, %v145, 0.0
  %196 = vadd.xlane.f32.xlu0 %v195
  %v197 = vpop.xlane.xlu0 %196
  %v198 = vrcp.pop 32.0
  %v199 = vmul.f32 32.0, %v198
  %v200 = vsub.f32 1.0, %v199
  %v201 = vmul.f32 %v198, %v200
  %v202 = vadd.f32 %v198, %v201
  %vm203 = vweird.f32 %v198
  %v204 = vsel %vm203, %v198, %v202
  %v205 = vmul.f32 %v152, %v204
  %v206 = vmul.f32 %v155, %v204
  %v207 = vmul.f32 %v158, %v204
  %v208 = vmul.f32 %v161, %v204
  %v209 = vmul.f32 %v164, %v204
  %v210 = vmul.f32 %v167, %v204
  %v211 = vmul.f32 %v170, %v204
  %v212 = vmul.f32 %v173, %v204
  %v213 = vmul.f32 %v176, %v204
  %v214 = vmul.f32 %v179, %v204
  %v215 = vmul.f32 %v182, %v204
  %v216 = vmul.f32 %v185, %v204
  %v217 = vmul.f32 %v188, %v204
  %v218 = vmul.f32 %v191, %v204
  %v219 = vmul.f32 %v194, %v204
  %v220 = vmul.f32 %v197, %v204
  %v221 = vsub.f32 %v108, %v205
  %v222 = vsub.f32 %v110, %v206
  %v223 = vsub.f32 %v113, %v207
  %v224 = vsub.f32 %v115, %v208
  %v225 = vsub.f32 %v118, %v209
  %v226 = vsub.f32 %v120, %v210
  %v227 = vsub.f32 %v123, %v211
  %v228 = vsub.f32 %v125, %v212
  %v229 = vsub.f32 %v128, %v213
  %v230 = vsub.f32 %v130, %v214
  %v231 = vsub.f32 %v133, %v215
  %v232 = vsub.f32 %v135, %v216
  %v233 = vsub.f32 %v138, %v217
  %v234 = vsub.f32 %v140, %v218
  %v235 = vsub.f32 %v143, %v219
  %v236 = vsub.f32 %v145, %v220
  %v237 = vmul.f32 %v221, %v221
  %v238 = vmul.f32 %v222, %v222
  %v239 = vmul.f32 %v223, %v223
  %v240 = vmul.f32 %v224, %v224
  %v241 = vmul.f32 %v225, %v225
  %v242 = vmul.f32 %v226, %v226
  %v243 = vmul.f32 %v227, %v227
  %v244 = vmul.f32 %v228, %v228
  %v245 = vmul.f32 %v229, %v229
  %v246 = vmul.f32 %v230, %v230
  %v247 = vmul.f32 %v231, %v231
  %v248 = vmul.f32 %v232, %v232
  %v249 = vmul.f32 %v233, %v233
  %v250 = vmul.f32 %v234, %v234
  %v251 = vmul.f32 %v235, %v235
  %v252 = vmul.f32 %v236, %v236
  %v253 = vsel %vm149, %v237, 0.0
  %254 = vadd.xlane.f32.xlu0 %v253
  %v255 = vpop.xlane.xlu0 %254
  %v256 = vsel %vm149, %v238, 0.0
  %257 = vadd.xlane.f32.xlu0 %v256
  %v258 = vpop.xlane.xlu0 %257
  %v259 = vsel %vm149, %v239, 0.0
  %260 = vadd.xlane.f32.xlu0 %v259
  %v261 = vpop.xlane.xlu0 %260
  %v262 = vsel %vm149, %v240, 0.0
  %263 = vadd.xlane.f32.xlu0 %v262
  %v264 = vpop.xlane.xlu0 %263
  %v265 = vsel %vm149, %v241, 0.0
  %266 = vadd.xlane.f32.xlu0 %v265
  %v267 = vpop.xlane.xlu0 %266
  %v268 = vsel %vm149, %v242, 0.0
  %269 = vadd.xlane.f32.xlu0 %v268
  %v270 = vpop.xlane.xlu0 %269
  %v271 = vsel %vm149, %v243, 0.0
  %272 = vadd.xlane.f32.xlu0 %v271
  %v273 = vpop.xlane.xlu0 %272
  %v274 = vsel %vm149, %v244, 0.0
  %275 = vadd.xlane.f32.xlu0 %v274
  %v276 = vpop.xlane.xlu0 %275
  %v277 = vsel %vm149, %v245, 0.0
  %278 = vadd.xlane.f32.xlu0 %v277
  %v279 = vpop.xlane.xlu0 %278
  %v280 = vsel %vm149, %v246, 0.0
  %281 = vadd.xlane.f32.xlu0 %v280
  %v282 = vpop.xlane.xlu0 %281
  %v283 = vsel %vm149, %v247, 0.0
  %284 = vadd.xlane.f32.xlu0 %v283
  %v285 = vpop.xlane.xlu0 %284
  %v286 = vsel %vm149, %v248, 0.0
  %287 = vadd.xlane.f32.xlu0 %v286
  %v288 = vpop.xlane.xlu0 %287
  %v289 = vsel %vm149, %v249, 0.0
  %290 = vadd.xlane.f32.xlu0 %v289
  %v291 = vpop.xlane.xlu0 %290
  %v292 = vsel %vm149, %v250, 0.0
  %293 = vadd.xlane.f32.xlu0 %v292
  %v294 = vpop.xlane.xlu0 %293
  %v295 = vsel %vm149, %v251, 0.0
  %296 = vadd.xlane.f32.xlu0 %v295
  %v297 = vpop.xlane.xlu0 %296
  %v298 = vsel %vm149, %v252, 0.0
  %299 = vadd.xlane.f32.xlu0 %v298
  %v300 = vpop.xlane.xlu0 %299
  %v301 = vmul.f32 %v255, %v204
  %v302 = vmul.f32 %v258, %v204
  %v303 = vmul.f32 %v261, %v204
  %v304 = vmul.f32 %v264, %v204
  %v305 = vmul.f32 %v267, %v204
  %v306 = vmul.f32 %v270, %v204
  %v307 = vmul.f32 %v273, %v204
  %v308 = vmul.f32 %v276, %v204
  %v309 = vmul.f32 %v279, %v204
  %v310 = vmul.f32 %v282, %v204
  %v311 = vmul.f32 %v285, %v204
  %v312 = vmul.f32 %v288, %v204
  %v313 = vmul.f32 %v291, %v204
  %v314 = vmul.f32 %v294, %v204
  %v315 = vmul.f32 %v297, %v204
  %v316 = vmul.f32 %v300, %v204
  %v317 = vadd.f32 %v301, 1e-05
  %v318 = vadd.f32 %v302, 1e-05
  %v319 = vadd.f32 %v303, 1e-05
  %v320 = vadd.f32 %v304, 1e-05
  %v321 = vadd.f32 %v305, 1e-05
  %v322 = vadd.f32 %v306, 1e-05
  %v323 = vadd.f32 %v307, 1e-05
  %v324 = vadd.f32 %v308, 1e-05
  %v325 = vadd.f32 %v309, 1e-05
  %v326 = vadd.f32 %v310, 1e-05
  %v327 = vadd.f32 %v311, 1e-05
  %v328 = vadd.f32 %v312, 1e-05
  %v329 = vadd.f32 %v313, 1e-05
  %v330 = vadd.f32 %v314, 1e-05
  %v331 = vadd.f32 %v315, 1e-05
  %v332 = vadd.f32 %v316, 1e-05
  %v333 = vrsqrt.pop %v317
  %v334 = vmul.f32 %v333, %v317
  %v335 = vmul.f32 %v334, %v333
  %v336 = vmul.f32 0.5, %v335
  %v337 = vsub.f32 1.5, %v336
  %v338 = vmul.f32 %v333, %v337
  %vm339 = vweird.f32 %v317
  %vm340 = vweird.f32 %v333
  %vm341 = vmor %vm339, %vm340
  %v342 = vsel %vm341, %v333, %v338
  %v343 = vrsqrt.pop %v318
  %v344 = vmul.f32 %v343, %v318
  %v345 = vmul.f32 %v344, %v343
  %v346 = vmul.f32 0.5, %v345
  %v347 = vsub.f32 1.5, %v346
  %v348 = vmul.f32 %v343, %v347
  %vm349 = vweird.f32 %v318
  %vm350 = vweird.f32 %v343
  %vm351 = vmor %vm349, %vm350
  %v352 = vsel %vm351, %v343, %v348
  %v353 = vrsqrt.pop %v319
  %v354 = vmul.f32 %v353, %v319
  %v355 = vmul.f32 %v354, %v353
  %v356 = vmul.f32 0.5, %v355
  %v357 = vsub.f32 1.5, %v356
  %v358 = vmul.f32 %v353, %v357
  %vm359 = vweird.f32 %v319
  %vm360 = vweird.f32 %v353
  %vm361 = vmor %vm359, %vm360
  %v362 = vsel %vm361, %v353, %v358
  %v363 = vrsqrt.pop %v320
  %v364 = vmul.f32 %v363, %v320
  %v365 = vmul.f32 %v364, %v363
  %v366 = vmul.f32 0.5, %v365
  %v367 = vsub.f32 1.5, %v366
  %v368 = vmul.f32 %v363, %v367
  %vm369 = vweird.f32 %v320
  %vm370 = vweird.f32 %v363
  %vm371 = vmor %vm369, %vm370
  %v372 = vsel %vm371, %v363, %v368
  %v373 = vrsqrt.pop %v321
  %v374 = vmul.f32 %v373, %v321
  %v375 = vmul.f32 %v374, %v373
  %v376 = vmul.f32 0.5, %v375
  %v377 = vsub.f32 1.5, %v376
  %v378 = vmul.f32 %v373, %v377
  %vm379 = vweird.f32 %v321
  %vm380 = vweird.f32 %v373
  %vm381 = vmor %vm379, %vm380
  %v382 = vsel %vm381, %v373, %v378
  %v383 = vrsqrt.pop %v322
  %v384 = vmul.f32 %v383, %v322
  %v385 = vmul.f32 %v384, %v383
  %v386 = vmul.f32 0.5, %v385
  %v387 = vsub.f32 1.5, %v386
  %v388 = vmul.f32 %v383, %v387
  %vm389 = vweird.f32 %v322
  %vm390 = vweird.f32 %v383
  %vm391 = vmor %vm389, %vm390
  %v392 = vsel %vm391, %v383, %v388
  %v393 = vrsqrt.pop %v323
  %v394 = vmul.f32 %v393, %v323
  %v395 = vmul.f32 %v394, %v393
  %v396 = vmul.f32 0.5, %v395
  %v397 = vsub.f32 1.5, %v396
  %v398 = vmul.f32 %v393, %v397
  %vm399 = vweird.f32 %v323
  %vm400 = vweird.f32 %v393
  %vm401 = vmor %vm399, %vm400
  %v402 = vsel %vm401, %v393, %v398
  %v403 = vrsqrt.pop %v324
  %v404 = vmul.f32 %v403, %v324
  %v405 = vmul.f32 %v404, %v403
  %v406 = vmul.f32 0.5, %v405
  %v407 = vsub.f32 1.5, %v406
  %v408 = vmul.f32 %v403, %v407
  %vm409 = vweird.f32 %v324
  %vm410 = vweird.f32 %v403
  %vm411 = vmor %vm409, %vm410
  %v412 = vsel %vm411, %v403, %v408
  %v413 = vrsqrt.pop %v325
  %v414 = vmul.f32 %v413, %v325
  %v415 = vmul.f32 %v414, %v413
  %v416 = vmul.f32 0.5, %v415
  %v417 = vsub.f32 1.5, %v416
  %v418 = vmul.f32 %v413, %v417
  %vm419 = vweird.f32 %v325
  %vm420 = vweird.f32 %v413
  %vm421 = vmor %vm419, %vm420
  %v422 = vsel %vm421, %v413, %v418
  %v423 = vrsqrt.pop %v326
  %v424 = vmul.f32 %v423, %v326
  %v425 = vmul.f32 %v424, %v423
  %v426 = vmul.f32 0.5, %v425
  %v427 = vsub.f32 1.5, %v426
  %v428 = vmul.f32 %v423, %v427
  %vm429 = vweird.f32 %v326
  %vm430 = vweird.f32 %v423
  %vm431 = vmor %vm429, %vm430
  %v432 = vsel %vm431, %v423, %v428
  %v433 = vrsqrt.pop %v327
  %v434 = vmul.f32 %v433, %v327
  %v435 = vmul.f32 %v434, %v433
  %v436 = vmul.f32 0.5, %v435
  %v437 = vsub.f32 1.5, %v436
  %v438 = vmul.f32 %v433, %v437
  %vm439 = vweird.f32 %v327
  %vm440 = vweird.f32 %v433
  %vm441 = vmor %vm439, %vm440
  %v442 = vsel %vm441, %v433, %v438
  %v443 = vrsqrt.pop %v328
  %v444 = vmul.f32 %v443, %v328
  %v445 = vmul.f32 %v444, %v443
  %v446 = vmul.f32 0.5, %v445
  %v447 = vsub.f32 1.5, %v446
  %v448 = vmul.f32 %v443, %v447
  %vm449 = vweird.f32 %v328
  %vm450 = vweird.f32 %v443
  %vm451 = vmor %vm449, %vm450
  %v452 = vsel %vm451, %v443, %v448
  %v453 = vrsqrt.pop %v329
  %v454 = vmul.f32 %v453, %v329
  %v455 = vmul.f32 %v454, %v453
  %v456 = vmul.f32 0.5, %v455
  %v457 = vsub.f32 1.5, %v456
  %v458 = vmul.f32 %v453, %v457
  %vm459 = vweird.f32 %v329
  %vm460 = vweird.f32 %v453
  %vm461 = vmor %vm459, %vm460
  %v462 = vsel %vm461, %v453, %v458
  %v463 = vrsqrt.pop %v330
  %v464 = vmul.f32 %v463, %v330
  %v465 = vmul.f32 %v464, %v463
  %v466 = vmul.f32 0.5, %v465
  %v467 = vsub.f32 1.5, %v466
  %v468 = vmul.f32 %v463, %v467
  %vm469 = vweird.f32 %v330
  %vm470 = vweird.f32 %v463
  %vm471 = vmor %vm469, %vm470
  %v472 = vsel %vm471, %v463, %v468
  %v473 = vrsqrt.pop %v331
  %v474 = vmul.f32 %v473, %v331
  %v475 = vmul.f32 %v474, %v473
  %v476 = vmul.f32 0.5, %v475
  %v477 = vsub.f32 1.5, %v476
  %v478 = vmul.f32 %v473, %v477
  %vm479 = vweird.f32 %v331
  %vm480 = vweird.f32 %v473
  %vm481 = vmor %vm479, %vm480
  %v482 = vsel %vm481, %v473, %v478
  %v483 = vrsqrt.pop %v332
  %v484 = vmul.f32 %v483, %v332
  %v485 = vmul.f32 %v484, %v483
  %v486 = vmul.f32 0.5, %v485
  %v487 = vsub.f32 1.5, %v486
  %v488 = vmul.f32 %v483, %v487
  %vm489 = vweird.f32 %v332
  %vm490 = vweird.f32 %v483
  %vm491 = vmor %vm489, %vm490
  %v492 = vsel %vm491, %v483, %v488
  %v493 = vmul.f32 %v221, %v342
  %v494 = vmul.f32 %v222, %v352
  %v495 = vmul.f32 %v223, %v362
  %v496 = vmul.f32 %v224, %v372
  %v497 = vmul.f32 %v225, %v382
  %v498 = vmul.f32 %v226, %v392
  %v499 = vmul.f32 %v227, %v402
  %v500 = vmul.f32 %v228, %v412
  %v501 = vmul.f32 %v229, %v422
  %v502 = vmul.f32 %v230, %v432
  %v503 = vmul.f32 %v231, %v442
  %v504 = vmul.f32 %v232, %v452
  %v505 = vmul.f32 %v233, %v462
  %v506 = vmul.f32 %v234, %v472
  %v507 = vmul.f32 %v235, %v482
  %v508 = vmul.f32 %v236, %v492
  %v510 = vperm.slane %v147, 0
  %v512 = vmul.f32 %v493, %v510
  %v513 = vmul.f32 %v494, %v510
  %v514 = vmul.f32 %v495, %v510
  %v515 = vmul.f32 %v496, %v510
  %v516 = vmul.f32 %v497, %v510
  %v517 = vmul.f32 %v498, %v510
  %v518 = vmul.f32 %v499, %v510
  %v519 = vmul.f32 %v500, %v510
  %v520 = vmul.f32 %v501, %v510
  %v521 = vmul.f32 %v502, %v510
  %v522 = vmul.f32 %v503, %v510
  %v523 = vmul.f32 %v504, %v510
  %v524 = vmul.f32 %v505, %v510
  %v525 = vmul.f32 %v506, %v510
  %v526 = vmul.f32 %v507, %v510
  %v527 = vmul.f32 %v508, %v510
  %v529 = vperm.slane %v148, 0
  %v531 = vadd.f32 %v512, %v529
  %v532 = vadd.f32 %v513, %v529
  %v533 = vadd.f32 %v514, %v529
  %v534 = vadd.f32 %v515, %v529
  %v535 = vadd.f32 %v516, %v529
  %v536 = vadd.f32 %v517, %v529
  %v537 = vadd.f32 %v518, %v529
  %v538 = vadd.f32 %v519, %v529
  %v539 = vadd.f32 %v520, %v529
  %v540 = vadd.f32 %v521, %v529
  %v541 = vadd.f32 %v522, %v529
  %v542 = vadd.f32 %v523, %v529
  %v543 = vadd.f32 %v524, %v529
  %v544 = vadd.f32 %v525, %v529
  %v545 = vadd.f32 %v526, %v529
  %v546 = vadd.f32 %v527, %v529
  %547 = vst.msk [vmem:[%s5] sm:$0xff] %vm149, %v531
  %548 = vst.msk [vmem:[%s5 + $0x8] sm:$0xff] %vm149, %v532
  %549 = vst.msk [vmem:[%s5 + $0x10] sm:$0xff] %vm149, %v533
  %550 = vst.msk [vmem:[%s5 + $0x18] sm:$0xff] %vm149, %v534
  %551 = vst.msk [vmem:[%s5 + $0x20] sm:$0xff] %vm149, %v535
  %552 = vst.msk [vmem:[%s5 + $0x28] sm:$0xff] %vm149, %v536
  %553 = vst.msk [vmem:[%s5 + $0x30] sm:$0xff] %vm149, %v537
  %554 = vst.msk [vmem:[%s5 + $0x38] sm:$0xff] %vm149, %v538
  %555 = vst.msk [vmem:[%s5 + $0x40] sm:$0xff] %vm149, %v539
  %556 = vst.msk [vmem:[%s5 + $0x48] sm:$0xff] %vm149, %v540
  %557 = vst.msk [vmem:[%s5 + $0x50] sm:$0xff] %vm149, %v541
  %558 = vst.msk [vmem:[%s5 + $0x58] sm:$0xff] %vm149, %v542
  %559 = vst.msk [vmem:[%s5 + $0x60] sm:$0xff] %vm149, %v543
  %560 = vst.msk [vmem:[%s5 + $0x68] sm:$0xff] %vm149, %v544
  %561 = vst.msk [vmem:[%s5 + $0x70] sm:$0xff] %vm149, %v545
  %562 = vst.msk [vmem:[%s5 + $0x78] sm:$0xff] %vm149, %v546
  // Predicated region
  $region22: #{swin_forward.7} parent=0 // pred_check
    _
  $region23: #{swin_forward.7} parent=0 // pred_check_branch
    %564 = sbr.rel (0) target = $region25
  $region24: #{swin_forward.7} parent=0 // pred_region
    _
  $region25: #{swin_forward.7} parent=0 // pred_fallthru
    _
  // Predicated region
  $region26: #{swin_forward.7} parent=0 // pred_check
    _
  $region27: #{swin_forward.7} parent=0 // pred_check_branch
    %566 = sbr.rel (0) target = $region29
  $region28: #{swin_forward.7} parent=0 // pred_region
    _
  $region29: #{swin_forward.7} parent=0 // pred_fallthru
    _

// kernel: swin_forward.8
$region0: #{swin_forward.8}
  #allocation0 [shape = 'u32[]', space=smem, size = 0x4, offset = 0x4, fixed_abs, tag = 'smem constant byte address 0x4 - core index']
  #allocation1 [shape = 'u32[72,128]{1,0:T(1,128)}', space=vmem, size = 0x9000, scoped, tag = 'internal scratch']
  %s0 = inlined_call_operand.vmem [shape: f32[2,4,16,32], index: 0, kind: input, shape index: {}]
  %s1 = inlined_call_operand.vmem [shape: f32[4,2,16,16], index: 1, kind: input, shape index: {}]
  %s2 = inlined_call_operand.vmem [shape: bf16[3,2,32,16], index: 2, kind: input, shape index: {}]
  %s3 = inlined_call_operand.vmem [shape: f32[3,2,1,16], index: 3, kind: input, shape index: {}]
  %s4 = inlined_call_operand.vmem [shape: bf16[2,16,32], index: 4, kind: input, shape index: {}]
  %s5 = inlined_call_operand.vmem [shape: f32[1,32], index: 5, kind: input, shape index: {}, may-alias: {5,7,9,13}]
  %s6 = inlined_call_operand.vmem [shape: f32[1,32], index: 6, kind: input, shape index: {}, may-alias: {6,8}]
  %s7 = inlined_call_operand.vmem [shape: f32[1,32], index: 7, kind: input, shape index: {}, may-alias: {5,7,9,13}]
  %s8 = inlined_call_operand.vmem [shape: f32[1,32], index: 8, kind: input, shape index: {}, may-alias: {6,8}]
  %s9 = inlined_call_operand.vmem [shape: f32[1,32], index: 9, kind: input, shape index: {}, may-alias: {5,7,9,13}]
  %s10 = inlined_call_operand.vmem [shape: bf16[32,128], index: 10, kind: input, shape index: {}]
  %s11 = inlined_call_operand.vmem [shape: f32[1,128], index: 11, kind: input, shape index: {}]
  %s12 = inlined_call_operand.vmem [shape: bf16[128,32], index: 12, kind: input, shape index: {}]
  %s13 = inlined_call_operand.vmem [shape: f32[1,32], index: 13, kind: input, shape index: {}, may-alias: {5,7,9,13}]
  %s14 = inlined_call_operand.vmem [shape: f32[2,4,16,32], index: 14, kind: output, shape index: {}]
  %s15 = sld [smem:[#allocation0]]
  $region89: #{swin_forward.8} parent=0
    _
  %s17 = ssub.s32 1, %s15
  %s18 = scalar_select 0, %s17, %s15
  loop: start=0, step=1, limit=4
  $region2: #{swin_forward.8} parent=0 // loop_pre_header
    _
  $region3: #{swin_forward.8} parent=0 // loop_header
    %s20 = sphi 0, %s24
    %p21 = scmp.ge.s32.totalorder %s20, 4
    %s30 = sphi 0, %s32
    %s33 = sphi 0, %s30
    %s34 = sphi 0, %s33
    %s50 = sphi 0, %s34
    %s54 = sphi 0, %s54
    %s56 = sphi 0, %s54
    %s57 = sphi 0, %s56
    %s71 = sphi 0, %s57
    %s75 = sphi 0, %s75
    %s77 = sphi 0, %s75
    %s78 = sphi 0, %s77
    %s92 = sphi 0, %s78
    %s96 = sphi 0, %s96
    %s98 = sphi 0, %s96
    %s99 = sphi 0, %s98
    %s113 = sphi 0, %s99
    %s117 = sphi 0, %s117
    %s119 = sphi 0, %s117
    %s120 = sphi 0, %s119
    %s134 = sphi 0, %s120
    %s138 = sphi 0, %s138
    %s140 = sphi 0, %s138
    %s141 = sphi 0, %s140
    %s155 = sphi 0, %s141
    %s159 = sphi 0, %s159
    %s161 = sphi 0, %s159
    %s162 = sphi 0, %s161
    %s176 = sphi 0, %s162
    %s180 = sphi 0, %s180
    %s182 = sphi 0, %s180
    %s183 = sphi 0, %s182
    %s197 = sphi 0, %s183
    %s201 = sphi 0, %s201
    %s203 = sphi 0, %s201
    %s204 = sphi 0, %s203
    %s218 = sphi 0, %s204
    %s222 = sphi 0, %s222
    %s224 = sphi 0, %s222
    %s225 = sphi 0, %s224
    %s239 = sphi 0, %s225
    %s243 = sphi 0, %s243
    %s245 = sphi 0, %s243
    %s246 = sphi 0, %s245
    %s260 = sphi 0, %s246
    %s264 = sphi 0, %s264
    %s266 = sphi 0, %s264
    %s267 = sphi 0, %s266
    %s281 = sphi 0, %s267
    %s285 = sphi 0, %s285
    %s287 = sphi 0, %s285
    %s288 = sphi 0, %s287
    %s302 = sphi 0, %s288
    %s306 = sphi 0, %s306
    %s308 = sphi 0, %s306
    %s309 = sphi 0, %s308
    %s323 = sphi 0, %s309
    %s329 = sphi 0, %s331
    %s332 = sphi 0, %s329
    %s333 = sphi 0, %s332
    %s349 = sphi 0, %s333
  $region4: #{swin_forward.8} parent=0 // loop_header_branch
    %23 = sbr.rel (%p21) target = $region8
  $region5: #{swin_forward.8} parent=0 // loop_body
    %s25 = ssub.s32 %s20, 1
    %s26 = ssub.s32 %s20, 2
    %s27 = sadd.s32 %s20, 1
    %s28 = ssub.s32 %s20, %s27
    %p29 = scmp.eq.s32.totalorder %s28, 0
    %s31 = sadd.s32 %s30, 1
    %s32 = scalar_select %p29, %s30, %s31
    %p35 = pneg %p29
    %p36 = scmp.eq.s32.totalorder %s20, 1
    %p37 = por %p35, %p36
    %p38 = scmp.ne.s32.totalorder %s30, %s33
    %p39 = scmp.eq.s32.totalorder %s20, 0
    %p40 = por %p38, %p39
    %p41 = scmp.ne.s32.totalorder %s30, %s33
    %p42 = scmp.eq.s32.totalorder %s25, 1
    %p43 = por %p41, %p42
    %p44 = scmp.ne.s32.totalorder %s33, %s34
    %p45 = scmp.eq.s32.totalorder %s25, 0
    %p46 = por %p44, %p45
    %p47 = scmp.ne.s32.totalorder %s33, %s34
    %p48 = scmp.eq.s32.totalorder %s26, 1
    %p49 = por %p47, %p48
    %p51 = scmp.ne.s32.totalorder %s34, %s50
    %p52 = scmp.eq.s32.totalorder %s26, 0
    %p53 = por %p51, %p52
    %s55 = sadd.s32 %s54, 1
    %p58 = scmp.eq.s32.totalorder %s20, 1
    %p59 = scmp.ne.s32.totalorder %s54, %s56
    %p60 = scmp.eq.s32.totalorder %s20, 0
    %p61 = por %p59, %p60
    %p62 = scmp.ne.s32.totalorder %s54, %s56
    %p63 = scmp.eq.s32.totalorder %s25, 1
    %p64 = por %p62, %p63
    %p65 = scmp.ne.s32.totalorder %s56, %s57
    %p66 = scmp.eq.s32.totalorder %s25, 0
    %p67 = por %p65, %p66
    %p68 = scmp.ne.s32.totalorder %s56, %s57
    %p69 = scmp.eq.s32.totalorder %s26, 1
    %p70 = por %p68, %p69
    %p72 = scmp.ne.s32.totalorder %s57, %s71
    %p73 = scmp.eq.s32.totalorder %s26, 0
    %p74 = por %p72, %p73
    %s76 = sadd.s32 %s75, 1
    %p79 = scmp.eq.s32.totalorder %s20, 1
    %p80 = scmp.ne.s32.totalorder %s75, %s77
    %p81 = scmp.eq.s32.totalorder %s20, 0
    %p82 = por %p80, %p81
    %p83 = scmp.ne.s32.totalorder %s75, %s77
    %p84 = scmp.eq.s32.totalorder %s25, 1
    %p85 = por %p83, %p84
    %p86 = scmp.ne.s32.totalorder %s77, %s78
    %p87 = scmp.eq.s32.totalorder %s25, 0
    %p88 = por %p86, %p87
    %p89 = scmp.ne.s32.totalorder %s77, %s78
    %p90 = scmp.eq.s32.totalorder %s26, 1
    %p91 = por %p89, %p90
    %p93 = scmp.ne.s32.totalorder %s78, %s92
    %p94 = scmp.eq.s32.totalorder %s26, 0
    %p95 = por %p93, %p94
    %s97 = sadd.s32 %s96, 1
    %p100 = scmp.eq.s32.totalorder %s20, 1
    %p101 = scmp.ne.s32.totalorder %s96, %s98
    %p102 = scmp.eq.s32.totalorder %s20, 0
    %p103 = por %p101, %p102
    %p104 = scmp.ne.s32.totalorder %s96, %s98
    %p105 = scmp.eq.s32.totalorder %s25, 1
    %p106 = por %p104, %p105
    %p107 = scmp.ne.s32.totalorder %s98, %s99
    %p108 = scmp.eq.s32.totalorder %s25, 0
    %p109 = por %p107, %p108
    %p110 = scmp.ne.s32.totalorder %s98, %s99
    %p111 = scmp.eq.s32.totalorder %s26, 1
    %p112 = por %p110, %p111
    %p114 = scmp.ne.s32.totalorder %s99, %s113
    %p115 = scmp.eq.s32.totalorder %s26, 0
    %p116 = por %p114, %p115
    %s118 = sadd.s32 %s117, 1
    %p121 = scmp.eq.s32.totalorder %s20, 1
    %p122 = scmp.ne.s32.totalorder %s117, %s119
    %p123 = scmp.eq.s32.totalorder %s20, 0
    %p124 = por %p122, %p123
    %p125 = scmp.ne.s32.totalorder %s117, %s119
    %p126 = scmp.eq.s32.totalorder %s25, 1
    %p127 = por %p125, %p126
    %p128 = scmp.ne.s32.totalorder %s119, %s120
    %p129 = scmp.eq.s32.totalorder %s25, 0
    %p130 = por %p128, %p129
    %p131 = scmp.ne.s32.totalorder %s119, %s120
    %p132 = scmp.eq.s32.totalorder %s26, 1
    %p133 = por %p131, %p132
    %p135 = scmp.ne.s32.totalorder %s120, %s134
    %p136 = scmp.eq.s32.totalorder %s26, 0
    %p137 = por %p135, %p136
    %s139 = sadd.s32 %s138, 1
    %p142 = scmp.eq.s32.totalorder %s20, 1
    %p143 = scmp.ne.s32.totalorder %s138, %s140
    %p144 = scmp.eq.s32.totalorder %s20, 0
    %p145 = por %p143, %p144
    %p146 = scmp.ne.s32.totalorder %s138, %s140
    %p147 = scmp.eq.s32.totalorder %s25, 1
    %p148 = por %p146, %p147
    %p149 = scmp.ne.s32.totalorder %s140, %s141
    %p150 = scmp.eq.s32.totalorder %s25, 0
    %p151 = por %p149, %p150
    %p152 = scmp.ne.s32.totalorder %s140, %s141
    %p153 = scmp.eq.s32.totalorder %s26, 1
    %p154 = por %p152, %p153
    %p156 = scmp.ne.s32.totalorder %s141, %s155
    %p157 = scmp.eq.s32.totalorder %s26, 0
    %p158 = por %p156, %p157
    %s160 = sadd.s32 %s159, 1
    %p163 = scmp.eq.s32.totalorder %s20, 1
    %p164 = scmp.ne.s32.totalorder %s159, %s161
    %p165 = scmp.eq.s32.totalorder %s20, 0
    %p166 = por %p164, %p165
    %p167 = scmp.ne.s32.totalorder %s159, %s161
    %p168 = scmp.eq.s32.totalorder %s25, 1
    %p169 = por %p167, %p168
    %p170 = scmp.ne.s32.totalorder %s161, %s162
    %p171 = scmp.eq.s32.totalorder %s25, 0
    %p172 = por %p170, %p171
    %p173 = scmp.ne.s32.totalorder %s161, %s162
    %p174 = scmp.eq.s32.totalorder %s26, 1
    %p175 = por %p173, %p174
    %p177 = scmp.ne.s32.totalorder %s162, %s176
    %p178 = scmp.eq.s32.totalorder %s26, 0
    %p179 = por %p177, %p178
    %s181 = sadd.s32 %s180, 1
    %p184 = scmp.eq.s32.totalorder %s20, 1
    %p185 = scmp.ne.s32.totalorder %s180, %s182
    %p186 = scmp.eq.s32.totalorder %s20, 0
    %p187 = por %p185, %p186
    %p188 = scmp.ne.s32.totalorder %s180, %s182
    %p189 = scmp.eq.s32.totalorder %s25, 1
    %p190 = por %p188, %p189
    %p191 = scmp.ne.s32.totalorder %s182, %s183
    %p192 = scmp.eq.s32.totalorder %s25, 0
    %p193 = por %p191, %p192
    %p194 = scmp.ne.s32.totalorder %s182, %s183
    %p195 = scmp.eq.s32.totalorder %s26, 1
    %p196 = por %p194, %p195
    %p198 = scmp.ne.s32.totalorder %s183, %s197
    %p199 = scmp.eq.s32.totalorder %s26, 0
    %p200 = por %p198, %p199
    %s202 = sadd.s32 %s201, 1
    %p205 = scmp.eq.s32.totalorder %s20, 1
    %p206 = scmp.ne.s32.totalorder %s201, %s203
    %p207 = scmp.eq.s32.totalorder %s20, 0
    %p208 = por %p206, %p207
    %p209 = scmp.ne.s32.totalorder %s201, %s203
    %p210 = scmp.eq.s32.totalorder %s25, 1
    %p211 = por %p209, %p210
    %p212 = scmp.ne.s32.totalorder %s203, %s204
    %p213 = scmp.eq.s32.totalorder %s25, 0
    %p214 = por %p212, %p213
    %p215 = scmp.ne.s32.totalorder %s203, %s204
    %p216 = scmp.eq.s32.totalorder %s26, 1
    %p217 = por %p215, %p216
    %p219 = scmp.ne.s32.totalorder %s204, %s218
    %p220 = scmp.eq.s32.totalorder %s26, 0
    %p221 = por %p219, %p220
    %s223 = sadd.s32 %s222, 1
    %p226 = scmp.eq.s32.totalorder %s20, 1
    %p227 = scmp.ne.s32.totalorder %s222, %s224
    %p228 = scmp.eq.s32.totalorder %s20, 0
    %p229 = por %p227, %p228
    %p230 = scmp.ne.s32.totalorder %s222, %s224
    %p231 = scmp.eq.s32.totalorder %s25, 1
    %p232 = por %p230, %p231
    %p233 = scmp.ne.s32.totalorder %s224, %s225
    %p234 = scmp.eq.s32.totalorder %s25, 0
    %p235 = por %p233, %p234
    %p236 = scmp.ne.s32.totalorder %s224, %s225
    %p237 = scmp.eq.s32.totalorder %s26, 1
    %p238 = por %p236, %p237
    %p240 = scmp.ne.s32.totalorder %s225, %s239
    %p241 = scmp.eq.s32.totalorder %s26, 0
    %p242 = por %p240, %p241
    %s244 = sadd.s32 %s243, 1
    %p247 = scmp.eq.s32.totalorder %s20, 1
    %p248 = scmp.ne.s32.totalorder %s243, %s245
    %p249 = scmp.eq.s32.totalorder %s20, 0
    %p250 = por %p248, %p249
    %p251 = scmp.ne.s32.totalorder %s243, %s245
    %p252 = scmp.eq.s32.totalorder %s25, 1
    %p253 = por %p251, %p252
    %p254 = scmp.ne.s32.totalorder %s245, %s246
    %p255 = scmp.eq.s32.totalorder %s25, 0
    %p256 = por %p254, %p255
    %p257 = scmp.ne.s32.totalorder %s245, %s246
    %p258 = scmp.eq.s32.totalorder %s26, 1
    %p259 = por %p257, %p258
    %p261 = scmp.ne.s32.totalorder %s246, %s260
    %p262 = scmp.eq.s32.totalorder %s26, 0
    %p263 = por %p261, %p262
    %s265 = sadd.s32 %s264, 1
    %p268 = scmp.eq.s32.totalorder %s20, 1
    %p269 = scmp.ne.s32.totalorder %s264, %s266
    %p270 = scmp.eq.s32.totalorder %s20, 0
    %p271 = por %p269, %p270
    %p272 = scmp.ne.s32.totalorder %s264, %s266
    %p273 = scmp.eq.s32.totalorder %s25, 1
    %p274 = por %p272, %p273
    %p275 = scmp.ne.s32.totalorder %s266, %s267
    %p276 = scmp.eq.s32.totalorder %s25, 0
    %p277 = por %p275, %p276
    %p278 = scmp.ne.s32.totalorder %s266, %s267
    %p279 = scmp.eq.s32.totalorder %s26, 1
    %p280 = por %p278, %p279
    %p282 = scmp.ne.s32.totalorder %s267, %s281
    %p283 = scmp.eq.s32.totalorder %s26, 0
    %p284 = por %p282, %p283
    %s286 = sadd.s32 %s285, 1
    %p289 = scmp.eq.s32.totalorder %s20, 1
    %p290 = scmp.ne.s32.totalorder %s285, %s287
    %p291 = scmp.eq.s32.totalorder %s20, 0
    %p292 = por %p290, %p291
    %p293 = scmp.ne.s32.totalorder %s285, %s287
    %p294 = scmp.eq.s32.totalorder %s25, 1
    %p295 = por %p293, %p294
    %p296 = scmp.ne.s32.totalorder %s287, %s288
    %p297 = scmp.eq.s32.totalorder %s25, 0
    %p298 = por %p296, %p297
    %p299 = scmp.ne.s32.totalorder %s287, %s288
    %p300 = scmp.eq.s32.totalorder %s26, 1
    %p301 = por %p299, %p300
    %p303 = scmp.ne.s32.totalorder %s288, %s302
    %p304 = scmp.eq.s32.totalorder %s26, 0
    %p305 = por %p303, %p304
    %s307 = sadd.s32 %s306, 1
    %p310 = scmp.eq.s32.totalorder %s20, 1
    %p311 = scmp.ne.s32.totalorder %s306, %s308
    %p312 = scmp.eq.s32.totalorder %s20, 0
    %p313 = por %p311, %p312
    %p314 = scmp.ne.s32.totalorder %s306, %s308
    %p315 = scmp.eq.s32.totalorder %s25, 1
    %p316 = por %p314, %p315
    %p317 = scmp.ne.s32.totalorder %s308, %s309
    %p318 = scmp.eq.s32.totalorder %s25, 0
    %p319 = por %p317, %p318
    %p320 = scmp.ne.s32.totalorder %s308, %s309
    %p321 = scmp.eq.s32.totalorder %s26, 1
    %p322 = por %p320, %p321
    %p324 = scmp.ne.s32.totalorder %s309, %s323
    %p325 = scmp.eq.s32.totalorder %s26, 0
    %p326 = por %p324, %p325
    %s327 = ssub.s32 %s20, %s27
    %p328 = scmp.eq.s32.totalorder %s327, 0
    %s330 = sadd.s32 %s329, 1
    %s331 = scalar_select %p328, %s329, %s330
    %p334 = pneg %p328
    %p335 = scmp.eq.s32.totalorder %s20, 1
    %p336 = por %p334, %p335
    %p337 = scmp.ne.s32.totalorder %s329, %s332
    %p338 = scmp.eq.s32.totalorder %s20, 0
    %p339 = por %p337, %p338
    %p340 = scmp.ne.s32.totalorder %s329, %s332
    %p341 = scmp.eq.s32.totalorder %s25, 1
    %p342 = por %p340, %p341
    %p343 = scmp.ne.s32.totalorder %s332, %s333
    %p344 = scmp.eq.s32.totalorder %s25, 0
    %p345 = por %p343, %p344
    %p346 = scmp.ne.s32.totalorder %s332, %s333
    %p347 = scmp.eq.s32.totalorder %s26, 1
    %p348 = por %p346, %p347
    %p350 = scmp.ne.s32.totalorder %s333, %s349
    %p351 = scmp.eq.s32.totalorder %s26, 0
    %p352 = por %p350, %p351
    %p353 = scmp.le.s32.totalorder 1, %s20
    %p354 = scmp.lt.s32.totalorder %s20, 3
    %p355 = pnand %p353, %p354
    %p356 = pneg %p355
    // Predicated region
    $region9: #{swin_forward.8} parent=5 // pred_check
      _
    $region10: #{swin_forward.8} parent=5 // pred_check_branch
      %358 = sbr.rel (%p355) target = $region12
    $region11: #{swin_forward.8} parent=5 // pred_region
      %s359 = ssub.s32 %s20, 1
      // Predicated region
      $region13: #{swin_forward.8} parent=11 // pred_check
        %p360 = pneg %p67
      $region14: #{swin_forward.8} parent=11 // pred_check_branch
        %362 = sbr.rel (%p360) target = $region16
      $region15: #{swin_forward.8} parent=11 // pred_region
        _
      $region16: #{swin_forward.8} parent=11 // pred_fallthru
        _
      // Predicated region
      $region17: #{swin_forward.8} parent=11 // pred_check
        %p363 = pneg %p88
      $region18: #{swin_forward.8} parent=11 // pred_check_branch
        %365 = sbr.rel (%p363) target = $region20
      $region19: #{swin_forward.8} parent=11 // pred_region
        _
      $region20: #{swin_forward.8} parent=11 // pred_fallthru
        _
      // Predicated region
      $region21: #{swin_forward.8} parent=11 // pred_check
        %p366 = pneg %p109
      $region22: #{swin_forward.8} parent=11 // pred_check_branch
        %368 = sbr.rel (%p366) target = $region24
      $region23: #{swin_forward.8} parent=11 // pred_region
        _
      $region24: #{swin_forward.8} parent=11 // pred_fallthru
        _
      // Predicated region
      $region25: #{swin_forward.8} parent=11 // pred_check
        %p369 = pneg %p130
      $region26: #{swin_forward.8} parent=11 // pred_check_branch
        %371 = sbr.rel (%p369) target = $region28
      $region27: #{swin_forward.8} parent=11 // pred_region
        _
      $region28: #{swin_forward.8} parent=11 // pred_fallthru
        _
      // Predicated region
      $region29: #{swin_forward.8} parent=11 // pred_check
        %p372 = pneg %p151
      $region30: #{swin_forward.8} parent=11 // pred_check_branch
        %374 = sbr.rel (%p372) target = $region32
      $region31: #{swin_forward.8} parent=11 // pred_region
        _
      $region32: #{swin_forward.8} parent=11 // pred_fallthru
        _
      // Predicated region
      $region33: #{swin_forward.8} parent=11 // pred_check
        %p375 = pneg %p172
      $region34: #{swin_forward.8} parent=11 // pred_check_branch
        %377 = sbr.rel (%p375) target = $region36
      $region35: #{swin_forward.8} parent=11 // pred_region
        _
      $region36: #{swin_forward.8} parent=11 // pred_fallthru
        _
      // Predicated region
      $region37: #{swin_forward.8} parent=11 // pred_check
        %p378 = pneg %p193
      $region38: #{swin_forward.8} parent=11 // pred_check_branch
        %380 = sbr.rel (%p378) target = $region40
      $region39: #{swin_forward.8} parent=11 // pred_region
        _
      $region40: #{swin_forward.8} parent=11 // pred_fallthru
        _
      // Predicated region
      $region41: #{swin_forward.8} parent=11 // pred_check
        %p381 = pneg %p214
      $region42: #{swin_forward.8} parent=11 // pred_check_branch
        %383 = sbr.rel (%p381) target = $region44
      $region43: #{swin_forward.8} parent=11 // pred_region
        _
      $region44: #{swin_forward.8} parent=11 // pred_fallthru
        _
      // Predicated region
      $region45: #{swin_forward.8} parent=11 // pred_check
        %p384 = pneg %p235
      $region46: #{swin_forward.8} parent=11 // pred_check_branch
        %386 = sbr.rel (%p384) target = $region48
      $region47: #{swin_forward.8} parent=11 // pred_region
        _
      $region48: #{swin_forward.8} parent=11 // pred_fallthru
        _
      // Predicated region
      $region49: #{swin_forward.8} parent=11 // pred_check
        %p387 = pneg %p256
      $region50: #{swin_forward.8} parent=11 // pred_check_branch
        %389 = sbr.rel (%p387) target = $region52
      $region51: #{swin_forward.8} parent=11 // pred_region
        _
      $region52: #{swin_forward.8} parent=11 // pred_fallthru
        _
      // Predicated region
      $region53: #{swin_forward.8} parent=11 // pred_check
        %p390 = pneg %p277
      $region54: #{swin_forward.8} parent=11 // pred_check_branch
        %392 = sbr.rel (%p390) target = $region56
      $region55: #{swin_forward.8} parent=11 // pred_region
        _
      $region56: #{swin_forward.8} parent=11 // pred_fallthru
        _
      // Predicated region
      $region57: #{swin_forward.8} parent=11 // pred_check
        %p393 = pneg %p298
      $region58: #{swin_forward.8} parent=11 // pred_check_branch
        %395 = sbr.rel (%p393) target = $region60
      $region59: #{swin_forward.8} parent=11 // pred_region
        _
      $region60: #{swin_forward.8} parent=11 // pred_fallthru
        _
      // Predicated region
      $region61: #{swin_forward.8} parent=11 // pred_check
        %p396 = pneg %p319
      $region62: #{swin_forward.8} parent=11 // pred_check_branch
        %398 = sbr.rel (%p396) target = $region64
      $region63: #{swin_forward.8} parent=11 // pred_region
        _
      $region64: #{swin_forward.8} parent=11 // pred_fallthru
        _
    $region12: #{swin_forward.8} parent=5 // pred_fallthru
      _
    %p399 = scmp.lt.s32.totalorder %s20, 2
    // Predicated region
    $region65: #{swin_forward.8} parent=5 // pred_check
      %p400 = pneg %p399
    $region66: #{swin_forward.8} parent=5 // pred_check_branch
      %402 = sbr.rel (%p400) target = $region68
    $region67: #{swin_forward.8} parent=5 // pred_region
      // Predicated region
      $region69: #{swin_forward.8} parent=67 // pred_check
        %p403 = pneg %p40
      $region70: #{swin_forward.8} parent=67 // pred_check_branch
        %405 = sbr.rel (%p403) target = $region72
      $region71: #{swin_forward.8} parent=67 // pred_region
        %p406 = scmp.lt.s32.totalorder %s20, 1
        %s407 = scalar_select %p406, %s20, 1
        %s408 = smul.addr %s407, 8
        %s409 = smul.addr %s408, 8
        %s410 = scalar_lea.vmem %s0, %s409
      $region72: #{swin_forward.8} parent=67 // pred_fallthru
        _
    $region68: #{swin_forward.8} parent=5 // pred_fallthru
      _
    %p411 = scmp.le.s32.totalorder 1, %s20
    %p412 = scmp.lt.s32.totalorder %s20, 3
    %p413 = pnand %p411, %p412
    %p414 = pneg %p413
    // Predicated region
    $region73: #{swin_forward.8} parent=5 // pred_check
      _
    $region74: #{swin_forward.8} parent=5 // pred_check_branch
      %416 = sbr.rel (%p413) target = $region76
    $region75: #{swin_forward.8} parent=5 // pred_region
      %s417 = ssub.s32 %s20, 1
      %p418 = scmp.lt.s32.totalorder %s25, 1
      %s419 = scalar_select %p418, %s25, 1
      %s420 = smul.addr %s419, 8
      %s421 = smul.addr %s420, 8
      %s422 = scalar_lea.vmem %s0, %s421
      %p423 = pneg %p46
      %p424 = pneg %p43
      %p425 = pneg %p67
      %p426 = pneg %p64
      %p427 = pneg %p88
      %p428 = pneg %p85
      %p429 = pneg %p109
      %p430 = pneg %p106
      %p431 = pneg %p130
      %p432 = pneg %p127
      %p433 = pneg %p151
      %p434 = pneg %p148
      %p435 = pneg %p172
      %p436 = pneg %p169
      %p437 = pneg %p193
      %p438 = pneg %p190
      %p439 = pneg %p214
      %p440 = pneg %p211
      %p441 = pneg %p235
      %p442 = pneg %p232
      %p443 = pneg %p256
      %p444 = pneg %p253
      %p445 = pneg %p277
      %p446 = pneg %p274
      %p447 = pneg %p298
      %p448 = pneg %p295
      %p449 = pneg %p319
      %p450 = pneg %p316
      %p451 = pneg %p345
      %p452 = pneg %p342
      %p453 = scmp.lt.s32.totalorder %s25, 1
      %s454 = scalar_select %p453, %s25, 1
      %s455 = smul.addr %s454, 8
      %s456 = smul.addr %s455, 8
      %s457 = scalar_lea.vmem %s14, %s456
      %p458 = scmp.lt.s32.totalorder %s25, 1
      %s459 = scalar_select %p458, %s25, 1
      %s460 = smul.addr %s459, 8
      %s461 = smul.addr %s460, 8
      %s462 = scalar_lea.vmem %s0, %s461
      %p463 = scmp.lt.s32.totalorder %s25, 1
      %s464 = scalar_select %p463, %s25, 1
      %s465 = smul.addr %s464, 8
      %s466 = smul.addr %s465, 8
      %s467 = scalar_lea.vmem %s14, %s466
      %v469 = vld [vmem:[%s462] sm:$0xff]
      %v470 = vld [vmem:[%s462 + $0x8] sm:$0xff]
      %v471 = vld [vmem:[%s462 + $0x10] sm:$0xff]
      %v472 = vld [vmem:[%s462 + $0x18] sm:$0xff]
      %v473 = vld [vmem:[%s462 + $0x20] sm:$0xff]
      %v474 = vld [vmem:[%s462 + $0x28] sm:$0xff]
      %v475 = vld [vmem:[%s462 + $0x30] sm:$0xff]
      %v476 = vld [vmem:[%s462 + $0x38] sm:$0xff]
      %v477 = vld [vmem:[%s6] sm:$0x1]
      %v478 = vld [vmem:[%s7] sm:$0x1]
      %vm479 = vcmask 261120
      %v480 = vsel %vm479, %v469, 0.0
      %481 = vadd.xlane.f32.xlu0 %v480
      %v482 = vpop.xlane.xlu0 %481
      %v483 = vsel %vm479, %v470, 0.0
      %484 = vadd.xlane.f32.xlu0 %v483
      %v485 = vpop.xlane.xlu0 %484
      %v486 = vsel %vm479, %v471, 0.0
      %487 = vadd.xlane.f32.xlu0 %v486
      %v488 = vpop.xlane.xlu0 %487
      %v489 = vsel %vm479, %v472, 0.0
      %490 = vadd.xlane.f32.xlu0 %v489
      %v491 = vpop.xlane.xlu0 %490
      %v492 = vsel %vm479, %v473, 0.0
      %493 = vadd.xlane.f32.xlu0 %v492
      %v494 = vpop.xlane.xlu0 %493
      %v495 = vsel %vm479, %v474, 0.0
      %496 = vadd.xlane.f32.xlu0 %v495
      %v497 = vpop.xlane.xlu0 %496
      %v498 = vsel %vm479, %v475, 0.0
      %499 = vadd.xlane.f32.xlu0 %v498
      %v500 = vpop.xlane.xlu0 %499
      %v501 = vsel %vm479, %v476, 0.0
      %502 = vadd.xlane.f32.xlu0 %v501
      %v503 = vpop.xlane.xlu0 %502
      %v504 = vrcp.pop 32.0
      %v505 = vmul.f32 32.0, %v504
      %v506 = vsub.f32 1.0, %v505
      %v507 = vmul.f32 %v504, %v506
      %v508 = vadd.f32 %v504, %v507
      %vm509 = vweird.f32 %v504
      %v510 = vsel %vm509, %v504, %v508
      %v511 = vmul.f32 %v482, %v510
      %v512 = vmul.f32 %v485, %v510
      %v513 = vmul.f32 %v488, %v510
      %v514 = vmul.f32 %v491, %v510
      %v515 = vmul.f32 %v494, %v510
      %v516 = vmul.f32 %v497, %v510
      %v517 = vmul.f32 %v500, %v510
      %v518 = vmul.f32 %v503, %v510
      %v519 = vsub.f32 %v469, %v511
      %v520 = vsub.f32 %v470, %v512
      %v521 = vsub.f32 %v471, %v513
      %v522 = vsub.f32 %v472, %v514
      %v523 = vsub.f32 %v473, %v515
      %v524 = vsub.f32 %v474, %v516
      %v525 = vsub.f32 %v475, %v517
      %v526 = vsub.f32 %v476, %v518
      %v527 = vmul.f32 %v519, %v519
      %v528 = vmul.f32 %v520, %v520
      %v529 = vmul.f32 %v521, %v521
      %v530 = vmul.f32 %v522, %v522
      %v531 = vmul.f32 %v523, %v523
      %v532 = vmul.f32 %v524, %v524
      %v533 = vmul.f32 %v525, %v525
      %v534 = vmul.f32 %v526, %v526
      %v535 = vsel %vm479, %v527, 0.0
      %536 = vadd.xlane.f32.xlu0 %v535
      %v537 = vpop.xlane.xlu0 %536
      %v538 = vsel %vm479, %v528, 0.0
      %539 = vadd.xlane.f32.xlu0 %v538
      %v540 = vpop.xlane.xlu0 %539
      %v541 = vsel %vm479, %v529, 0.0
      %542 = vadd.xlane.f32.xlu0 %v541
      %v543 = vpop.xlane.xlu0 %542
      %v544 = vsel %vm479, %v530, 0.0
      %545 = vadd.xlane.f32.xlu0 %v544
      %v546 = vpop.xlane.xlu0 %545
      %v547 = vsel %vm479, %v531, 0.0
      %548 = vadd.xlane.f32.xlu0 %v547
      %v549 = vpop.xlane.xlu0 %548
      %v550 = vsel %vm479, %v532, 0.0
      %551 = vadd.xlane.f32.xlu0 %v550
      %v552 = vpop.xlane.xlu0 %551
      %v553 = vsel %vm479, %v533, 0.0
      %554 = vadd.xlane.f32.xlu0 %v553
      %v555 = vpop.xlane.xlu0 %554
      %v556 = vsel %vm479, %v534, 0.0
      %557 = vadd.xlane.f32.xlu0 %v556
      %v558 = vpop.xlane.xlu0 %557
      %v559 = vmul.f32 %v537, %v510
      %v560 = vmul.f32 %v540, %v510
      %v561 = vmul.f32 %v543, %v510
      %v562 = vmul.f32 %v546, %v510
      %v563 = vmul.f32 %v549, %v510
      %v564 = vmul.f32 %v552, %v510
      %v565 = vmul.f32 %v555, %v510
      %v566 = vmul.f32 %v558, %v510
      %v567 = vadd.f32 %v559, 1e-05
      %v568 = vadd.f32 %v560, 1e-05
      %v569 = vadd.f32 %v561, 1e-05
      %v570 = vadd.f32 %v562, 1e-05
      %v571 = vadd.f32 %v563, 1e-05
      %v572 = vadd.f32 %v564, 1e-05
      %v573 = vadd.f32 %v565, 1e-05
      %v574 = vadd.f32 %v566, 1e-05
      %v575 = vrsqrt.pop %v567
      %v576 = vmul.f32 %v575, %v567
      %v577 = vmul.f32 %v576, %v575
      %v578 = vmul.f32 0.5, %v577
      %v579 = vsub.f32 1.5, %v578
      %v580 = vmul.f32 %v575, %v579
      %vm581 = vweird.f32 %v567
      %vm582 = vweird.f32 %v575
      %vm583 = vmor %vm581, %vm582
      %v584 = vsel %vm583, %v575, %v580
      %v585 = vrsqrt.pop %v568
      %v586 = vmul.f32 %v585, %v568
      %v587 = vmul.f32 %v586, %v585
      %v588 = vmul.f32 0.5, %v587
      %v589 = vsub.f32 1.5, %v588
      %v590 = vmul.f32 %v585, %v589
      %vm591 = vweird.f32 %v568
      %vm592 = vweird.f32 %v585
      %vm593 = vmor %vm591, %vm592
      %v594 = vsel %vm593, %v585, %v590
      %v595 = vrsqrt.pop %v569
      %v596 = vmul.f32 %v595, %v569
      %v597 = vmul.f32 %v596, %v595
      %v598 = vmul.f32 0.5, %v597
      %v599 = vsub.f32 1.5, %v598
      %v600 = vmul.f32 %v595, %v599
      %vm601 = vweird.f32 %v569
      %vm602 = vweird.f32 %v595
      %vm603 = vmor %vm601, %vm602
      %v604 = vsel %vm603, %v595, %v600
      %v605 = vrsqrt.pop %v570
      %v606 = vmul.f32 %v605, %v570
      %v607 = vmul.f32 %v606, %v605
      %v608 = vmul.f32 0.5, %v607
      %v609 = vsub.f32 1.5, %v608
      %v610 = vmul.f32 %v605, %v609
      %vm611 = vweird.f32 %v570
      %vm612 = vweird.f32 %v605
      %vm613 = vmor %vm611, %vm612
      %v614 = vsel %vm613, %v605, %v610
      %v615 = vrsqrt.pop %v571
      %v616 = vmul.f32 %v615, %v571
      %v617 = vmul.f32 %v616, %v615
      %v618 = vmul.f32 0.5, %v617
      %v619 = vsub.f32 1.5, %v618
      %v620 = vmul.f32 %v615, %v619
      %vm621 = vweird.f32 %v571
      %vm622 = vweird.f32 %v615
      %vm623 = vmor %vm621, %vm622
      %v624 = vsel %vm623, %v615, %v620
      %v625 = vrsqrt.pop %v572
      %v626 = vmul.f32 %v625, %v572
      %v627 = vmul.f32 %v626, %v625
      %v628 = vmul.f32 0.5, %v627
      %v629 = vsub.f32 1.5, %v628
      %v630 = vmul.f32 %v625, %v629
      %vm631 = vweird.f32 %v572
      %vm632 = vweird.f32 %v625
      %vm633 = vmor %vm631, %vm632
      %v634 = vsel %vm633, %v625, %v630
      %v635 = vrsqrt.pop %v573
      %v636 = vmul.f32 %v635, %v573
      %v637 = vmul.f32 %v636, %v635
      %v638 = vmul.f32 0.5, %v637
      %v639 = vsub.f32 1.5, %v638
      %v640 = vmul.f32 %v635, %v639
      %vm641 = vweird.f32 %v573
      %vm642 = vweird.f32 %v635
      %vm643 = vmor %vm641, %vm642
      %v644 = vsel %vm643, %v635, %v640
      %v645 = vrsqrt.pop %v574
      %v646 = vmul.f32 %v645, %v574
      %v647 = vmul.f32 %v646, %v645
      %v648 = vmul.f32 0.5, %v647
      %v649 = vsub.f32 1.5, %v648
      %v650 = vmul.f32 %v645, %v649
      %vm651 = vweird.f32 %v574
      %vm652 = vweird.f32 %v645
      %vm653 = vmor %vm651, %vm652
      %v654 = vsel %vm653, %v645, %v650
      %v655 = vmul.f32 %v519, %v584
      %v656 = vmul.f32 %v520, %v594
      %v657 = vmul.f32 %v521, %v604
      %v658 = vmul.f32 %v522, %v614
      %v659 = vmul.f32 %v523, %v624
      %v660 = vmul.f32 %v524, %v634
      %v661 = vmul.f32 %v525, %v644
      %v662 = vmul.f32 %v526, %v654
      %v664 = vperm.slane %v477, 0
      %v666 = vmul.f32 %v655, %v664
      %v667 = vmul.f32 %v656, %v664
      %v668 = vmul.f32 %v657, %v664
      %v669 = vmul.f32 %v658, %v664
      %v670 = vmul.f32 %v659, %v664
      %v671 = vmul.f32 %v660, %v664
      %v672 = vmul.f32 %v661, %v664
      %v673 = vmul.f32 %v662, %v664
      %v675 = vperm.slane %v478, 0
      %v677 = vadd.f32 %v666, %v675
      %v678 = vadd.f32 %v667, %v675
      %v679 = vadd.f32 %v668, %v675
      %v680 = vadd.f32 %v669, %v675
      %v681 = vadd.f32 %v670, %v675
      %v682 = vadd.f32 %v671, %v675
      %v683 = vadd.f32 %v672, %v675
      %v684 = vadd.f32 %v673, %v675
      %v685 = vpack.c.bf16 %v678, %v677
      %v686 = vpack.c.bf16 %v680, %v679
      %v687 = vpack.c.bf16 %v682, %v681
      %v688 = vpack.c.bf16 %v684, %v683
      %v689 = vld [vmem:[%s2] sm:$0xf]
      %v690 = vld [vmem:[%s2 + $0x4] sm:$0xf]
      %v691 = vld [vmem:[%s2 + $0x8] sm:$0xf]
      %v692 = vld [vmem:[%s2 + $0xc] sm:$0xf]
      %v693 = vld [vmem:[%s2 + $0x10] sm:$0xf]
      %v694 = vld [vmem:[%s2 + $0x14] sm:$0xf]
      %v695 = vld [vmem:[%s2 + $0x18] sm:$0xf]
      %v696 = vld [vmem:[%s2 + $0x1c] sm:$0xf]
      %v697 = vld [vmem:[%s2 + $0x20] sm:$0xf]
      %v698 = vld [vmem:[%s2 + $0x24] sm:$0xf]
      %v699 = vld [vmem:[%s2 + $0x28] sm:$0xf]
      %v700 = vld [vmem:[%s2 + $0x2c] sm:$0xf]
      %v701 = vld [vmem:[%s2 + $0x30] sm:$0xf]
      %v702 = vld [vmem:[%s2 + $0x34] sm:$0xf]
      %v703 = vld [vmem:[%s2 + $0x38] sm:$0xf]
      %v704 = vld [vmem:[%s2 + $0x3c] sm:$0xf]
      %v705 = vld [vmem:[%s2 + $0x40] sm:$0xf]
      %v706 = vld [vmem:[%s2 + $0x44] sm:$0xf]
      %v707 = vld [vmem:[%s2 + $0x48] sm:$0xf]
      %v708 = vld [vmem:[%s2 + $0x4c] sm:$0xf]
      %v709 = vld [vmem:[%s2 + $0x50] sm:$0xf]
      %v710 = vld [vmem:[%s2 + $0x54] sm:$0xf]
      %v711 = vld [vmem:[%s2 + $0x58] sm:$0xf]
      %v712 = vld [vmem:[%s2 + $0x5c] sm:$0xf]
      %v713 = vld [vmem:[%s3] sm:$0x1]
      %v714 = vld [vmem:[%s3 + $0x1] sm:$0x1]
      %v715 = vld [vmem:[%s3 + $0x2] sm:$0x1]
      %v716 = vld [vmem:[%s3 + $0x3] sm:$0x1]
      %v717 = vld [vmem:[%s3 + $0x4] sm:$0x1]
      %v718 = vld [vmem:[%s3 + $0x5] sm:$0x1]
      %v719 = vld [vmem:[%s4] sm:$0xf]
      %v720 = vld [vmem:[%s4 + $0x4] sm:$0xf]
      %v721 = vld [vmem:[%s4 + $0x8] sm:$0xf]
      %v722 = vld [vmem:[%s4 + $0xc] sm:$0xf]
      %v723 = vld [vmem:[%s1] sm:$0xff]
      %v724 = vld [vmem:[%s1 + $0x8] sm:$0xff]
      %v725 = vld [vmem:[%s1 + $0x10] sm:$0xff]
      %v726 = vld [vmem:[%s1 + $0x18] sm:$0xff]
      %v727 = vld [vmem:[%s1 + $0x20] sm:$0xff]
      %v728 = vld [vmem:[%s1 + $0x28] sm:$0xff]
      %v729 = vld [vmem:[%s1 + $0x30] sm:$0xff]
      %v730 = vld [vmem:[%s1 + $0x38] sm:$0xff]
      %v731 = vld [vmem:[%s1 + $0x40] sm:$0xff]
      %v732 = vld [vmem:[%s1 + $0x48] sm:$0xff]
      %v733 = vld [vmem:[%s1 + $0x50] sm:$0xff]
      %v734 = vld [vmem:[%s1 + $0x58] sm:$0xff]
      %v735 = vld [vmem:[%s1 + $0x60] sm:$0xff]
      %v736 = vld [vmem:[%s1 + $0x68] sm:$0xff]
      %v737 = vld [vmem:[%s1 + $0x70] sm:$0xff]
      %v738 = vld [vmem:[%s1 + $0x78] sm:$0xff]
      %v740 = vperm.slane %v713, 0
      %v746 = vunpack.c.l.b16 %v689
      %v747 = vunpack.c.l.b16 %v690
      %v748 = vunpack.c.l.b16 %v691
      %v749 = vunpack.c.l.b16 %v692
      %v750 = vpack.c.b16 %v747, %v746
      %v751 = vpack.c.b16 %v749, %v748
      %v755 = vsel %vm479, %v685, 0
      %v758 = vsel %vm479, %v686, 0
      %v761 = vsel %vm479, %v687, 0
      %v764 = vsel %vm479, %v688, 0
      %766 = vmatpush.bf16.msra.mxu0 0
      %767 = vmatpush.bf16.msra.mxu0 0
      %768 = vmatpush.bf16.msra.mxu0 0
      %769 = vmatpush.bf16.msra.mxu0 0
      %770 = vmatpush.bf16.msra.mxu0 0
      %771 = vmatpush.bf16.msra.mxu0 0
      %772 = vmatpush.bf16.msra.mxu0 %v751
      %773 = vmatpush.bf16.msra.mxu0 %v750
      %774 = vmatmul.bf16.gmra.mxu0 %v755
      %v775 = vpop.f32.mrf.mxu0
      %v776 = vadd.f32 %v740, %v775
      %v777 = vpop.f32.mrf.mxu0
      %v778 = vadd.f32 %v740, %v777
      %779 = vmatmul.bf16.gmra.mxu0 %v758
      %v780 = vpop.f32.mrf.mxu0
      %v781 = vadd.f32 %v740, %v780
      %v782 = vpop.f32.mrf.mxu0
      %v783 = vadd.f32 %v740, %v782
      %784 = vmatmul.bf16.gmra.mxu0 %v761
      %v785 = vpop.f32.mrf.mxu0
      %v786 = vadd.f32 %v740, %v785
      %v787 = vpop.f32.mrf.mxu0
      %v788 = vadd.f32 %v740, %v787
      %789 = vmatmul.bf16.gmra.mxu0 %v764
      %v790 = vpop.f32.mrf.mxu0
      %v791 = vadd.f32 %v740, %v790
      %v792 = vpop.f32.mrf.mxu0
      %v793 = vadd.f32 %v740, %v792
      %794 = vdwg.mxu0
      %v796 = vperm.slane %v715, 0
      %v802 = vunpack.c.l.b16 %v697
      %v803 = vunpack.c.l.b16 %v698
      %v804 = vunpack.c.l.b16 %v699
      %v805 = vunpack.c.l.b16 %v700
      %v806 = vpack.c.b16 %v803, %v802
      %v807 = vpack.c.b16 %v805, %v804
      %810 = vmatpush.bf16.msra.mxu0 0
      %811 = vmatpush.bf16.msra.mxu0 0
      %812 = vmatpush.bf16.msra.mxu0 0
      %813 = vmatpush.bf16.msra.mxu0 0
      %814 = vmatpush.bf16.msra.mxu0 0
      %815 = vmatpush.bf16.msra.mxu0 0
      %816 = vmatpush.bf16.msra.mxu0 %v807
      %817 = vmatpush.bf16.msra.mxu0 %v806
      %818 = vmatmul.bf16.gmra.mxu0 %v755
      %v819 = vpop.f32.mrf.mxu0
      %v820 = vadd.f32 %v796, %v819
      %v821 = vpop.f32.mrf.mxu0
      %v822 = vadd.f32 %v796, %v821
      %823 = vmatmul.bf16.gmra.mxu0 %v758
      %v824 = vpop.f32.mrf.mxu0
      %v825 = vadd.f32 %v796, %v824
      %v826 = vpop.f32.mrf.mxu0
      %v827 = vadd.f32 %v796, %v826
      %828 = vmatmul.bf16.gmra.mxu0 %v761
      %v829 = vpop.f32.mrf.mxu0
      %v830 = vadd.f32 %v796, %v829
      %v831 = vpop.f32.mrf.mxu0
      %v832 = vadd.f32 %v796, %v831
      %833 = vmatmul.bf16.gmra.mxu0 %v764
      %v834 = vpop.f32.mrf.mxu0
      %v835 = vadd.f32 %v796, %v834
      %v836 = vpop.f32.mrf.mxu0
      %v837 = vadd.f32 %v796, %v836
      %838 = vdwg.mxu0
      %v840 = vperm.slane %v717, 0
      %v846 = vunpack.c.l.b16 %v705
      %v847 = vunpack.c.l.b16 %v706
      %v848 = vunpack.c.l.b16 %v707
      %v849 = vunpack.c.l.b16 %v708
      %v850 = vpack.c.b16 %v847, %v846
      %v851 = vpack.c.b16 %v849, %v848
      %854 = vmatpush.bf16.msra.mxu0 0
      %855 = vmatpush.bf16.msra.mxu0 0
      %856 = vmatpush.bf16.msra.mxu0 0
      %857 = vmatpush.bf16.msra.mxu0 0
      %858 = vmatpush.bf16.msra.mxu0 0
      %859 = vmatpush.bf16.msra.mxu0 0
      %860 = vmatpush.bf16.msra.mxu0 %v851
      %861 = vmatpush.bf16.msra.mxu0 %v850
      %862 = vmatmul.bf16.gmra.mxu0 %v755
      %v863 = vpop.f32.mrf.mxu0
      %v864 = vadd.f32 %v840, %v863
      %v865 = vpop.f32.mrf.mxu0
      %v866 = vadd.f32 %v840, %v865
      %867 = vmatmul.bf16.gmra.mxu0 %v758
      %v868 = vpop.f32.mrf.mxu0
      %v869 = vadd.f32 %v840, %v868
      %v870 = vpop.f32.mrf.mxu0
      %v871 = vadd.f32 %v840, %v870
      %872 = vmatmul.bf16.gmra.mxu0 %v761
      %v873 = vpop.f32.mrf.mxu0
      %v874 = vadd.f32 %v840, %v873
      %v875 = vpop.f32.mrf.mxu0
      %v876 = vadd.f32 %v840, %v875
      %877 = vmatmul.bf16.gmra.mxu0 %v764
      %v878 = vpop.f32.mrf.mxu0
      %v879 = vadd.f32 %v840, %v878
      %v880 = vpop.f32.mrf.mxu0
      %v881 = vadd.f32 %v840, %v880
      %882 = vdwg.mxu0
      %v883 = vmul.f32 %v776, 0.25
      %v884 = vmul.f32 %v778, 0.25
      %v885 = vmul.f32 %v781, 0.25
      %v886 = vmul.f32 %v783, 0.25
      %v887 = vmul.f32 %v786, 0.25
      %v888 = vmul.f32 %v788, 0.25
      %v889 = vmul.f32 %v791, 0.25
      %v890 = vmul.f32 %v793, 0.25
      %v891 = vpack.c.bf16 %v883, %v883
      %v892 = vpack.c.bf16 %v884, %v884
      %v893 = vpack.c.bf16 %v885, %v885
      %v894 = vpack.c.bf16 %v886, %v886
      %v895 = vpack.c.bf16 %v887, %v887
      %v896 = vpack.c.bf16 %v888, %v888
      %v897 = vpack.c.bf16 %v889, %v889
      %v898 = vpack.c.bf16 %v890, %v890
      %v899 = vpack.c.bf16 %v820, %v820
      %v900 = vpack.c.bf16 %v822, %v822
      %v901 = vpack.c.bf16 %v825, %v825
      %v902 = vpack.c.bf16 %v827, %v827
      %v903 = vpack.c.bf16 %v830, %v830
      %v904 = vpack.c.bf16 %v832, %v832
      %v905 = vpack.c.bf16 %v835, %v835
      %v906 = vpack.c.bf16 %v837, %v837
      %v907 = vpack.c.bf16 %v864, %v864
      %v908 = vpack.c.bf16 %v866, %v866
      %v909 = vpack.c.bf16 %v869, %v869
      %v910 = vpack.c.bf16 %v871, %v871
      %v911 = vpack.c.bf16 %v874, %v874
      %v912 = vpack.c.bf16 %v876, %v876
      %v913 = vpack.c.bf16 %v879, %v879
      %v914 = vpack.c.bf16 %v881, %v881
      %v917 = vunpack.c.l.b16 %v891
      %v918 = vunpack.c.l.b16 %v892
      %v919 = vpack.c.b16 %v918, %v917
      %v922 = vunpack.c.l.b16 %v899
      %v923 = vunpack.c.l.b16 %v900
      %v924 = vpack.c.b16 %v923, %v922
      %vm925 = vcmask 130048
      %v927 = vsel %vm925, %v919, 0
      %v930 = vsel %vm925, %v924, 0
      %932 = vmatpush.bf16.xpose.msra.mxu0 0
      %933 = vmatpush.bf16.xpose.msra.mxu0 0
      %934 = vmatpush.bf16.xpose.msra.mxu0 0
      %935 = vmatpush.bf16.xpose.msra.mxu0 0
      %936 = vmatpush.bf16.xpose.msra.mxu0 0
      %937 = vmatpush.bf16.xpose.msra.mxu0 0
      %938 = vmatpush.bf16.xpose.msra.mxu0 0
      %939 = vmatpush.bf16.xpose.msra.mxu0 %v930
      %940 = vmatmul.bf16.gmra.mxu0 %v927
      %v941 = vpop.f32.mrf.mxu0
      %v942 = vadd.f32 %v723, %v941
      %v943 = vpop.f32.mrf.mxu0
      %v944 = vadd.f32 %v724, %v943
      %945 = vdwg.mxu0
      %v948 = vunpack.c.l.b16 %v893
      %v949 = vunpack.c.l.b16 %v894
      %v950 = vpack.c.b16 %v949, %v948
      %v953 = vunpack.c.l.b16 %v901
      %v954 = vunpack.c.l.b16 %v902
      %v955 = vpack.c.b16 %v954, %v953
      %v957 = vsel %vm925, %v950, 0
      %v960 = vsel %vm925, %v955, 0
      %962 = vmatpush.bf16.xpose.msra.mxu0 0
      %963 = vmatpush.bf16.xpose.msra.mxu0 0
      %964 = vmatpush.bf16.xpose.msra.mxu0 0
      %965 = vmatpush.bf16.xpose.msra.mxu0 0
      %966 = vmatpush.bf16.xpose.msra.mxu0 0
      %967 = vmatpush.bf16.xpose.msra.mxu0 0
      %968 = vmatpush.bf16.xpose.msra.mxu0 0
      %969 = vmatpush.bf16.xpose.msra.mxu0 %v960
      %970 = vmatmul.bf16.gmra.mxu0 %v957
      %v971 = vpop.f32.mrf.mxu0
      %v972 = vadd.f32 %v727, %v971
      %v973 = vpop.f32.mrf.mxu0
      %v974 = vadd.f32 %v728, %v973
      %975 = vdwg.mxu0
      %v978 = vunpack.c.l.b16 %v895
      %v979 = vunpack.c.l.b16 %v896
      %v980 = vpack.c.b16 %v979, %v978
      %v983 = vunpack.c.l.b16 %v903
      %v984 = vunpack.c.l.b16 %v904
      %v985 = vpack.c.b16 %v984, %v983
      %v987 = vsel %vm925, %v980, 0
      %v990 = vsel %vm925, %v985, 0
      %992 = vmatpush.bf16.xpose.msra.mxu0 0
      %993 = vmatpush.bf16.xpose.msra.mxu0 0
      %994 = vmatpush.bf16.xpose.msra.mxu0 0
      %995 = vmatpush.bf16.xpose.msra.mxu0 0
      %996 = vmatpush.bf16.xpose.msra.mxu0 0
      %997 = vmatpush.bf16.xpose.msra.mxu0 0
      %998 = vmatpush.bf16.xpose.msra.mxu0 0
      %999 = vmatpush.bf16.xpose.msra.mxu0 %v990
      %1000 = vmatmul.bf16.gmra.mxu0 %v987
      %v1001 = vpop.f32.mrf.mxu0
      %v1002 = vadd.f32 %v731, %v1001
      %v1003 = vpop.f32.mrf.mxu0
      %v1004 = vadd.f32 %v732, %v1003
      %1005 = vdwg.mxu0
      %v1008 = vunpack.c.l.b16 %v897
      %v1009 = vunpack.c.l.b16 %v898
      %v1010 = vpack.c.b16 %v1009, %v1008
      %v1013 = vunpack.c.l.b16 %v905
      %v1014 = vunpack.c.l.b16 %v906
      %v1015 = vpack.c.b16 %v1014, %v1013
      %v1017 = vsel %vm925, %v1010, 0
      %v1020 = vsel %vm925, %v1015, 0
      %1022 = vmatpush.bf16.xpose.msra.mxu0 0
      %1023 = vmatpush.bf16.xpose.msra.mxu0 0
      %1024 = vmatpush.bf16.xpose.msra.mxu0 0
      %1025 = vmatpush.bf16.xpose.msra.mxu0 0
      %1026 = vmatpush.bf16.xpose.msra.mxu0 0
      %1027 = vmatpush.bf16.xpose.msra.mxu0 0
      %1028 = vmatpush.bf16.xpose.msra.mxu0 0
      %1029 = vmatpush.bf16.xpose.msra.mxu0 %v1020
      %1030 = vmatmul.bf16.gmra.mxu0 %v1017
      %v1031 = vpop.f32.mrf.mxu0
      %v1032 = vadd.f32 %v735, %v1031
      %v1033 = vpop.f32.mrf.mxu0
      %v1034 = vadd.f32 %v736, %v1033
      %1035 = vdwg.mxu0
      %v1036 = vsel %vm925, %v942, -inf
      %1037 = vmax.xlane.f32.xlu0 %v1036
      %v1038 = vpop.xlane.xlu0 %1037
      %v1039 = vsel %vm925, %v944, -inf
      %1040 = vmax.xlane.f32.xlu0 %v1039
      %v1041 = vpop.xlane.xlu0 %1040
      %v1042 = vsel %vm925, %v972, -inf
      %1043 = vmax.xlane.f32.xlu0 %v1042
      %v1044 = vpop.xlane.xlu0 %1043
      %v1045 = vsel %vm925, %v974, -inf
      %1046 = vmax.xlane.f32.xlu0 %v1045
      %v1047 = vpop.xlane.xlu0 %1046
      %v1048 = vsel %vm925, %v1002, -inf
      %1049 = vmax.xlane.f32.xlu0 %v1048
      %v1050 = vpop.xlane.xlu0 %1049
      %v1051 = vsel %vm925, %v1004, -inf
      %1052 = vmax.xlane.f32.xlu0 %v1051
      %v1053 = vpop.xlane.xlu0 %1052
      %v1054 = vsel %vm925, %v1032, -inf
      %1055 = vmax.xlane.f32.xlu0 %v1054
      %v1056 = vpop.xlane.xlu0 %1055
      %v1057 = vsel %vm925, %v1034, -inf
      %1058 = vmax.xlane.f32.xlu0 %v1057
      %v1059 = vpop.xlane.xlu0 %1058
      %v1060 = vsub.f32 %v942, %v1038
      %v1061 = vsub.f32 %v944, %v1041
      %v1062 = vsub.f32 %v972, %v1044
      %v1063 = vsub.f32 %v974, %v1047
      %v1064 = vsub.f32 %v1002, %v1050
      %v1065 = vsub.f32 %v1004, %v1053
      %v1066 = vsub.f32 %v1032, %v1056
      %v1067 = vsub.f32 %v1034, %v1059
      %v1068 = vmul.f32 %v1060, 1.442695
      %v1069 = vpow.pop %v1068
      %v1070 = vmul.f32 %v1061, 1.442695
      %v1071 = vpow.pop %v1070
      %v1072 = vmul.f32 %v1062, 1.442695
      %v1073 = vpow.pop %v1072
      %v1074 = vmul.f32 %v1063, 1.442695
      %v1075 = vpow.pop %v1074
      %v1076 = vmul.f32 %v1064, 1.442695
      %v1077 = vpow.pop %v1076
      %v1078 = vmul.f32 %v1065, 1.442695
      %v1079 = vpow.pop %v1078
      %v1080 = vmul.f32 %v1066, 1.442695
      %v1081 = vpow.pop %v1080
      %v1082 = vmul.f32 %v1067, 1.442695
      %v1083 = vpow.pop %v1082
      %v1084 = vsel %vm925, %v1069, 0.0
      %1085 = vadd.xlane.f32.xlu0 %v1084
      %v1086 = vpop.xlane.xlu0 %1085
      %v1087 = vsel %vm925, %v1071, 0.0
      %1088 = vadd.xlane.f32.xlu0 %v1087
      %v1089 = vpop.xlane.xlu0 %1088
      %v1090 = vsel %vm925, %v1073, 0.0
      %1091 = vadd.xlane.f32.xlu0 %v1090
      %v1092 = vpop.xlane.xlu0 %1091
      %v1093 = vsel %vm925, %v1075, 0.0
      %1094 = vadd.xlane.f32.xlu0 %v1093
      %v1095 = vpop.xlane.xlu0 %1094
      %v1096 = vsel %vm925, %v1077, 0.0
      %1097 = vadd.xlane.f32.xlu0 %v1096
      %v1098 = vpop.xlane.xlu0 %1097
      %v1099 = vsel %vm925, %v1079, 0.0
      %1100 = vadd.xlane.f32.xlu0 %v1099
      %v1101 = vpop.xlane.xlu0 %1100
      %v1102 = vsel %vm925, %v1081, 0.0
      %1103 = vadd.xlane.f32.xlu0 %v1102
      %v1104 = vpop.xlane.xlu0 %1103
      %v1105 = vsel %vm925, %v1083, 0.0
      %1106 = vadd.xlane.f32.xlu0 %v1105
      %v1107 = vpop.xlane.xlu0 %1106
      %v1108 = vrcp.pop %v1086
      %v1109 = vmul.f32 %v1086, %v1108
      %v1110 = vsub.f32 1.0, %v1109
      %v1111 = vmul.f32 %v1108, %v1110
      %v1112 = vadd.f32 %v1108, %v1111
      %vm1113 = vweird.f32 %v1086
      %vm1114 = vweird.f32 %v1108
      %vm1115 = vmor %vm1113, %vm1114
      %v1116 = vsel %vm1115, %v1108, %v1112
      %v1117 = vand.u32 2147483647, %v1086
      %vm1118 = vcmp.eq.f32.partialorder %v1117, 8.507059e+37
      %v1119 = vand.u32 %v1086, 2147483648
      %v1120 = vor.u32 1.1754944e-38, %v1119
      %v1121 = vsel %vm1118, %v1120, %v1116
      %v1122 = vmul.f32 %v1069, %v1121
      %v1123 = vrcp.pop %v1089
      %v1124 = vmul.f32 %v1089, %v1123
      %v1125 = vsub.f32 1.0, %v1124
      %v1126 = vmul.f32 %v1123, %v1125
      %v1127 = vadd.f32 %v1123, %v1126
      %vm1128 = vweird.f32 %v1089
      %vm1129 = vweird.f32 %v1123
      %vm1130 = vmor %vm1128, %vm1129
      %v1131 = vsel %vm1130, %v1123, %v1127
      %v1132 = vand.u32 2147483647, %v1089
      %vm1133 = vcmp.eq.f32.partialorder %v1132, 8.507059e+37
      %v1134 = vand.u32 %v1089, 2147483648
      %v1135 = vor.u32 1.1754944e-38, %v1134
      %v1136 = vsel %vm1133, %v1135, %v1131
      %v1137 = vmul.f32 %v1071, %v1136
      %v1138 = vrcp.pop %v1092
      %v1139 = vmul.f32 %v1092, %v1138
      %v1140 = vsub.f32 1.0, %v1139
      %v1141 = vmul.f32 %v1138, %v1140
      %v1142 = vadd.f32 %v1138, %v1141
      %vm1143 = vweird.f32 %v1092
      %vm1144 = vweird.f32 %v1138
      %vm1145 = vmor %vm1143, %vm1144
      %v1146 = vsel %vm1145, %v1138, %v1142
      %v1147 = vand.u32 2147483647, %v1092
      %vm1148 = vcmp.eq.f32.partialorder %v1147, 8.507059e+37
      %v1149 = vand.u32 %v1092, 2147483648
      %v1150 = vor.u32 1.1754944e-38, %v1149
      %v1151 = vsel %vm1148, %v1150, %v1146
      %v1152 = vmul.f32 %v1073, %v1151
      %v1153 = vrcp.pop %v1095
      %v1154 = vmul.f32 %v1095, %v1153
      %v1155 = vsub.f32 1.0, %v1154
      %v1156 = vmul.f32 %v1153, %v1155
      %v1157 = vadd.f32 %v1153, %v1156
      %vm1158 = vweird.f32 %v1095
      %vm1159 = vweird.f32 %v1153
      %vm1160 = vmor %vm1158, %vm1159
      %v1161 = vsel %vm1160, %v1153, %v1157
      %v1162 = vand.u32 2147483647, %v1095
      %vm1163 = vcmp.eq.f32.partialorder %v1162, 8.507059e+37
      %v1164 = vand.u32 %v1095, 2147483648
      %v1165 = vor.u32 1.1754944e-38, %v1164
      %v1166 = vsel %vm1163, %v1165, %v1161
      %v1167 = vmul.f32 %v1075, %v1166
      %v1168 = vrcp.pop %v1098
      %v1169 = vmul.f32 %v1098, %v1168
      %v1170 = vsub.f32 1.0, %v1169
      %v1171 = vmul.f32 %v1168, %v1170
      %v1172 = vadd.f32 %v1168, %v1171
      %vm1173 = vweird.f32 %v1098
      %vm1174 = vweird.f32 %v1168
      %vm1175 = vmor %vm1173, %vm1174
      %v1176 = vsel %vm1175, %v1168, %v1172
      %v1177 = vand.u32 2147483647, %v1098
      %vm1178 = vcmp.eq.f32.partialorder %v1177, 8.507059e+37
      %v1179 = vand.u32 %v1098, 2147483648
      %v1180 = vor.u32 1.1754944e-38, %v1179
      %v1181 = vsel %vm1178, %v1180, %v1176
      %v1182 = vmul.f32 %v1077, %v1181
      %v1183 = vrcp.pop %v1101
      %v1184 = vmul.f32 %v1101, %v1183
      %v1185 = vsub.f32 1.0, %v1184
      %v1186 = vmul.f32 %v1183, %v1185
      %v1187 = vadd.f32 %v1183, %v1186
      %vm1188 = vweird.f32 %v1101
      %vm1189 = vweird.f32 %v1183
      %vm1190 = vmor %vm1188, %vm1189
      %v1191 = vsel %vm1190, %v1183, %v1187
      %v1192 = vand.u32 2147483647, %v1101
      %vm1193 = vcmp.eq.f32.partialorder %v1192, 8.507059e+37
      %v1194 = vand.u32 %v1101, 2147483648
      %v1195 = vor.u32 1.1754944e-38, %v1194
      %v1196 = vsel %vm1193, %v1195, %v1191
      %v1197 = vmul.f32 %v1079, %v1196
      %v1198 = vrcp.pop %v1104
      %v1199 = vmul.f32 %v1104, %v1198
      %v1200 = vsub.f32 1.0, %v1199
      %v1201 = vmul.f32 %v1198, %v1200
      %v1202 = vadd.f32 %v1198, %v1201
      %vm1203 = vweird.f32 %v1104
      %vm1204 = vweird.f32 %v1198
      %vm1205 = vmor %vm1203, %vm1204
      %v1206 = vsel %vm1205, %v1198, %v1202
      %v1207 = vand.u32 2147483647, %v1104
      %vm1208 = vcmp.eq.f32.partialorder %v1207, 8.507059e+37
      %v1209 = vand.u32 %v1104, 2147483648
      %v1210 = vor.u32 1.1754944e-38, %v1209
      %v1211 = vsel %vm1208, %v1210, %v1206
      %v1212 = vmul.f32 %v1081, %v1211
      %v1213 = vrcp.pop %v1107
      %v1214 = vmul.f32 %v1107, %v1213
      %v1215 = vsub.f32 1.0, %v1214
      %v1216 = vmul.f32 %v1213, %v1215
      %v1217 = vadd.f32 %v1213, %v1216
      %vm1218 = vweird.f32 %v1107
      %vm1219 = vweird.f32 %v1213
      %vm1220 = vmor %vm1218, %vm1219
      %v1221 = vsel %vm1220, %v1213, %v1217
      %v1222 = vand.u32 2147483647, %v1107
      %vm1223 = vcmp.eq.f32.partialorder %v1222, 8.507059e+37
      %v1224 = vand.u32 %v1107, 2147483648
      %v1225 = vor.u32 1.1754944e-38, %v1224
      %v1226 = vsel %vm1223, %v1225, %v1221
      %v1227 = vmul.f32 %v1083, %v1226
      %v1228 = vpack.c.bf16 %v1122, %v1122
      %v1229 = vpack.c.bf16 %v1137, %v1137
      %v1230 = vpack.c.bf16 %v1152, %v1152
      %v1231 = vpack.c.bf16 %v1167, %v1167
      %v1232 = vpack.c.bf16 %v1182, %v1182
      %v1233 = vpack.c.bf16 %v1197, %v1197
      %v1234 = vpack.c.bf16 %v1212, %v1212
      %v1235 = vpack.c.bf16 %v1227, %v1227
      %v1238 = vunpack.c.l.b16 %v1228
      %v1239 = vunpack.c.l.b16 %v1229
      %v1240 = vpack.c.b16 %v1239, %v1238
      %v1243 = vunpack.c.l.b16 %v907
      %v1244 = vunpack.c.l.b16 %v908
      %v1245 = vpack.c.b16 %v1244, %v1243
      %v1248 = vsel %vm925, %v1240, 0
      %1250 = vmatpush.bf16.msra.mxu0 0
      %1251 = vmatpush.bf16.msra.mxu0 0
      %1252 = vmatpush.bf16.msra.mxu0 0
      %1253 = vmatpush.bf16.msra.mxu0 0
      %1254 = vmatpush.bf16.msra.mxu0 0
      %1255 = vmatpush.bf16.msra.mxu0 0
      %1256 = vmatpush.bf16.msra.mxu0 0
      %1257 = vmatpush.bf16.msra.mxu0 %v1245
      %1258 = vmatmul.bf16.gmra.mxu0 %v1248
      %v1259 = vpop.f32.mrf.mxu0
      %v1260 = vadd.f32 0.0, %v1259
      %v1261 = vpop.f32.mrf.mxu0
      %v1262 = vadd.f32 0.0, %v1261
      %1263 = vdwg.mxu0
      %v1266 = vunpack.c.l.b16 %v1230
      %v1267 = vunpack.c.l.b16 %v1231
      %v1268 = vpack.c.b16 %v1267, %v1266
      %v1271 = vunpack.c.l.b16 %v909
      %v1272 = vunpack.c.l.b16 %v910
      %v1273 = vpack.c.b16 %v1272, %v1271
      %v1276 = vsel %vm925, %v1268, 0
      %1278 = vmatpush.bf16.msra.mxu0 0
      %1279 = vmatpush.bf16.msra.mxu0 0
      %1280 = vmatpush.bf16.msra.mxu0 0
      %1281 = vmatpush.bf16.msra.mxu0 0
      %1282 = vmatpush.bf16.msra.mxu0 0
      %1283 = vmatpush.bf16.msra.mxu0 0
      %1284 = vmatpush.bf16.msra.mxu0 0
      %1285 = vmatpush.bf16.msra.mxu0 %v1273
      %1286 = vmatmul.bf16.gmra.mxu0 %v1276
      %v1287 = vpop.f32.mrf.mxu0
      %v1288 = vadd.f32 0.0, %v1287
      %v1289 = vpop.f32.mrf.mxu0
      %v1290 = vadd.f32 0.0, %v1289
      %1291 = vdwg.mxu0
      %v1294 = vunpack.c.l.b16 %v1232
      %v1295 = vunpack.c.l.b16 %v1233
      %v1296 = vpack.c.b16 %v1295, %v1294
      %v1299 = vunpack.c.l.b16 %v911
      %v1300 = vunpack.c.l.b16 %v912
      %v1301 = vpack.c.b16 %v1300, %v1299
      %v1304 = vsel %vm925, %v1296, 0
      %1306 = vmatpush.bf16.msra.mxu0 0
      %1307 = vmatpush.bf16.msra.mxu0 0
      %1308 = vmatpush.bf16.msra.mxu0 0
      %1309 = vmatpush.bf16.msra.mxu0 0
      %1310 = vmatpush.bf16.msra.mxu0 0
      %1311 = vmatpush.bf16.msra.mxu0 0
      %1312 = vmatpush.bf16.msra.mxu0 0
      %1313 = vmatpush.bf16.msra.mxu0 %v1301
      %1314 = vmatmul.bf16.gmra.mxu0 %v1304
      %v1315 = vpop.f32.mrf.mxu0
      %v1316 = vadd.f32 0.0, %v1315
      %v1317 = vpop.f32.mrf.mxu0
      %v1318 = vadd.f32 0.0, %v1317
      %1319 = vdwg.mxu0
      %v1322 = vunpack.c.l.b16 %v1234
      %v1323 = vunpack.c.l.b16 %v1235
      %v1324 = vpack.c.b16 %v1323, %v1322
      %v1327 = vunpack.c.l.b16 %v913
      %v1328 = vunpack.c.l.b16 %v914
      %v1329 = vpack.c.b16 %v1328, %v1327
      %v1332 = vsel %vm925, %v1324, 0
      %1334 = vmatpush.bf16.msra.mxu0 0
      %1335 = vmatpush.bf16.msra.mxu0 0
      %1336 = vmatpush.bf16.msra.mxu0 0
      %1337 = vmatpush.bf16.msra.mxu0 0
      %1338 = vmatpush.bf16.msra.mxu0 0
      %1339 = vmatpush.bf16.msra.mxu0 0
      %1340 = vmatpush.bf16.msra.mxu0 0
      %1341 = vmatpush.bf16.msra.mxu0 %v1329
      %1342 = vmatmul.bf16.gmra.mxu0 %v1332
      %v1343 = vpop.f32.mrf.mxu0
      %v1344 = vadd.f32 0.0, %v1343
      %v1345 = vpop.f32.mrf.mxu0
      %v1346 = vadd.f32 0.0, %v1345
      %1347 = vdwg.mxu0
      %v1348 = vpack.c.bf16 %v1262, %v1260
      %v1349 = vpack.c.bf16 %v1290, %v1288
      %v1350 = vpack.c.bf16 %v1318, %v1316
      %v1351 = vpack.c.bf16 %v1346, %v1344
      %v1353 = vperm.slane %v714, 0
      %v1359 = vunpack.c.l.b16 %v693
      %v1360 = vunpack.c.l.b16 %v694
      %v1361 = vunpack.c.l.b16 %v695
      %v1362 = vunpack.c.l.b16 %v696
      %v1363 = vpack.c.b16 %v1360, %v1359
      %v1364 = vpack.c.b16 %v1362, %v1361
      %1367 = vmatpush.bf16.msra.mxu0 0
      %1368 = vmatpush.bf16.msra.mxu0 0
      %1369 = vmatpush.bf16.msra.mxu0 0
      %1370 = vmatpush.bf16.msra.mxu0 0
      %1371 = vmatpush.bf16.msra.mxu0 0
      %1372 = vmatpush.bf16.msra.mxu0 0
      %1373 = vmatpush.bf16.msra.mxu0 %v1364
      %1374 = vmatpush.bf16.msra.mxu0 %v1363
      %1375 = vmatmul.bf16.gmra.mxu0 %v755
      %v1376 = vpop.f32.mrf.mxu0
      %v1377 = vadd.f32 %v1353, %v1376
      %v1378 = vpop.f32.mrf.mxu0
      %v1379 = vadd.f32 %v1353, %v1378
      %1380 = vmatmul.bf16.gmra.mxu0 %v758
      %v1381 = vpop.f32.mrf.mxu0
      %v1382 = vadd.f32 %v1353, %v1381
      %v1383 = vpop.f32.mrf.mxu0
      %v1384 = vadd.f32 %v1353, %v1383
      %1385 = vmatmul.bf16.gmra.mxu0 %v761
      %v1386 = vpop.f32.mrf.mxu0
      %v1387 = vadd.f32 %v1353, %v1386
      %v1388 = vpop.f32.mrf.mxu0
      %v1389 = vadd.f32 %v1353, %v1388
      %1390 = vmatmul.bf16.gmra.mxu0 %v764
      %v1391 = vpop.f32.mrf.mxu0
      %v1392 = vadd.f32 %v1353, %v1391
      %v1393 = vpop.f32.mrf.mxu0
      %v1394 = vadd.f32 %v1353, %v1393
      %1395 = vdwg.mxu0
      %v1397 = vperm.slane %v716, 0
      %v1403 = vunpack.c.l.b16 %v701
      %v1404 = vunpack.c.l.b16 %v702
      %v1405 = vunpack.c.l.b16 %v703
      %v1406 = vunpack.c.l.b16 %v704
      %v1407 = vpack.c.b16 %v1404, %v1403
      %v1408 = vpack.c.b16 %v1406, %v1405
      %1411 = vmatpush.bf16.msra.mxu0 0
      %1412 = vmatpush.bf16.msra.mxu0 0
      %1413 = vmatpush.bf16.msra.mxu0 0
      %1414 = vmatpush.bf16.msra.mxu0 0
      %1415 = vmatpush.bf16.msra.mxu0 0
      %1416 = vmatpush.bf16.msra.mxu0 0
      %1417 = vmatpush.bf16.msra.mxu0 %v1408
      %1418 = vmatpush.bf16.msra.mxu0 %v1407
      %1419 = vmatmul.bf16.gmra.mxu0 %v755
      %v1420 = vpop.f32.mrf.mxu0
      %v1421 = vadd.f32 %v1397, %v1420
      %v1422 = vpop.f32.mrf.mxu0
      %v1423 = vadd.f32 %v1397, %v1422
      %1424 = vmatmul.bf16.gmra.mxu0 %v758
      %v1425 = vpop.f32.mrf.mxu0
      %v1426 = vadd.f32 %v1397, %v1425
      %v1427 = vpop.f32.mrf.mxu0
      %v1428 = vadd.f32 %v1397, %v1427
      %1429 = vmatmul.bf16.gmra.mxu0 %v761
      %v1430 = vpop.f32.mrf.mxu0
      %v1431 = vadd.f32 %v1397, %v1430
      %v1432 = vpop.f32.mrf.mxu0
      %v1433 = vadd.f32 %v1397, %v1432
      %1434 = vmatmul.bf16.gmra.mxu0 %v764
      %v1435 = vpop.f32.mrf.mxu0
      %v1436 = vadd.f32 %v1397, %v1435
      %v1437 = vpop.f32.mrf.mxu0
      %v1438 = vadd.f32 %v1397, %v1437
      %1439 = vdwg.mxu0
      %v1441 = vperm.slane %v718, 0
      %v1447 = vunpack.c.l.b16 %v709
      %v1448 = vunpack.c.l.b16 %v710
      %v1449 = vunpack.c.l.b16 %v711
      %v1450 = vunpack.c.l.b16 %v712
      %v1451 = vpack.c.b16 %v1448, %v1447
      %v1452 = vpack.c.b16 %v1450, %v1449
      %1455 = vmatpush.bf16.msra.mxu0 0
      %1456 = vmatpush.bf16.msra.mxu0 0
      %1457 = vmatpush.bf16.msra.mxu0 0
      %1458 = vmatpush.bf16.msra.mxu0 0
      %1459 = vmatpush.bf16.msra.mxu0 0
      %1460 = vmatpush.bf16.msra.mxu0 0
      %1461 = vmatpush.bf16.msra.mxu0 %v1452
      %1462 = vmatpush.bf16.msra.mxu0 %v1451
      %1463 = vmatmul.bf16.gmra.mxu0 %v755
      %v1464 = vpop.f32.mrf.mxu0
      %v1465 = vadd.f32 %v1441, %v1464
      %v1466 = vpop.f32.mrf.mxu0
      %v1467 = vadd.f32 %v1441, %v1466
      %1468 = vmatmul.bf16.gmra.mxu0 %v758
      %v1469 = vpop.f32.mrf.mxu0
      %v1470 = vadd.f32 %v1441, %v1469
      %v1471 = vpop.f32.mrf.mxu0
      %v1472 = vadd.f32 %v1441, %v1471
      %1473 = vmatmul.bf16.gmra.mxu0 %v761
      %v1474 = vpop.f32.mrf.mxu0
      %v1475 = vadd.f32 %v1441, %v1474
      %v1476 = vpop.f32.mrf.mxu0
      %v1477 = vadd.f32 %v1441, %v1476
      %1478 = vmatmul.bf16.gmra.mxu0 %v764
      %v1479 = vpop.f32.mrf.mxu0
      %v1480 = vadd.f32 %v1441, %v1479
      %v1481 = vpop.f32.mrf.mxu0
      %v1482 = vadd.f32 %v1441, %v1481
      %1483 = vdwg.mxu0
      %v1484 = vmul.f32 %v1377, 0.25
      %v1485 = vmul.f32 %v1379, 0.25
      %v1486 = vmul.f32 %v1382, 0.25
      %v1487 = vmul.f32 %v1384, 0.25
      %v1488 = vmul.f32 %v1387, 0.25
      %v1489 = vmul.f32 %v1389, 0.25
      %v1490 = vmul.f32 %v1392, 0.25
      %v1491 = vmul.f32 %v1394, 0.25
      %v1492 = vpack.c.bf16 %v1484, %v1484
      %v1493 = vpack.c.bf16 %v1485, %v1485
      %v1494 = vpack.c.bf16 %v1486, %v1486
      %v1495 = vpack.c.bf16 %v1487, %v1487
      %v1496 = vpack.c.bf16 %v1488, %v1488
      %v1497 = vpack.c.bf16 %v1489, %v1489
      %v1498 = vpack.c.bf16 %v1490, %v1490
      %v1499 = vpack.c.bf16 %v1491, %v1491
      %v1500 = vpack.c.bf16 %v1421, %v1421
      %v1501 = vpack.c.bf16 %v1423, %v1423
      %v1502 = vpack.c.bf16 %v1426, %v1426
      %v1503 = vpack.c.bf16 %v1428, %v1428
      %v1504 = vpack.c.bf16 %v1431, %v1431
      %v1505 = vpack.c.bf16 %v1433, %v1433
      %v1506 = vpack.c.bf16 %v1436, %v1436
      %v1507 = vpack.c.bf16 %v1438, %v1438
      %v1508 = vpack.c.bf16 %v1465, %v1465
      %v1509 = vpack.c.bf16 %v1467, %v1467
      %v1510 = vpack.c.bf16 %v1470, %v1470
      %v1511 = vpack.c.bf16 %v1472, %v1472
      %v1512 = vpack.c.bf16 %v1475, %v1475
      %v1513 = vpack.c.bf16 %v1477, %v1477
      %v1514 = vpack.c.bf16 %v1480, %v1480
      %v1515 = vpack.c.bf16 %v1482, %v1482
      %v1518 = vunpack.c.l.b16 %v1492
      %v1519 = vunpack.c.l.b16 %v1493
      %v1520 = vpack.c.b16 %v1519, %v1518
      %v1523 = vunpack.c.l.b16 %v1500
      %v1524 = vunpack.c.l.b16 %v1501
      %v1525 = vpack.c.b16 %v1524, %v1523
      %v1527 = vsel %vm925, %v1520, 0
      %v1530 = vsel %vm925, %v1525, 0
      %1532 = vmatpush.bf16.xpose.msra.mxu0 0
      %1533 = vmatpush.bf16.xpose.msra.mxu0 0
      %1534 = vmatpush.bf16.xpose.msra.mxu0 0
      %1535 = vmatpush.bf16.xpose.msra.mxu0 0
      %1536 = vmatpush.bf16.xpose.msra.mxu0 0
      %1537 = vmatpush.bf16.xpose.msra.mxu0 0
      %1538 = vmatpush.bf16.xpose.msra.mxu0 0
      %1539 = vmatpush.bf16.xpose.msra.mxu0 %v1530
      %1540 = vmatmul.bf16.gmra.mxu0 %v1527
      %v1541 = vpop.f32.mrf.mxu0
      %v1542 = vadd.f32 %v725, %v1541
      %v1543 = vpop.f32.mrf.mxu0
      %v1544 = vadd.f32 %v726, %v1543
      %1545 = vdwg.mxu0
      %v1548 = vunpack.c.l.b16 %v1494
      %v1549 = vunpack.c.l.b16 %v1495
      %v1550 = vpack.c.b16 %v1549, %v1548
      %v1553 = vunpack.c.l.b16 %v1502
      %v1554 = vunpack.c.l.b16 %v1503
      %v1555 = vpack.c.b16 %v1554, %v1553
      %v1557 = vsel %vm925, %v1550, 0
      %v1560 = vsel %vm925, %v1555, 0
      %1562 = vmatpush.bf16.xpose.msra.mxu0 0
      %1563 = vmatpush.bf16.xpose.msra.mxu0 0
      %1564 = vmatpush.bf16.xpose.msra.mxu0 0
      %1565 = vmatpush.bf16.xpose.msra.mxu0 0
      %1566 = vmatpush.bf16.xpose.msra.mxu0 0
      %1567 = vmatpush.bf16.xpose.msra.mxu0 0
      %1568 = vmatpush.bf16.xpose.msra.mxu0 0
      %1569 = vmatpush.bf16.xpose.msra.mxu0 %v1560
      %1570 = vmatmul.bf16.gmra.mxu0 %v1557
      %v1571 = vpop.f32.mrf.mxu0
      %v1572 = vadd.f32 %v729, %v1571
      %v1573 = vpop.f32.mrf.mxu0
      %v1574 = vadd.f32 %v730, %v1573
      %1575 = vdwg.mxu0
      %v1578 = vunpack.c.l.b16 %v1496
      %v1579 = vunpack.c.l.b16 %v1497
      %v1580 = vpack.c.b16 %v1579, %v1578
      %v1583 = vunpack.c.l.b16 %v1504
      %v1584 = vunpack.c.l.b16 %v1505
      %v1585 = vpack.c.b16 %v1584, %v1583
      %v1587 = vsel %vm925, %v1580, 0
      %v1590 = vsel %vm925, %v1585, 0
      %1592 = vmatpush.bf16.xpose.msra.mxu0 0
      %1593 = vmatpush.bf16.xpose.msra.mxu0 0
      %1594 = vmatpush.bf16.xpose.msra.mxu0 0
      %1595 = vmatpush.bf16.xpose.msra.mxu0 0
      %1596 = vmatpush.bf16.xpose.msra.mxu0 0
      %1597 = vmatpush.bf16.xpose.msra.mxu0 0
      %1598 = vmatpush.bf16.xpose.msra.mxu0 0
      %1599 = vmatpush.bf16.xpose.msra.mxu0 %v1590
      %1600 = vmatmul.bf16.gmra.mxu0 %v1587
      %v1601 = vpop.f32.mrf.mxu0
      %v1602 = vadd.f32 %v733, %v1601
      %v1603 = vpop.f32.mrf.mxu0
      %v1604 = vadd.f32 %v734, %v1603
      %1605 = vdwg.mxu0
      %v1608 = vunpack.c.l.b16 %v1498
      %v1609 = vunpack.c.l.b16 %v1499
      %v1610 = vpack.c.b16 %v1609, %v1608
      %v1613 = vunpack.c.l.b16 %v1506
      %v1614 = vunpack.c.l.b16 %v1507
      %v1615 = vpack.c.b16 %v1614, %v1613
      %v1617 = vsel %vm925, %v1610, 0
      %v1620 = vsel %vm925, %v1615, 0
      %1622 = vmatpush.bf16.xpose.msra.mxu0 0
      %1623 = vmatpush.bf16.xpose.msra.mxu0 0
      %1624 = vmatpush.bf16.xpose.msra.mxu0 0
      %1625 = vmatpush.bf16.xpose.msra.mxu0 0
      %1626 = vmatpush.bf16.xpose.msra.mxu0 0
      %1627 = vmatpush.bf16.xpose.msra.mxu0 0
      %1628 = vmatpush.bf16.xpose.msra.mxu0 0
      %1629 = vmatpush.bf16.xpose.msra.mxu0 %v1620
      %1630 = vmatmul.bf16.gmra.mxu0 %v1617
      %v1631 = vpop.f32.mrf.mxu0
      %v1632 = vadd.f32 %v737, %v1631
      %v1633 = vpop.f32.mrf.mxu0
      %v1634 = vadd.f32 %v738, %v1633
      %1635 = vdwg.mxu0
      %v1636 = vsel %vm925, %v1542, -inf
      %1637 = vmax.xlane.f32.xlu0 %v1636
      %v1638 = vpop.xlane.xlu0 %1637
      %v1639 = vsel %vm925, %v1544, -inf
      %1640 = vmax.xlane.f32.xlu0 %v1639
      %v1641 = vpop.xlane.xlu0 %1640
      %v1642 = vsel %vm925, %v1572, -inf
      %1643 = vmax.xlane.f32.xlu0 %v1642
      %v1644 = vpop.xlane.xlu0 %1643
      %v1645 = vsel %vm925, %v1574, -inf
      %1646 = vmax.xlane.f32.xlu0 %v1645
      %v1647 = vpop.xlane.xlu0 %1646
      %v1648 = vsel %vm925, %v1602, -inf
      %1649 = vmax.xlane.f32.xlu0 %v1648
      %v1650 = vpop.xlane.xlu0 %1649
      %v1651 = vsel %vm925, %v1604, -inf
      %1652 = vmax.xlane.f32.xlu0 %v1651
      %v1653 = vpop.xlane.xlu0 %1652
      %v1654 = vsel %vm925, %v1632, -inf
      %1655 = vmax.xlane.f32.xlu0 %v1654
      %v1656 = vpop.xlane.xlu0 %1655
      %v1657 = vsel %vm925, %v1634, -inf
      %1658 = vmax.xlane.f32.xlu0 %v1657
      %v1659 = vpop.xlane.xlu0 %1658
      %v1660 = vsub.f32 %v1542, %v1638
      %v1661 = vsub.f32 %v1544, %v1641
      %v1662 = vsub.f32 %v1572, %v1644
      %v1663 = vsub.f32 %v1574, %v1647
      %v1664 = vsub.f32 %v1602, %v1650
      %v1665 = vsub.f32 %v1604, %v1653
      %v1666 = vsub.f32 %v1632, %v1656
      %v1667 = vsub.f32 %v1634, %v1659
      %v1668 = vmul.f32 %v1660, 1.442695
      %v1669 = vpow.pop %v1668
      %v1670 = vmul.f32 %v1661, 1.442695
      %v1671 = vpow.pop %v1670
      %v1672 = vmul.f32 %v1662, 1.442695
      %v1673 = vpow.pop %v1672
      %v1674 = vmul.f32 %v1663, 1.442695
      %v1675 = vpow.pop %v1674
      %v1676 = vmul.f32 %v1664, 1.442695
      %v1677 = vpow.pop %v1676
      %v1678 = vmul.f32 %v1665, 1.442695
      %v1679 = vpow.pop %v1678
      %v1680 = vmul.f32 %v1666, 1.442695
      %v1681 = vpow.pop %v1680
      %v1682 = vmul.f32 %v1667, 1.442695
      %v1683 = vpow.pop %v1682
      %v1684 = vsel %vm925, %v1669, 0.0
      %1685 = vadd.xlane.f32.xlu0 %v1684
      %v1686 = vpop.xlane.xlu0 %1685
      %v1687 = vsel %vm925, %v1671, 0.0
      %1688 = vadd.xlane.f32.xlu0 %v1687
      %v1689 = vpop.xlane.xlu0 %1688
      %v1690 = vsel %vm925, %v1673, 0.0
      %1691 = vadd.xlane.f32.xlu0 %v1690
      %v1692 = vpop.xlane.xlu0 %1691
      %v1693 = vsel %vm925, %v1675, 0.0
      %1694 = vadd.xlane.f32.xlu0 %v1693
      %v1695 = vpop.xlane.xlu0 %1694
      %v1696 = vsel %vm925, %v1677, 0.0
      %1697 = vadd.xlane.f32.xlu0 %v1696
      %v1698 = vpop.xlane.xlu0 %1697
      %v1699 = vsel %vm925, %v1679, 0.0
      %1700 = vadd.xlane.f32.xlu0 %v1699
      %v1701 = vpop.xlane.xlu0 %1700
      %v1702 = vsel %vm925, %v1681, 0.0
      %1703 = vadd.xlane.f32.xlu0 %v1702
      %v1704 = vpop.xlane.xlu0 %1703
      %v1705 = vsel %vm925, %v1683, 0.0
      %1706 = vadd.xlane.f32.xlu0 %v1705
      %v1707 = vpop.xlane.xlu0 %1706
      %v1708 = vrcp.pop %v1686
      %v1709 = vmul.f32 %v1686, %v1708
      %v1710 = vsub.f32 1.0, %v1709
      %v1711 = vmul.f32 %v1708, %v1710
      %v1712 = vadd.f32 %v1708, %v1711
      %vm1713 = vweird.f32 %v1686
      %vm1714 = vweird.f32 %v1708
      %vm1715 = vmor %vm1713, %vm1714
      %v1716 = vsel %vm1715, %v1708, %v1712
      %v1717 = vand.u32 2147483647, %v1686
      %vm1718 = vcmp.eq.f32.partialorder %v1717, 8.507059e+37
      %v1719 = vand.u32 %v1686, 2147483648
      %v1720 = vor.u32 1.1754944e-38, %v1719
      %v1721 = vsel %vm1718, %v1720, %v1716
      %v1722 = vmul.f32 %v1669, %v1721
      %v1723 = vrcp.pop %v1689
      %v1724 = vmul.f32 %v1689, %v1723
      %v1725 = vsub.f32 1.0, %v1724
      %v1726 = vmul.f32 %v1723, %v1725
      %v1727 = vadd.f32 %v1723, %v1726
      %vm1728 = vweird.f32 %v1689
      %vm1729 = vweird.f32 %v1723
      %vm1730 = vmor %vm1728, %vm1729
      %v1731 = vsel %vm1730, %v1723, %v1727
      %v1732 = vand.u32 2147483647, %v1689
      %vm1733 = vcmp.eq.f32.partialorder %v1732, 8.507059e+37
      %v1734 = vand.u32 %v1689, 2147483648
      %v1735 = vor.u32 1.1754944e-38, %v1734
      %v1736 = vsel %vm1733, %v1735, %v1731
      %v1737 = vmul.f32 %v1671, %v1736
      %v1738 = vrcp.pop %v1692
      %v1739 = vmul.f32 %v1692, %v1738
      %v1740 = vsub.f32 1.0, %v1739
      %v1741 = vmul.f32 %v1738, %v1740
      %v1742 = vadd.f32 %v1738, %v1741
      %vm1743 = vweird.f32 %v1692
      %vm1744 = vweird.f32 %v1738
      %vm1745 = vmor %vm1743, %vm1744
      %v1746 = vsel %vm1745, %v1738, %v1742
      %v1747 = vand.u32 2147483647, %v1692
      %vm1748 = vcmp.eq.f32.partialorder %v1747, 8.507059e+37
      %v1749 = vand.u32 %v1692, 2147483648
      %v1750 = vor.u32 1.1754944e-38, %v1749
      %v1751 = vsel %vm1748, %v1750, %v1746
      %v1752 = vmul.f32 %v1673, %v1751
      %v1753 = vrcp.pop %v1695
      %v1754 = vmul.f32 %v1695, %v1753
      %v1755 = vsub.f32 1.0, %v1754
      %v1756 = vmul.f32 %v1753, %v1755
      %v1757 = vadd.f32 %v1753, %v1756
      %vm1758 = vweird.f32 %v1695
      %vm1759 = vweird.f32 %v1753
      %vm1760 = vmor %vm1758, %vm1759
      %v1761 = vsel %vm1760, %v1753, %v1757
      %v1762 = vand.u32 2147483647, %v1695
      %vm1763 = vcmp.eq.f32.partialorder %v1762, 8.507059e+37
      %v1764 = vand.u32 %v1695, 2147483648
      %v1765 = vor.u32 1.1754944e-38, %v1764
      %v1766 = vsel %vm1763, %v1765, %v1761
      %v1767 = vmul.f32 %v1675, %v1766
      %v1768 = vrcp.pop %v1698
      %v1769 = vmul.f32 %v1698, %v1768
      %v1770 = vsub.f32 1.0, %v1769
      %v1771 = vmul.f32 %v1768, %v1770
      %v1772 = vadd.f32 %v1768, %v1771
      %vm1773 = vweird.f32 %v1698
      %vm1774 = vweird.f32 %v1768
      %vm1775 = vmor %vm1773, %vm1774
      %v1776 = vsel %vm1775, %v1768, %v1772
      %v1777 = vand.u32 2147483647, %v1698
      %vm1778 = vcmp.eq.f32.partialorder %v1777, 8.507059e+37
      %v1779 = vand.u32 %v1698, 2147483648
      %v1780 = vor.u32 1.1754944e-38, %v1779
      %v1781 = vsel %vm1778, %v1780, %v1776
      %v1782 = vmul.f32 %v1677, %v1781
      %v1783 = vrcp.pop %v1701
      %v1784 = vmul.f32 %v1701, %v1783
      %v1785 = vsub.f32 1.0, %v1784
      %v1786 = vmul.f32 %v1783, %v1785
      %v1787 = vadd.f32 %v1783, %v1786
      %vm1788 = vweird.f32 %v1701
      %vm1789 = vweird.f32 %v1783
      %vm1790 = vmor %vm1788, %vm1789
      %v1791 = vsel %vm1790, %v1783, %v1787
      %v1792 = vand.u32 2147483647, %v1701
      %vm1793 = vcmp.eq.f32.partialorder %v1792, 8.507059e+37
      %v1794 = vand.u32 %v1701, 2147483648
      %v1795 = vor.u32 1.1754944e-38, %v1794
      %v1796 = vsel %vm1793, %v1795, %v1791
      %v1797 = vmul.f32 %v1679, %v1796
      %v1798 = vrcp.pop %v1704
      %v1799 = vmul.f32 %v1704, %v1798
      %v1800 = vsub.f32 1.0, %v1799
      %v1801 = vmul.f32 %v1798, %v1800
      %v1802 = vadd.f32 %v1798, %v1801
      %vm1803 = vweird.f32 %v1704
      %vm1804 = vweird.f32 %v1798
      %vm1805 = vmor %vm1803, %vm1804
      %v1806 = vsel %vm1805, %v1798, %v1802
      %v1807 = vand.u32 2147483647, %v1704
      %vm1808 = vcmp.eq.f32.partialorder %v1807, 8.507059e+37
      %v1809 = vand.u32 %v1704, 2147483648
      %v1810 = vor.u32 1.1754944e-38, %v1809
      %v1811 = vsel %vm1808, %v1810, %v1806
      %v1812 = vmul.f32 %v1681, %v1811
      %v1813 = vrcp.pop %v1707
      %v1814 = vmul.f32 %v1707, %v1813
      %v1815 = vsub.f32 1.0, %v1814
      %v1816 = vmul.f32 %v1813, %v1815
      %v1817 = vadd.f32 %v1813, %v1816
      %vm1818 = vweird.f32 %v1707
      %vm1819 = vweird.f32 %v1813
      %vm1820 = vmor %vm1818, %vm1819
      %v1821 = vsel %vm1820, %v1813, %v1817
      %v1822 = vand.u32 2147483647, %v1707
      %vm1823 = vcmp.eq.f32.partialorder %v1822, 8.507059e+37
      %v1824 = vand.u32 %v1707, 2147483648
      %v1825 = vor.u32 1.1754944e-38, %v1824
      %v1826 = vsel %vm1823, %v1825, %v1821
      %v1827 = vmul.f32 %v1683, %v1826
      %v1828 = vpack.c.bf16 %v1722, %v1722
      %v1829 = vpack.c.bf16 %v1737, %v1737
      %v1830 = vpack.c.bf16 %v1752, %v1752
      %v1831 = vpack.c.bf16 %v1767, %v1767
      %v1832 = vpack.c.bf16 %v1782, %v1782
      %v1833 = vpack.c.bf16 %v1797, %v1797
      %v1834 = vpack.c.bf16 %v1812, %v1812
      %v1835 = vpack.c.bf16 %v1827, %v1827
      %v1838 = vunpack.c.l.b16 %v1828
      %v1839 = vunpack.c.l.b16 %v1829
      %v1840 = vpack.c.b16 %v1839, %v1838
      %v1843 = vunpack.c.l.b16 %v1508
      %v1844 = vunpack.c.l.b16 %v1509
      %v1845 = vpack.c.b16 %v1844, %v1843
      %v1848 = vsel %vm925, %v1840, 0
      %1850 = vmatpush.bf16.msra.mxu0 0
      %1851 = vmatpush.bf16.msra.mxu0 0
      %1852 = vmatpush.bf16.msra.mxu0 0
      %1853 = vmatpush.bf16.msra.mxu0 0
      %1854 = vmatpush.bf16.msra.mxu0 0
      %1855 = vmatpush.bf16.msra.mxu0 0
      %1856 = vmatpush.bf16.msra.mxu0 0
      %1857 = vmatpush.bf16.msra.mxu0 %v1845
      %1858 = vmatmul.bf16.gmra.mxu0 %v1848
      %v1859 = vpop.f32.mrf.mxu0
      %v1860 = vadd.f32 0.0, %v1859
      %v1861 = vpop.f32.mrf.mxu0
      %v1862 = vadd.f32 0.0, %v1861
      %1863 = vdwg.mxu0
      %v1866 = vunpack.c.l.b16 %v1830
      %v1867 = vunpack.c.l.b16 %v1831
      %v1868 = vpack.c.b16 %v1867, %v1866
      %v1871 = vunpack.c.l.b16 %v1510
      %v1872 = vunpack.c.l.b16 %v1511
      %v1873 = vpack.c.b16 %v1872, %v1871
      %v1876 = vsel %vm925, %v1868, 0
      %1878 = vmatpush.bf16.msra.mxu0 0
      %1879 = vmatpush.bf16.msra.mxu0 0
      %1880 = vmatpush.bf16.msra.mxu0 0
      %1881 = vmatpush.bf16.msra.mxu0 0
      %1882 = vmatpush.bf16.msra.mxu0 0
      %1883 = vmatpush.bf16.msra.mxu0 0
      %1884 = vmatpush.bf16.msra.mxu0 0
      %1885 = vmatpush.bf16.msra.mxu0 %v1873
      %1886 = vmatmul.bf16.gmra.mxu0 %v1876
      %v1887 = vpop.f32.mrf.mxu0
      %v1888 = vadd.f32 0.0, %v1887
      %v1889 = vpop.f32.mrf.mxu0
      %v1890 = vadd.f32 0.0, %v1889
      %1891 = vdwg.mxu0
      %v1894 = vunpack.c.l.b16 %v1832
      %v1895 = vunpack.c.l.b16 %v1833
      %v1896 = vpack.c.b16 %v1895, %v1894
      %v1899 = vunpack.c.l.b16 %v1512
      %v1900 = vunpack.c.l.b16 %v1513
      %v1901 = vpack.c.b16 %v1900, %v1899
      %v1904 = vsel %vm925, %v1896, 0
      %1906 = vmatpush.bf16.msra.mxu0 0
      %1907 = vmatpush.bf16.msra.mxu0 0
      %1908 = vmatpush.bf16.msra.mxu0 0
      %1909 = vmatpush.bf16.msra.mxu0 0
      %1910 = vmatpush.bf16.msra.mxu0 0
      %1911 = vmatpush.bf16.msra.mxu0 0
      %1912 = vmatpush.bf16.msra.mxu0 0
      %1913 = vmatpush.bf16.msra.mxu0 %v1901
      %1914 = vmatmul.bf16.gmra.mxu0 %v1904
      %v1915 = vpop.f32.mrf.mxu0
      %v1916 = vadd.f32 0.0, %v1915
      %v1917 = vpop.f32.mrf.mxu0
      %v1918 = vadd.f32 0.0, %v1917
      %1919 = vdwg.mxu0
      %v1922 = vunpack.c.l.b16 %v1834
      %v1923 = vunpack.c.l.b16 %v1835
      %v1924 = vpack.c.b16 %v1923, %v1922
      %v1927 = vunpack.c.l.b16 %v1514
      %v1928 = vunpack.c.l.b16 %v1515
      %v1929 = vpack.c.b16 %v1928, %v1927
      %v1932 = vsel %vm925, %v1924, 0
      %1934 = vmatpush.bf16.msra.mxu0 0
      %1935 = vmatpush.bf16.msra.mxu0 0
      %1936 = vmatpush.bf16.msra.mxu0 0
      %1937 = vmatpush.bf16.msra.mxu0 0
      %1938 = vmatpush.bf16.msra.mxu0 0
      %1939 = vmatpush.bf16.msra.mxu0 0
      %1940 = vmatpush.bf16.msra.mxu0 0
      %1941 = vmatpush.bf16.msra.mxu0 %v1929
      %1942 = vmatmul.bf16.gmra.mxu0 %v1932
      %v1943 = vpop.f32.mrf.mxu0
      %v1944 = vadd.f32 0.0, %v1943
      %v1945 = vpop.f32.mrf.mxu0
      %v1946 = vadd.f32 0.0, %v1945
      %1947 = vdwg.mxu0
      %v1948 = vpack.c.bf16 %v1862, %v1860
      %v1949 = vpack.c.bf16 %v1890, %v1888
      %v1950 = vpack.c.bf16 %v1918, %v1916
      %v1951 = vpack.c.bf16 %v1946, %v1944
      %v1954 = vunpack.c.l.b16 %v721
      %v1955 = vunpack.c.l.b16 %v722
      %v1956 = vpack.c.b16 %v1955, %v1954
      %v1959 = vsel %vm925, %v1948, 0
      %v1962 = vsel %vm925, %v1949, 0
      %v1965 = vsel %vm925, %v1950, 0
      %v1968 = vsel %vm925, %v1951, 0
      %1970 = vmatpush.bf16.msra.mxu0 0
      %1971 = vmatpush.bf16.msra.mxu0 0
      %1972 = vmatpush.bf16.msra.mxu0 0
      %1973 = vmatpush.bf16.msra.mxu0 0
      %1974 = vmatpush.bf16.msra.mxu0 0
      %1975 = vmatpush.bf16.msra.mxu0 0
      %1976 = vmatpush.bf16.msra.mxu0 0
      %1977 = vmatpush.bf16.msra.mxu0 %v1956
      %1978 = vmatmul.bf16.gmra.mxu0 %v1959
      %v1979 = vpop.f32.mrf.mxu0
      %v1980 = vadd.f32 0.0, %v1979
      %v1981 = vpop.f32.mrf.mxu0
      %v1982 = vadd.f32 0.0, %v1981
      %1983 = vmatmul.bf16.gmra.mxu0 %v1962
      %v1984 = vpop.f32.mrf.mxu0
      %v1985 = vadd.f32 0.0, %v1984
      %v1986 = vpop.f32.mrf.mxu0
      %v1987 = vadd.f32 0.0, %v1986
      %1988 = vmatmul.bf16.gmra.mxu0 %v1965
      %v1989 = vpop.f32.mrf.mxu0
      %v1990 = vadd.f32 0.0, %v1989
      %v1991 = vpop.f32.mrf.mxu0
      %v1992 = vadd.f32 0.0, %v1991
      %1993 = vmatmul.bf16.gmra.mxu0 %v1968
      %v1994 = vpop.f32.mrf.mxu0
      %v1995 = vadd.f32 0.0, %v1994
      %v1996 = vpop.f32.mrf.mxu0
      %v1997 = vadd.f32 0.0, %v1996
      %1998 = vdwg.mxu0
      %v2001 = vunpack.c.l.b16 %v719
      %v2002 = vunpack.c.l.b16 %v720
      %v2003 = vpack.c.b16 %v2002, %v2001
      %v2006 = vsel %vm925, %v1348, 0
      %v2009 = vsel %vm925, %v1349, 0
      %v2012 = vsel %vm925, %v1350, 0
      %v2015 = vsel %vm925, %v1351, 0
      %2017 = vmatpush.bf16.msra.mxu0 0
      %2018 = vmatpush.bf16.msra.mxu0 0
      %2019 = vmatpush.bf16.msra.mxu0 0
      %2020 = vmatpush.bf16.msra.mxu0 0
      %2021 = vmatpush.bf16.msra.mxu0 0
      %2022 = vmatpush.bf16.msra.mxu0 0
      %2023 = vmatpush.bf16.msra.mxu0 0
      %2024 = vmatpush.bf16.msra.mxu0 %v2003
      %2025 = vmatmul.bf16.gmra.mxu0 %v2006
      %v2026 = vpop.f32.mrf.mxu0
      %v2027 = vadd.f32 %v1980, %v2026
      %v2028 = vpop.f32.mrf.mxu0
      %v2029 = vadd.f32 %v1982, %v2028
      %2030 = vmatmul.bf16.gmra.mxu0 %v2009
      %v2031 = vpop.f32.mrf.mxu0
      %v2032 = vadd.f32 %v1985, %v2031
      %v2033 = vpop.f32.mrf.mxu0
      %v2034 = vadd.f32 %v1987, %v2033
      %2035 = vmatmul.bf16.gmra.mxu0 %v2012
      %v2036 = vpop.f32.mrf.mxu0
      %v2037 = vadd.f32 %v1990, %v2036
      %v2038 = vpop.f32.mrf.mxu0
      %v2039 = vadd.f32 %v1992, %v2038
      %2040 = vmatmul.bf16.gmra.mxu0 %v2015
      %v2041 = vpop.f32.mrf.mxu0
      %v2042 = vadd.f32 %v1995, %v2041
      %v2043 = vpop.f32.mrf.mxu0
      %v2044 = vadd.f32 %v1997, %v2043
      %2045 = vdwg.mxu0
      %v2046 = vadd.f32 %v469, %v2027
      %v2047 = vadd.f32 %v470, %v2029
      %v2048 = vadd.f32 %v471, %v2032
      %v2049 = vadd.f32 %v472, %v2034
      %v2050 = vadd.f32 %v473, %v2037
      %v2051 = vadd.f32 %v474, %v2039
      %v2052 = vadd.f32 %v475, %v2042
      %v2053 = vadd.f32 %v476, %v2044
      %v2054 = vld [vmem:[%s5] sm:$0x1]
      %v2056 = vperm.slane %v2054, 0
      %v2058 = vadd.f32 %v2046, %v2056
      %v2059 = vadd.f32 %v2047, %v2056
      %v2060 = vadd.f32 %v2048, %v2056
      %v2061 = vadd.f32 %v2049, %v2056
      %v2062 = vadd.f32 %v2050, %v2056
      %v2063 = vadd.f32 %v2051, %v2056
      %v2064 = vadd.f32 %v2052, %v2056
      %v2065 = vadd.f32 %v2053, %v2056
      %v2066 = vld [vmem:[%s8] sm:$0x1]
      %v2067 = vld [vmem:[%s9] sm:$0x1]
      %v2068 = vsel %vm479, %v2058, 0.0
      %2069 = vadd.xlane.f32.xlu0 %v2068
      %v2070 = vpop.xlane.xlu0 %2069
      %v2071 = vsel %vm479, %v2059, 0.0
      %2072 = vadd.xlane.f32.xlu0 %v2071
      %v2073 = vpop.xlane.xlu0 %2072
      %v2074 = vsel %vm479, %v2060, 0.0
      %2075 = vadd.xlane.f32.xlu0 %v2074
      %v2076 = vpop.xlane.xlu0 %2075
      %v2077 = vsel %vm479, %v2061, 0.0
      %2078 = vadd.xlane.f32.xlu0 %v2077
      %v2079 = vpop.xlane.xlu0 %2078
      %v2080 = vsel %vm479, %v2062, 0.0
      %2081 = vadd.xlane.f32.xlu0 %v2080
      %v2082 = vpop.xlane.xlu0 %2081
      %v2083 = vsel %vm479, %v2063, 0.0
      %2084 = vadd.xlane.f32.xlu0 %v2083
      %v2085 = vpop.xlane.xlu0 %2084
      %v2086 = vsel %vm479, %v2064, 0.0
      %2087 = vadd.xlane.f32.xlu0 %v2086
      %v2088 = vpop.xlane.xlu0 %2087
      %v2089 = vsel %vm479, %v2065, 0.0
      %2090 = vadd.xlane.f32.xlu0 %v2089
      %v2091 = vpop.xlane.xlu0 %2090
      %v2092 = vmul.f32 %v2070, %v510
      %v2093 = vmul.f32 %v2073, %v510
      %v2094 = vmul.f32 %v2076, %v510
      %v2095 = vmul.f32 %v2079, %v510
      %v2096 = vmul.f32 %v2082, %v510
      %v2097 = vmul.f32 %v2085, %v510
      %v2098 = vmul.f32 %v2088, %v510
      %v2099 = vmul.f32 %v2091, %v510
      %v2100 = vsub.f32 %v2058, %v2092
      %v2101 = vsub.f32 %v2059, %v2093
      %v2102 = vsub.f32 %v2060, %v2094
      %v2103 = vsub.f32 %v2061, %v2095
      %v2104 = vsub.f32 %v2062, %v2096
      %v2105 = vsub.f32 %v2063, %v2097
      %v2106 = vsub.f32 %v2064, %v2098
      %v2107 = vsub.f32 %v2065, %v2099
      %v2108 = vmul.f32 %v2100, %v2100
      %v2109 = vmul.f32 %v2101, %v2101
      %v2110 = vmul.f32 %v2102, %v2102
      %v2111 = vmul.f32 %v2103, %v2103
      %v2112 = vmul.f32 %v2104, %v2104
      %v2113 = vmul.f32 %v2105, %v2105
      %v2114 = vmul.f32 %v2106, %v2106
      %v2115 = vmul.f32 %v2107, %v2107
      %v2116 = vsel %vm479, %v2108, 0.0
      %2117 = vadd.xlane.f32.xlu0 %v2116
      %v2118 = vpop.xlane.xlu0 %2117
      %v2119 = vsel %vm479, %v2109, 0.0
      %2120 = vadd.xlane.f32.xlu0 %v2119
      %v2121 = vpop.xlane.xlu0 %2120
      %v2122 = vsel %vm479, %v2110, 0.0
      %2123 = vadd.xlane.f32.xlu0 %v2122
      %v2124 = vpop.xlane.xlu0 %2123
      %v2125 = vsel %vm479, %v2111, 0.0
      %2126 = vadd.xlane.f32.xlu0 %v2125
      %v2127 = vpop.xlane.xlu0 %2126
      %v2128 = vsel %vm479, %v2112, 0.0
      %2129 = vadd.xlane.f32.xlu0 %v2128
      %v2130 = vpop.xlane.xlu0 %2129
      %v2131 = vsel %vm479, %v2113, 0.0
      %2132 = vadd.xlane.f32.xlu0 %v2131
      %v2133 = vpop.xlane.xlu0 %2132
      %v2134 = vsel %vm479, %v2114, 0.0
      %2135 = vadd.xlane.f32.xlu0 %v2134
      %v2136 = vpop.xlane.xlu0 %2135
      %v2137 = vsel %vm479, %v2115, 0.0
      %2138 = vadd.xlane.f32.xlu0 %v2137
      %v2139 = vpop.xlane.xlu0 %2138
      %v2140 = vmul.f32 %v2118, %v510
      %v2141 = vmul.f32 %v2121, %v510
      %v2142 = vmul.f32 %v2124, %v510
      %v2143 = vmul.f32 %v2127, %v510
      %v2144 = vmul.f32 %v2130, %v510
      %v2145 = vmul.f32 %v2133, %v510
      %v2146 = vmul.f32 %v2136, %v510
      %v2147 = vmul.f32 %v2139, %v510
      %v2148 = vadd.f32 %v2140, 1e-05
      %v2149 = vadd.f32 %v2141, 1e-05
      %v2150 = vadd.f32 %v2142, 1e-05
      %v2151 = vadd.f32 %v2143, 1e-05
      %v2152 = vadd.f32 %v2144, 1e-05
      %v2153 = vadd.f32 %v2145, 1e-05
      %v2154 = vadd.f32 %v2146, 1e-05
      %v2155 = vadd.f32 %v2147, 1e-05
      %v2156 = vrsqrt.pop %v2148
      %v2157 = vmul.f32 %v2156, %v2148
      %v2158 = vmul.f32 %v2157, %v2156
      %v2159 = vmul.f32 0.5, %v2158
      %v2160 = vsub.f32 1.5, %v2159
      %v2161 = vmul.f32 %v2156, %v2160
      %vm2162 = vweird.f32 %v2148
      %vm2163 = vweird.f32 %v2156
      %vm2164 = vmor %vm2162, %vm2163
      %v2165 = vsel %vm2164, %v2156, %v2161
      %v2166 = vrsqrt.pop %v2149
      %v2167 = vmul.f32 %v2166, %v2149
      %v2168 = vmul.f32 %v2167, %v2166
      %v2169 = vmul.f32 0.5, %v2168
      %v2170 = vsub.f32 1.5, %v2169
      %v2171 = vmul.f32 %v2166, %v2170
      %vm2172 = vweird.f32 %v2149
      %vm2173 = vweird.f32 %v2166
      %vm2174 = vmor %vm2172, %vm2173
      %v2175 = vsel %vm2174, %v2166, %v2171
      %v2176 = vrsqrt.pop %v2150
      %v2177 = vmul.f32 %v2176, %v2150
      %v2178 = vmul.f32 %v2177, %v2176
      %v2179 = vmul.f32 0.5, %v2178
      %v2180 = vsub.f32 1.5, %v2179
      %v2181 = vmul.f32 %v2176, %v2180
      %vm2182 = vweird.f32 %v2150
      %vm2183 = vweird.f32 %v2176
      %vm2184 = vmor %vm2182, %vm2183
      %v2185 = vsel %vm2184, %v2176, %v2181
      %v2186 = vrsqrt.pop %v2151
      %v2187 = vmul.f32 %v2186, %v2151
      %v2188 = vmul.f32 %v2187, %v2186
      %v2189 = vmul.f32 0.5, %v2188
      %v2190 = vsub.f32 1.5, %v2189
      %v2191 = vmul.f32 %v2186, %v2190
      %vm2192 = vweird.f32 %v2151
      %vm2193 = vweird.f32 %v2186
      %vm2194 = vmor %vm2192, %vm2193
      %v2195 = vsel %vm2194, %v2186, %v2191
      %v2196 = vrsqrt.pop %v2152
      %v2197 = vmul.f32 %v2196, %v2152
      %v2198 = vmul.f32 %v2197, %v2196
      %v2199 = vmul.f32 0.5, %v2198
      %v2200 = vsub.f32 1.5, %v2199
      %v2201 = vmul.f32 %v2196, %v2200
      %vm2202 = vweird.f32 %v2152
      %vm2203 = vweird.f32 %v2196
      %vm2204 = vmor %vm2202, %vm2203
      %v2205 = vsel %vm2204, %v2196, %v2201
      %v2206 = vrsqrt.pop %v2153
      %v2207 = vmul.f32 %v2206, %v2153
      %v2208 = vmul.f32 %v2207, %v2206
      %v2209 = vmul.f32 0.5, %v2208
      %v2210 = vsub.f32 1.5, %v2209
      %v2211 = vmul.f32 %v2206, %v2210
      %vm2212 = vweird.f32 %v2153
      %vm2213 = vweird.f32 %v2206
      %vm2214 = vmor %vm2212, %vm2213
      %v2215 = vsel %vm2214, %v2206, %v2211
      %v2216 = vrsqrt.pop %v2154
      %v2217 = vmul.f32 %v2216, %v2154
      %v2218 = vmul.f32 %v2217, %v2216
      %v2219 = vmul.f32 0.5, %v2218
      %v2220 = vsub.f32 1.5, %v2219
      %v2221 = vmul.f32 %v2216, %v2220
      %vm2222 = vweird.f32 %v2154
      %vm2223 = vweird.f32 %v2216
      %vm2224 = vmor %vm2222, %vm2223
      %v2225 = vsel %vm2224, %v2216, %v2221
      %v2226 = vrsqrt.pop %v2155
      %v2227 = vmul.f32 %v2226, %v2155
      %v2228 = vmul.f32 %v2227, %v2226
      %v2229 = vmul.f32 0.5, %v2228
      %v2230 = vsub.f32 1.5, %v2229
      %v2231 = vmul.f32 %v2226, %v2230
      %vm2232 = vweird.f32 %v2155
      %vm2233 = vweird.f32 %v2226
      %vm2234 = vmor %vm2232, %vm2233
      %v2235 = vsel %vm2234, %v2226, %v2231
      %v2236 = vmul.f32 %v2100, %v2165
      %v2237 = vmul.f32 %v2101, %v2175
      %v2238 = vmul.f32 %v2102, %v2185
      %v2239 = vmul.f32 %v2103, %v2195
      %v2240 = vmul.f32 %v2104, %v2205
      %v2241 = vmul.f32 %v2105, %v2215
      %v2242 = vmul.f32 %v2106, %v2225
      %v2243 = vmul.f32 %v2107, %v2235
      %v2245 = vperm.slane %v2066, 0
      %v2247 = vmul.f32 %v2236, %v2245
      %v2248 = vmul.f32 %v2237, %v2245
      %v2249 = vmul.f32 %v2238, %v2245
      %v2250 = vmul.f32 %v2239, %v2245
      %v2251 = vmul.f32 %v2240, %v2245
      %v2252 = vmul.f32 %v2241, %v2245
      %v2253 = vmul.f32 %v2242, %v2245
      %v2254 = vmul.f32 %v2243, %v2245
      %v2256 = vperm.slane %v2067, 0
      %v2258 = vadd.f32 %v2247, %v2256
      %v2259 = vadd.f32 %v2248, %v2256
      %v2260 = vadd.f32 %v2249, %v2256
      %v2261 = vadd.f32 %v2250, %v2256
      %v2262 = vadd.f32 %v2251, %v2256
      %v2263 = vadd.f32 %v2252, %v2256
      %v2264 = vadd.f32 %v2253, %v2256
      %v2265 = vadd.f32 %v2254, %v2256
      %v2266 = vpack.c.bf16 %v2259, %v2258
      %v2267 = vpack.c.bf16 %v2261, %v2260
      %v2268 = vpack.c.bf16 %v2263, %v2262
      %v2269 = vpack.c.bf16 %v2265, %v2264
      %v2270 = vld [vmem:[%s10] sm:$0xf]
      %v2271 = vld [vmem:[%s10 + $0x4] sm:$0xf]
      %v2272 = vld [vmem:[%s10 + $0x8] sm:$0xf]
      %v2273 = vld [vmem:[%s10 + $0xc] sm:$0xf]
      %v2274 = vld [vmem:[%s11] sm:$0x1]
      %v2276 = vperm.slane %v2274, 0
      %v2282 = vunpack.c.l.b16 %v2270
      %v2283 = vunpack.c.l.b16 %v2271
      %v2284 = vunpack.c.l.b16 %v2272
      %v2285 = vunpack.c.l.b16 %v2273
      %v2286 = vpack.c.b16 %v2283, %v2282
      %v2287 = vpack.c.b16 %v2285, %v2284
      %v2291 = vsel %vm479, %v2266, 0
      %v2294 = vsel %vm479, %v2267, 0
      %v2297 = vsel %vm479, %v2268, 0
      %v2300 = vsel %vm479, %v2269, 0
      %2302 = vmatpush.bf16.msra.mxu0 0
      %2303 = vmatpush.bf16.msra.mxu0 0
      %2304 = vmatpush.bf16.msra.mxu0 0
      %2305 = vmatpush.bf16.msra.mxu0 0
      %2306 = vmatpush.bf16.msra.mxu0 0
      %2307 = vmatpush.bf16.msra.mxu0 0
      %2308 = vmatpush.bf16.msra.mxu0 %v2287
      %2309 = vmatpush.bf16.msra.mxu0 %v2286
      %2310 = vmatmul.bf16.gmra.mxu0 %v2291
      %v2311 = vpop.f32.mrf.mxu0
      %v2312 = vadd.f32 %v2276, %v2311
      %v2313 = vpop.f32.mrf.mxu0
      %v2314 = vadd.f32 %v2276, %v2313
      %2315 = vmatmul.bf16.gmra.mxu0 %v2294
      %v2316 = vpop.f32.mrf.mxu0
      %v2317 = vadd.f32 %v2276, %v2316
      %v2318 = vpop.f32.mrf.mxu0
      %v2319 = vadd.f32 %v2276, %v2318
      %2320 = vmatmul.bf16.gmra.mxu0 %v2297
      %v2321 = vpop.f32.mrf.mxu0
      %v2322 = vadd.f32 %v2276, %v2321
      %v2323 = vpop.f32.mrf.mxu0
      %v2324 = vadd.f32 %v2276, %v2323
      %2325 = vmatmul.bf16.gmra.mxu0 %v2300
      %v2326 = vpop.f32.mrf.mxu0
      %v2327 = vadd.f32 %v2276, %v2326
      %v2328 = vpop.f32.mrf.mxu0
      %v2329 = vadd.f32 %v2276, %v2328
      %2330 = vdwg.mxu0
      %v2331 = vmul.f32 %v2312, 0.5
      %v2332 = vmul.f32 %v2314, 0.5
      %v2333 = vmul.f32 %v2317, 0.5
      %v2334 = vmul.f32 %v2319, 0.5
      %v2335 = vmul.f32 %v2322, 0.5
      %v2336 = vmul.f32 %v2324, 0.5
      %v2337 = vmul.f32 %v2327, 0.5
      %v2338 = vmul.f32 %v2329, 0.5
      %v2339 = vmul.f32 %v2312, 0.044715
      %v2340 = vmul.f32 %v2314, 0.044715
      %v2341 = vmul.f32 %v2317, 0.044715
      %v2342 = vmul.f32 %v2319, 0.044715
      %v2343 = vmul.f32 %v2322, 0.044715
      %v2344 = vmul.f32 %v2324, 0.044715
      %v2345 = vmul.f32 %v2327, 0.044715
      %v2346 = vmul.f32 %v2329, 0.044715
      %v2347 = vmul.f32 %v2339, %v2312
      %v2348 = vmul.f32 %v2340, %v2314
      %v2349 = vmul.f32 %v2341, %v2317
      %v2350 = vmul.f32 %v2342, %v2319
      %v2351 = vmul.f32 %v2343, %v2322
      %v2352 = vmul.f32 %v2344, %v2324
      %v2353 = vmul.f32 %v2345, %v2327
      %v2354 = vmul.f32 %v2346, %v2329
      %v2355 = vmul.f32 %v2347, %v2312
      %v2356 = vmul.f32 %v2348, %v2314
      %v2357 = vmul.f32 %v2349, %v2317
      %v2358 = vmul.f32 %v2350, %v2319
      %v2359 = vmul.f32 %v2351, %v2322
      %v2360 = vmul.f32 %v2352, %v2324
      %v2361 = vmul.f32 %v2353, %v2327
      %v2362 = vmul.f32 %v2354, %v2329
      %v2363 = vadd.f32 %v2312, %v2355
      %v2364 = vadd.f32 %v2314, %v2356
      %v2365 = vadd.f32 %v2317, %v2357
      %v2366 = vadd.f32 %v2319, %v2358
      %v2367 = vadd.f32 %v2322, %v2359
      %v2368 = vadd.f32 %v2324, %v2360
      %v2369 = vadd.f32 %v2327, %v2361
      %v2370 = vadd.f32 %v2329, %v2362
      %v2371 = vmul.f32 %v2363, 0.7978846
      %v2372 = vmul.f32 %v2364, 0.7978846
      %v2373 = vmul.f32 %v2365, 0.7978846
      %v2374 = vmul.f32 %v2366, 0.7978846
      %v2375 = vmul.f32 %v2367, 0.7978846
      %v2376 = vmul.f32 %v2368, 0.7978846
      %v2377 = vmul.f32 %v2369, 0.7978846
      %v2378 = vmul.f32 %v2370, 0.7978846
      %v2379 = vtanh.pop %v2371
      %v2380 = vtanh.pop %v2372
      %v2381 = vtanh.pop %v2373
      %v2382 = vtanh.pop %v2374
      %v2383 = vtanh.pop %v2375
      %v2384 = vtanh.pop %v2376
      %v2385 = vtanh.pop %v2377
      %v2386 = vtanh.pop %v2378
      %v2387 = vadd.f32 %v2379, 1.0
      %v2388 = vadd.f32 %v2380, 1.0
      %v2389 = vadd.f32 %v2381, 1.0
      %v2390 = vadd.f32 %v2382, 1.0
      %v2391 = vadd.f32 %v2383, 1.0
      %v2392 = vadd.f32 %v2384, 1.0
      %v2393 = vadd.f32 %v2385, 1.0
      %v2394 = vadd.f32 %v2386, 1.0
      %v2395 = vmul.f32 %v2331, %v2387
      %v2396 = vmul.f32 %v2332, %v2388
      %v2397 = vmul.f32 %v2333, %v2389
      %v2398 = vmul.f32 %v2334, %v2390
      %v2399 = vmul.f32 %v2335, %v2391
      %v2400 = vmul.f32 %v2336, %v2392
      %v2401 = vmul.f32 %v2337, %v2393
      %v2402 = vmul.f32 %v2338, %v2394
      %v2403 = vpack.c.bf16 %v2396, %v2395
      %v2404 = vpack.c.bf16 %v2398, %v2397
      %v2405 = vpack.c.bf16 %v2400, %v2399
      %v2406 = vpack.c.bf16 %v2402, %v2401
      %v2407 = vld [vmem:[%s12] sm:$0xf]
      %v2408 = vld [vmem:[%s12 + $0x4] sm:$0xf]
      %v2409 = vld [vmem:[%s12 + $0x8] sm:$0xf]
      %v2410 = vld [vmem:[%s12 + $0xc] sm:$0xf]
      %v2411 = vld [vmem:[%s12 + $0x10] sm:$0xf]
      %v2412 = vld [vmem:[%s12 + $0x14] sm:$0xf]
      %v2413 = vld [vmem:[%s12 + $0x18] sm:$0xf]
      %v2414 = vld [vmem:[%s12 + $0x1c] sm:$0xf]
      %v2415 = vld [vmem:[%s12 + $0x20] sm:$0xf]
      %v2416 = vld [vmem:[%s12 + $0x24] sm:$0xf]
      %v2417 = vld [vmem:[%s12 + $0x28] sm:$0xf]
      %v2418 = vld [vmem:[%s12 + $0x2c] sm:$0xf]
      %v2419 = vld [vmem:[%s12 + $0x30] sm:$0xf]
      %v2420 = vld [vmem:[%s12 + $0x34] sm:$0xf]
      %v2421 = vld [vmem:[%s12 + $0x38] sm:$0xf]
      %v2422 = vld [vmem:[%s12 + $0x3c] sm:$0xf]
      %v2423 = vld [vmem:[%s13] sm:$0x1]
      %v2425 = vperm.slane %v2423, 0
      %v2443 = vunpack.c.l.b16 %v2407
      %v2444 = vunpack.c.l.b16 %v2408
      %v2445 = vunpack.c.l.b16 %v2409
      %v2446 = vunpack.c.l.b16 %v2410
      %v2447 = vunpack.c.l.b16 %v2411
      %v2448 = vunpack.c.l.b16 %v2412
      %v2449 = vunpack.c.l.b16 %v2413
      %v2450 = vunpack.c.l.b16 %v2414
      %v2451 = vunpack.c.l.b16 %v2415
      %v2452 = vunpack.c.l.b16 %v2416
      %v2453 = vunpack.c.l.b16 %v2417
      %v2454 = vunpack.c.l.b16 %v2418
      %v2455 = vunpack.c.l.b16 %v2419
      %v2456 = vunpack.c.l.b16 %v2420
      %v2457 = vunpack.c.l.b16 %v2421
      %v2458 = vunpack.c.l.b16 %v2422
      %v2459 = vpack.c.b16 %v2444, %v2443
      %v2460 = vpack.c.b16 %v2446, %v2445
      %v2461 = vpack.c.b16 %v2448, %v2447
      %v2462 = vpack.c.b16 %v2450, %v2449
      %v2463 = vpack.c.b16 %v2452, %v2451
      %v2464 = vpack.c.b16 %v2454, %v2453
      %v2465 = vpack.c.b16 %v2456, %v2455
      %v2466 = vpack.c.b16 %v2458, %v2457
      %2475 = vmatpush.bf16.msra.mxu0 %v2466
      %2476 = vmatpush.bf16.msra.mxu0 %v2465
      %2477 = vmatpush.bf16.msra.mxu0 %v2464
      %2478 = vmatpush.bf16.msra.mxu0 %v2463
      %2479 = vmatpush.bf16.msra.mxu0 %v2462
      %2480 = vmatpush.bf16.msra.mxu0 %v2461
      %2481 = vmatpush.bf16.msra.mxu0 %v2460
      %2482 = vmatpush.bf16.msra.mxu0 %v2459
      %2483 = vmatmul.bf16.gmra.mxu0 %v2403
      %v2484 = vpop.f32.mrf.mxu0
      %v2485 = vadd.f32 %v2425, %v2484
      %v2486 = vpop.f32.mrf.mxu0
      %v2487 = vadd.f32 %v2425, %v2486
      %2488 = vmatmul.bf16.gmra.mxu0 %v2404
      %v2489 = vpop.f32.mrf.mxu0
      %v2490 = vadd.f32 %v2425, %v2489
      %v2491 = vpop.f32.mrf.mxu0
      %v2492 = vadd.f32 %v2425, %v2491
      %2493 = vmatmul.bf16.gmra.mxu0 %v2405
      %v2494 = vpop.f32.mrf.mxu0
      %v2495 = vadd.f32 %v2425, %v2494
      %v2496 = vpop.f32.mrf.mxu0
      %v2497 = vadd.f32 %v2425, %v2496
      %2498 = vmatmul.bf16.gmra.mxu0 %v2406
      %v2499 = vpop.f32.mrf.mxu0
      %v2500 = vadd.f32 %v2425, %v2499
      %v2501 = vpop.f32.mrf.mxu0
      %v2502 = vadd.f32 %v2425, %v2501
      %2503 = vdwg.mxu0
      %v2504 = vadd.f32 %v2058, %v2485
      %v2505 = vadd.f32 %v2059, %v2487
      %v2506 = vadd.f32 %v2060, %v2490
      %v2507 = vadd.f32 %v2061, %v2492
      %v2508 = vadd.f32 %v2062, %v2495
      %v2509 = vadd.f32 %v2063, %v2497
      %v2510 = vadd.f32 %v2064, %v2500
      %v2511 = vadd.f32 %v2065, %v2502
      %2512 = vst.msk [vmem:[%s467] sm:$0xff] %vm479, %v2504
      %2513 = vst.msk [vmem:[%s467 + $0x8] sm:$0xff] %vm479, %v2505
      %2514 = vst.msk [vmem:[%s467 + $0x10] sm:$0xff] %vm479, %v2506
      %2515 = vst.msk [vmem:[%s467 + $0x18] sm:$0xff] %vm479, %v2507
      %2516 = vst.msk [vmem:[%s467 + $0x20] sm:$0xff] %vm479, %v2508
      %2517 = vst.msk [vmem:[%s467 + $0x28] sm:$0xff] %vm479, %v2509
      %2518 = vst.msk [vmem:[%s467 + $0x30] sm:$0xff] %vm479, %v2510
      %2519 = vst.msk [vmem:[%s467 + $0x38] sm:$0xff] %vm479, %v2511
      %p2520 = scmp.lt.s32.totalorder %s25, 1
      %s2521 = scalar_select %p2520, %s25, 1
      %s2522 = smul.addr %s2521, 8
      %s2523 = smul.addr %s2522, 8
      %s2524 = scalar_lea.vmem %s14, %s2523
      // Predicated region
      $region77: #{swin_forward.8} parent=75 // pred_check
        %p2525 = pneg %p342
      $region78: #{swin_forward.8} parent=75 // pred_check_branch
        %2527 = sbr.rel (%p2525) target = $region80
      $region79: #{swin_forward.8} parent=75 // pred_region
        _
      $region80: #{swin_forward.8} parent=75 // pred_fallthru
        _
    $region76: #{swin_forward.8} parent=5 // pred_fallthru
      _
    %p2528 = scmp.le.s32.totalorder 2, %s20
    // Predicated region
    $region81: #{swin_forward.8} parent=5 // pred_check
      %p2529 = pneg %p2528
    $region82: #{swin_forward.8} parent=5 // pred_check_branch
      %2531 = sbr.rel (%p2529) target = $region84
    $region83: #{swin_forward.8} parent=5 // pred_region
      %s2532 = ssub.s32 %s20, 2
      // Predicated region
      $region85: #{swin_forward.8} parent=83 // pred_check
        %p2533 = pneg %p348
      $region86: #{swin_forward.8} parent=83 // pred_check_branch
        %2535 = sbr.rel (%p2533) target = $region88
      $region87: #{swin_forward.8} parent=83 // pred_region
        %p2536 = scmp.lt.s32.totalorder %s26, 1
        %s2537 = scalar_select %p2536, %s26, 1
        %s2538 = smul.addr %s2537, 8
        %s2539 = smul.addr %s2538, 8
        %s2540 = scalar_lea.vmem %s14, %s2539
      $region88: #{swin_forward.8} parent=83 // pred_fallthru
        _
    $region84: #{swin_forward.8} parent=5 // pred_fallthru
      _
  $region6: #{swin_forward.8} parent=0 // loop_footer
    %s24 = sadd.s32 1, %s20
  $region7: #{swin_forward.8} parent=0 // loop_footer_branch
    %19 = sbr.rel target = $region3
  $region8: #{swin_forward.8} parent=0 // loop_exit
    _

// kernel: swin_forward.10
$region0: #{swin_forward.10}
  #allocation0 [shape = 'u32[]', space=smem, size = 0x4, offset = 0x4, fixed_abs, tag = 'smem constant byte address 0x4 - core index']
  #allocation1 [shape = 'u32[72,128]{1,0:T(1,128)}', space=vmem, size = 0x9000, scoped, tag = 'internal scratch']
  %s0 = inlined_call_operand.vmem [shape: f32[32,128], index: 0, kind: input, shape index: {}]
  %s1 = inlined_call_operand.vmem [shape: f32[1,128], index: 1, kind: input, shape index: {}]
  %s2 = inlined_call_operand.vmem [shape: f32[1,128], index: 2, kind: input, shape index: {}]
  %s3 = inlined_call_operand.vmem [shape: bf16[128,64], index: 3, kind: input, shape index: {}]
  %s4 = inlined_call_operand.vmem [shape: f32[32,64], index: 4, kind: output, shape index: {}]
  %s5 = sld [smem:[#allocation0]]
  $region26: #{swin_forward.10} parent=0
    _
  %s7 = ssub.s32 1, %s5
  %s8 = scalar_select 0, %s7, %s5
  // Predicated region
  $region2: #{swin_forward.10} parent=0 // pred_check
    _
  $region3: #{swin_forward.10} parent=0 // pred_check_branch
    %10 = sbr.rel (0) target = $region5
  $region4: #{swin_forward.10} parent=0 // pred_region
    _
  $region5: #{swin_forward.10} parent=0 // pred_fallthru
    _
  // Predicated region
  $region6: #{swin_forward.10} parent=0 // pred_check
    _
  $region7: #{swin_forward.10} parent=0 // pred_check_branch
    %12 = sbr.rel (0) target = $region9
  $region8: #{swin_forward.10} parent=0 // pred_region
    _
  $region9: #{swin_forward.10} parent=0 // pred_fallthru
    _
  // Predicated region
  $region10: #{swin_forward.10} parent=0 // pred_check
    _
  $region11: #{swin_forward.10} parent=0 // pred_check_branch
    %14 = sbr.rel (0) target = $region13
  $region12: #{swin_forward.10} parent=0 // pred_region
    _
  $region13: #{swin_forward.10} parent=0 // pred_fallthru
    _
  // Predicated region
  $region14: #{swin_forward.10} parent=0 // pred_check
    _
  $region15: #{swin_forward.10} parent=0 // pred_check_branch
    %16 = sbr.rel (0) target = $region17
  $region16: #{swin_forward.10} parent=0 // pred_region
    _
  $region17: #{swin_forward.10} parent=0 // pred_fallthru
    _
  %v17 = vld [vmem:[%s0] sm:$0xff]
  %v18 = vld [vmem:[%s0 + $0x8] sm:$0xff]
  %v19 = vld [vmem:[%s0 + $0x10] sm:$0xff]
  %v20 = vld [vmem:[%s0 + $0x18] sm:$0xff]
  %v21 = vld [vmem:[%s1] sm:$0x1]
  %v22 = vld [vmem:[%s2] sm:$0x1]
  %23 = vadd.xlane.f32.xlu0 %v17
  %v24 = vpop.xlane.xlu0 %23
  %25 = vadd.xlane.f32.xlu0 %v18
  %v26 = vpop.xlane.xlu0 %25
  %27 = vadd.xlane.f32.xlu0 %v19
  %v28 = vpop.xlane.xlu0 %27
  %29 = vadd.xlane.f32.xlu0 %v20
  %v30 = vpop.xlane.xlu0 %29
  %v31 = vrcp.pop 128.0
  %v32 = vmul.f32 128.0, %v31
  %v33 = vsub.f32 1.0, %v32
  %v34 = vmul.f32 %v31, %v33
  %v35 = vadd.f32 %v31, %v34
  %vm36 = vweird.f32 %v31
  %v37 = vsel %vm36, %v31, %v35
  %v38 = vmul.f32 %v24, %v37
  %v39 = vmul.f32 %v26, %v37
  %v40 = vmul.f32 %v28, %v37
  %v41 = vmul.f32 %v30, %v37
  %v42 = vsub.f32 %v17, %v38
  %v43 = vsub.f32 %v18, %v39
  %v44 = vsub.f32 %v19, %v40
  %v45 = vsub.f32 %v20, %v41
  %v46 = vmul.f32 %v42, %v42
  %v47 = vmul.f32 %v43, %v43
  %v48 = vmul.f32 %v44, %v44
  %v49 = vmul.f32 %v45, %v45
  %50 = vadd.xlane.f32.xlu0 %v46
  %v51 = vpop.xlane.xlu0 %50
  %52 = vadd.xlane.f32.xlu0 %v47
  %v53 = vpop.xlane.xlu0 %52
  %54 = vadd.xlane.f32.xlu0 %v48
  %v55 = vpop.xlane.xlu0 %54
  %56 = vadd.xlane.f32.xlu0 %v49
  %v57 = vpop.xlane.xlu0 %56
  %v58 = vmul.f32 %v51, %v37
  %v59 = vmul.f32 %v53, %v37
  %v60 = vmul.f32 %v55, %v37
  %v61 = vmul.f32 %v57, %v37
  %v62 = vadd.f32 %v58, 1e-05
  %v63 = vadd.f32 %v59, 1e-05
  %v64 = vadd.f32 %v60, 1e-05
  %v65 = vadd.f32 %v61, 1e-05
  %v66 = vrsqrt.pop %v62
  %v67 = vmul.f32 %v66, %v62
  %v68 = vmul.f32 %v67, %v66
  %v69 = vmul.f32 0.5, %v68
  %v70 = vsub.f32 1.5, %v69
  %v71 = vmul.f32 %v66, %v70
  %vm72 = vweird.f32 %v62
  %vm73 = vweird.f32 %v66
  %vm74 = vmor %vm72, %vm73
  %v75 = vsel %vm74, %v66, %v71
  %v76 = vrsqrt.pop %v63
  %v77 = vmul.f32 %v76, %v63
  %v78 = vmul.f32 %v77, %v76
  %v79 = vmul.f32 0.5, %v78
  %v80 = vsub.f32 1.5, %v79
  %v81 = vmul.f32 %v76, %v80
  %vm82 = vweird.f32 %v63
  %vm83 = vweird.f32 %v76
  %vm84 = vmor %vm82, %vm83
  %v85 = vsel %vm84, %v76, %v81
  %v86 = vrsqrt.pop %v64
  %v87 = vmul.f32 %v86, %v64
  %v88 = vmul.f32 %v87, %v86
  %v89 = vmul.f32 0.5, %v88
  %v90 = vsub.f32 1.5, %v89
  %v91 = vmul.f32 %v86, %v90
  %vm92 = vweird.f32 %v64
  %vm93 = vweird.f32 %v86
  %vm94 = vmor %vm92, %vm93
  %v95 = vsel %vm94, %v86, %v91
  %v96 = vrsqrt.pop %v65
  %v97 = vmul.f32 %v96, %v65
  %v98 = vmul.f32 %v97, %v96
  %v99 = vmul.f32 0.5, %v98
  %v100 = vsub.f32 1.5, %v99
  %v101 = vmul.f32 %v96, %v100
  %vm102 = vweird.f32 %v65
  %vm103 = vweird.f32 %v96
  %vm104 = vmor %vm102, %vm103
  %v105 = vsel %vm104, %v96, %v101
  %v106 = vmul.f32 %v42, %v75
  %v107 = vmul.f32 %v43, %v85
  %v108 = vmul.f32 %v44, %v95
  %v109 = vmul.f32 %v45, %v105
  %v111 = vperm.slane %v21, 0
  %v113 = vmul.f32 %v106, %v111
  %v114 = vmul.f32 %v107, %v111
  %v115 = vmul.f32 %v108, %v111
  %v116 = vmul.f32 %v109, %v111
  %v118 = vperm.slane %v22, 0
  %v120 = vadd.f32 %v113, %v118
  %v121 = vadd.f32 %v114, %v118
  %v122 = vadd.f32 %v115, %v118
  %v123 = vadd.f32 %v116, %v118
  %v124 = vpack.c.bf16 %v121, %v120
  %v125 = vpack.c.bf16 %v123, %v122
  %v126 = vld [vmem:[%s3] sm:$0xf]
  %v127 = vld [vmem:[%s3 + $0x4] sm:$0xf]
  %v128 = vld [vmem:[%s3 + $0x8] sm:$0xf]
  %v129 = vld [vmem:[%s3 + $0xc] sm:$0xf]
  %v130 = vld [vmem:[%s3 + $0x10] sm:$0xf]
  %v131 = vld [vmem:[%s3 + $0x14] sm:$0xf]
  %v132 = vld [vmem:[%s3 + $0x18] sm:$0xf]
  %v133 = vld [vmem:[%s3 + $0x1c] sm:$0xf]
  %v134 = vld [vmem:[%s3 + $0x20] sm:$0xf]
  %v135 = vld [vmem:[%s3 + $0x24] sm:$0xf]
  %v136 = vld [vmem:[%s3 + $0x28] sm:$0xf]
  %v137 = vld [vmem:[%s3 + $0x2c] sm:$0xf]
  %v138 = vld [vmem:[%s3 + $0x30] sm:$0xf]
  %v139 = vld [vmem:[%s3 + $0x34] sm:$0xf]
  %v140 = vld [vmem:[%s3 + $0x38] sm:$0xf]
  %v141 = vld [vmem:[%s3 + $0x3c] sm:$0xf]
  %v158 = vunpack.c.l.b16 %v126
  %v159 = vunpack.c.l.b16 %v127
  %v160 = vunpack.c.l.b16 %v128
  %v161 = vunpack.c.l.b16 %v129
  %v162 = vunpack.c.l.b16 %v130
  %v163 = vunpack.c.l.b16 %v131
  %v164 = vunpack.c.l.b16 %v132
  %v165 = vunpack.c.l.b16 %v133
  %v166 = vunpack.c.l.b16 %v134
  %v167 = vunpack.c.l.b16 %v135
  %v168 = vunpack.c.l.b16 %v136
  %v169 = vunpack.c.l.b16 %v137
  %v170 = vunpack.c.l.b16 %v138
  %v171 = vunpack.c.l.b16 %v139
  %v172 = vunpack.c.l.b16 %v140
  %v173 = vunpack.c.l.b16 %v141
  %v174 = vpack.c.b16 %v159, %v158
  %v175 = vpack.c.b16 %v161, %v160
  %v176 = vpack.c.b16 %v163, %v162
  %v177 = vpack.c.b16 %v165, %v164
  %v178 = vpack.c.b16 %v167, %v166
  %v179 = vpack.c.b16 %v169, %v168
  %v180 = vpack.c.b16 %v171, %v170
  %v181 = vpack.c.b16 %v173, %v172
  %190 = vmatpush.bf16.msra.mxu0 %v181
  %191 = vmatpush.bf16.msra.mxu0 %v180
  %192 = vmatpush.bf16.msra.mxu0 %v179
  %193 = vmatpush.bf16.msra.mxu0 %v178
  %194 = vmatpush.bf16.msra.mxu0 %v177
  %195 = vmatpush.bf16.msra.mxu0 %v176
  %196 = vmatpush.bf16.msra.mxu0 %v175
  %197 = vmatpush.bf16.msra.mxu0 %v174
  %198 = vmatmul.bf16.gmra.mxu0 %v124
  %v199 = vpop.f32.mrf.mxu0
  %v200 = vadd.f32 0.0, %v199
  %v201 = vpop.f32.mrf.mxu0
  %v202 = vadd.f32 0.0, %v201
  %203 = vmatmul.bf16.gmra.mxu0 %v125
  %v204 = vpop.f32.mrf.mxu0
  %v205 = vadd.f32 0.0, %v204
  %v206 = vpop.f32.mrf.mxu0
  %v207 = vadd.f32 0.0, %v206
  %208 = vdwg.mxu0
  %vm209 = vcmask 523264
  %210 = vst.msk [vmem:[%s4] sm:$0xff] %vm209, %v200
  %211 = vst.msk [vmem:[%s4 + $0x8] sm:$0xff] %vm209, %v202
  %212 = vst.msk [vmem:[%s4 + $0x10] sm:$0xff] %vm209, %v205
  %213 = vst.msk [vmem:[%s4 + $0x18] sm:$0xff] %vm209, %v207
  // Predicated region
  $region18: #{swin_forward.10} parent=0 // pred_check
    _
  $region19: #{swin_forward.10} parent=0 // pred_check_branch
    %215 = sbr.rel (0) target = $region21
  $region20: #{swin_forward.10} parent=0 // pred_region
    _
  $region21: #{swin_forward.10} parent=0 // pred_fallthru
    _
  // Predicated region
  $region22: #{swin_forward.10} parent=0 // pred_check
    _
  $region23: #{swin_forward.10} parent=0 // pred_check_branch
    %217 = sbr.rel (0) target = $region25
  $region24: #{swin_forward.10} parent=0 // pred_region
    _
  $region25: #{swin_forward.10} parent=0 // pred_fallthru
    _

// kernel: swin_forward.13
$region0: #{swin_forward.13}
  #allocation0 [shape = 'u32[]', space=smem, size = 0x4, offset = 0x4, fixed_abs, tag = 'smem constant byte address 0x4 - core index']
  #allocation1 [shape = 'u32[72,128]{1,0:T(1,128)}', space=vmem, size = 0x9000, scoped, tag = 'internal scratch']
  %s0 = inlined_call_operand.vmem [shape: f32[2,16,64], index: 0, kind: input, shape index: {}]
  %s1 = inlined_call_operand.vmem [shape: f32[1,64], index: 1, kind: input, shape index: {}]
  %s2 = inlined_call_operand.vmem [shape: f32[1,64], index: 2, kind: input, shape index: {}]
  %s3 = inlined_call_operand.vmem [shape: bf16[64,10], index: 3, kind: input, shape index: {}]
  %s4 = inlined_call_operand.vmem [shape: f32[1,10], index: 4, kind: input, shape index: {}]
  %s5 = inlined_call_operand.hbm [shape: f32[2,10], index: 5, kind: output, shape index: {}]
  %s6 = sld [smem:[#allocation0]]
  $region30: #{swin_forward.13} parent=0
    _
  %s8 = ssub.s32 1, %s6
  %s9 = scalar_select 0, %s8, %s6
  $region1: #{swin_forward.13} parent=0
    #allocation2 [shape = 'u8[1024]{0}', space=vmem, size = 0x400, scoped, tag = 'output window, operand 0, single buffered']
    #allocation3 [shape = 's32[1]{0}', space=sflag, size = 0x4, scoped, tag = 'scoped memory for swin_forward.13']
    %10 = vsyncpa [#allocation3], 0
    // Predicated region
    $region2: #{swin_forward.13} parent=1 // pred_check
      _
    $region3: #{swin_forward.13} parent=1 // pred_check_branch
      %12 = sbr.rel (0) target = $region5
    $region4: #{swin_forward.13} parent=1 // pred_region
      _
    $region5: #{swin_forward.13} parent=1 // pred_fallthru
      _
    // Predicated region
    $region6: #{swin_forward.13} parent=1 // pred_check
      _
    $region7: #{swin_forward.13} parent=1 // pred_check_branch
      %14 = sbr.rel (0) target = $region9
    $region8: #{swin_forward.13} parent=1 // pred_region
      _
    $region9: #{swin_forward.13} parent=1 // pred_fallthru
      _
    // Predicated region
    $region10: #{swin_forward.13} parent=1 // pred_check
      _
    $region11: #{swin_forward.13} parent=1 // pred_check_branch
      %16 = sbr.rel (0) target = $region13
    $region12: #{swin_forward.13} parent=1 // pred_region
      _
    $region13: #{swin_forward.13} parent=1 // pred_fallthru
      _
    // Predicated region
    $region14: #{swin_forward.13} parent=1 // pred_check
      _
    $region15: #{swin_forward.13} parent=1 // pred_check_branch
      %18 = sbr.rel (0) target = $region17
    $region16: #{swin_forward.13} parent=1 // pred_region
      _
    $region17: #{swin_forward.13} parent=1 // pred_fallthru
      _
    // Predicated region
    $region18: #{swin_forward.13} parent=1 // pred_check
      _
    $region19: #{swin_forward.13} parent=1 // pred_check_branch
      %20 = sbr.rel (0) target = $region21
    $region20: #{swin_forward.13} parent=1 // pred_region
      _
    $region21: #{swin_forward.13} parent=1 // pred_fallthru
      _
    %v22 = vld [vmem:[%s0] sm:$0xff]
    %v23 = vld [vmem:[%s0 + $0x8] sm:$0xff]
    %v24 = vld [vmem:[%s0 + $0x10] sm:$0xff]
    %v25 = vld [vmem:[%s0 + $0x18] sm:$0xff]
    %v26 = vld [vmem:[%s1] sm:$0x1]
    %v27 = vld [vmem:[%s2] sm:$0x1]
    %vm28 = vcmask 523264
    %v29 = vsel %vm28, %v22, 0.0
    %30 = vadd.xlane.f32.xlu0 %v29
    %v31 = vpop.xlane.xlu0 %30
    %v32 = vsel %vm28, %v23, 0.0
    %33 = vadd.xlane.f32.xlu0 %v32
    %v34 = vpop.xlane.xlu0 %33
    %v35 = vsel %vm28, %v24, 0.0
    %36 = vadd.xlane.f32.xlu0 %v35
    %v37 = vpop.xlane.xlu0 %36
    %v38 = vsel %vm28, %v25, 0.0
    %39 = vadd.xlane.f32.xlu0 %v38
    %v40 = vpop.xlane.xlu0 %39
    %v41 = vrcp.pop 64.0
    %v42 = vmul.f32 64.0, %v41
    %v43 = vsub.f32 1.0, %v42
    %v44 = vmul.f32 %v41, %v43
    %v45 = vadd.f32 %v41, %v44
    %vm46 = vweird.f32 %v41
    %v47 = vsel %vm46, %v41, %v45
    %v48 = vmul.f32 %v31, %v47
    %v49 = vmul.f32 %v34, %v47
    %v50 = vmul.f32 %v37, %v47
    %v51 = vmul.f32 %v40, %v47
    %v52 = vsub.f32 %v22, %v48
    %v53 = vsub.f32 %v23, %v49
    %v54 = vsub.f32 %v24, %v50
    %v55 = vsub.f32 %v25, %v51
    %v56 = vmul.f32 %v52, %v52
    %v57 = vmul.f32 %v53, %v53
    %v58 = vmul.f32 %v54, %v54
    %v59 = vmul.f32 %v55, %v55
    %v60 = vsel %vm28, %v56, 0.0
    %61 = vadd.xlane.f32.xlu0 %v60
    %v62 = vpop.xlane.xlu0 %61
    %v63 = vsel %vm28, %v57, 0.0
    %64 = vadd.xlane.f32.xlu0 %v63
    %v65 = vpop.xlane.xlu0 %64
    %v66 = vsel %vm28, %v58, 0.0
    %67 = vadd.xlane.f32.xlu0 %v66
    %v68 = vpop.xlane.xlu0 %67
    %v69 = vsel %vm28, %v59, 0.0
    %70 = vadd.xlane.f32.xlu0 %v69
    %v71 = vpop.xlane.xlu0 %70
    %v72 = vmul.f32 %v62, %v47
    %v73 = vmul.f32 %v65, %v47
    %v74 = vmul.f32 %v68, %v47
    %v75 = vmul.f32 %v71, %v47
    %v76 = vadd.f32 %v72, 1e-05
    %v77 = vadd.f32 %v73, 1e-05
    %v78 = vadd.f32 %v74, 1e-05
    %v79 = vadd.f32 %v75, 1e-05
    %v80 = vrsqrt.pop %v76
    %v81 = vmul.f32 %v80, %v76
    %v82 = vmul.f32 %v81, %v80
    %v83 = vmul.f32 0.5, %v82
    %v84 = vsub.f32 1.5, %v83
    %v85 = vmul.f32 %v80, %v84
    %vm86 = vweird.f32 %v76
    %vm87 = vweird.f32 %v80
    %vm88 = vmor %vm86, %vm87
    %v89 = vsel %vm88, %v80, %v85
    %v90 = vrsqrt.pop %v77
    %v91 = vmul.f32 %v90, %v77
    %v92 = vmul.f32 %v91, %v90
    %v93 = vmul.f32 0.5, %v92
    %v94 = vsub.f32 1.5, %v93
    %v95 = vmul.f32 %v90, %v94
    %vm96 = vweird.f32 %v77
    %vm97 = vweird.f32 %v90
    %vm98 = vmor %vm96, %vm97
    %v99 = vsel %vm98, %v90, %v95
    %v100 = vrsqrt.pop %v78
    %v101 = vmul.f32 %v100, %v78
    %v102 = vmul.f32 %v101, %v100
    %v103 = vmul.f32 0.5, %v102
    %v104 = vsub.f32 1.5, %v103
    %v105 = vmul.f32 %v100, %v104
    %vm106 = vweird.f32 %v78
    %vm107 = vweird.f32 %v100
    %vm108 = vmor %vm106, %vm107
    %v109 = vsel %vm108, %v100, %v105
    %v110 = vrsqrt.pop %v79
    %v111 = vmul.f32 %v110, %v79
    %v112 = vmul.f32 %v111, %v110
    %v113 = vmul.f32 0.5, %v112
    %v114 = vsub.f32 1.5, %v113
    %v115 = vmul.f32 %v110, %v114
    %vm116 = vweird.f32 %v79
    %vm117 = vweird.f32 %v110
    %vm118 = vmor %vm116, %vm117
    %v119 = vsel %vm118, %v110, %v115
    %v120 = vmul.f32 %v52, %v89
    %v121 = vmul.f32 %v53, %v99
    %v122 = vmul.f32 %v54, %v109
    %v123 = vmul.f32 %v55, %v119
    %v125 = vperm.slane %v26, 0
    %v127 = vmul.f32 %v120, %v125
    %v128 = vmul.f32 %v121, %v125
    %v129 = vmul.f32 %v122, %v125
    %v130 = vmul.f32 %v123, %v125
    %v132 = vperm.slane %v27, 0
    %v134 = vadd.f32 %v127, %v132
    %v135 = vadd.f32 %v128, %v132
    %v136 = vadd.f32 %v129, %v132
    %v137 = vadd.f32 %v130, %v132
    %v138 = vsel %vm28, %v134, 0.0
    %v139 = vsel %vm28, %v135, 0.0
    %v140 = vadd.f32 %v138, %v139
    %v141 = vrot.slane %v140, 4
    %v142 = vadd.f32 %v140, %v141
    %v143 = vrot.slane %v142, 2
    %v144 = vadd.f32 %v142, %v143
    %v145 = vrot.slane %v144, 1
    %v146 = vadd.f32 %v144, %v145
    %v147 = vrcp.pop 16.0
    %v148 = vmul.f32 16.0, %v147
    %v149 = vsub.f32 1.0, %v148
    %v150 = vmul.f32 %v147, %v149
    %v151 = vadd.f32 %v147, %v150
    %vm152 = vweird.f32 %v147
    %v153 = vsel %vm152, %v147, %v151
    %v154 = vmul.f32 %v146, %v153
    %v155 = vsel %vm28, %v136, 0.0
    %v156 = vsel %vm28, %v137, 0.0
    %v157 = vadd.f32 %v155, %v156
    %v158 = vrot.slane %v157, 4
    %v159 = vadd.f32 %v157, %v158
    %v160 = vrot.slane %v159, 2
    %v161 = vadd.f32 %v159, %v160
    %v162 = vrot.slane %v161, 1
    %v163 = vadd.f32 %v161, %v162
    %v164 = vmul.f32 %v163, %v153
    %vm165 = vcmask 1040384
    %v166 = vsel %vm165, %v154, %v164
    %v167 = vpack.c.bf16 %v166, %v166
    %v168 = vld [vmem:[%s3] sm:$0xf]
    %v169 = vld [vmem:[%s3 + $0x4] sm:$0xf]
    %v170 = vld [vmem:[%s3 + $0x8] sm:$0xf]
    %v171 = vld [vmem:[%s3 + $0xc] sm:$0xf]
    %v172 = vld [vmem:[%s3 + $0x10] sm:$0xf]
    %v173 = vld [vmem:[%s3 + $0x14] sm:$0xf]
    %v174 = vld [vmem:[%s3 + $0x18] sm:$0xf]
    %v175 = vld [vmem:[%s3 + $0x1c] sm:$0xf]
    %v176 = vld [vmem:[%s4] sm:$0x1]
    %v178 = vperm.slane %v176, 0
    %v188 = vunpack.c.l.b16 %v168
    %v189 = vunpack.c.l.b16 %v169
    %v190 = vunpack.c.l.b16 %v170
    %v191 = vunpack.c.l.b16 %v171
    %v192 = vunpack.c.l.b16 %v172
    %v193 = vunpack.c.l.b16 %v173
    %v194 = vunpack.c.l.b16 %v174
    %v195 = vunpack.c.l.b16 %v175
    %v196 = vpack.c.b16 %v189, %v188
    %v197 = vpack.c.b16 %v191, %v190
    %v198 = vpack.c.b16 %v193, %v192
    %v199 = vpack.c.b16 %v195, %v194
    %v205 = vsel %vm28, %v167, 0
    %207 = vmatpush.bf16.msra.mxu0 0
    %208 = vmatpush.bf16.msra.mxu0 0
    %209 = vmatpush.bf16.msra.mxu0 0
    %210 = vmatpush.bf16.msra.mxu0 0
    %211 = vmatpush.bf16.msra.mxu0 %v199
    %212 = vmatpush.bf16.msra.mxu0 %v198
    %213 = vmatpush.bf16.msra.mxu0 %v197
    %214 = vmatpush.bf16.msra.mxu0 %v196
    %215 = vmatmul.bf16.gmra.mxu0 %v205
    %v216 = vpop.f32.mrf.mxu0
    %v217 = vadd.f32 %v178, %v216
    %v218 = vpop.f32.mrf.mxu0
    %219 = vdwg.mxu0
    %vm220 = vcmask 74752
    %221 = vst.msk [vmem:[#allocation2] sm:$0x3] %vm220, %v217
    // Predicated region
    $region22: #{swin_forward.13} parent=1 // pred_check
      _
    $region23: #{swin_forward.13} parent=1 // pred_check_branch
      %223 = sbr.rel (0) target = $region25
    $region24: #{swin_forward.13} parent=1 // pred_region
      %225 = vsyncadd [#allocation3], 0
      %s227 = sshll.u32 [#allocation2], 4
      %s228 = int_to_ptr.vmem [resolvable:$true] %s227
      %s229 = sshll.u32 %s5, 4
      %s230 = int_to_ptr.hbm [resolvable:$true] %s229
      %232 = dma.vmem_to_hbm [thread:$0]  %s228, 32, %s230, [#allocation3]
    $region25: #{swin_forward.13} parent=1 // pred_fallthru
      _
    // Predicated region
    $region26: #{swin_forward.13} parent=1 // pred_check
      _
    $region27: #{swin_forward.13} parent=1 // pred_check_branch
      %234 = sbr.rel (0) target = $region29
    $region28: #{swin_forward.13} parent=1 // pred_region
      %236 = dma.done [#allocation3], 32
    $region29: #{swin_forward.13} parent=1 // pred_fallthru
      _
    %237 = vsyncpa [#allocation3], 1

// kernel: swin_forward.11
$region0: #{swin_forward.11}
  #allocation0 [shape = 'u32[]', space=smem, size = 0x4, offset = 0x4, fixed_abs, tag = 'smem constant byte address 0x4 - core index']
  #allocation1 [shape = 'u32[72,128]{1,0:T(1,128)}', space=vmem, size = 0x9000, scoped, tag = 'internal scratch']
  %s0 = inlined_call_operand.vmem [shape: f32[2,1,16,64], index: 0, kind: input, shape index: {}]
  %s1 = inlined_call_operand.vmem [shape: f32[1,4,16,16], index: 1, kind: input, shape index: {}]
  %s2 = inlined_call_operand.vmem [shape: bf16[3,4,64,16], index: 2, kind: input, shape index: {}]
  %s3 = inlined_call_operand.vmem [shape: f32[3,4,1,16], index: 3, kind: input, shape index: {}]
  %s4 = inlined_call_operand.vmem [shape: bf16[4,16,64], index: 4, kind: input, shape index: {}]
  %s5 = inlined_call_operand.vmem [shape: f32[1,64], index: 5, kind: input, shape index: {}, may-alias: {5,7,9,13}]
  %s6 = inlined_call_operand.vmem [shape: f32[1,64], index: 6, kind: input, shape index: {}, may-alias: {6,8}]
  %s7 = inlined_call_operand.vmem [shape: f32[1,64], index: 7, kind: input, shape index: {}, may-alias: {5,7,9,13}]
  %s8 = inlined_call_operand.vmem [shape: f32[1,64], index: 8, kind: input, shape index: {}, may-alias: {6,8}]
  %s9 = inlined_call_operand.vmem [shape: f32[1,64], index: 9, kind: input, shape index: {}, may-alias: {5,7,9,13}]
  %s10 = inlined_call_operand.vmem [shape: bf16[64,256], index: 10, kind: input, shape index: {}]
  %s11 = inlined_call_operand.vmem [shape: f32[1,256], index: 11, kind: input, shape index: {}]
  %s12 = inlined_call_operand.vmem [shape: bf16[256,64], index: 12, kind: input, shape index: {}]
  %s13 = inlined_call_operand.vmem [shape: f32[1,64], index: 13, kind: input, shape index: {}, may-alias: {5,7,9,13}]
  %s14 = inlined_call_operand.vmem [shape: f32[2,1,16,64], index: 14, kind: output, shape index: {}]
  %s15 = sld [smem:[#allocation0]]
  $region89: #{swin_forward.11} parent=0
    _
  %s17 = ssub.s32 1, %s15
  %s18 = scalar_select 0, %s17, %s15
  loop: start=0, step=1, limit=4
  $region2: #{swin_forward.11} parent=0 // loop_pre_header
    _
  $region3: #{swin_forward.11} parent=0 // loop_header
    %s20 = sphi 0, %s24
    %p21 = scmp.ge.s32.totalorder %s20, 4
    %s30 = sphi 0, %s32
    %s33 = sphi 0, %s30
    %s34 = sphi 0, %s33
    %s50 = sphi 0, %s34
    %s54 = sphi 0, %s54
    %s56 = sphi 0, %s54
    %s57 = sphi 0, %s56
    %s71 = sphi 0, %s57
    %s75 = sphi 0, %s75
    %s77 = sphi 0, %s75
    %s78 = sphi 0, %s77
    %s92 = sphi 0, %s78
    %s96 = sphi 0, %s96
    %s98 = sphi 0, %s96
    %s99 = sphi 0, %s98
    %s113 = sphi 0, %s99
    %s117 = sphi 0, %s117
    %s119 = sphi 0, %s117
    %s120 = sphi 0, %s119
    %s134 = sphi 0, %s120
    %s138 = sphi 0, %s138
    %s140 = sphi 0, %s138
    %s141 = sphi 0, %s140
    %s155 = sphi 0, %s141
    %s159 = sphi 0, %s159
    %s161 = sphi 0, %s159
    %s162 = sphi 0, %s161
    %s176 = sphi 0, %s162
    %s180 = sphi 0, %s180
    %s182 = sphi 0, %s180
    %s183 = sphi 0, %s182
    %s197 = sphi 0, %s183
    %s201 = sphi 0, %s201
    %s203 = sphi 0, %s201
    %s204 = sphi 0, %s203
    %s218 = sphi 0, %s204
    %s222 = sphi 0, %s222
    %s224 = sphi 0, %s222
    %s225 = sphi 0, %s224
    %s239 = sphi 0, %s225
    %s243 = sphi 0, %s243
    %s245 = sphi 0, %s243
    %s246 = sphi 0, %s245
    %s260 = sphi 0, %s246
    %s264 = sphi 0, %s264
    %s266 = sphi 0, %s264
    %s267 = sphi 0, %s266
    %s281 = sphi 0, %s267
    %s285 = sphi 0, %s285
    %s287 = sphi 0, %s285
    %s288 = sphi 0, %s287
    %s302 = sphi 0, %s288
    %s306 = sphi 0, %s306
    %s308 = sphi 0, %s306
    %s309 = sphi 0, %s308
    %s323 = sphi 0, %s309
    %s329 = sphi 0, %s331
    %s332 = sphi 0, %s329
    %s333 = sphi 0, %s332
    %s349 = sphi 0, %s333
  $region4: #{swin_forward.11} parent=0 // loop_header_branch
    %23 = sbr.rel (%p21) target = $region8
  $region5: #{swin_forward.11} parent=0 // loop_body
    %s25 = ssub.s32 %s20, 1
    %s26 = ssub.s32 %s20, 2
    %s27 = sadd.s32 %s20, 1
    %s28 = ssub.s32 %s20, %s27
    %p29 = scmp.eq.s32.totalorder %s28, 0
    %s31 = sadd.s32 %s30, 1
    %s32 = scalar_select %p29, %s30, %s31
    %p35 = pneg %p29
    %p36 = scmp.eq.s32.totalorder %s20, 1
    %p37 = por %p35, %p36
    %p38 = scmp.ne.s32.totalorder %s30, %s33
    %p39 = scmp.eq.s32.totalorder %s20, 0
    %p40 = por %p38, %p39
    %p41 = scmp.ne.s32.totalorder %s30, %s33
    %p42 = scmp.eq.s32.totalorder %s25, 1
    %p43 = por %p41, %p42
    %p44 = scmp.ne.s32.totalorder %s33, %s34
    %p45 = scmp.eq.s32.totalorder %s25, 0
    %p46 = por %p44, %p45
    %p47 = scmp.ne.s32.totalorder %s33, %s34
    %p48 = scmp.eq.s32.totalorder %s26, 1
    %p49 = por %p47, %p48
    %p51 = scmp.ne.s32.totalorder %s34, %s50
    %p52 = scmp.eq.s32.totalorder %s26, 0
    %p53 = por %p51, %p52
    %s55 = sadd.s32 %s54, 1
    %p58 = scmp.eq.s32.totalorder %s20, 1
    %p59 = scmp.ne.s32.totalorder %s54, %s56
    %p60 = scmp.eq.s32.totalorder %s20, 0
    %p61 = por %p59, %p60
    %p62 = scmp.ne.s32.totalorder %s54, %s56
    %p63 = scmp.eq.s32.totalorder %s25, 1
    %p64 = por %p62, %p63
    %p65 = scmp.ne.s32.totalorder %s56, %s57
    %p66 = scmp.eq.s32.totalorder %s25, 0
    %p67 = por %p65, %p66
    %p68 = scmp.ne.s32.totalorder %s56, %s57
    %p69 = scmp.eq.s32.totalorder %s26, 1
    %p70 = por %p68, %p69
    %p72 = scmp.ne.s32.totalorder %s57, %s71
    %p73 = scmp.eq.s32.totalorder %s26, 0
    %p74 = por %p72, %p73
    %s76 = sadd.s32 %s75, 1
    %p79 = scmp.eq.s32.totalorder %s20, 1
    %p80 = scmp.ne.s32.totalorder %s75, %s77
    %p81 = scmp.eq.s32.totalorder %s20, 0
    %p82 = por %p80, %p81
    %p83 = scmp.ne.s32.totalorder %s75, %s77
    %p84 = scmp.eq.s32.totalorder %s25, 1
    %p85 = por %p83, %p84
    %p86 = scmp.ne.s32.totalorder %s77, %s78
    %p87 = scmp.eq.s32.totalorder %s25, 0
    %p88 = por %p86, %p87
    %p89 = scmp.ne.s32.totalorder %s77, %s78
    %p90 = scmp.eq.s32.totalorder %s26, 1
    %p91 = por %p89, %p90
    %p93 = scmp.ne.s32.totalorder %s78, %s92
    %p94 = scmp.eq.s32.totalorder %s26, 0
    %p95 = por %p93, %p94
    %s97 = sadd.s32 %s96, 1
    %p100 = scmp.eq.s32.totalorder %s20, 1
    %p101 = scmp.ne.s32.totalorder %s96, %s98
    %p102 = scmp.eq.s32.totalorder %s20, 0
    %p103 = por %p101, %p102
    %p104 = scmp.ne.s32.totalorder %s96, %s98
    %p105 = scmp.eq.s32.totalorder %s25, 1
    %p106 = por %p104, %p105
    %p107 = scmp.ne.s32.totalorder %s98, %s99
    %p108 = scmp.eq.s32.totalorder %s25, 0
    %p109 = por %p107, %p108
    %p110 = scmp.ne.s32.totalorder %s98, %s99
    %p111 = scmp.eq.s32.totalorder %s26, 1
    %p112 = por %p110, %p111
    %p114 = scmp.ne.s32.totalorder %s99, %s113
    %p115 = scmp.eq.s32.totalorder %s26, 0
    %p116 = por %p114, %p115
    %s118 = sadd.s32 %s117, 1
    %p121 = scmp.eq.s32.totalorder %s20, 1
    %p122 = scmp.ne.s32.totalorder %s117, %s119
    %p123 = scmp.eq.s32.totalorder %s20, 0
    %p124 = por %p122, %p123
    %p125 = scmp.ne.s32.totalorder %s117, %s119
    %p126 = scmp.eq.s32.totalorder %s25, 1
    %p127 = por %p125, %p126
    %p128 = scmp.ne.s32.totalorder %s119, %s120
    %p129 = scmp.eq.s32.totalorder %s25, 0
    %p130 = por %p128, %p129
    %p131 = scmp.ne.s32.totalorder %s119, %s120
    %p132 = scmp.eq.s32.totalorder %s26, 1
    %p133 = por %p131, %p132
    %p135 = scmp.ne.s32.totalorder %s120, %s134
    %p136 = scmp.eq.s32.totalorder %s26, 0
    %p137 = por %p135, %p136
    %s139 = sadd.s32 %s138, 1
    %p142 = scmp.eq.s32.totalorder %s20, 1
    %p143 = scmp.ne.s32.totalorder %s138, %s140
    %p144 = scmp.eq.s32.totalorder %s20, 0
    %p145 = por %p143, %p144
    %p146 = scmp.ne.s32.totalorder %s138, %s140
    %p147 = scmp.eq.s32.totalorder %s25, 1
    %p148 = por %p146, %p147
    %p149 = scmp.ne.s32.totalorder %s140, %s141
    %p150 = scmp.eq.s32.totalorder %s25, 0
    %p151 = por %p149, %p150
    %p152 = scmp.ne.s32.totalorder %s140, %s141
    %p153 = scmp.eq.s32.totalorder %s26, 1
    %p154 = por %p152, %p153
    %p156 = scmp.ne.s32.totalorder %s141, %s155
    %p157 = scmp.eq.s32.totalorder %s26, 0
    %p158 = por %p156, %p157
    %s160 = sadd.s32 %s159, 1
    %p163 = scmp.eq.s32.totalorder %s20, 1
    %p164 = scmp.ne.s32.totalorder %s159, %s161
    %p165 = scmp.eq.s32.totalorder %s20, 0
    %p166 = por %p164, %p165
    %p167 = scmp.ne.s32.totalorder %s159, %s161
    %p168 = scmp.eq.s32.totalorder %s25, 1
    %p169 = por %p167, %p168
    %p170 = scmp.ne.s32.totalorder %s161, %s162
    %p171 = scmp.eq.s32.totalorder %s25, 0
    %p172 = por %p170, %p171
    %p173 = scmp.ne.s32.totalorder %s161, %s162
    %p174 = scmp.eq.s32.totalorder %s26, 1
    %p175 = por %p173, %p174
    %p177 = scmp.ne.s32.totalorder %s162, %s176
    %p178 = scmp.eq.s32.totalorder %s26, 0
    %p179 = por %p177, %p178
    %s181 = sadd.s32 %s180, 1
    %p184 = scmp.eq.s32.totalorder %s20, 1
    %p185 = scmp.ne.s32.totalorder %s180, %s182
    %p186 = scmp.eq.s32.totalorder %s20, 0
    %p187 = por %p185, %p186
    %p188 = scmp.ne.s32.totalorder %s180, %s182
    %p189 = scmp.eq.s32.totalorder %s25, 1
    %p190 = por %p188, %p189
    %p191 = scmp.ne.s32.totalorder %s182, %s183
    %p192 = scmp.eq.s32.totalorder %s25, 0
    %p193 = por %p191, %p192
    %p194 = scmp.ne.s32.totalorder %s182, %s183
    %p195 = scmp.eq.s32.totalorder %s26, 1
    %p196 = por %p194, %p195
    %p198 = scmp.ne.s32.totalorder %s183, %s197
    %p199 = scmp.eq.s32.totalorder %s26, 0
    %p200 = por %p198, %p199
    %s202 = sadd.s32 %s201, 1
    %p205 = scmp.eq.s32.totalorder %s20, 1
    %p206 = scmp.ne.s32.totalorder %s201, %s203
    %p207 = scmp.eq.s32.totalorder %s20, 0
    %p208 = por %p206, %p207
    %p209 = scmp.ne.s32.totalorder %s201, %s203
    %p210 = scmp.eq.s32.totalorder %s25, 1
    %p211 = por %p209, %p210
    %p212 = scmp.ne.s32.totalorder %s203, %s204
    %p213 = scmp.eq.s32.totalorder %s25, 0
    %p214 = por %p212, %p213
    %p215 = scmp.ne.s32.totalorder %s203, %s204
    %p216 = scmp.eq.s32.totalorder %s26, 1
    %p217 = por %p215, %p216
    %p219 = scmp.ne.s32.totalorder %s204, %s218
    %p220 = scmp.eq.s32.totalorder %s26, 0
    %p221 = por %p219, %p220
    %s223 = sadd.s32 %s222, 1
    %p226 = scmp.eq.s32.totalorder %s20, 1
    %p227 = scmp.ne.s32.totalorder %s222, %s224
    %p228 = scmp.eq.s32.totalorder %s20, 0
    %p229 = por %p227, %p228
    %p230 = scmp.ne.s32.totalorder %s222, %s224
    %p231 = scmp.eq.s32.totalorder %s25, 1
    %p232 = por %p230, %p231
    %p233 = scmp.ne.s32.totalorder %s224, %s225
    %p234 = scmp.eq.s32.totalorder %s25, 0
    %p235 = por %p233, %p234
    %p236 = scmp.ne.s32.totalorder %s224, %s225
    %p237 = scmp.eq.s32.totalorder %s26, 1
    %p238 = por %p236, %p237
    %p240 = scmp.ne.s32.totalorder %s225, %s239
    %p241 = scmp.eq.s32.totalorder %s26, 0
    %p242 = por %p240, %p241
    %s244 = sadd.s32 %s243, 1
    %p247 = scmp.eq.s32.totalorder %s20, 1
    %p248 = scmp.ne.s32.totalorder %s243, %s245
    %p249 = scmp.eq.s32.totalorder %s20, 0
    %p250 = por %p248, %p249
    %p251 = scmp.ne.s32.totalorder %s243, %s245
    %p252 = scmp.eq.s32.totalorder %s25, 1
    %p253 = por %p251, %p252
    %p254 = scmp.ne.s32.totalorder %s245, %s246
    %p255 = scmp.eq.s32.totalorder %s25, 0
    %p256 = por %p254, %p255
    %p257 = scmp.ne.s32.totalorder %s245, %s246
    %p258 = scmp.eq.s32.totalorder %s26, 1
    %p259 = por %p257, %p258
    %p261 = scmp.ne.s32.totalorder %s246, %s260
    %p262 = scmp.eq.s32.totalorder %s26, 0
    %p263 = por %p261, %p262
    %s265 = sadd.s32 %s264, 1
    %p268 = scmp.eq.s32.totalorder %s20, 1
    %p269 = scmp.ne.s32.totalorder %s264, %s266
    %p270 = scmp.eq.s32.totalorder %s20, 0
    %p271 = por %p269, %p270
    %p272 = scmp.ne.s32.totalorder %s264, %s266
    %p273 = scmp.eq.s32.totalorder %s25, 1
    %p274 = por %p272, %p273
    %p275 = scmp.ne.s32.totalorder %s266, %s267
    %p276 = scmp.eq.s32.totalorder %s25, 0
    %p277 = por %p275, %p276
    %p278 = scmp.ne.s32.totalorder %s266, %s267
    %p279 = scmp.eq.s32.totalorder %s26, 1
    %p280 = por %p278, %p279
    %p282 = scmp.ne.s32.totalorder %s267, %s281
    %p283 = scmp.eq.s32.totalorder %s26, 0
    %p284 = por %p282, %p283
    %s286 = sadd.s32 %s285, 1
    %p289 = scmp.eq.s32.totalorder %s20, 1
    %p290 = scmp.ne.s32.totalorder %s285, %s287
    %p291 = scmp.eq.s32.totalorder %s20, 0
    %p292 = por %p290, %p291
    %p293 = scmp.ne.s32.totalorder %s285, %s287
    %p294 = scmp.eq.s32.totalorder %s25, 1
    %p295 = por %p293, %p294
    %p296 = scmp.ne.s32.totalorder %s287, %s288
    %p297 = scmp.eq.s32.totalorder %s25, 0
    %p298 = por %p296, %p297
    %p299 = scmp.ne.s32.totalorder %s287, %s288
    %p300 = scmp.eq.s32.totalorder %s26, 1
    %p301 = por %p299, %p300
    %p303 = scmp.ne.s32.totalorder %s288, %s302
    %p304 = scmp.eq.s32.totalorder %s26, 0
    %p305 = por %p303, %p304
    %s307 = sadd.s32 %s306, 1
    %p310 = scmp.eq.s32.totalorder %s20, 1
    %p311 = scmp.ne.s32.totalorder %s306, %s308
    %p312 = scmp.eq.s32.totalorder %s20, 0
    %p313 = por %p311, %p312
    %p314 = scmp.ne.s32.totalorder %s306, %s308
    %p315 = scmp.eq.s32.totalorder %s25, 1
    %p316 = por %p314, %p315
    %p317 = scmp.ne.s32.totalorder %s308, %s309
    %p318 = scmp.eq.s32.totalorder %s25, 0
    %p319 = por %p317, %p318
    %p320 = scmp.ne.s32.totalorder %s308, %s309
    %p321 = scmp.eq.s32.totalorder %s26, 1
    %p322 = por %p320, %p321
    %p324 = scmp.ne.s32.totalorder %s309, %s323
    %p325 = scmp.eq.s32.totalorder %s26, 0
    %p326 = por %p324, %p325
    %s327 = ssub.s32 %s20, %s27
    %p328 = scmp.eq.s32.totalorder %s327, 0
    %s330 = sadd.s32 %s329, 1
    %s331 = scalar_select %p328, %s329, %s330
    %p334 = pneg %p328
    %p335 = scmp.eq.s32.totalorder %s20, 1
    %p336 = por %p334, %p335
    %p337 = scmp.ne.s32.totalorder %s329, %s332
    %p338 = scmp.eq.s32.totalorder %s20, 0
    %p339 = por %p337, %p338
    %p340 = scmp.ne.s32.totalorder %s329, %s332
    %p341 = scmp.eq.s32.totalorder %s25, 1
    %p342 = por %p340, %p341
    %p343 = scmp.ne.s32.totalorder %s332, %s333
    %p344 = scmp.eq.s32.totalorder %s25, 0
    %p345 = por %p343, %p344
    %p346 = scmp.ne.s32.totalorder %s332, %s333
    %p347 = scmp.eq.s32.totalorder %s26, 1
    %p348 = por %p346, %p347
    %p350 = scmp.ne.s32.totalorder %s333, %s349
    %p351 = scmp.eq.s32.totalorder %s26, 0
    %p352 = por %p350, %p351
    %p353 = scmp.le.s32.totalorder 1, %s20
    %p354 = scmp.lt.s32.totalorder %s20, 3
    %p355 = pnand %p353, %p354
    %p356 = pneg %p355
    // Predicated region
    $region9: #{swin_forward.11} parent=5 // pred_check
      _
    $region10: #{swin_forward.11} parent=5 // pred_check_branch
      %358 = sbr.rel (%p355) target = $region12
    $region11: #{swin_forward.11} parent=5 // pred_region
      %s359 = ssub.s32 %s20, 1
      // Predicated region
      $region13: #{swin_forward.11} parent=11 // pred_check
        %p360 = pneg %p67
      $region14: #{swin_forward.11} parent=11 // pred_check_branch
        %362 = sbr.rel (%p360) target = $region16
      $region15: #{swin_forward.11} parent=11 // pred_region
        _
      $region16: #{swin_forward.11} parent=11 // pred_fallthru
        _
      // Predicated region
      $region17: #{swin_forward.11} parent=11 // pred_check
        %p363 = pneg %p88
      $region18: #{swin_forward.11} parent=11 // pred_check_branch
        %365 = sbr.rel (%p363) target = $region20
      $region19: #{swin_forward.11} parent=11 // pred_region
        _
      $region20: #{swin_forward.11} parent=11 // pred_fallthru
        _
      // Predicated region
      $region21: #{swin_forward.11} parent=11 // pred_check
        %p366 = pneg %p109
      $region22: #{swin_forward.11} parent=11 // pred_check_branch
        %368 = sbr.rel (%p366) target = $region24
      $region23: #{swin_forward.11} parent=11 // pred_region
        _
      $region24: #{swin_forward.11} parent=11 // pred_fallthru
        _
      // Predicated region
      $region25: #{swin_forward.11} parent=11 // pred_check
        %p369 = pneg %p130
      $region26: #{swin_forward.11} parent=11 // pred_check_branch
        %371 = sbr.rel (%p369) target = $region28
      $region27: #{swin_forward.11} parent=11 // pred_region
        _
      $region28: #{swin_forward.11} parent=11 // pred_fallthru
        _
      // Predicated region
      $region29: #{swin_forward.11} parent=11 // pred_check
        %p372 = pneg %p151
      $region30: #{swin_forward.11} parent=11 // pred_check_branch
        %374 = sbr.rel (%p372) target = $region32
      $region31: #{swin_forward.11} parent=11 // pred_region
        _
      $region32: #{swin_forward.11} parent=11 // pred_fallthru
        _
      // Predicated region
      $region33: #{swin_forward.11} parent=11 // pred_check
        %p375 = pneg %p172
      $region34: #{swin_forward.11} parent=11 // pred_check_branch
        %377 = sbr.rel (%p375) target = $region36
      $region35: #{swin_forward.11} parent=11 // pred_region
        _
      $region36: #{swin_forward.11} parent=11 // pred_fallthru
        _
      // Predicated region
      $region37: #{swin_forward.11} parent=11 // pred_check
        %p378 = pneg %p193
      $region38: #{swin_forward.11} parent=11 // pred_check_branch
        %380 = sbr.rel (%p378) target = $region40
      $region39: #{swin_forward.11} parent=11 // pred_region
        _
      $region40: #{swin_forward.11} parent=11 // pred_fallthru
        _
      // Predicated region
      $region41: #{swin_forward.11} parent=11 // pred_check
        %p381 = pneg %p214
      $region42: #{swin_forward.11} parent=11 // pred_check_branch
        %383 = sbr.rel (%p381) target = $region44
      $region43: #{swin_forward.11} parent=11 // pred_region
        _
      $region44: #{swin_forward.11} parent=11 // pred_fallthru
        _
      // Predicated region
      $region45: #{swin_forward.11} parent=11 // pred_check
        %p384 = pneg %p235
      $region46: #{swin_forward.11} parent=11 // pred_check_branch
        %386 = sbr.rel (%p384) target = $region48
      $region47: #{swin_forward.11} parent=11 // pred_region
        _
      $region48: #{swin_forward.11} parent=11 // pred_fallthru
        _
      // Predicated region
      $region49: #{swin_forward.11} parent=11 // pred_check
        %p387 = pneg %p256
      $region50: #{swin_forward.11} parent=11 // pred_check_branch
        %389 = sbr.rel (%p387) target = $region52
      $region51: #{swin_forward.11} parent=11 // pred_region
        _
      $region52: #{swin_forward.11} parent=11 // pred_fallthru
        _
      // Predicated region
      $region53: #{swin_forward.11} parent=11 // pred_check
        %p390 = pneg %p277
      $region54: #{swin_forward.11} parent=11 // pred_check_branch
        %392 = sbr.rel (%p390) target = $region56
      $region55: #{swin_forward.11} parent=11 // pred_region
        _
      $region56: #{swin_forward.11} parent=11 // pred_fallthru
        _
      // Predicated region
      $region57: #{swin_forward.11} parent=11 // pred_check
        %p393 = pneg %p298
      $region58: #{swin_forward.11} parent=11 // pred_check_branch
        %395 = sbr.rel (%p393) target = $region60
      $region59: #{swin_forward.11} parent=11 // pred_region
        _
      $region60: #{swin_forward.11} parent=11 // pred_fallthru
        _
      // Predicated region
      $region61: #{swin_forward.11} parent=11 // pred_check
        %p396 = pneg %p319
      $region62: #{swin_forward.11} parent=11 // pred_check_branch
        %398 = sbr.rel (%p396) target = $region64
      $region63: #{swin_forward.11} parent=11 // pred_region
        _
      $region64: #{swin_forward.11} parent=11 // pred_fallthru
        _
    $region12: #{swin_forward.11} parent=5 // pred_fallthru
      _
    %p399 = scmp.lt.s32.totalorder %s20, 2
    // Predicated region
    $region65: #{swin_forward.11} parent=5 // pred_check
      %p400 = pneg %p399
    $region66: #{swin_forward.11} parent=5 // pred_check_branch
      %402 = sbr.rel (%p400) target = $region68
    $region67: #{swin_forward.11} parent=5 // pred_region
      // Predicated region
      $region69: #{swin_forward.11} parent=67 // pred_check
        %p403 = pneg %p40
      $region70: #{swin_forward.11} parent=67 // pred_check_branch
        %405 = sbr.rel (%p403) target = $region72
      $region71: #{swin_forward.11} parent=67 // pred_region
        %p406 = scmp.lt.s32.totalorder %s20, 1
        %s407 = scalar_select %p406, %s20, 1
        %s408 = smul.addr %s407, 2
        %s409 = smul.addr %s408, 8
        %s410 = scalar_lea.vmem %s0, %s409
      $region72: #{swin_forward.11} parent=67 // pred_fallthru
        _
    $region68: #{swin_forward.11} parent=5 // pred_fallthru
      _
    %p411 = scmp.le.s32.totalorder 1, %s20
    %p412 = scmp.lt.s32.totalorder %s20, 3
    %p413 = pnand %p411, %p412
    %p414 = pneg %p413
    // Predicated region
    $region73: #{swin_forward.11} parent=5 // pred_check
      _
    $region74: #{swin_forward.11} parent=5 // pred_check_branch
      %416 = sbr.rel (%p413) target = $region76
    $region75: #{swin_forward.11} parent=5 // pred_region
      %s417 = ssub.s32 %s20, 1
      %p418 = scmp.lt.s32.totalorder %s25, 1
      %s419 = scalar_select %p418, %s25, 1
      %s420 = smul.addr %s419, 2
      %s421 = smul.addr %s420, 8
      %s422 = scalar_lea.vmem %s0, %s421
      %p423 = pneg %p46
      %p424 = pneg %p43
      %p425 = pneg %p67
      %p426 = pneg %p64
      %p427 = pneg %p88
      %p428 = pneg %p85
      %p429 = pneg %p109
      %p430 = pneg %p106
      %p431 = pneg %p130
      %p432 = pneg %p127
      %p433 = pneg %p151
      %p434 = pneg %p148
      %p435 = pneg %p172
      %p436 = pneg %p169
      %p437 = pneg %p193
      %p438 = pneg %p190
      %p439 = pneg %p214
      %p440 = pneg %p211
      %p441 = pneg %p235
      %p442 = pneg %p232
      %p443 = pneg %p256
      %p444 = pneg %p253
      %p445 = pneg %p277
      %p446 = pneg %p274
      %p447 = pneg %p298
      %p448 = pneg %p295
      %p449 = pneg %p319
      %p450 = pneg %p316
      %p451 = pneg %p345
      %p452 = pneg %p342
      %p453 = scmp.lt.s32.totalorder %s25, 1
      %s454 = scalar_select %p453, %s25, 1
      %s455 = smul.addr %s454, 2
      %s456 = smul.addr %s455, 8
      %s457 = scalar_lea.vmem %s14, %s456
      %p458 = scmp.lt.s32.totalorder %s25, 1
      %s459 = scalar_select %p458, %s25, 1
      %s460 = smul.addr %s459, 2
      %s461 = smul.addr %s460, 8
      %s462 = scalar_lea.vmem %s0, %s461
      %p463 = scmp.lt.s32.totalorder %s25, 1
      %s464 = scalar_select %p463, %s25, 1
      %s465 = smul.addr %s464, 2
      %s466 = smul.addr %s465, 8
      %s467 = scalar_lea.vmem %s14, %s466
      %v469 = vld [vmem:[%s462] sm:$0xff]
      %v470 = vld [vmem:[%s462 + $0x8] sm:$0xff]
      %v471 = vld [vmem:[%s6] sm:$0x1]
      %v472 = vld [vmem:[%s7] sm:$0x1]
      %vm473 = vcmask 523264
      %v474 = vsel %vm473, %v469, 0.0
      %475 = vadd.xlane.f32.xlu0 %v474
      %v476 = vpop.xlane.xlu0 %475
      %v477 = vsel %vm473, %v470, 0.0
      %478 = vadd.xlane.f32.xlu0 %v477
      %v479 = vpop.xlane.xlu0 %478
      %v480 = vrcp.pop 64.0
      %v481 = vmul.f32 64.0, %v480
      %v482 = vsub.f32 1.0, %v481
      %v483 = vmul.f32 %v480, %v482
      %v484 = vadd.f32 %v480, %v483
      %vm485 = vweird.f32 %v480
      %v486 = vsel %vm485, %v480, %v484
      %v487 = vmul.f32 %v476, %v486
      %v488 = vmul.f32 %v479, %v486
      %v489 = vsub.f32 %v469, %v487
      %v490 = vsub.f32 %v470, %v488
      %v491 = vmul.f32 %v489, %v489
      %v492 = vmul.f32 %v490, %v490
      %v493 = vsel %vm473, %v491, 0.0
      %494 = vadd.xlane.f32.xlu0 %v493
      %v495 = vpop.xlane.xlu0 %494
      %v496 = vsel %vm473, %v492, 0.0
      %497 = vadd.xlane.f32.xlu0 %v496
      %v498 = vpop.xlane.xlu0 %497
      %v499 = vmul.f32 %v495, %v486
      %v500 = vmul.f32 %v498, %v486
      %v501 = vadd.f32 %v499, 1e-05
      %v502 = vadd.f32 %v500, 1e-05
      %v503 = vrsqrt.pop %v501
      %v504 = vmul.f32 %v503, %v501
      %v505 = vmul.f32 %v504, %v503
      %v506 = vmul.f32 0.5, %v505
      %v507 = vsub.f32 1.5, %v506
      %v508 = vmul.f32 %v503, %v507
      %vm509 = vweird.f32 %v501
      %vm510 = vweird.f32 %v503
      %vm511 = vmor %vm509, %vm510
      %v512 = vsel %vm511, %v503, %v508
      %v513 = vrsqrt.pop %v502
      %v514 = vmul.f32 %v513, %v502
      %v515 = vmul.f32 %v514, %v513
      %v516 = vmul.f32 0.5, %v515
      %v517 = vsub.f32 1.5, %v516
      %v518 = vmul.f32 %v513, %v517
      %vm519 = vweird.f32 %v502
      %vm520 = vweird.f32 %v513
      %vm521 = vmor %vm519, %vm520
      %v522 = vsel %vm521, %v513, %v518
      %v523 = vmul.f32 %v489, %v512
      %v524 = vmul.f32 %v490, %v522
      %v526 = vperm.slane %v471, 0
      %v528 = vmul.f32 %v523, %v526
      %v529 = vmul.f32 %v524, %v526
      %v531 = vperm.slane %v472, 0
      %v533 = vadd.f32 %v528, %v531
      %v534 = vadd.f32 %v529, %v531
      %v535 = vpack.c.bf16 %v534, %v533
      %v536 = vld [vmem:[%s2] sm:$0xf]
      %v537 = vld [vmem:[%s2 + $0x4] sm:$0xf]
      %v538 = vld [vmem:[%s2 + $0x8] sm:$0xf]
      %v539 = vld [vmem:[%s2 + $0xc] sm:$0xf]
      %v540 = vld [vmem:[%s2 + $0x10] sm:$0xf]
      %v541 = vld [vmem:[%s2 + $0x14] sm:$0xf]
      %v542 = vld [vmem:[%s2 + $0x18] sm:$0xf]
      %v543 = vld [vmem:[%s2 + $0x1c] sm:$0xf]
      %v544 = vld [vmem:[%s2 + $0x20] sm:$0xf]
      %v545 = vld [vmem:[%s2 + $0x24] sm:$0xf]
      %v546 = vld [vmem:[%s2 + $0x28] sm:$0xf]
      %v547 = vld [vmem:[%s2 + $0x2c] sm:$0xf]
      %v548 = vld [vmem:[%s2 + $0x30] sm:$0xf]
      %v549 = vld [vmem:[%s2 + $0x34] sm:$0xf]
      %v550 = vld [vmem:[%s2 + $0x38] sm:$0xf]
      %v551 = vld [vmem:[%s2 + $0x3c] sm:$0xf]
      %v552 = vld [vmem:[%s2 + $0x40] sm:$0xf]
      %v553 = vld [vmem:[%s2 + $0x44] sm:$0xf]
      %v554 = vld [vmem:[%s2 + $0x48] sm:$0xf]
      %v555 = vld [vmem:[%s2 + $0x4c] sm:$0xf]
      %v556 = vld [vmem:[%s2 + $0x50] sm:$0xf]
      %v557 = vld [vmem:[%s2 + $0x54] sm:$0xf]
      %v558 = vld [vmem:[%s2 + $0x58] sm:$0xf]
      %v559 = vld [vmem:[%s2 + $0x5c] sm:$0xf]
      %v560 = vld [vmem:[%s2 + $0x60] sm:$0xf]
      %v561 = vld [vmem:[%s2 + $0x64] sm:$0xf]
      %v562 = vld [vmem:[%s2 + $0x68] sm:$0xf]
      %v563 = vld [vmem:[%s2 + $0x6c] sm:$0xf]
      %v564 = vld [vmem:[%s2 + $0x70] sm:$0xf]
      %v565 = vld [vmem:[%s2 + $0x74] sm:$0xf]
      %v566 = vld [vmem:[%s2 + $0x78] sm:$0xf]
      %v567 = vld [vmem:[%s2 + $0x7c] sm:$0xf]
      %v568 = vld [vmem:[%s2 + $0x80] sm:$0xf]
      %v569 = vld [vmem:[%s2 + $0x84] sm:$0xf]
      %v570 = vld [vmem:[%s2 + $0x88] sm:$0xf]
      %v571 = vld [vmem:[%s2 + $0x8c] sm:$0xf]
      %v572 = vld [vmem:[%s2 + $0x90] sm:$0xf]
      %v573 = vld [vmem:[%s2 + $0x94] sm:$0xf]
      %v574 = vld [vmem:[%s2 + $0x98] sm:$0xf]
      %v575 = vld [vmem:[%s2 + $0x9c] sm:$0xf]
      %v576 = vld [vmem:[%s2 + $0xa0] sm:$0xf]
      %v577 = vld [vmem:[%s2 + $0xa4] sm:$0xf]
      %v578 = vld [vmem:[%s2 + $0xa8] sm:$0xf]
      %v579 = vld [vmem:[%s2 + $0xac] sm:$0xf]
      %v580 = vld [vmem:[%s2 + $0xb0] sm:$0xf]
      %v581 = vld [vmem:[%s2 + $0xb4] sm:$0xf]
      %v582 = vld [vmem:[%s2 + $0xb8] sm:$0xf]
      %v583 = vld [vmem:[%s2 + $0xbc] sm:$0xf]
      %v584 = vld [vmem:[%s2 + $0xc0] sm:$0xf]
      %v585 = vld [vmem:[%s2 + $0xc4] sm:$0xf]
      %v586 = vld [vmem:[%s2 + $0xc8] sm:$0xf]
      %v587 = vld [vmem:[%s2 + $0xcc] sm:$0xf]
      %v588 = vld [vmem:[%s2 + $0xd0] sm:$0xf]
      %v589 = vld [vmem:[%s2 + $0xd4] sm:$0xf]
      %v590 = vld [vmem:[%s2 + $0xd8] sm:$0xf]
      %v591 = vld [vmem:[%s2 + $0xdc] sm:$0xf]
      %v592 = vld [vmem:[%s2 + $0xe0] sm:$0xf]
      %v593 = vld [vmem:[%s2 + $0xe4] sm:$0xf]
      %v594 = vld [vmem:[%s2 + $0xe8] sm:$0xf]
      %v595 = vld [vmem:[%s2 + $0xec] sm:$0xf]
      %v596 = vld [vmem:[%s2 + $0xf0] sm:$0xf]
      %v597 = vld [vmem:[%s2 + $0xf4] sm:$0xf]
      %v598 = vld [vmem:[%s2 + $0xf8] sm:$0xf]
      %v599 = vld [vmem:[%s2 + $0xfc] sm:$0xf]
      %v600 = vld [vmem:[%s2 + $0x100] sm:$0xf]
      %v601 = vld [vmem:[%s2 + $0x104] sm:$0xf]
      %v602 = vld [vmem:[%s2 + $0x108] sm:$0xf]
      %v603 = vld [vmem:[%s2 + $0x10c] sm:$0xf]
      %v604 = vld [vmem:[%s2 + $0x110] sm:$0xf]
      %v605 = vld [vmem:[%s2 + $0x114] sm:$0xf]
      %v606 = vld [vmem:[%s2 + $0x118] sm:$0xf]
      %v607 = vld [vmem:[%s2 + $0x11c] sm:$0xf]
      %v608 = vld [vmem:[%s2 + $0x120] sm:$0xf]
      %v609 = vld [vmem:[%s2 + $0x124] sm:$0xf]
      %v610 = vld [vmem:[%s2 + $0x128] sm:$0xf]
      %v611 = vld [vmem:[%s2 + $0x12c] sm:$0xf]
      %v612 = vld [vmem:[%s2 + $0x130] sm:$0xf]
      %v613 = vld [vmem:[%s2 + $0x134] sm:$0xf]
      %v614 = vld [vmem:[%s2 + $0x138] sm:$0xf]
      %v615 = vld [vmem:[%s2 + $0x13c] sm:$0xf]
      %v616 = vld [vmem:[%s2 + $0x140] sm:$0xf]
      %v617 = vld [vmem:[%s2 + $0x144] sm:$0xf]
      %v618 = vld [vmem:[%s2 + $0x148] sm:$0xf]
      %v619 = vld [vmem:[%s2 + $0x14c] sm:$0xf]
      %v620 = vld [vmem:[%s2 + $0x150] sm:$0xf]
      %v621 = vld [vmem:[%s2 + $0x154] sm:$0xf]
      %v622 = vld [vmem:[%s2 + $0x158] sm:$0xf]
      %v623 = vld [vmem:[%s2 + $0x15c] sm:$0xf]
      %v624 = vld [vmem:[%s2 + $0x160] sm:$0xf]
      %v625 = vld [vmem:[%s2 + $0x164] sm:$0xf]
      %v626 = vld [vmem:[%s2 + $0x168] sm:$0xf]
      %v627 = vld [vmem:[%s2 + $0x16c] sm:$0xf]
      %v628 = vld [vmem:[%s2 + $0x170] sm:$0xf]
      %v629 = vld [vmem:[%s2 + $0x174] sm:$0xf]
      %v630 = vld [vmem:[%s2 + $0x178] sm:$0xf]
      %v631 = vld [vmem:[%s2 + $0x17c] sm:$0xf]
      %v632 = vld [vmem:[%s3] sm:$0x1]
      %v633 = vld [vmem:[%s3 + $0x1] sm:$0x1]
      %v634 = vld [vmem:[%s3 + $0x2] sm:$0x1]
      %v635 = vld [vmem:[%s3 + $0x3] sm:$0x1]
      %v636 = vld [vmem:[%s3 + $0x4] sm:$0x1]
      %v637 = vld [vmem:[%s3 + $0x5] sm:$0x1]
      %v638 = vld [vmem:[%s3 + $0x6] sm:$0x1]
      %v639 = vld [vmem:[%s3 + $0x7] sm:$0x1]
      %v640 = vld [vmem:[%s3 + $0x8] sm:$0x1]
      %v641 = vld [vmem:[%s3 + $0x9] sm:$0x1]
      %v642 = vld [vmem:[%s3 + $0xa] sm:$0x1]
      %v643 = vld [vmem:[%s3 + $0xb] sm:$0x1]
      %v644 = vld [vmem:[%s4] sm:$0xf]
      %v645 = vld [vmem:[%s4 + $0x4] sm:$0xf]
      %v646 = vld [vmem:[%s4 + $0x8] sm:$0xf]
      %v647 = vld [vmem:[%s4 + $0xc] sm:$0xf]
      %v648 = vld [vmem:[%s4 + $0x10] sm:$0xf]
      %v649 = vld [vmem:[%s4 + $0x14] sm:$0xf]
      %v650 = vld [vmem:[%s4 + $0x18] sm:$0xf]
      %v651 = vld [vmem:[%s4 + $0x1c] sm:$0xf]
      %v652 = vld [vmem:[%s1] sm:$0xff]
      %v653 = vld [vmem:[%s1 + $0x8] sm:$0xff]
      %v654 = vld [vmem:[%s1 + $0x10] sm:$0xff]
      %v655 = vld [vmem:[%s1 + $0x18] sm:$0xff]
      %v656 = vld [vmem:[%s1 + $0x20] sm:$0xff]
      %v657 = vld [vmem:[%s1 + $0x28] sm:$0xff]
      %v658 = vld [vmem:[%s1 + $0x30] sm:$0xff]
      %v659 = vld [vmem:[%s1 + $0x38] sm:$0xff]
      %v661 = vperm.slane %v632, 0
      %v671 = vunpack.c.l.b16 %v536
      %v672 = vunpack.c.l.b16 %v537
      %v673 = vunpack.c.l.b16 %v538
      %v674 = vunpack.c.l.b16 %v539
      %v675 = vunpack.c.l.b16 %v540
      %v676 = vunpack.c.l.b16 %v541
      %v677 = vunpack.c.l.b16 %v542
      %v678 = vunpack.c.l.b16 %v543
      %v679 = vpack.c.b16 %v672, %v671
      %v680 = vpack.c.b16 %v674, %v673
      %v681 = vpack.c.b16 %v676, %v675
      %v682 = vpack.c.b16 %v678, %v677
      %v688 = vsel %vm473, %v535, 0
      %690 = vmatpush.bf16.msra.mxu0 0
      %691 = vmatpush.bf16.msra.mxu0 0
      %692 = vmatpush.bf16.msra.mxu0 0
      %693 = vmatpush.bf16.msra.mxu0 0
      %694 = vmatpush.bf16.msra.mxu0 %v682
      %695 = vmatpush.bf16.msra.mxu0 %v681
      %696 = vmatpush.bf16.msra.mxu0 %v680
      %697 = vmatpush.bf16.msra.mxu0 %v679
      %698 = vmatmul.bf16.gmra.mxu0 %v688
      %v699 = vpop.f32.mrf.mxu0
      %v700 = vadd.f32 %v661, %v699
      %v701 = vpop.f32.mrf.mxu0
      %v702 = vadd.f32 %v661, %v701
      %703 = vdwg.mxu0
      %v705 = vperm.slane %v636, 0
      %v715 = vunpack.c.l.b16 %v568
      %v716 = vunpack.c.l.b16 %v569
      %v717 = vunpack.c.l.b16 %v570
      %v718 = vunpack.c.l.b16 %v571
      %v719 = vunpack.c.l.b16 %v572
      %v720 = vunpack.c.l.b16 %v573
      %v721 = vunpack.c.l.b16 %v574
      %v722 = vunpack.c.l.b16 %v575
      %v723 = vpack.c.b16 %v716, %v715
      %v724 = vpack.c.b16 %v718, %v717
      %v725 = vpack.c.b16 %v720, %v719
      %v726 = vpack.c.b16 %v722, %v721
      %731 = vmatpush.bf16.msra.mxu0 0
      %732 = vmatpush.bf16.msra.mxu0 0
      %733 = vmatpush.bf16.msra.mxu0 0
      %734 = vmatpush.bf16.msra.mxu0 0
      %735 = vmatpush.bf16.msra.mxu0 %v726
      %736 = vmatpush.bf16.msra.mxu0 %v725
      %737 = vmatpush.bf16.msra.mxu0 %v724
      %738 = vmatpush.bf16.msra.mxu0 %v723
      %739 = vmatmul.bf16.gmra.mxu0 %v688
      %v740 = vpop.f32.mrf.mxu0
      %v741 = vadd.f32 %v705, %v740
      %v742 = vpop.f32.mrf.mxu0
      %v743 = vadd.f32 %v705, %v742
      %744 = vdwg.mxu0
      %v746 = vperm.slane %v640, 0
      %v756 = vunpack.c.l.b16 %v600
      %v757 = vunpack.c.l.b16 %v601
      %v758 = vunpack.c.l.b16 %v602
      %v759 = vunpack.c.l.b16 %v603
      %v760 = vunpack.c.l.b16 %v604
      %v761 = vunpack.c.l.b16 %v605
      %v762 = vunpack.c.l.b16 %v606
      %v763 = vunpack.c.l.b16 %v607
      %v764 = vpack.c.b16 %v757, %v756
      %v765 = vpack.c.b16 %v759, %v758
      %v766 = vpack.c.b16 %v761, %v760
      %v767 = vpack.c.b16 %v763, %v762
      %772 = vmatpush.bf16.msra.mxu0 0
      %773 = vmatpush.bf16.msra.mxu0 0
      %774 = vmatpush.bf16.msra.mxu0 0
      %775 = vmatpush.bf16.msra.mxu0 0
      %776 = vmatpush.bf16.msra.mxu0 %v767
      %777 = vmatpush.bf16.msra.mxu0 %v766
      %778 = vmatpush.bf16.msra.mxu0 %v765
      %779 = vmatpush.bf16.msra.mxu0 %v764
      %780 = vmatmul.bf16.gmra.mxu0 %v688
      %v781 = vpop.f32.mrf.mxu0
      %v782 = vadd.f32 %v746, %v781
      %v783 = vpop.f32.mrf.mxu0
      %v784 = vadd.f32 %v746, %v783
      %785 = vdwg.mxu0
      %v786 = vmul.f32 %v700, 0.25
      %v787 = vmul.f32 %v702, 0.25
      %v788 = vpack.c.bf16 %v786, %v786
      %v789 = vpack.c.bf16 %v787, %v787
      %v790 = vpack.c.bf16 %v741, %v741
      %v791 = vpack.c.bf16 %v743, %v743
      %v792 = vpack.c.bf16 %v782, %v782
      %v793 = vpack.c.bf16 %v784, %v784
      %v796 = vunpack.c.l.b16 %v788
      %v797 = vunpack.c.l.b16 %v789
      %v798 = vpack.c.b16 %v797, %v796
      %v801 = vunpack.c.l.b16 %v790
      %v802 = vunpack.c.l.b16 %v791
      %v803 = vpack.c.b16 %v802, %v801
      %vm804 = vcmask 130048
      %v806 = vsel %vm804, %v798, 0
      %v809 = vsel %vm804, %v803, 0
      %811 = vmatpush.bf16.xpose.msra.mxu0 0
      %812 = vmatpush.bf16.xpose.msra.mxu0 0
      %813 = vmatpush.bf16.xpose.msra.mxu0 0
      %814 = vmatpush.bf16.xpose.msra.mxu0 0
      %815 = vmatpush.bf16.xpose.msra.mxu0 0
      %816 = vmatpush.bf16.xpose.msra.mxu0 0
      %817 = vmatpush.bf16.xpose.msra.mxu0 0
      %818 = vmatpush.bf16.xpose.msra.mxu0 %v809
      %819 = vmatmul.bf16.gmra.mxu0 %v806
      %v820 = vpop.f32.mrf.mxu0
      %v821 = vadd.f32 %v652, %v820
      %v822 = vpop.f32.mrf.mxu0
      %v823 = vadd.f32 %v653, %v822
      %824 = vdwg.mxu0
      %v825 = vsel %vm804, %v821, -inf
      %826 = vmax.xlane.f32.xlu0 %v825
      %v827 = vpop.xlane.xlu0 %826
      %v828 = vsel %vm804, %v823, -inf
      %829 = vmax.xlane.f32.xlu0 %v828
      %v830 = vpop.xlane.xlu0 %829
      %v831 = vsub.f32 %v821, %v827
      %v832 = vsub.f32 %v823, %v830
      %v833 = vmul.f32 %v831, 1.442695
      %v834 = vpow.pop %v833
      %v835 = vmul.f32 %v832, 1.442695
      %v836 = vpow.pop %v835
      %v837 = vsel %vm804, %v834, 0.0
      %838 = vadd.xlane.f32.xlu0 %v837
      %v839 = vpop.xlane.xlu0 %838
      %v840 = vsel %vm804, %v836, 0.0
      %841 = vadd.xlane.f32.xlu0 %v840
      %v842 = vpop.xlane.xlu0 %841
      %v843 = vrcp.pop %v839
      %v844 = vmul.f32 %v839, %v843
      %v845 = vsub.f32 1.0, %v844
      %v846 = vmul.f32 %v843, %v845
      %v847 = vadd.f32 %v843, %v846
      %vm848 = vweird.f32 %v839
      %vm849 = vweird.f32 %v843
      %vm850 = vmor %vm848, %vm849
      %v851 = vsel %vm850, %v843, %v847
      %v852 = vand.u32 2147483647, %v839
      %vm853 = vcmp.eq.f32.partialorder %v852, 8.507059e+37
      %v854 = vand.u32 %v839, 2147483648
      %v855 = vor.u32 1.1754944e-38, %v854
      %v856 = vsel %vm853, %v855, %v851
      %v857 = vmul.f32 %v834, %v856
      %v858 = vrcp.pop %v842
      %v859 = vmul.f32 %v842, %v858
      %v860 = vsub.f32 1.0, %v859
      %v861 = vmul.f32 %v858, %v860
      %v862 = vadd.f32 %v858, %v861
      %vm863 = vweird.f32 %v842
      %vm864 = vweird.f32 %v858
      %vm865 = vmor %vm863, %vm864
      %v866 = vsel %vm865, %v858, %v862
      %v867 = vand.u32 2147483647, %v842
      %vm868 = vcmp.eq.f32.partialorder %v867, 8.507059e+37
      %v869 = vand.u32 %v842, 2147483648
      %v870 = vor.u32 1.1754944e-38, %v869
      %v871 = vsel %vm868, %v870, %v866
      %v872 = vmul.f32 %v836, %v871
      %v873 = vpack.c.bf16 %v857, %v857
      %v874 = vpack.c.bf16 %v872, %v872
      %v877 = vunpack.c.l.b16 %v873
      %v878 = vunpack.c.l.b16 %v874
      %v879 = vpack.c.b16 %v878, %v877
      %v882 = vunpack.c.l.b16 %v792
      %v883 = vunpack.c.l.b16 %v793
      %v884 = vpack.c.b16 %v883, %v882
      %v887 = vsel %vm804, %v879, 0
      %889 = vmatpush.bf16.msra.mxu0 0
      %890 = vmatpush.bf16.msra.mxu0 0
      %891 = vmatpush.bf16.msra.mxu0 0
      %892 = vmatpush.bf16.msra.mxu0 0
      %893 = vmatpush.bf16.msra.mxu0 0
      %894 = vmatpush.bf16.msra.mxu0 0
      %895 = vmatpush.bf16.msra.mxu0 0
      %896 = vmatpush.bf16.msra.mxu0 %v884
      %897 = vmatmul.bf16.gmra.mxu0 %v887
      %v898 = vpop.f32.mrf.mxu0
      %v899 = vadd.f32 0.0, %v898
      %v900 = vpop.f32.mrf.mxu0
      %v901 = vadd.f32 0.0, %v900
      %902 = vdwg.mxu0
      %v903 = vpack.c.bf16 %v901, %v899
      %v905 = vperm.slane %v633, 0
      %v915 = vunpack.c.l.b16 %v544
      %v916 = vunpack.c.l.b16 %v545
      %v917 = vunpack.c.l.b16 %v546
      %v918 = vunpack.c.l.b16 %v547
      %v919 = vunpack.c.l.b16 %v548
      %v920 = vunpack.c.l.b16 %v549
      %v921 = vunpack.c.l.b16 %v550
      %v922 = vunpack.c.l.b16 %v551
      %v923 = vpack.c.b16 %v916, %v915
      %v924 = vpack.c.b16 %v918, %v917
      %v925 = vpack.c.b16 %v920, %v919
      %v926 = vpack.c.b16 %v922, %v921
      %931 = vmatpush.bf16.msra.mxu0 0
      %932 = vmatpush.bf16.msra.mxu0 0
      %933 = vmatpush.bf16.msra.mxu0 0
      %934 = vmatpush.bf16.msra.mxu0 0
      %935 = vmatpush.bf16.msra.mxu0 %v926
      %936 = vmatpush.bf16.msra.mxu0 %v925
      %937 = vmatpush.bf16.msra.mxu0 %v924
      %938 = vmatpush.bf16.msra.mxu0 %v923
      %939 = vmatmul.bf16.gmra.mxu0 %v688
      %v940 = vpop.f32.mrf.mxu0
      %v941 = vadd.f32 %v905, %v940
      %v942 = vpop.f32.mrf.mxu0
      %v943 = vadd.f32 %v905, %v942
      %944 = vdwg.mxu0
      %v946 = vperm.slane %v637, 0
      %v956 = vunpack.c.l.b16 %v576
      %v957 = vunpack.c.l.b16 %v577
      %v958 = vunpack.c.l.b16 %v578
      %v959 = vunpack.c.l.b16 %v579
      %v960 = vunpack.c.l.b16 %v580
      %v961 = vunpack.c.l.b16 %v581
      %v962 = vunpack.c.l.b16 %v582
      %v963 = vunpack.c.l.b16 %v583
      %v964 = vpack.c.b16 %v957, %v956
      %v965 = vpack.c.b16 %v959, %v958
      %v966 = vpack.c.b16 %v961, %v960
      %v967 = vpack.c.b16 %v963, %v962
      %972 = vmatpush.bf16.msra.mxu0 0
      %973 = vmatpush.bf16.msra.mxu0 0
      %974 = vmatpush.bf16.msra.mxu0 0
      %975 = vmatpush.bf16.msra.mxu0 0
      %976 = vmatpush.bf16.msra.mxu0 %v967
      %977 = vmatpush.bf16.msra.mxu0 %v966
      %978 = vmatpush.bf16.msra.mxu0 %v965
      %979 = vmatpush.bf16.msra.mxu0 %v964
      %980 = vmatmul.bf16.gmra.mxu0 %v688
      %v981 = vpop.f32.mrf.mxu0
      %v982 = vadd.f32 %v946, %v981
      %v983 = vpop.f32.mrf.mxu0
      %v984 = vadd.f32 %v946, %v983
      %985 = vdwg.mxu0
      %v987 = vperm.slane %v641, 0
      %v997 = vunpack.c.l.b16 %v608
      %v998 = vunpack.c.l.b16 %v609
      %v999 = vunpack.c.l.b16 %v610
      %v1000 = vunpack.c.l.b16 %v611
      %v1001 = vunpack.c.l.b16 %v612
      %v1002 = vunpack.c.l.b16 %v613
      %v1003 = vunpack.c.l.b16 %v614
      %v1004 = vunpack.c.l.b16 %v615
      %v1005 = vpack.c.b16 %v998, %v997
      %v1006 = vpack.c.b16 %v1000, %v999
      %v1007 = vpack.c.b16 %v1002, %v1001
      %v1008 = vpack.c.b16 %v1004, %v1003
      %1013 = vmatpush.bf16.msra.mxu0 0
      %1014 = vmatpush.bf16.msra.mxu0 0
      %1015 = vmatpush.bf16.msra.mxu0 0
      %1016 = vmatpush.bf16.msra.mxu0 0
      %1017 = vmatpush.bf16.msra.mxu0 %v1008
      %1018 = vmatpush.bf16.msra.mxu0 %v1007
      %1019 = vmatpush.bf16.msra.mxu0 %v1006
      %1020 = vmatpush.bf16.msra.mxu0 %v1005
      %1021 = vmatmul.bf16.gmra.mxu0 %v688
      %v1022 = vpop.f32.mrf.mxu0
      %v1023 = vadd.f32 %v987, %v1022
      %v1024 = vpop.f32.mrf.mxu0
      %v1025 = vadd.f32 %v987, %v1024
      %1026 = vdwg.mxu0
      %v1027 = vmul.f32 %v941, 0.25
      %v1028 = vmul.f32 %v943, 0.25
      %v1029 = vpack.c.bf16 %v1027, %v1027
      %v1030 = vpack.c.bf16 %v1028, %v1028
      %v1031 = vpack.c.bf16 %v982, %v982
      %v1032 = vpack.c.bf16 %v984, %v984
      %v1033 = vpack.c.bf16 %v1023, %v1023
      %v1034 = vpack.c.bf16 %v1025, %v1025
      %v1037 = vunpack.c.l.b16 %v1029
      %v1038 = vunpack.c.l.b16 %v1030
      %v1039 = vpack.c.b16 %v1038, %v1037
      %v1042 = vunpack.c.l.b16 %v1031
      %v1043 = vunpack.c.l.b16 %v1032
      %v1044 = vpack.c.b16 %v1043, %v1042
      %v1046 = vsel %vm804, %v1039, 0
      %v1049 = vsel %vm804, %v1044, 0
      %1051 = vmatpush.bf16.xpose.msra.mxu0 0
      %1052 = vmatpush.bf16.xpose.msra.mxu0 0
      %1053 = vmatpush.bf16.xpose.msra.mxu0 0
      %1054 = vmatpush.bf16.xpose.msra.mxu0 0
      %1055 = vmatpush.bf16.xpose.msra.mxu0 0
      %1056 = vmatpush.bf16.xpose.msra.mxu0 0
      %1057 = vmatpush.bf16.xpose.msra.mxu0 0
      %1058 = vmatpush.bf16.xpose.msra.mxu0 %v1049
      %1059 = vmatmul.bf16.gmra.mxu0 %v1046
      %v1060 = vpop.f32.mrf.mxu0
      %v1061 = vadd.f32 %v654, %v1060
      %v1062 = vpop.f32.mrf.mxu0
      %v1063 = vadd.f32 %v655, %v1062
      %1064 = vdwg.mxu0
      %v1065 = vsel %vm804, %v1061, -inf
      %1066 = vmax.xlane.f32.xlu0 %v1065
      %v1067 = vpop.xlane.xlu0 %1066
      %v1068 = vsel %vm804, %v1063, -inf
      %1069 = vmax.xlane.f32.xlu0 %v1068
      %v1070 = vpop.xlane.xlu0 %1069
      %v1071 = vsub.f32 %v1061, %v1067
      %v1072 = vsub.f32 %v1063, %v1070
      %v1073 = vmul.f32 %v1071, 1.442695
      %v1074 = vpow.pop %v1073
      %v1075 = vmul.f32 %v1072, 1.442695
      %v1076 = vpow.pop %v1075
      %v1077 = vsel %vm804, %v1074, 0.0
      %1078 = vadd.xlane.f32.xlu0 %v1077
      %v1079 = vpop.xlane.xlu0 %1078
      %v1080 = vsel %vm804, %v1076, 0.0
      %1081 = vadd.xlane.f32.xlu0 %v1080
      %v1082 = vpop.xlane.xlu0 %1081
      %v1083 = vrcp.pop %v1079
      %v1084 = vmul.f32 %v1079, %v1083
      %v1085 = vsub.f32 1.0, %v1084
      %v1086 = vmul.f32 %v1083, %v1085
      %v1087 = vadd.f32 %v1083, %v1086
      %vm1088 = vweird.f32 %v1079
      %vm1089 = vweird.f32 %v1083
      %vm1090 = vmor %vm1088, %vm1089
      %v1091 = vsel %vm1090, %v1083, %v1087
      %v1092 = vand.u32 2147483647, %v1079
      %vm1093 = vcmp.eq.f32.partialorder %v1092, 8.507059e+37
      %v1094 = vand.u32 %v1079, 2147483648
      %v1095 = vor.u32 1.1754944e-38, %v1094
      %v1096 = vsel %vm1093, %v1095, %v1091
      %v1097 = vmul.f32 %v1074, %v1096
      %v1098 = vrcp.pop %v1082
      %v1099 = vmul.f32 %v1082, %v1098
      %v1100 = vsub.f32 1.0, %v1099
      %v1101 = vmul.f32 %v1098, %v1100
      %v1102 = vadd.f32 %v1098, %v1101
      %vm1103 = vweird.f32 %v1082
      %vm1104 = vweird.f32 %v1098
      %vm1105 = vmor %vm1103, %vm1104
      %v1106 = vsel %vm1105, %v1098, %v1102
      %v1107 = vand.u32 2147483647, %v1082
      %vm1108 = vcmp.eq.f32.partialorder %v1107, 8.507059e+37
      %v1109 = vand.u32 %v1082, 2147483648
      %v1110 = vor.u32 1.1754944e-38, %v1109
      %v1111 = vsel %vm1108, %v1110, %v1106
      %v1112 = vmul.f32 %v1076, %v1111
      %v1113 = vpack.c.bf16 %v1097, %v1097
      %v1114 = vpack.c.bf16 %v1112, %v1112
      %v1117 = vunpack.c.l.b16 %v1113
      %v1118 = vunpack.c.l.b16 %v1114
      %v1119 = vpack.c.b16 %v1118, %v1117
      %v1122 = vunpack.c.l.b16 %v1033
      %v1123 = vunpack.c.l.b16 %v1034
      %v1124 = vpack.c.b16 %v1123, %v1122
      %v1127 = vsel %vm804, %v1119, 0
      %1129 = vmatpush.bf16.msra.mxu0 0
      %1130 = vmatpush.bf16.msra.mxu0 0
      %1131 = vmatpush.bf16.msra.mxu0 0
      %1132 = vmatpush.bf16.msra.mxu0 0
      %1133 = vmatpush.bf16.msra.mxu0 0
      %1134 = vmatpush.bf16.msra.mxu0 0
      %1135 = vmatpush.bf16.msra.mxu0 0
      %1136 = vmatpush.bf16.msra.mxu0 %v1124
      %1137 = vmatmul.bf16.gmra.mxu0 %v1127
      %v1138 = vpop.f32.mrf.mxu0
      %v1139 = vadd.f32 0.0, %v1138
      %v1140 = vpop.f32.mrf.mxu0
      %v1141 = vadd.f32 0.0, %v1140
      %1142 = vdwg.mxu0
      %v1143 = vpack.c.bf16 %v1141, %v1139
      %v1146 = vunpack.c.l.b16 %v646
      %v1147 = vunpack.c.l.b16 %v647
      %v1148 = vpack.c.b16 %v1147, %v1146
      %v1151 = vsel %vm804, %v1143, 0
      %1153 = vmatpush.bf16.msra.mxu0 0
      %1154 = vmatpush.bf16.msra.mxu0 0
      %1155 = vmatpush.bf16.msra.mxu0 0
      %1156 = vmatpush.bf16.msra.mxu0 0
      %1157 = vmatpush.bf16.msra.mxu0 0
      %1158 = vmatpush.bf16.msra.mxu0 0
      %1159 = vmatpush.bf16.msra.mxu0 0
      %1160 = vmatpush.bf16.msra.mxu0 %v1148
      %1161 = vmatmul.bf16.gmra.mxu0 %v1151
      %v1162 = vpop.f32.mrf.mxu0
      %v1163 = vadd.f32 0.0, %v1162
      %v1164 = vpop.f32.mrf.mxu0
      %v1165 = vadd.f32 0.0, %v1164
      %1166 = vdwg.mxu0
      %v1169 = vunpack.c.l.b16 %v644
      %v1170 = vunpack.c.l.b16 %v645
      %v1171 = vpack.c.b16 %v1170, %v1169
      %v1174 = vsel %vm804, %v903, 0
      %1176 = vmatpush.bf16.msra.mxu0 0
      %1177 = vmatpush.bf16.msra.mxu0 0
      %1178 = vmatpush.bf16.msra.mxu0 0
      %1179 = vmatpush.bf16.msra.mxu0 0
      %1180 = vmatpush.bf16.msra.mxu0 0
      %1181 = vmatpush.bf16.msra.mxu0 0
      %1182 = vmatpush.bf16.msra.mxu0 0
      %1183 = vmatpush.bf16.msra.mxu0 %v1171
      %1184 = vmatmul.bf16.gmra.mxu0 %v1174
      %v1185 = vpop.f32.mrf.mxu0
      %v1186 = vadd.f32 %v1163, %v1185
      %v1187 = vpop.f32.mrf.mxu0
      %v1188 = vadd.f32 %v1165, %v1187
      %1189 = vdwg.mxu0
      %v1191 = vperm.slane %v634, 0
      %v1201 = vunpack.c.l.b16 %v552
      %v1202 = vunpack.c.l.b16 %v553
      %v1203 = vunpack.c.l.b16 %v554
      %v1204 = vunpack.c.l.b16 %v555
      %v1205 = vunpack.c.l.b16 %v556
      %v1206 = vunpack.c.l.b16 %v557
      %v1207 = vunpack.c.l.b16 %v558
      %v1208 = vunpack.c.l.b16 %v559
      %v1209 = vpack.c.b16 %v1202, %v1201
      %v1210 = vpack.c.b16 %v1204, %v1203
      %v1211 = vpack.c.b16 %v1206, %v1205
      %v1212 = vpack.c.b16 %v1208, %v1207
      %1217 = vmatpush.bf16.msra.mxu0 0
      %1218 = vmatpush.bf16.msra.mxu0 0
      %1219 = vmatpush.bf16.msra.mxu0 0
      %1220 = vmatpush.bf16.msra.mxu0 0
      %1221 = vmatpush.bf16.msra.mxu0 %v1212
      %1222 = vmatpush.bf16.msra.mxu0 %v1211
      %1223 = vmatpush.bf16.msra.mxu0 %v1210
      %1224 = vmatpush.bf16.msra.mxu0 %v1209
      %1225 = vmatmul.bf16.gmra.mxu0 %v688
      %v1226 = vpop.f32.mrf.mxu0
      %v1227 = vadd.f32 %v1191, %v1226
      %v1228 = vpop.f32.mrf.mxu0
      %v1229 = vadd.f32 %v1191, %v1228
      %1230 = vdwg.mxu0
      %v1232 = vperm.slane %v638, 0
      %v1242 = vunpack.c.l.b16 %v584
      %v1243 = vunpack.c.l.b16 %v585
      %v1244 = vunpack.c.l.b16 %v586
      %v1245 = vunpack.c.l.b16 %v587
      %v1246 = vunpack.c.l.b16 %v588
      %v1247 = vunpack.c.l.b16 %v589
      %v1248 = vunpack.c.l.b16 %v590
      %v1249 = vunpack.c.l.b16 %v591
      %v1250 = vpack.c.b16 %v1243, %v1242
      %v1251 = vpack.c.b16 %v1245, %v1244
      %v1252 = vpack.c.b16 %v1247, %v1246
      %v1253 = vpack.c.b16 %v1249, %v1248
      %1258 = vmatpush.bf16.msra.mxu0 0
      %1259 = vmatpush.bf16.msra.mxu0 0
      %1260 = vmatpush.bf16.msra.mxu0 0
      %1261 = vmatpush.bf16.msra.mxu0 0
      %1262 = vmatpush.bf16.msra.mxu0 %v1253
      %1263 = vmatpush.bf16.msra.mxu0 %v1252
      %1264 = vmatpush.bf16.msra.mxu0 %v1251
      %1265 = vmatpush.bf16.msra.mxu0 %v1250
      %1266 = vmatmul.bf16.gmra.mxu0 %v688
      %v1267 = vpop.f32.mrf.mxu0
      %v1268 = vadd.f32 %v1232, %v1267
      %v1269 = vpop.f32.mrf.mxu0
      %v1270 = vadd.f32 %v1232, %v1269
      %1271 = vdwg.mxu0
      %v1273 = vperm.slane %v642, 0
      %v1283 = vunpack.c.l.b16 %v616
      %v1284 = vunpack.c.l.b16 %v617
      %v1285 = vunpack.c.l.b16 %v618
      %v1286 = vunpack.c.l.b16 %v619
      %v1287 = vunpack.c.l.b16 %v620
      %v1288 = vunpack.c.l.b16 %v621
      %v1289 = vunpack.c.l.b16 %v622
      %v1290 = vunpack.c.l.b16 %v623
      %v1291 = vpack.c.b16 %v1284, %v1283
      %v1292 = vpack.c.b16 %v1286, %v1285
      %v1293 = vpack.c.b16 %v1288, %v1287
      %v1294 = vpack.c.b16 %v1290, %v1289
      %1299 = vmatpush.bf16.msra.mxu0 0
      %1300 = vmatpush.bf16.msra.mxu0 0
      %1301 = vmatpush.bf16.msra.mxu0 0
      %1302 = vmatpush.bf16.msra.mxu0 0
      %1303 = vmatpush.bf16.msra.mxu0 %v1294
      %1304 = vmatpush.bf16.msra.mxu0 %v1293
      %1305 = vmatpush.bf16.msra.mxu0 %v1292
      %1306 = vmatpush.bf16.msra.mxu0 %v1291
      %1307 = vmatmul.bf16.gmra.mxu0 %v688
      %v1308 = vpop.f32.mrf.mxu0
      %v1309 = vadd.f32 %v1273, %v1308
      %v1310 = vpop.f32.mrf.mxu0
      %v1311 = vadd.f32 %v1273, %v1310
      %1312 = vdwg.mxu0
      %v1313 = vmul.f32 %v1227, 0.25
      %v1314 = vmul.f32 %v1229, 0.25
      %v1315 = vpack.c.bf16 %v1313, %v1313
      %v1316 = vpack.c.bf16 %v1314, %v1314
      %v1317 = vpack.c.bf16 %v1268, %v1268
      %v1318 = vpack.c.bf16 %v1270, %v1270
      %v1319 = vpack.c.bf16 %v1309, %v1309
      %v1320 = vpack.c.bf16 %v1311, %v1311
      %v1323 = vunpack.c.l.b16 %v1315
      %v1324 = vunpack.c.l.b16 %v1316
      %v1325 = vpack.c.b16 %v1324, %v1323
      %v1328 = vunpack.c.l.b16 %v1317
      %v1329 = vunpack.c.l.b16 %v1318
      %v1330 = vpack.c.b16 %v1329, %v1328
      %v1332 = vsel %vm804, %v1325, 0
      %v1335 = vsel %vm804, %v1330, 0
      %1337 = vmatpush.bf16.xpose.msra.mxu0 0
      %1338 = vmatpush.bf16.xpose.msra.mxu0 0
      %1339 = vmatpush.bf16.xpose.msra.mxu0 0
      %1340 = vmatpush.bf16.xpose.msra.mxu0 0
      %1341 = vmatpush.bf16.xpose.msra.mxu0 0
      %1342 = vmatpush.bf16.xpose.msra.mxu0 0
      %1343 = vmatpush.bf16.xpose.msra.mxu0 0
      %1344 = vmatpush.bf16.xpose.msra.mxu0 %v1335
      %1345 = vmatmul.bf16.gmra.mxu0 %v1332
      %v1346 = vpop.f32.mrf.mxu0
      %v1347 = vadd.f32 %v656, %v1346
      %v1348 = vpop.f32.mrf.mxu0
      %v1349 = vadd.f32 %v657, %v1348
      %1350 = vdwg.mxu0
      %v1351 = vsel %vm804, %v1347, -inf
      %1352 = vmax.xlane.f32.xlu0 %v1351
      %v1353 = vpop.xlane.xlu0 %1352
      %v1354 = vsel %vm804, %v1349, -inf
      %1355 = vmax.xlane.f32.xlu0 %v1354
      %v1356 = vpop.xlane.xlu0 %1355
      %v1357 = vsub.f32 %v1347, %v1353
      %v1358 = vsub.f32 %v1349, %v1356
      %v1359 = vmul.f32 %v1357, 1.442695
      %v1360 = vpow.pop %v1359
      %v1361 = vmul.f32 %v1358, 1.442695
      %v1362 = vpow.pop %v1361
      %v1363 = vsel %vm804, %v1360, 0.0
      %1364 = vadd.xlane.f32.xlu0 %v1363
      %v1365 = vpop.xlane.xlu0 %1364
      %v1366 = vsel %vm804, %v1362, 0.0
      %1367 = vadd.xlane.f32.xlu0 %v1366
      %v1368 = vpop.xlane.xlu0 %1367
      %v1369 = vrcp.pop %v1365
      %v1370 = vmul.f32 %v1365, %v1369
      %v1371 = vsub.f32 1.0, %v1370
      %v1372 = vmul.f32 %v1369, %v1371
      %v1373 = vadd.f32 %v1369, %v1372
      %vm1374 = vweird.f32 %v1365
      %vm1375 = vweird.f32 %v1369
      %vm1376 = vmor %vm1374, %vm1375
      %v1377 = vsel %vm1376, %v1369, %v1373
      %v1378 = vand.u32 2147483647, %v1365
      %vm1379 = vcmp.eq.f32.partialorder %v1378, 8.507059e+37
      %v1380 = vand.u32 %v1365, 2147483648
      %v1381 = vor.u32 1.1754944e-38, %v1380
      %v1382 = vsel %vm1379, %v1381, %v1377
      %v1383 = vmul.f32 %v1360, %v1382
      %v1384 = vrcp.pop %v1368
      %v1385 = vmul.f32 %v1368, %v1384
      %v1386 = vsub.f32 1.0, %v1385
      %v1387 = vmul.f32 %v1384, %v1386
      %v1388 = vadd.f32 %v1384, %v1387
      %vm1389 = vweird.f32 %v1368
      %vm1390 = vweird.f32 %v1384
      %vm1391 = vmor %vm1389, %vm1390
      %v1392 = vsel %vm1391, %v1384, %v1388
      %v1393 = vand.u32 2147483647, %v1368
      %vm1394 = vcmp.eq.f32.partialorder %v1393, 8.507059e+37
      %v1395 = vand.u32 %v1368, 2147483648
      %v1396 = vor.u32 1.1754944e-38, %v1395
      %v1397 = vsel %vm1394, %v1396, %v1392
      %v1398 = vmul.f32 %v1362, %v1397
      %v1399 = vpack.c.bf16 %v1383, %v1383
      %v1400 = vpack.c.bf16 %v1398, %v1398
      %v1403 = vunpack.c.l.b16 %v1399
      %v1404 = vunpack.c.l.b16 %v1400
      %v1405 = vpack.c.b16 %v1404, %v1403
      %v1408 = vunpack.c.l.b16 %v1319
      %v1409 = vunpack.c.l.b16 %v1320
      %v1410 = vpack.c.b16 %v1409, %v1408
      %v1413 = vsel %vm804, %v1405, 0
      %1415 = vmatpush.bf16.msra.mxu0 0
      %1416 = vmatpush.bf16.msra.mxu0 0
      %1417 = vmatpush.bf16.msra.mxu0 0
      %1418 = vmatpush.bf16.msra.mxu0 0
      %1419 = vmatpush.bf16.msra.mxu0 0
      %1420 = vmatpush.bf16.msra.mxu0 0
      %1421 = vmatpush.bf16.msra.mxu0 0
      %1422 = vmatpush.bf16.msra.mxu0 %v1410
      %1423 = vmatmul.bf16.gmra.mxu0 %v1413
      %v1424 = vpop.f32.mrf.mxu0
      %v1425 = vadd.f32 0.0, %v1424
      %v1426 = vpop.f32.mrf.mxu0
      %v1427 = vadd.f32 0.0, %v1426
      %1428 = vdwg.mxu0
      %v1429 = vpack.c.bf16 %v1427, %v1425
      %v1432 = vunpack.c.l.b16 %v648
      %v1433 = vunpack.c.l.b16 %v649
      %v1434 = vpack.c.b16 %v1433, %v1432
      %v1437 = vsel %vm804, %v1429, 0
      %1439 = vmatpush.bf16.msra.mxu0 0
      %1440 = vmatpush.bf16.msra.mxu0 0
      %1441 = vmatpush.bf16.msra.mxu0 0
      %1442 = vmatpush.bf16.msra.mxu0 0
      %1443 = vmatpush.bf16.msra.mxu0 0
      %1444 = vmatpush.bf16.msra.mxu0 0
      %1445 = vmatpush.bf16.msra.mxu0 0
      %1446 = vmatpush.bf16.msra.mxu0 %v1434
      %1447 = vmatmul.bf16.gmra.mxu0 %v1437
      %v1448 = vpop.f32.mrf.mxu0
      %v1449 = vadd.f32 0.0, %v1448
      %v1450 = vpop.f32.mrf.mxu0
      %v1451 = vadd.f32 0.0, %v1450
      %1452 = vdwg.mxu0
      %v1453 = vadd.f32 %v1186, %v1449
      %v1454 = vadd.f32 %v1188, %v1451
      %v1456 = vperm.slane %v635, 0
      %v1466 = vunpack.c.l.b16 %v560
      %v1467 = vunpack.c.l.b16 %v561
      %v1468 = vunpack.c.l.b16 %v562
      %v1469 = vunpack.c.l.b16 %v563
      %v1470 = vunpack.c.l.b16 %v564
      %v1471 = vunpack.c.l.b16 %v565
      %v1472 = vunpack.c.l.b16 %v566
      %v1473 = vunpack.c.l.b16 %v567
      %v1474 = vpack.c.b16 %v1467, %v1466
      %v1475 = vpack.c.b16 %v1469, %v1468
      %v1476 = vpack.c.b16 %v1471, %v1470
      %v1477 = vpack.c.b16 %v1473, %v1472
      %1482 = vmatpush.bf16.msra.mxu0 0
      %1483 = vmatpush.bf16.msra.mxu0 0
      %1484 = vmatpush.bf16.msra.mxu0 0
      %1485 = vmatpush.bf16.msra.mxu0 0
      %1486 = vmatpush.bf16.msra.mxu0 %v1477
      %1487 = vmatpush.bf16.msra.mxu0 %v1476
      %1488 = vmatpush.bf16.msra.mxu0 %v1475
      %1489 = vmatpush.bf16.msra.mxu0 %v1474
      %1490 = vmatmul.bf16.gmra.mxu0 %v688
      %v1491 = vpop.f32.mrf.mxu0
      %v1492 = vadd.f32 %v1456, %v1491
      %v1493 = vpop.f32.mrf.mxu0
      %v1494 = vadd.f32 %v1456, %v1493
      %1495 = vdwg.mxu0
      %v1497 = vperm.slane %v639, 0
      %v1507 = vunpack.c.l.b16 %v592
      %v1508 = vunpack.c.l.b16 %v593
      %v1509 = vunpack.c.l.b16 %v594
      %v1510 = vunpack.c.l.b16 %v595
      %v1511 = vunpack.c.l.b16 %v596
      %v1512 = vunpack.c.l.b16 %v597
      %v1513 = vunpack.c.l.b16 %v598
      %v1514 = vunpack.c.l.b16 %v599
      %v1515 = vpack.c.b16 %v1508, %v1507
      %v1516 = vpack.c.b16 %v1510, %v1509
      %v1517 = vpack.c.b16 %v1512, %v1511
      %v1518 = vpack.c.b16 %v1514, %v1513
      %1523 = vmatpush.bf16.msra.mxu0 0
      %1524 = vmatpush.bf16.msra.mxu0 0
      %1525 = vmatpush.bf16.msra.mxu0 0
      %1526 = vmatpush.bf16.msra.mxu0 0
      %1527 = vmatpush.bf16.msra.mxu0 %v1518
      %1528 = vmatpush.bf16.msra.mxu0 %v1517
      %1529 = vmatpush.bf16.msra.mxu0 %v1516
      %1530 = vmatpush.bf16.msra.mxu0 %v1515
      %1531 = vmatmul.bf16.gmra.mxu0 %v688
      %v1532 = vpop.f32.mrf.mxu0
      %v1533 = vadd.f32 %v1497, %v1532
      %v1534 = vpop.f32.mrf.mxu0
      %v1535 = vadd.f32 %v1497, %v1534
      %1536 = vdwg.mxu0
      %v1538 = vperm.slane %v643, 0
      %v1548 = vunpack.c.l.b16 %v624
      %v1549 = vunpack.c.l.b16 %v625
      %v1550 = vunpack.c.l.b16 %v626
      %v1551 = vunpack.c.l.b16 %v627
      %v1552 = vunpack.c.l.b16 %v628
      %v1553 = vunpack.c.l.b16 %v629
      %v1554 = vunpack.c.l.b16 %v630
      %v1555 = vunpack.c.l.b16 %v631
      %v1556 = vpack.c.b16 %v1549, %v1548
      %v1557 = vpack.c.b16 %v1551, %v1550
      %v1558 = vpack.c.b16 %v1553, %v1552
      %v1559 = vpack.c.b16 %v1555, %v1554
      %1564 = vmatpush.bf16.msra.mxu0 0
      %1565 = vmatpush.bf16.msra.mxu0 0
      %1566 = vmatpush.bf16.msra.mxu0 0
      %1567 = vmatpush.bf16.msra.mxu0 0
      %1568 = vmatpush.bf16.msra.mxu0 %v1559
      %1569 = vmatpush.bf16.msra.mxu0 %v1558
      %1570 = vmatpush.bf16.msra.mxu0 %v1557
      %1571 = vmatpush.bf16.msra.mxu0 %v1556
      %1572 = vmatmul.bf16.gmra.mxu0 %v688
      %v1573 = vpop.f32.mrf.mxu0
      %v1574 = vadd.f32 %v1538, %v1573
      %v1575 = vpop.f32.mrf.mxu0
      %v1576 = vadd.f32 %v1538, %v1575
      %1577 = vdwg.mxu0
      %v1578 = vmul.f32 %v1492, 0.25
      %v1579 = vmul.f32 %v1494, 0.25
      %v1580 = vpack.c.bf16 %v1578, %v1578
      %v1581 = vpack.c.bf16 %v1579, %v1579
      %v1582 = vpack.c.bf16 %v1533, %v1533
      %v1583 = vpack.c.bf16 %v1535, %v1535
      %v1584 = vpack.c.bf16 %v1574, %v1574
      %v1585 = vpack.c.bf16 %v1576, %v1576
      %v1588 = vunpack.c.l.b16 %v1580
      %v1589 = vunpack.c.l.b16 %v1581
      %v1590 = vpack.c.b16 %v1589, %v1588
      %v1593 = vunpack.c.l.b16 %v1582
      %v1594 = vunpack.c.l.b16 %v1583
      %v1595 = vpack.c.b16 %v1594, %v1593
      %v1597 = vsel %vm804, %v1590, 0
      %v1600 = vsel %vm804, %v1595, 0
      %1602 = vmatpush.bf16.xpose.msra.mxu0 0
      %1603 = vmatpush.bf16.xpose.msra.mxu0 0
      %1604 = vmatpush.bf16.xpose.msra.mxu0 0
      %1605 = vmatpush.bf16.xpose.msra.mxu0 0
      %1606 = vmatpush.bf16.xpose.msra.mxu0 0
      %1607 = vmatpush.bf16.xpose.msra.mxu0 0
      %1608 = vmatpush.bf16.xpose.msra.mxu0 0
      %1609 = vmatpush.bf16.xpose.msra.mxu0 %v1600
      %1610 = vmatmul.bf16.gmra.mxu0 %v1597
      %v1611 = vpop.f32.mrf.mxu0
      %v1612 = vadd.f32 %v658, %v1611
      %v1613 = vpop.f32.mrf.mxu0
      %v1614 = vadd.f32 %v659, %v1613
      %1615 = vdwg.mxu0
      %v1616 = vsel %vm804, %v1612, -inf
      %1617 = vmax.xlane.f32.xlu0 %v1616
      %v1618 = vpop.xlane.xlu0 %1617
      %v1619 = vsel %vm804, %v1614, -inf
      %1620 = vmax.xlane.f32.xlu0 %v1619
      %v1621 = vpop.xlane.xlu0 %1620
      %v1622 = vsub.f32 %v1612, %v1618
      %v1623 = vsub.f32 %v1614, %v1621
      %v1624 = vmul.f32 %v1622, 1.442695
      %v1625 = vpow.pop %v1624
      %v1626 = vmul.f32 %v1623, 1.442695
      %v1627 = vpow.pop %v1626
      %v1628 = vsel %vm804, %v1625, 0.0
      %1629 = vadd.xlane.f32.xlu0 %v1628
      %v1630 = vpop.xlane.xlu0 %1629
      %v1631 = vsel %vm804, %v1627, 0.0
      %1632 = vadd.xlane.f32.xlu0 %v1631
      %v1633 = vpop.xlane.xlu0 %1632
      %v1634 = vrcp.pop %v1630
      %v1635 = vmul.f32 %v1630, %v1634
      %v1636 = vsub.f32 1.0, %v1635
      %v1637 = vmul.f32 %v1634, %v1636
      %v1638 = vadd.f32 %v1634, %v1637
      %vm1639 = vweird.f32 %v1630
      %vm1640 = vweird.f32 %v1634
      %vm1641 = vmor %vm1639, %vm1640
      %v1642 = vsel %vm1641, %v1634, %v1638
      %v1643 = vand.u32 2147483647, %v1630
      %vm1644 = vcmp.eq.f32.partialorder %v1643, 8.507059e+37
      %v1645 = vand.u32 %v1630, 2147483648
      %v1646 = vor.u32 1.1754944e-38, %v1645
      %v1647 = vsel %vm1644, %v1646, %v1642
      %v1648 = vmul.f32 %v1625, %v1647
      %v1649 = vrcp.pop %v1633
      %v1650 = vmul.f32 %v1633, %v1649
      %v1651 = vsub.f32 1.0, %v1650
      %v1652 = vmul.f32 %v1649, %v1651
      %v1653 = vadd.f32 %v1649, %v1652
      %vm1654 = vweird.f32 %v1633
      %vm1655 = vweird.f32 %v1649
      %vm1656 = vmor %vm1654, %vm1655
      %v1657 = vsel %vm1656, %v1649, %v1653
      %v1658 = vand.u32 2147483647, %v1633
      %vm1659 = vcmp.eq.f32.partialorder %v1658, 8.507059e+37
      %v1660 = vand.u32 %v1633, 2147483648
      %v1661 = vor.u32 1.1754944e-38, %v1660
      %v1662 = vsel %vm1659, %v1661, %v1657
      %v1663 = vmul.f32 %v1627, %v1662
      %v1664 = vpack.c.bf16 %v1648, %v1648
      %v1665 = vpack.c.bf16 %v1663, %v1663
      %v1668 = vunpack.c.l.b16 %v1664
      %v1669 = vunpack.c.l.b16 %v1665
      %v1670 = vpack.c.b16 %v1669, %v1668
      %v1673 = vunpack.c.l.b16 %v1584
      %v1674 = vunpack.c.l.b16 %v1585
      %v1675 = vpack.c.b16 %v1674, %v1673
      %v1678 = vsel %vm804, %v1670, 0
      %1680 = vmatpush.bf16.msra.mxu0 0
      %1681 = vmatpush.bf16.msra.mxu0 0
      %1682 = vmatpush.bf16.msra.mxu0 0
      %1683 = vmatpush.bf16.msra.mxu0 0
      %1684 = vmatpush.bf16.msra.mxu0 0
      %1685 = vmatpush.bf16.msra.mxu0 0
      %1686 = vmatpush.bf16.msra.mxu0 0
      %1687 = vmatpush.bf16.msra.mxu0 %v1675
      %1688 = vmatmul.bf16.gmra.mxu0 %v1678
      %v1689 = vpop.f32.mrf.mxu0
      %v1690 = vadd.f32 0.0, %v1689
      %v1691 = vpop.f32.mrf.mxu0
      %v1692 = vadd.f32 0.0, %v1691
      %1693 = vdwg.mxu0
      %v1694 = vpack.c.bf16 %v1692, %v1690
      %v1697 = vunpack.c.l.b16 %v650
      %v1698 = vunpack.c.l.b16 %v651
      %v1699 = vpack.c.b16 %v1698, %v1697
      %v1702 = vsel %vm804, %v1694, 0
      %1704 = vmatpush.bf16.msra.mxu0 0
      %1705 = vmatpush.bf16.msra.mxu0 0
      %1706 = vmatpush.bf16.msra.mxu0 0
      %1707 = vmatpush.bf16.msra.mxu0 0
      %1708 = vmatpush.bf16.msra.mxu0 0
      %1709 = vmatpush.bf16.msra.mxu0 0
      %1710 = vmatpush.bf16.msra.mxu0 0
      %1711 = vmatpush.bf16.msra.mxu0 %v1699
      %1712 = vmatmul.bf16.gmra.mxu0 %v1702
      %v1713 = vpop.f32.mrf.mxu0
      %v1714 = vadd.f32 0.0, %v1713
      %v1715 = vpop.f32.mrf.mxu0
      %v1716 = vadd.f32 0.0, %v1715
      %1717 = vdwg.mxu0
      %v1718 = vadd.f32 %v1453, %v1714
      %v1719 = vadd.f32 %v1454, %v1716
      %v1720 = vadd.f32 %v469, %v1718
      %v1721 = vadd.f32 %v470, %v1719
      %v1722 = vld [vmem:[%s5] sm:$0x1]
      %v1724 = vperm.slane %v1722, 0
      %v1726 = vadd.f32 %v1720, %v1724
      %v1727 = vadd.f32 %v1721, %v1724
      %v1728 = vld [vmem:[%s8] sm:$0x1]
      %v1729 = vld [vmem:[%s9] sm:$0x1]
      %v1730 = vsel %vm473, %v1726, 0.0
      %1731 = vadd.xlane.f32.xlu0 %v1730
      %v1732 = vpop.xlane.xlu0 %1731
      %v1733 = vsel %vm473, %v1727, 0.0
      %1734 = vadd.xlane.f32.xlu0 %v1733
      %v1735 = vpop.xlane.xlu0 %1734
      %v1736 = vmul.f32 %v1732, %v486
      %v1737 = vmul.f32 %v1735, %v486
      %v1738 = vsub.f32 %v1726, %v1736
      %v1739 = vsub.f32 %v1727, %v1737
      %v1740 = vmul.f32 %v1738, %v1738
      %v1741 = vmul.f32 %v1739, %v1739
      %v1742 = vsel %vm473, %v1740, 0.0
      %1743 = vadd.xlane.f32.xlu0 %v1742
      %v1744 = vpop.xlane.xlu0 %1743
      %v1745 = vsel %vm473, %v1741, 0.0
      %1746 = vadd.xlane.f32.xlu0 %v1745
      %v1747 = vpop.xlane.xlu0 %1746
      %v1748 = vmul.f32 %v1744, %v486
      %v1749 = vmul.f32 %v1747, %v486
      %v1750 = vadd.f32 %v1748, 1e-05
      %v1751 = vadd.f32 %v1749, 1e-05
      %v1752 = vrsqrt.pop %v1750
      %v1753 = vmul.f32 %v1752, %v1750
      %v1754 = vmul.f32 %v1753, %v1752
      %v1755 = vmul.f32 0.5, %v1754
      %v1756 = vsub.f32 1.5, %v1755
      %v1757 = vmul.f32 %v1752, %v1756
      %vm1758 = vweird.f32 %v1750
      %vm1759 = vweird.f32 %v1752
      %vm1760 = vmor %vm1758, %vm1759
      %v1761 = vsel %vm1760, %v1752, %v1757
      %v1762 = vrsqrt.pop %v1751
      %v1763 = vmul.f32 %v1762, %v1751
      %v1764 = vmul.f32 %v1763, %v1762
      %v1765 = vmul.f32 0.5, %v1764
      %v1766 = vsub.f32 1.5, %v1765
      %v1767 = vmul.f32 %v1762, %v1766
      %vm1768 = vweird.f32 %v1751
      %vm1769 = vweird.f32 %v1762
      %vm1770 = vmor %vm1768, %vm1769
      %v1771 = vsel %vm1770, %v1762, %v1767
      %v1772 = vmul.f32 %v1738, %v1761
      %v1773 = vmul.f32 %v1739, %v1771
      %v1775 = vperm.slane %v1728, 0
      %v1777 = vmul.f32 %v1772, %v1775
      %v1778 = vmul.f32 %v1773, %v1775
      %v1780 = vperm.slane %v1729, 0
      %v1782 = vadd.f32 %v1777, %v1780
      %v1783 = vadd.f32 %v1778, %v1780
      %v1784 = vpack.c.bf16 %v1783, %v1782
      %v1785 = vld [vmem:[%s10] sm:$0xff]
      %v1786 = vld [vmem:[%s10 + $0x8] sm:$0xff]
      %v1787 = vld [vmem:[%s10 + $0x10] sm:$0xff]
      %v1788 = vld [vmem:[%s10 + $0x18] sm:$0xff]
      %v1789 = vld [vmem:[%s10 + $0x20] sm:$0xff]
      %v1790 = vld [vmem:[%s10 + $0x28] sm:$0xff]
      %v1791 = vld [vmem:[%s10 + $0x30] sm:$0xff]
      %v1792 = vld [vmem:[%s10 + $0x38] sm:$0xff]
      %v1793 = vld [vmem:[%s11] sm:$0x3]
      %v1795 = vperm.slane %v1793, 0
      %v1796 = vperm.slane %v1793, 1
      %v1807 = vunpack.c.l.b16 %v1785
      %v1808 = vunpack.c.h.b16 %v1785
      %v1809 = vunpack.c.l.b16 %v1786
      %v1810 = vunpack.c.h.b16 %v1786
      %v1811 = vunpack.c.l.b16 %v1787
      %v1812 = vunpack.c.h.b16 %v1787
      %v1813 = vunpack.c.l.b16 %v1788
      %v1814 = vunpack.c.h.b16 %v1788
      %v1815 = vunpack.c.l.b16 %v1789
      %v1816 = vunpack.c.h.b16 %v1789
      %v1817 = vunpack.c.l.b16 %v1790
      %v1818 = vunpack.c.h.b16 %v1790
      %v1819 = vunpack.c.l.b16 %v1791
      %v1820 = vunpack.c.h.b16 %v1791
      %v1821 = vunpack.c.l.b16 %v1792
      %v1822 = vunpack.c.h.b16 %v1792
      %v1823 = vpack.c.b16 %v1809, %v1807
      %v1824 = vpack.c.b16 %v1810, %v1808
      %v1825 = vpack.c.b16 %v1813, %v1811
      %v1826 = vpack.c.b16 %v1814, %v1812
      %v1827 = vpack.c.b16 %v1817, %v1815
      %v1828 = vpack.c.b16 %v1818, %v1816
      %v1829 = vpack.c.b16 %v1821, %v1819
      %v1830 = vpack.c.b16 %v1822, %v1820
      %v1840 = vsel %vm473, %v1784, 0
      %1842 = vmatpush.bf16.msra.mxu0 0
      %1843 = vmatpush.bf16.msra.mxu0 0
      %1844 = vmatpush.bf16.msra.mxu0 0
      %1845 = vmatpush.bf16.msra.mxu0 0
      %1846 = vmatpush.bf16.msra.mxu0 %v1829
      %1847 = vmatpush.bf16.msra.mxu0 %v1827
      %1848 = vmatpush.bf16.msra.mxu0 %v1825
      %1849 = vmatpush.bf16.msra.mxu0 %v1823
      %1850 = vmatmul.bf16.gmra.mxu0 %v1840
      %v1851 = vpop.f32.mrf.mxu0
      %v1852 = vadd.f32 %v1795, %v1851
      %v1853 = vpop.f32.mrf.mxu0
      %v1854 = vadd.f32 %v1795, %v1853
      %1855 = vdwg.mxu0
      %1856 = vmatpush.bf16.msra.mxu0 0
      %1857 = vmatpush.bf16.msra.mxu0 0
      %1858 = vmatpush.bf16.msra.mxu0 0
      %1859 = vmatpush.bf16.msra.mxu0 0
      %1860 = vmatpush.bf16.msra.mxu0 %v1830
      %1861 = vmatpush.bf16.msra.mxu0 %v1828
      %1862 = vmatpush.bf16.msra.mxu0 %v1826
      %1863 = vmatpush.bf16.msra.mxu0 %v1824
      %1864 = vmatmul.bf16.gmra.mxu0 %v1840
      %v1865 = vpop.f32.mrf.mxu0
      %v1866 = vadd.f32 %v1796, %v1865
      %v1867 = vpop.f32.mrf.mxu0
      %v1868 = vadd.f32 %v1796, %v1867
      %1869 = vdwg.mxu0
      %v1870 = vmul.f32 %v1852, 0.5
      %v1871 = vmul.f32 %v1866, 0.5
      %v1872 = vmul.f32 %v1854, 0.5
      %v1873 = vmul.f32 %v1868, 0.5
      %v1874 = vmul.f32 %v1852, 0.044715
      %v1875 = vmul.f32 %v1866, 0.044715
      %v1876 = vmul.f32 %v1854, 0.044715
      %v1877 = vmul.f32 %v1868, 0.044715
      %v1878 = vmul.f32 %v1874, %v1852
      %v1879 = vmul.f32 %v1875, %v1866
      %v1880 = vmul.f32 %v1876, %v1854
      %v1881 = vmul.f32 %v1877, %v1868
      %v1882 = vmul.f32 %v1878, %v1852
      %v1883 = vmul.f32 %v1879, %v1866
      %v1884 = vmul.f32 %v1880, %v1854
      %v1885 = vmul.f32 %v1881, %v1868
      %v1886 = vadd.f32 %v1852, %v1882
      %v1887 = vadd.f32 %v1866, %v1883
      %v1888 = vadd.f32 %v1854, %v1884
      %v1889 = vadd.f32 %v1868, %v1885
      %v1890 = vmul.f32 %v1886, 0.7978846
      %v1891 = vmul.f32 %v1887, 0.7978846
      %v1892 = vmul.f32 %v1888, 0.7978846
      %v1893 = vmul.f32 %v1889, 0.7978846
      %v1894 = vtanh.pop %v1890
      %v1895 = vtanh.pop %v1891
      %v1896 = vtanh.pop %v1892
      %v1897 = vtanh.pop %v1893
      %v1898 = vadd.f32 %v1894, 1.0
      %v1899 = vadd.f32 %v1895, 1.0
      %v1900 = vadd.f32 %v1896, 1.0
      %v1901 = vadd.f32 %v1897, 1.0
      %v1902 = vmul.f32 %v1870, %v1898
      %v1903 = vmul.f32 %v1871, %v1899
      %v1904 = vmul.f32 %v1872, %v1900
      %v1905 = vmul.f32 %v1873, %v1901
      %v1906 = vpack.c.bf16 %v1904, %v1902
      %v1907 = vpack.c.bf16 %v1905, %v1903
      %v1908 = vld [vmem:[%s12] sm:$0xf]
      %v1909 = vld [vmem:[%s12 + $0x4] sm:$0xf]
      %v1910 = vld [vmem:[%s12 + $0x8] sm:$0xf]
      %v1911 = vld [vmem:[%s12 + $0xc] sm:$0xf]
      %v1912 = vld [vmem:[%s12 + $0x10] sm:$0xf]
      %v1913 = vld [vmem:[%s12 + $0x14] sm:$0xf]
      %v1914 = vld [vmem:[%s12 + $0x18] sm:$0xf]
      %v1915 = vld [vmem:[%s12 + $0x1c] sm:$0xf]
      %v1916 = vld [vmem:[%s12 + $0x20] sm:$0xf]
      %v1917 = vld [vmem:[%s12 + $0x24] sm:$0xf]
      %v1918 = vld [vmem:[%s12 + $0x28] sm:$0xf]
      %v1919 = vld [vmem:[%s12 + $0x2c] sm:$0xf]
      %v1920 = vld [vmem:[%s12 + $0x30] sm:$0xf]
      %v1921 = vld [vmem:[%s12 + $0x34] sm:$0xf]
      %v1922 = vld [vmem:[%s12 + $0x38] sm:$0xf]
      %v1923 = vld [vmem:[%s12 + $0x3c] sm:$0xf]
      %v1924 = vld [vmem:[%s12 + $0x40] sm:$0xf]
      %v1925 = vld [vmem:[%s12 + $0x44] sm:$0xf]
      %v1926 = vld [vmem:[%s12 + $0x48] sm:$0xf]
      %v1927 = vld [vmem:[%s12 + $0x4c] sm:$0xf]
      %v1928 = vld [vmem:[%s12 + $0x50] sm:$0xf]
      %v1929 = vld [vmem:[%s12 + $0x54] sm:$0xf]
      %v1930 = vld [vmem:[%s12 + $0x58] sm:$0xf]
      %v1931 = vld [vmem:[%s12 + $0x5c] sm:$0xf]
      %v1932 = vld [vmem:[%s12 + $0x60] sm:$0xf]
      %v1933 = vld [vmem:[%s12 + $0x64] sm:$0xf]
      %v1934 = vld [vmem:[%s12 + $0x68] sm:$0xf]
      %v1935 = vld [vmem:[%s12 + $0x6c] sm:$0xf]
      %v1936 = vld [vmem:[%s12 + $0x70] sm:$0xf]
      %v1937 = vld [vmem:[%s12 + $0x74] sm:$0xf]
      %v1938 = vld [vmem:[%s12 + $0x78] sm:$0xf]
      %v1939 = vld [vmem:[%s12 + $0x7c] sm:$0xf]
      %v1940 = vld [vmem:[%s13] sm:$0x1]
      %v1942 = vperm.slane %v1940, 0
      %v1976 = vunpack.c.l.b16 %v1908
      %v1977 = vunpack.c.l.b16 %v1909
      %v1978 = vunpack.c.l.b16 %v1910
      %v1979 = vunpack.c.l.b16 %v1911
      %v1980 = vunpack.c.l.b16 %v1912
      %v1981 = vunpack.c.l.b16 %v1913
      %v1982 = vunpack.c.l.b16 %v1914
      %v1983 = vunpack.c.l.b16 %v1915
      %v1984 = vunpack.c.l.b16 %v1916
      %v1985 = vunpack.c.l.b16 %v1917
      %v1986 = vunpack.c.l.b16 %v1918
      %v1987 = vunpack.c.l.b16 %v1919
      %v1988 = vunpack.c.l.b16 %v1920
      %v1989 = vunpack.c.l.b16 %v1921
      %v1990 = vunpack.c.l.b16 %v1922
      %v1991 = vunpack.c.l.b16 %v1923
      %v1992 = vunpack.c.l.b16 %v1924
      %v1993 = vunpack.c.l.b16 %v1925
      %v1994 = vunpack.c.l.b16 %v1926
      %v1995 = vunpack.c.l.b16 %v1927
      %v1996 = vunpack.c.l.b16 %v1928
      %v1997 = vunpack.c.l.b16 %v1929
      %v1998 = vunpack.c.l.b16 %v1930
      %v1999 = vunpack.c.l.b16 %v1931
      %v2000 = vunpack.c.l.b16 %v1932
      %v2001 = vunpack.c.l.b16 %v1933
      %v2002 = vunpack.c.l.b16 %v1934
      %v2003 = vunpack.c.l.b16 %v1935
      %v2004 = vunpack.c.l.b16 %v1936
      %v2005 = vunpack.c.l.b16 %v1937
      %v2006 = vunpack.c.l.b16 %v1938
      %v2007 = vunpack.c.l.b16 %v1939
      %v2008 = vpack.c.b16 %v1977, %v1976
      %v2009 = vpack.c.b16 %v1979, %v1978
      %v2010 = vpack.c.b16 %v1981, %v1980
      %v2011 = vpack.c.b16 %v1983, %v1982
      %v2012 = vpack.c.b16 %v1985, %v1984
      %v2013 = vpack.c.b16 %v1987, %v1986
      %v2014 = vpack.c.b16 %v1989, %v1988
      %v2015 = vpack.c.b16 %v1991, %v1990
      %v2016 = vpack.c.b16 %v1993, %v1992
      %v2017 = vpack.c.b16 %v1995, %v1994
      %v2018 = vpack.c.b16 %v1997, %v1996
      %v2019 = vpack.c.b16 %v1999, %v1998
      %v2020 = vpack.c.b16 %v2001, %v2000
      %v2021 = vpack.c.b16 %v2003, %v2002
      %v2022 = vpack.c.b16 %v2005, %v2004
      %v2023 = vpack.c.b16 %v2007, %v2006
      %2040 = vmatpush.bf16.msra.mxu0 %v2015
      %2041 = vmatpush.bf16.msra.mxu0 %v2014
      %2042 = vmatpush.bf16.msra.mxu0 %v2013
      %2043 = vmatpush.bf16.msra.mxu0 %v2012
      %2044 = vmatpush.bf16.msra.mxu0 %v2011
      %2045 = vmatpush.bf16.msra.mxu0 %v2010
      %2046 = vmatpush.bf16.msra.mxu0 %v2009
      %2047 = vmatpush.bf16.msra.mxu0 %v2008
      %2048 = vmatmul.bf16.gmra.mxu0 %v1906
      %v2049 = vpop.f32.mrf.mxu0
      %v2050 = vadd.f32 %v1942, %v2049
      %v2051 = vpop.f32.mrf.mxu0
      %v2052 = vadd.f32 %v1942, %v2051
      %2053 = vdwg.mxu0
      %2054 = vmatpush.bf16.msra.mxu0 %v2023
      %2055 = vmatpush.bf16.msra.mxu0 %v2022
      %2056 = vmatpush.bf16.msra.mxu0 %v2021
      %2057 = vmatpush.bf16.msra.mxu0 %v2020
      %2058 = vmatpush.bf16.msra.mxu0 %v2019
      %2059 = vmatpush.bf16.msra.mxu0 %v2018
      %2060 = vmatpush.bf16.msra.mxu0 %v2017
      %2061 = vmatpush.bf16.msra.mxu0 %v2016
      %2062 = vmatmul.bf16.gmra.mxu0 %v1907
      %v2063 = vpop.f32.mrf.mxu0
      %v2064 = vadd.f32 %v2050, %v2063
      %v2065 = vpop.f32.mrf.mxu0
      %v2066 = vadd.f32 %v2052, %v2065
      %2067 = vdwg.mxu0
      %v2068 = vadd.f32 %v1726, %v2064
      %v2069 = vadd.f32 %v1727, %v2066
      %2070 = vst.msk [vmem:[%s467] sm:$0xff] %vm473, %v2068
      %2071 = vst.msk [vmem:[%s467 + $0x8] sm:$0xff] %vm473, %v2069
      %p2072 = scmp.lt.s32.totalorder %s25, 1
      %s2073 = scalar_select %p2072, %s25, 1
      %s2074 = smul.addr %s2073, 2
      %s2075 = smul.addr %s2074, 8
      %s2076 = scalar_lea.vmem %s14, %s2075
      // Predicated region
      $region77: #{swin_forward.11} parent=75 // pred_check
        %p2077 = pneg %p342
      $region78: #{swin_forward.11} parent=75 // pred_check_branch
        %2079 = sbr.rel (%p2077) target = $region80
      $region79: #{swin_forward.11} parent=75 // pred_region
        _
      $region80: #{swin_forward.11} parent=75 // pred_fallthru
        _
    $region76: #{swin_forward.11} parent=5 // pred_fallthru
      _
    %p2080 = scmp.le.s32.totalorder 2, %s20
    // Predicated region
    $region81: #{swin_forward.11} parent=5 // pred_check
      %p2081 = pneg %p2080
    $region82: #{swin_forward.11} parent=5 // pred_check_branch
      %2083 = sbr.rel (%p2081) target = $region84
    $region83: #{swin_forward.11} parent=5 // pred_region
      %s2084 = ssub.s32 %s20, 2
      // Predicated region
      $region85: #{swin_forward.11} parent=83 // pred_check
        %p2085 = pneg %p348
      $region86: #{swin_forward.11} parent=83 // pred_check_branch
        %2087 = sbr.rel (%p2085) target = $region88
      $region87: #{swin_forward.11} parent=83 // pred_region
        %p2088 = scmp.lt.s32.totalorder %s26, 1
        %s2089 = scalar_select %p2088, %s26, 1
        %s2090 = smul.addr %s2089, 2
        %s2091 = smul.addr %s2090, 8
        %s2092 = scalar_lea.vmem %s14, %s2091
      $region88: #{swin_forward.11} parent=83 // pred_fallthru
        _
    $region84: #{swin_forward.11} parent=5 // pred_fallthru
      _
  $region6: #{swin_forward.11} parent=0 // loop_footer
    %s24 = sadd.s32 1, %s20
  $region7: #{swin_forward.11} parent=0 // loop_footer_branch
    %19 = sbr.rel target = $region3
  $region8: #{swin_forward.11} parent=0 // loop_exit
    _

</llo_original>
